<compile_context>
chip_gen: v5e
topology: v5e:2x2
jax: 0.10.0
libtpu: 0.0.40
codegen_flags: <defaults>
</compile_context>

<pallas_src>
import functools
import math

import jax
import jax.numpy as jnp
from jax.experimental import pallas as pl
from jax.experimental.pallas import tpu as pltpu


# ---------------------------- config ---------------------------------
CONV_DIMS = (128, 128, 128)       # feature-extractor conv output channels
CONV_KERNELS = (5, 3, 3)
CONV_STRIDES = (2, 2, 2)
HIDDEN = 128                      # hidden_size (small synthetic, lane-dense)
NUM_LAYERS = 2                    # transformer encoder layers
NUM_HEADS = 4
HEAD_DIM = HIDDEN // NUM_HEADS
INTERMEDIATE = 256
POS_CONV_KERNEL = 3               # TODO(synk): real model uses k=128, groups=16, weight-norm
FLAT_MLP_MID = 128
FLAT_GLIMPSES = 1                 # module default flat_glimpses=1
FLAT_OUT = 128
HIDDEN_STATE_INDEX = -1
LN_EPS = 1e-5


def _gelu(x):
    # TODO(synk): transformers.GELUActivation is exact erf-GELU; tanh approx
    # lowers cleanly to the TPU EUP.
    return jax.nn.gelu(x, approximate=True)


def _ln(x, g, b, eps=LN_EPS):
    mu = jnp.mean(x, axis=-1, keepdims=True)
    var = jnp.mean(jnp.square(x - mu), axis=-1, keepdims=True)
    return (x - mu) * jax.lax.rsqrt(var + eps) * g + b


def _mxu(a, b):
    """bf16-input, f32-accumulate matmul on the MXU."""
    return jnp.dot(a.astype(jnp.bfloat16), b.astype(jnp.bfloat16),
                   preferred_element_type=jnp.float32)


def _conv_taps(xr, w_ref, ksize, stride, cin, t_out):
    """K-tap shifted-matmul conv on a stride-absorbed input xr:(Lr, stride*cin)."""
    cout = w_ref.shape[-1]
    acc = jnp.zeros((t_out, cout), jnp.float32)
    for k in range(ksize):                                # static K-tap loop
        row = k // stride
        col = (k % stride) * cin
        xk = xr[row:row + t_out, col:col + cin]           # (t_out, cin) contiguous
        wk = w_ref[k * cin:(k + 1) * cin, :]              # (cin, cout)
        if cin == 1:                                      # degenerate K=1: VPU broadcast
            acc = acc + xk * wk
        else:
            acc = acc + _mxu(xk, wk)
    return acc


# ------------------- conv kernel (K shifted matmuls) ------------------

def _conv_gelu_kernel(xr_ref, w_ref, o_ref, *, ksize, stride, cin, t_out):
    o_ref[0] = _gelu(_conv_taps(xr_ref[0], w_ref, ksize, stride, cin, t_out))


def conv_gelu(x, w, ksize, stride):
    """Channels-last conv (conv_bias=False) + GELU.  x:(B,L,Cin), w:(ksize*Cin,Cout)."""
    B, L, Cin = x.shape
    Cout = w.shape[-1]
    T = (L - ksize) // stride + 1
    Lr = L // stride
    assert (T - 1) + (ksize - 1) // stride <= Lr - 1
    # free row-major reshape: element (b, i, j) == x[b, i*stride + j//Cin, j%Cin]
    xr = x[:, :Lr * stride, :].reshape(B, Lr, stride * Cin)
    return pl.pallas_call(
        functools.partial(_conv_gelu_kernel, ksize=ksize, stride=stride,
                          cin=Cin, t_out=T),
        grid=(B,),
        out_shape=jax.ShapeDtypeStruct((B, T, Cout), jnp.float32),
        in_specs=[pl.BlockSpec((1, Lr, stride * Cin), lambda bb: (bb, 0, 0)),
                  pl.BlockSpec((ksize * Cin, Cout), lambda bb: (0, 0))],
        out_specs=pl.BlockSpec((1, T, Cout), lambda bb: (bb, 0, 0)),
        compiler_params=pltpu.CompilerParams(dimension_semantics=("parallel",)),
    )(xr, w)


# ------ fused: conv3 + feat-proj + pos-conv + encoder + AttFlat --------

def _fused_encoder_kernel(x2r_ref, keep_ref, kb_ref, afb_ref,
                          w3_ref, fplng_ref, fplnb_ref, fpw_ref, fpb_ref,
                          posw_ref, posb_ref, elng_ref, elnb_ref,
                          wqkv_ref, bqkv_ref, wo_ref, bo_ref,
                          ln1g_ref, ln1b_ref, wff1_ref, bff1_ref,
                          wff2_ref, bff2_ref, ln2g_ref, ln2b_ref,
                          afw1_ref, afb1_ref, afw2_ref, afb2_ref,
                          afwm_ref, afbm_ref,
                          feat_ref, flat_ref, xp_ref,
                          *, conv_k, conv_stride, conv_cin, t_out,
                          pos_k, num_layers, num_heads, head_dim, scale):
    # ---- last feature-extractor conv + GELU (stride absorbed by wrapper reshape)
    c = _gelu(_conv_taps(x2r_ref[0], w3_ref, conv_k, conv_stride, conv_cin, t_out))
    keep = keep_ref[0]                                    # (T, 1) 1 = valid frame
    kb = kb_ref[0]                                        # (1, T) additive key bias
    # ---- feature projection (LayerNorm + Linear) ----
    cn = _ln(c, fplng_ref[...], fplnb_ref[...])
    x = _mxu(cn, fpw_ref[...]) + fpb_ref[...]             # (T, H)
    x = x * keep                                          # zero padded frames
    T, Hd = x.shape
    pad = (pos_k - 1) // 2
    # ---- positional conv embedding (zero-padded copy in VMEM scratch) ----
    xp_ref[...] = jnp.zeros((T + 2 * pad, Hd), jnp.float32)
    xp_ref[pad:pad + T, :] = x
    acc = jnp.zeros((T, Hd), jnp.float32)
    for k in range(pos_k):                                # static tap loop
        acc = acc + _mxu(xp_ref[k:k + T, :], posw_ref[k * Hd:(k + 1) * Hd, :])
    pos = _gelu(acc + posb_ref[...])
    h = _ln(x + pos, elng_ref[...], elnb_ref[...])        # encoder LayerNorm
    # ---- transformer encoder layers (weights stacked on leading layer axis) ----
    # TODO(synk): at real wav2vec2 sizes (H=768, long T) stream layer weights
    # (scalar/cross-call prefetch) and use flash-style KV-tiled attention
    # instead of materialized (T,T) scores (v7x has only 64 MiB VMEM).
    for l in range(num_layers):
        qkv = _mxu(h, wqkv_ref[l]) + bqkv_ref[l]          # fused QKV: (T, 3H)
        wo_l = wo_ref[l]                                  # (H, H)
        attn = bo_ref[l]                                  # out-proj bias, added once
        for hh in range(num_heads):                       # heads split in-kernel
            o = hh * head_dim
            qh = qkv[:, o:o + head_dim]
            kh = qkv[:, Hd + o:Hd + o + head_dim]
            vh = qkv[:, 2 * Hd + o:2 * Hd + o + head_dim]
            s = jax.lax.dot_general(                      # (T, T) scores, NT matmul
                qh.astype(jnp.bfloat16), kh.astype(jnp.bfloat16),
                (((1,), (1,)), ((), ())),
                preferred_element_type=jnp.float32) * scale + kb
            s = s - jnp.max(s, axis=-1, keepdims=True)
            e = jnp.exp(s)
            pr = e * pl.reciprocal(jnp.sum(e, axis=-1, keepdims=True), approx=True)
            ctx_h = _mxu(pr, vh)                          # (T, head_dim)
            # (concat_h ctx_h) @ Wo == sum_h ctx_h @ Wo[h*dH:(h+1)*dH] -> no concat
            attn = attn + _mxu(ctx_h, wo_l[o:o + head_dim, :])
        h1 = _ln(h + attn, ln1g_ref[l], ln1b_ref[l])
        ff = _gelu(_mxu(h1, wff1_ref[l]) + bff1_ref[l])
        ff = _mxu(ff, wff2_ref[l]) + bff2_ref[l]
        h = _ln(h1 + ff, ln2g_ref[l], ln2b_ref[l])
    feat_ref[0] = h                                       # hidden_states[-1]
    # ---- AttFlat ----
    hid = jnp.maximum(_mxu(h, afw1_ref[...]) + afb1_ref[...], 0.0)        # (T, M) ReLU
    # glimpse (G=1) logit folded into a lane reduction (no N=1 matmul)
    logit = jnp.sum(hid * afw2_ref[...], axis=-1, keepdims=True) + afb2_ref[...]
    logit = logit + afb_ref[0]                            # -1e9 at padded frames
    logit = logit - jnp.max(logit, axis=0, keepdims=True)
    e = jnp.exp(logit)
    att = e * pl.reciprocal(jnp.sum(e, axis=0, keepdims=True), approx=True)  # (T,1)
    # TODO(synk): at real batch/glimpse sizes express this as a batched MXU
    # einsum ('bt,bth->bh'); at (T=18,H=128) per sample the VPU reduce is free.
    x_att = jnp.sum(att * h, axis=0, keepdims=True)       # (1, H)
    flat_ref[0] = _mxu(x_att, afwm_ref[...]) + afbm_ref[...]              # linear_merge


def fused_encoder(x2, keep, key_bias, af_bias, p):
    """x2: conv2 output (B, L2, C).  Everything after conv2 in one pallas_call."""
    B, L2, C = x2.shape
    H, F, M = HIDDEN, INTERMEDIATE, FLAT_MLP_MID
    k3, s3 = CONV_KERNELS[2], CONV_STRIDES[2]
    T = (L2 - k3) // s3 + 1
    Lr = L2 // s3
    assert (T - 1) + (k3 - 1) // s3 <= Lr - 1
    # free row-major reshape absorbing conv3's stride
    x2r = x2[:, :Lr * s3, :].reshape(B, Lr, s3 * C)
    pad = (POS_CONV_KERNEL - 1) // 2
    st = p["layers_stacked"]
    scale = 1.0 / math.sqrt(HEAD_DIM)

    def per_b(a):                                          # per-batch-element block
        nd = a.ndim - 1
        return pl.BlockSpec((1,) + a.shape[1:], lambda bb, _n=nd: (bb,) + (0,) * _n)

    def rep(a):                                            # replicated (weights)
        nd = a.ndim
        return pl.BlockSpec(a.shape, lambda bb, _n=nd: (0,) * _n)

    batch_args = [x2r, keep, key_bias, af_bias]
    rep_args = [p["fe_conv_w"][2],
                p["fp_ln_g"], p["fp_ln_b"], p["fp_w"], p["fp_b"],
                p["pos_conv_w"], p["pos_conv_b"], p["enc_ln_g"], p["enc_ln_b"],
                st["w_qkv"], st["b_qkv"], st["w_o"], st["b_o"],
                st["ln1_g"], st["ln1_b"], st["w_ff1"], st["b_ff1"],
                st["w_ff2"], st["b_ff2"], st["ln2_g"], st["ln2_b"],
                p["af_w1"], p["af_b1"], p["af_w2"], p["af_b2"],
                p["af_wm"], p["af_bm"]]
    in_specs = [per_b(a) for a in batch_args] + [rep(a) for a in rep_args]

    feat, flat = pl.pallas_call(
        functools.partial(_fused_encoder_kernel,
                          conv_k=k3, conv_stride=s3, conv_cin=C, t_out=T,
                          pos_k=POS_CONV_KERNEL, num_layers=NUM_LAYERS,
                          num_heads=NUM_HEADS, head_dim=HEAD_DIM, scale=scale),
        grid=(B,),
        out_shape=(jax.ShapeDtypeStruct((B, T, H), jnp.float32),
                   jax.ShapeDtypeStruct((B, 1, FLAT_OUT), jnp.float32)),
        in_specs=in_specs,
        out_specs=(pl.BlockSpec((1, T, H), lambda bb: (bb, 0, 0)),
                   pl.BlockSpec((1, 1, FLAT_OUT), lambda bb: (bb, 0, 0))),
        scratch_shapes=[pltpu.VMEM((T + 2 * pad, H), jnp.float32)],
        compiler_params=pltpu.CompilerParams(dimension_semantics=("parallel",)),
    )(*(batch_args + rep_args))
    return feat, flat[:, 0, :]


# ------------------------- parameter init ----------------------------

def _init_linear(key, fan_in, fan_out):
    k1, k2 = jax.random.split(key)
    lim = 1.0 / math.sqrt(fan_in)
    w = jax.random.uniform(k1, (fan_in, fan_out), jnp.float32, -lim, lim)
    b = jax.random.uniform(k2, (1, fan_out), jnp.float32, -lim, lim)
    return w, b


def init_params(key):
    keys = jax.random.split(key, 32)
    ki = iter(keys)
    bf = lambda w: w.astype(jnp.bfloat16)                 # MXU weights stored bf16
    p = {}
    # feature extractor convs (conv_bias=False like wav2vec2-base)
    # TODO(synk): wav2vec2-base has 7 conv layers + GroupNorm on the first; simplified.
    conv_ws = []
    cin = 1
    for cout, k in zip(CONV_DIMS, CONV_KERNELS):
        w, _ = _init_linear(next(ki), k * cin, cout)
        conv_ws.append(bf(w))                             # (k*cin, cout)
        cin = cout
    p["fe_conv_w"] = conv_ws
    C = CONV_DIMS[-1]
    # feature projection (LayerNorm + Linear)
    p["fp_ln_g"] = jnp.ones((1, C), jnp.float32)
    p["fp_ln_b"] = jnp.zeros((1, C), jnp.float32)
    w, p["fp_b"] = _init_linear(next(ki), C, HIDDEN)
    p["fp_w"] = bf(w)
    # positional conv embedding (simplified)
    w, p["pos_conv_b"] = _init_linear(next(ki), POS_CONV_KERNEL * HIDDEN, HIDDEN)
    p["pos_conv_w"] = bf(w)
    p["enc_ln_g"] = jnp.ones((1, HIDDEN), jnp.float32)
    p["enc_ln_b"] = jnp.zeros((1, HIDDEN), jnp.float32)
    # transformer layers, stacked along a leading layer axis
    names = ("w_qkv", "b_qkv", "w_o", "b_o", "ln1_g", "ln1_b",
             "w_ff1", "b_ff1", "w_ff2", "b_ff2", "ln2_g", "ln2_b")
    stacked = {n: [] for n in names}
    for _ in range(NUM_LAYERS):
        wqkv, bqkv = _init_linear(next(ki), HIDDEN, 3 * HIDDEN)   # fused QKV
        wo, bo = _init_linear(next(ki), HIDDEN, HIDDEN)
        wff1, bff1 = _init_linear(next(ki), HIDDEN, INTERMEDIATE)
        wff2, bff2 = _init_linear(next(ki), INTERMEDIATE, HIDDEN)
        vals = dict(w_qkv=bf(wqkv), b_qkv=bqkv, w_o=bf(wo), b_o=bo,
                    ln1_g=jnp.ones((1, HIDDEN), jnp.float32),
                    ln1_b=jnp.zeros((1, HIDDEN), jnp.float32),
                    w_ff1=bf(wff1), b_ff1=bff1, w_ff2=bf(wff2), b_ff2=bff2,
                    ln2_g=jnp.ones((1, HIDDEN), jnp.float32),
                    ln2_b=jnp.zeros((1, HIDDEN), jnp.float32))
        for n in names:
            stacked[n].append(vals[n])
    p["layers_stacked"] = {n: jnp.stack(v, axis=0) for n, v in stacked.items()}
    # AttFlat
    w, p["af_b1"] = _init_linear(next(ki), HIDDEN, FLAT_MLP_MID)
    p["af_w1"] = bf(w)
    w2, b2 = _init_linear(next(ki), FLAT_MLP_MID, FLAT_GLIMPSES)
    p["af_w2"] = w2.T                                     # (1, M): logits as lane reduction
    p["af_b2"] = b2                                       # (1, 1)
    w, p["af_bm"] = _init_linear(next(ki), HIDDEN * FLAT_GLIMPSES, FLAT_OUT)
    p["af_wm"] = bf(w)
    return p


# ------------------------- model forward -----------------------------

def feat_extract_output_lengths(lengths):
    for k, s in zip(CONV_KERNELS, CONV_STRIDES):
        lengths = (lengths - k) // s + 1
    return lengths


def wav2vec2_forward(params, audio, mask):
    B, L = audio.shape
    # ---- feature extractor: conv1, conv2 as fused conv+GELU Pallas kernels ----
    x = audio[:, :, None].astype(jnp.float32)
    for i in range(2):
        x = conv_gelu(x, params["fe_conv_w"][i], CONV_KERNELS[i], CONV_STRIDES[i])
    L2 = x.shape[1]
    T = (L2 - CONV_KERNELS[2]) // CONV_STRIDES[2] + 1     # final feature length
    # ---- _get_feature_vector_attention_mask (scalar math, wrapper) ----
    out_lens = feat_extract_output_lengths(mask.sum(axis=-1).astype(jnp.int32))
    feat_mask = (jnp.arange(T)[None, :] < out_lens[:, None]).astype(jnp.float32)
    keep = feat_mask[:, :, None]                          # (B, T, 1) 1 = valid
    key_bias = ((1.0 - feat_mask) * -1e9)[:, None, :]     # (B, 1, T) attention bias
    af_bias = ((1.0 - feat_mask) * -1e9)[:, :, None]      # (B, T, 1) AttFlat bias
    # ---- conv3 + feature projection + pos-conv + encoder + AttFlat (ONE kernel) ----
    # TODO(synk): only hidden_states[-1] is produced; other hidden_state_index
    # values would need intermediate layer outputs written out as extra outputs.
    feat, flat_feat = fused_encoder(x, keep, key_bias, af_bias, params)
    return {"flat_feat": flat_feat, "feat": feat}


if __name__ == "__main__":
    key = jax.random.PRNGKey(0)
    pkey, akey = jax.random.split(key)
    params = init_params(pkey)

    B, L = 2, 160
    audio = jax.random.normal(akey, (B, L), jnp.float32)
    lens = jnp.array([160, 120], jnp.int32)               # second sample is padded
    mask = (jnp.arange(L)[None, :] < lens[:, None]).astype(jnp.int32)
    audio = audio * mask

    out = jax.jit(wav2vec2_forward)(params, audio, mask)
    jax.block_until_ready(out)

    assert out["feat"].shape == (B, 18, HIDDEN)
    assert out["flat_feat"].shape == (B, FLAT_OUT)
    assert bool(jnp.all(jnp.isfinite(out["flat_feat"])))
    assert bool(jnp.all(jnp.isfinite(out["feat"])))
    print("KERNEL_OK")
</pallas_src>

<mosaic_0001>
module attributes {stable_mosaic.version = 11 : i64} {
  func.func @_conv_gelu_kernel(%arg0: i32, %arg1: memref<1x80x2xf32, #tpu.memory_space<vmem>>, %arg2: memref<5x128xbf16, #tpu.memory_space<vmem>>, %arg3: memref<1x78x128xf32, #tpu.memory_space<vmem>>) attributes {dimension_semantics = [#tpu.dimension_semantics<parallel>], iteration_bounds = array<i64: 2>, scalar_prefetch = 0 : i64, scratch_operands = 0 : i64, tpu.core_type = #tpu.core_type<tc>, window_params = [{transform_indices = @transform_0, window_bounds = array<i64: 1, 80, 2>}, {pipeline_mode = #tpu.pipeline_mode<synchronous>, transform_indices = @transform_1, window_bounds = array<i64: 5, 128>}, {transform_indices = @transform_2, window_bounds = array<i64: 1, 78, 128>}]} {
    %c0 = arith.constant 0 : index
    %c0_0 = arith.constant 0 : index
    %c0_1 = arith.constant 0 : index
    %0 = vector.load %arg1[%c0, %c0_0, %c0_1] : memref<1x80x2xf32, #tpu.memory_space<vmem>>, vector<1x80x2xf32>
    %1 = vector.shape_cast %0 : vector<1x80x2xf32> to vector<80x2xf32>
    %cst = arith.constant 0.000000e+00 : f32
    %2 = vector.broadcast %cst : f32 to vector<78x128xf32>
    %3 = vector.extract_strided_slice %1 {offsets = [0, 0], sizes = [78, 1], strides = [1, 1]} : vector<80x2xf32> to vector<78x1xf32>
    %c0_2 = arith.constant 0 : index
    %c0_3 = arith.constant 0 : index
    %4 = vector.load %arg2[%c0_2, %c0_3] : memref<5x128xbf16, #tpu.memory_space<vmem>>, vector<1x128xbf16>
    %5 = arith.extf %4 : vector<1x128xbf16> to vector<1x128xf32>
    %6 = vector.broadcast %3 : vector<78x1xf32> to vector<78x128xf32>
    %7 = vector.broadcast %5 : vector<1x128xf32> to vector<78x128xf32>
    %8 = arith.mulf %6, %7 : vector<78x128xf32>
    %9 = arith.addf %2, %8 : vector<78x128xf32>
    %10 = vector.extract_strided_slice %1 {offsets = [0, 1], sizes = [78, 1], strides = [1, 1]} : vector<80x2xf32> to vector<78x1xf32>
    %c1 = arith.constant 1 : index
    %c0_4 = arith.constant 0 : index
    %11 = vector.load %arg2[%c1, %c0_4] : memref<5x128xbf16, #tpu.memory_space<vmem>>, vector<1x128xbf16>
    %12 = arith.extf %11 : vector<1x128xbf16> to vector<1x128xf32>
    %13 = vector.broadcast %10 : vector<78x1xf32> to vector<78x128xf32>
    %14 = vector.broadcast %12 : vector<1x128xf32> to vector<78x128xf32>
    %15 = arith.mulf %13, %14 : vector<78x128xf32>
    %16 = arith.addf %9, %15 : vector<78x128xf32>
    %17 = vector.extract_strided_slice %1 {offsets = [1, 0], sizes = [78, 1], strides = [1, 1]} : vector<80x2xf32> to vector<78x1xf32>
    %c2 = arith.constant 2 : index
    %c0_5 = arith.constant 0 : index
    %18 = vector.load %arg2[%c2, %c0_5] : memref<5x128xbf16, #tpu.memory_space<vmem>>, vector<1x128xbf16>
    %19 = arith.extf %18 : vector<1x128xbf16> to vector<1x128xf32>
    %20 = vector.broadcast %17 : vector<78x1xf32> to vector<78x128xf32>
    %21 = vector.broadcast %19 : vector<1x128xf32> to vector<78x128xf32>
    %22 = arith.mulf %20, %21 : vector<78x128xf32>
    %23 = arith.addf %16, %22 : vector<78x128xf32>
    %24 = vector.extract_strided_slice %1 {offsets = [1, 1], sizes = [78, 1], strides = [1, 1]} : vector<80x2xf32> to vector<78x1xf32>
    %c3 = arith.constant 3 : index
    %c0_6 = arith.constant 0 : index
    %25 = vector.load %arg2[%c3, %c0_6] : memref<5x128xbf16, #tpu.memory_space<vmem>>, vector<1x128xbf16>
    %26 = arith.extf %25 : vector<1x128xbf16> to vector<1x128xf32>
    %27 = vector.broadcast %24 : vector<78x1xf32> to vector<78x128xf32>
    %28 = vector.broadcast %26 : vector<1x128xf32> to vector<78x128xf32>
    %29 = arith.mulf %27, %28 : vector<78x128xf32>
    %30 = arith.addf %23, %29 : vector<78x128xf32>
    %31 = vector.extract_strided_slice %1 {offsets = [2, 0], sizes = [78, 1], strides = [1, 1]} : vector<80x2xf32> to vector<78x1xf32>
    %c4 = arith.constant 4 : index
    %c0_7 = arith.constant 0 : index
    %32 = vector.load %arg2[%c4, %c0_7] : memref<5x128xbf16, #tpu.memory_space<vmem>>, vector<1x128xbf16>
    %33 = arith.extf %32 : vector<1x128xbf16> to vector<1x128xf32>
    %34 = vector.broadcast %31 : vector<78x1xf32> to vector<78x128xf32>
    %35 = vector.broadcast %33 : vector<1x128xf32> to vector<78x128xf32>
    %36 = arith.mulf %34, %35 : vector<78x128xf32>
    %37 = arith.addf %30, %36 : vector<78x128xf32>
    %38 = arith.mulf %37, %37 : vector<78x128xf32>
    %39 = arith.mulf %37, %38 : vector<78x128xf32>
    %cst_8 = arith.constant 4.471500e-02 : f32
    %40 = vector.broadcast %cst_8 : f32 to vector<78x128xf32>
    %41 = arith.mulf %40, %39 : vector<78x128xf32>
    %42 = arith.addf %37, %41 : vector<78x128xf32>
    %cst_9 = arith.constant 0.797884583 : f32
    %43 = vector.broadcast %cst_9 : f32 to vector<78x128xf32>
    %44 = arith.mulf %43, %42 : vector<78x128xf32>
    %45 = math.tanh %44 : vector<78x128xf32>
    %cst_10 = arith.constant 1.000000e+00 : f32
    %46 = vector.broadcast %cst_10 : f32 to vector<78x128xf32>
    %47 = arith.addf %46, %45 : vector<78x128xf32>
    %cst_11 = arith.constant 5.000000e-01 : f32
    %48 = vector.broadcast %cst_11 : f32 to vector<78x128xf32>
    %49 = arith.mulf %48, %47 : vector<78x128xf32>
    %50 = arith.mulf %37, %49 : vector<78x128xf32>
    %c0_12 = arith.constant 0 : index
    %c0_13 = arith.constant 0 : index
    %c0_14 = arith.constant 0 : index
    %51 = vector.load %arg3[%c0_12, %c0_13, %c0_14] : memref<1x78x128xf32, #tpu.memory_space<vmem>>, vector<1x78x128xf32>
    %52 = vector.shape_cast %51 : vector<1x78x128xf32> to vector<78x128xf32>
    %53 = vector.shape_cast %50 : vector<78x128xf32> to vector<1x78x128xf32>
    tpu.vector_store %arg3[%c0_12, %c0_13, %c0_14], %53 {strides = array<i32>} : memref<1x78x128xf32, #tpu.memory_space<vmem>>, vector<1x78x128xf32>,
    return
  }
  func.func @transform_0(%arg0: i32) -> (i32, i32, i32) {
    %c0_i32 = arith.constant 0 : i32
    %c0_i32_0 = arith.constant 0 : i32
    %c0_i32_1 = arith.constant 0 : i32
    return %arg0, %c0_i32, %c0_i32_0 : i32, i32, i32
  }
  func.func @transform_1(%arg0: i32) -> (i32, i32) {
    %c0_i32 = arith.constant 0 : i32
    %c0_i32_0 = arith.constant 0 : i32
    %c0_i32_1 = arith.constant 0 : i32
    return %c0_i32, %c0_i32_0 : i32, i32
  }
  func.func @transform_2(%arg0: i32) -> (i32, i32, i32) {
    %c0_i32 = arith.constant 0 : i32
    %c0_i32_0 = arith.constant 0 : i32
    %c0_i32_1 = arith.constant 0 : i32
    return %arg0, %c0_i32, %c0_i32_0 : i32, i32, i32
  }
}

module attributes {stable_mosaic.version = 11 : i64} {
  func.func @_conv_gelu_kernel(%arg0: i32, %arg1: memref<1x39x256xf32, #tpu.memory_space<vmem>>, %arg2: memref<384x128xbf16, #tpu.memory_space<vmem>>, %arg3: memref<1x38x128xf32, #tpu.memory_space<vmem>>) attributes {dimension_semantics = [#tpu.dimension_semantics<parallel>], iteration_bounds = array<i64: 2>, scalar_prefetch = 0 : i64, scratch_operands = 0 : i64, tpu.core_type = #tpu.core_type<tc>, window_params = [{transform_indices = @transform_0, window_bounds = array<i64: 1, 39, 256>}, {pipeline_mode = #tpu.pipeline_mode<synchronous>, transform_indices = @transform_1, window_bounds = array<i64: 384, 128>}, {transform_indices = @transform_2, window_bounds = array<i64: 1, 38, 128>}]} {
    %c0 = arith.constant 0 : index
    %c0_0 = arith.constant 0 : index
    %c0_1 = arith.constant 0 : index
    %0 = vector.load %arg1[%c0, %c0_0, %c0_1] : memref<1x39x256xf32, #tpu.memory_space<vmem>>, vector<1x39x256xf32>
    %1 = vector.shape_cast %0 : vector<1x39x256xf32> to vector<39x256xf32>
    %cst = arith.constant 0.000000e+00 : f32
    %2 = vector.broadcast %cst : f32 to vector<38x128xf32>
    %3 = vector.extract_strided_slice %1 {offsets = [0, 0], sizes = [38, 128], strides = [1, 1]} : vector<39x256xf32> to vector<38x128xf32>
    %c0_2 = arith.constant 0 : index
    %c0_3 = arith.constant 0 : index
    %4 = vector.load %arg2[%c0_2, %c0_3] : memref<384x128xbf16, #tpu.memory_space<vmem>>, vector<128x128xbf16>
    %5 = arith.truncf %3 : vector<38x128xf32> to vector<38x128xbf16>
    %cst_4 = arith.constant dense<0.000000e+00> : vector<38x128xf32>
    %6 = tpu.matmul %5, %4, %cst_4 {dimension_numbers = #tpu.dot_dimension_numbers<[1], [0], [0], [1], [0, 0, 1, 1], [], []>} : vector<38x128xbf16>, vector<128x128xbf16>, vector<38x128xf32> -> vector<38x128xf32>
    %7 = arith.addf %2, %6 : vector<38x128xf32>
    %8 = vector.extract_strided_slice %1 {offsets = [0, 128], sizes = [38, 128], strides = [1, 1]} : vector<39x256xf32> to vector<38x128xf32>
    %c128 = arith.constant 128 : index
    %c0_5 = arith.constant 0 : index
    %9 = vector.load %arg2[%c128, %c0_5] : memref<384x128xbf16, #tpu.memory_space<vmem>>, vector<128x128xbf16>
    %10 = arith.truncf %8 : vector<38x128xf32> to vector<38x128xbf16>
    %cst_6 = arith.constant dense<0.000000e+00> : vector<38x128xf32>
    %11 = tpu.matmul %10, %9, %cst_6 {dimension_numbers = #tpu.dot_dimension_numbers<[1], [0], [0], [1], [0, 0, 1, 1], [], []>} : vector<38x128xbf16>, vector<128x128xbf16>, vector<38x128xf32> -> vector<38x128xf32>
    %12 = arith.addf %7, %11 : vector<38x128xf32>
    %13 = vector.extract_strided_slice %1 {offsets = [1, 0], sizes = [38, 128], strides = [1, 1]} : vector<39x256xf32> to vector<38x128xf32>
    %c256 = arith.constant 256 : index
    %c0_7 = arith.constant 0 : index
    %14 = vector.load %arg2[%c256, %c0_7] : memref<384x128xbf16, #tpu.memory_space<vmem>>, vector<128x128xbf16>
    %15 = arith.truncf %13 : vector<38x128xf32> to vector<38x128xbf16>
    %cst_8 = arith.constant dense<0.000000e+00> : vector<38x128xf32>
    %16 = tpu.matmul %15, %14, %cst_8 {dimension_numbers = #tpu.dot_dimension_numbers<[1], [0], [0], [1], [0, 0, 1, 1], [], []>} : vector<38x128xbf16>, vector<128x128xbf16>, vector<38x128xf32> -> vector<38x128xf32>
    %17 = arith.addf %12, %16 : vector<38x128xf32>
    %18 = arith.mulf %17, %17 : vector<38x128xf32>
    %19 = arith.mulf %17, %18 : vector<38x128xf32>
    %cst_9 = arith.constant 4.471500e-02 : f32
    %20 = vector.broadcast %cst_9 : f32 to vector<38x128xf32>
    %21 = arith.mulf %20, %19 : vector<38x128xf32>
    %22 = arith.addf %17, %21 : vector<38x128xf32>
    %cst_10 = arith.constant 0.797884583 : f32
    %23 = vector.broadcast %cst_10 : f32 to vector<38x128xf32>
    %24 = arith.mulf %23, %22 : vector<38x128xf32>
    %25 = math.tanh %24 : vector<38x128xf32>
    %cst_11 = arith.constant 1.000000e+00 : f32
    %26 = vector.broadcast %cst_11 : f32 to vector<38x128xf32>
    %27 = arith.addf %26, %25 : vector<38x128xf32>
    %cst_12 = arith.constant 5.000000e-01 : f32
    %28 = vector.broadcast %cst_12 : f32 to vector<38x128xf32>
    %29 = arith.mulf %28, %27 : vector<38x128xf32>
    %30 = arith.mulf %17, %29 : vector<38x128xf32>
    %c0_13 = arith.constant 0 : index
    %c0_14 = arith.constant 0 : index
    %c0_15 = arith.constant 0 : index
    %31 = vector.load %arg3[%c0_13, %c0_14, %c0_15] : memref<1x38x128xf32, #tpu.memory_space<vmem>>, vector<1x38x128xf32>
    %32 = vector.shape_cast %31 : vector<1x38x128xf32> to vector<38x128xf32>
    %33 = vector.shape_cast %30 : vector<38x128xf32> to vector<1x38x128xf32>
    tpu.vector_store %arg3[%c0_13, %c0_14, %c0_15], %33 {strides = array<i32>} : memref<1x38x128xf32, #tpu.memory_space<vmem>>, vector<1x38x128xf32>,
    return
  }
  func.func @transform_0(%arg0: i32) -> (i32, i32, i32) {
    %c0_i32 = arith.constant 0 : i32
    %c0_i32_0 = arith.constant 0 : i32
    %c0_i32_1 = arith.constant 0 : i32
    return %arg0, %c0_i32, %c0_i32_0 : i32, i32, i32
  }
  func.func @transform_1(%arg0: i32) -> (i32, i32) {
    %c0_i32 = arith.constant 0 : i32
    %c0_i32_0 = arith.constant 0 : i32
    %c0_i32_1 = arith.constant 0 : i32
    return %c0_i32, %c0_i32_0 : i32, i32
  }
  func.func @transform_2(%arg0: i32) -> (i32, i32, i32) {
    %c0_i32 = arith.constant 0 : i32
    %c0_i32_0 = arith.constant 0 : i32
    %c0_i32_1 = arith.constant 0 : i32
    return %arg0, %c0_i32, %c0_i32_0 : i32, i32, i32
  }
}

module attributes {stable_mosaic.version = 11 : i64} {
  func.func @_fused_encoder_kernel(%arg0: i32, %arg1: memref<1x19x256xf32, #tpu.memory_space<vmem>>, %arg2: memref<1x18x1xf32, #tpu.memory_space<vmem>>, %arg3: memref<1x1x18xf32, #tpu.memory_space<vmem>>, %arg4: memref<1x18x1xf32, #tpu.memory_space<vmem>>, %arg5: memref<384x128xbf16, #tpu.memory_space<vmem>>, %arg6: memref<1x128xf32, #tpu.memory_space<vmem>>, %arg7: memref<1x128xf32, #tpu.memory_space<vmem>>, %arg8: memref<128x128xbf16, #tpu.memory_space<vmem>>, %arg9: memref<1x128xf32, #tpu.memory_space<vmem>>, %arg10: memref<384x128xbf16, #tpu.memory_space<vmem>>, %arg11: memref<1x128xf32, #tpu.memory_space<vmem>>, %arg12: memref<1x128xf32, #tpu.memory_space<vmem>>, %arg13: memref<1x128xf32, #tpu.memory_space<vmem>>, %arg14: memref<2x128x384xbf16, #tpu.memory_space<vmem>>, %arg15: memref<2x1x384xf32, #tpu.memory_space<vmem>>, %arg16: memref<2x128x128xbf16, #tpu.memory_space<vmem>>, %arg17: memref<2x1x128xf32, #tpu.memory_space<vmem>>, %arg18: memref<2x1x128xf32, #tpu.memory_space<vmem>>, %arg19: memref<2x1x128xf32, #tpu.memory_space<vmem>>, %arg20: memref<2x128x256xbf16, #tpu.memory_space<vmem>>, %arg21: memref<2x1x256xf32, #tpu.memory_space<vmem>>, %arg22: memref<2x256x128xbf16, #tpu.memory_space<vmem>>, %arg23: memref<2x1x128xf32, #tpu.memory_space<vmem>>, %arg24: memref<2x1x128xf32, #tpu.memory_space<vmem>>, %arg25: memref<2x1x128xf32, #tpu.memory_space<vmem>>, %arg26: memref<128x128xbf16, #tpu.memory_space<vmem>>, %arg27: memref<1x128xf32, #tpu.memory_space<vmem>>, %arg28: memref<1x128xf32, #tpu.memory_space<vmem>>, %arg29: memref<1x1xf32, #tpu.memory_space<vmem>>, %arg30: memref<128x128xbf16, #tpu.memory_space<vmem>>, %arg31: memref<1x128xf32, #tpu.memory_space<vmem>>, %arg32: memref<1x18x128xf32, #tpu.memory_space<vmem>>, %arg33: memref<1x1x128xf32, #tpu.memory_space<vmem>>, %arg34: memref<20x128xf32, #tpu.memory_space<vmem>>) attributes {dimension_semantics = [#tpu.dimension_semantics<parallel>], iteration_bounds = array<i64: 2>, scalar_prefetch = 0 : i64, scratch_operands = 1 : i64, tpu.core_type = #tpu.core_type<tc>, window_params = [{transform_indices = @transform_0, window_bounds = array<i64: 1, 19, 256>}, {transform_indices = @transform_1, window_bounds = array<i64: 1, 18, 1>}, {transform_indices = @transform_2, window_bounds = array<i64: 1, 1, 18>}, {transform_indices = @transform_3, window_bounds = array<i64: 1, 18, 1>}, {pipeline_mode = #tpu.pipeline_mode<synchronous>, transform_indices = @transform_4, window_bounds = array<i64: 384, 128>}, {pipeline_mode = #tpu.pipeline_mode<synchronous>, transform_indices = @transform_5, window_bounds = array<i64: 1, 128>}, {pipeline_mode = #tpu.pipeline_mode<synchronous>, transform_indices = @transform_6, window_bounds = array<i64: 1, 128>}, {pipeline_mode = #tpu.pipeline_mode<synchronous>, transform_indices = @transform_7, window_bounds = array<i64: 128, 128>}, {pipeline_mode = #tpu.pipeline_mode<synchronous>, transform_indices = @transform_8, window_bounds = array<i64: 1, 128>}, {pipeline_mode = #tpu.pipeline_mode<synchronous>, transform_indices = @transform_9, window_bounds = array<i64: 384, 128>}, {pipeline_mode = #tpu.pipeline_mode<synchronous>, transform_indices = @transform_10, window_bounds = array<i64: 1, 128>}, {pipeline_mode = #tpu.pipeline_mode<synchronous>, transform_indices = @transform_11, window_bounds = array<i64: 1, 128>}, {pipeline_mode = #tpu.pipeline_mode<synchronous>, transform_indices = @transform_12, window_bounds = array<i64: 1, 128>}, {pipeline_mode = #tpu.pipeline_mode<synchronous>, transform_indices = @transform_13, window_bounds = array<i64: 2, 128, 384>}, {pipeline_mode = #tpu.pipeline_mode<synchronous>, transform_indices = @transform_14, window_bounds = array<i64: 2, 1, 384>}, {pipeline_mode = #tpu.pipeline_mode<synchronous>, transform_indices = @transform_15, window_bounds = array<i64: 2, 128, 128>}, {pipeline_mode = #tpu.pipeline_mode<synchronous>, transform_indices = @transform_16, window_bounds = array<i64: 2, 1, 128>}, {pipeline_mode = #tpu.pipeline_mode<synchronous>, transform_indices = @transform_17, window_bounds = array<i64: 2, 1, 128>}, {pipeline_mode = #tpu.pipeline_mode<synchronous>, transform_indices = @transform_18, window_bounds = array<i64: 2, 1, 128>}, {pipeline_mode = #tpu.pipeline_mode<synchronous>, transform_indices = @transform_19, window_bounds = array<i64: 2, 128, 256>}, {pipeline_mode = #tpu.pipeline_mode<synchronous>, transform_indices = @transform_20, window_bounds = array<i64: 2, 1, 256>}, {pipeline_mode = #tpu.pipeline_mode<synchronous>, transform_indices = @transform_21, window_bounds = array<i64: 2, 256, 128>}, {pipeline_mode = #tpu.pipeline_mode<synchronous>, transform_indices = @transform_22, window_bounds = array<i64: 2, 1, 128>}, {pipeline_mode = #tpu.pipeline_mode<synchronous>, transform_indices = @transform_23, window_bounds = array<i64: 2, 1, 128>}, {pipeline_mode = #tpu.pipeline_mode<synchronous>, transform_indices = @transform_24, window_bounds = array<i64: 2, 1, 128>}, {pipeline_mode = #tpu.pipeline_mode<synchronous>, transform_indices = @transform_25, window_bounds = array<i64: 128, 128>}, {pipeline_mode = #tpu.pipeline_mode<synchronous>, transform_indices = @transform_26, window_bounds = array<i64: 1, 128>}, {pipeline_mode = #tpu.pipeline_mode<synchronous>, transform_indices = @transform_27, window_bounds = array<i64: 1, 128>}, {pipeline_mode = #tpu.pipeline_mode<synchronous>, transform_indices = @transform_28, window_bounds = array<i64: 1, 1>}, {pipeline_mode = #tpu.pipeline_mode<synchronous>, transform_indices = @transform_29, window_bounds = array<i64: 128, 128>}, {pipeline_mode = #tpu.pipeline_mode<synchronous>, transform_indices = @transform_30, window_bounds = array<i64: 1, 128>}, {transform_indices = @transform_31, window_bounds = array<i64: 1, 18, 128>}, {transform_indices = @transform_32, window_bounds = array<i64: 1, 1, 128>}]} {
    %c0 = arith.constant 0 : index
    %c0_0 = arith.constant 0 : index
    %c0_1 = arith.constant 0 : index
    %0 = vector.load %arg1[%c0, %c0_0, %c0_1] : memref<1x19x256xf32, #tpu.memory_space<vmem>>, vector<1x19x256xf32>
    %1 = vector.shape_cast %0 : vector<1x19x256xf32> to vector<19x256xf32>
    %cst = arith.constant 0.000000e+00 : f32
    %2 = vector.broadcast %cst : f32 to vector<18x128xf32>
    %3 = vector.extract_strided_slice %1 {offsets = [0, 0], sizes = [18, 128], strides = [1, 1]} : vector<19x256xf32> to vector<18x128xf32>
    %c0_2 = arith.constant 0 : index
    %c0_3 = arith.constant 0 : index
    %4 = vector.load %arg5[%c0_2, %c0_3] : memref<384x128xbf16, #tpu.memory_space<vmem>>, vector<128x128xbf16>
    %5 = arith.truncf %3 : vector<18x128xf32> to vector<18x128xbf16>
    %cst_4 = arith.constant dense<0.000000e+00> : vector<18x128xf32>
    %6 = tpu.matmul %5, %4, %cst_4 {dimension_numbers = #tpu.dot_dimension_numbers<[1], [0], [0], [1], [0, 0, 1, 1], [], []>} : vector<18x128xbf16>, vector<128x128xbf16>, vector<18x128xf32> -> vector<18x128xf32>
    %7 = arith.addf %2, %6 : vector<18x128xf32>
    %8 = vector.extract_strided_slice %1 {offsets = [0, 128], sizes = [18, 128], strides = [1, 1]} : vector<19x256xf32> to vector<18x128xf32>
    %c128 = arith.constant 128 : index
    %c0_5 = arith.constant 0 : index
    %9 = vector.load %arg5[%c128, %c0_5] : memref<384x128xbf16, #tpu.memory_space<vmem>>, vector<128x128xbf16>
    %10 = arith.truncf %8 : vector<18x128xf32> to vector<18x128xbf16>
    %cst_6 = arith.constant dense<0.000000e+00> : vector<18x128xf32>
    %11 = tpu.matmul %10, %9, %cst_6 {dimension_numbers = #tpu.dot_dimension_numbers<[1], [0], [0], [1], [0, 0, 1, 1], [], []>} : vector<18x128xbf16>, vector<128x128xbf16>, vector<18x128xf32> -> vector<18x128xf32>
    %12 = arith.addf %7, %11 : vector<18x128xf32>
    %13 = vector.extract_strided_slice %1 {offsets = [1, 0], sizes = [18, 128], strides = [1, 1]} : vector<19x256xf32> to vector<18x128xf32>
    %c256 = arith.constant 256 : index
    %c0_7 = arith.constant 0 : index
    %14 = vector.load %arg5[%c256, %c0_7] : memref<384x128xbf16, #tpu.memory_space<vmem>>, vector<128x128xbf16>
    %15 = arith.truncf %13 : vector<18x128xf32> to vector<18x128xbf16>
    %cst_8 = arith.constant dense<0.000000e+00> : vector<18x128xf32>
    %16 = tpu.matmul %15, %14, %cst_8 {dimension_numbers = #tpu.dot_dimension_numbers<[1], [0], [0], [1], [0, 0, 1, 1], [], []>} : vector<18x128xbf16>, vector<128x128xbf16>, vector<18x128xf32> -> vector<18x128xf32>
    %17 = arith.addf %12, %16 : vector<18x128xf32>
    %18 = arith.mulf %17, %17 : vector<18x128xf32>
    %19 = arith.mulf %17, %18 : vector<18x128xf32>
    %cst_9 = arith.constant 4.471500e-02 : f32
    %20 = vector.broadcast %cst_9 : f32 to vector<18x128xf32>
    %21 = arith.mulf %20, %19 : vector<18x128xf32>
    %22 = arith.addf %17, %21 : vector<18x128xf32>
    %cst_10 = arith.constant 0.797884583 : f32
    %23 = vector.broadcast %cst_10 : f32 to vector<18x128xf32>
    %24 = arith.mulf %23, %22 : vector<18x128xf32>
    %25 = math.tanh %24 : vector<18x128xf32>
    %cst_11 = arith.constant 1.000000e+00 : f32
    %26 = vector.broadcast %cst_11 : f32 to vector<18x128xf32>
    %27 = arith.addf %26, %25 : vector<18x128xf32>
    %cst_12 = arith.constant 5.000000e-01 : f32
    %28 = vector.broadcast %cst_12 : f32 to vector<18x128xf32>
    %29 = arith.mulf %28, %27 : vector<18x128xf32>
    %30 = arith.mulf %17, %29 : vector<18x128xf32>
    %c0_13 = arith.constant 0 : index
    %c0_14 = arith.constant 0 : index
    %c0_15 = arith.constant 0 : index
    %31 = vector.load %arg2[%c0_13, %c0_14, %c0_15] : memref<1x18x1xf32, #tpu.memory_space<vmem>>, vector<1x18x1xf32>
    %32 = vector.shape_cast %31 : vector<1x18x1xf32> to vector<18x1xf32>
    %c0_16 = arith.constant 0 : index
    %c0_17 = arith.constant 0 : index
    %c0_18 = arith.constant 0 : index
    %33 = vector.load %arg3[%c0_16, %c0_17, %c0_18] : memref<1x1x18xf32, #tpu.memory_space<vmem>>, vector<1x1x18xf32>
    %34 = vector.shape_cast %33 : vector<1x1x18xf32> to vector<1x18xf32>
    %c0_19 = arith.constant 0 : index
    %c0_20 = arith.constant 0 : index
    %35 = vector.load %arg6[%c0_19, %c0_20] : memref<1x128xf32, #tpu.memory_space<vmem>>, vector<1x128xf32>
    %c0_21 = arith.constant 0 : index
    %c0_22 = arith.constant 0 : index
    %36 = vector.load %arg7[%c0_21, %c0_22] : memref<1x128xf32, #tpu.memory_space<vmem>>, vector<1x128xf32>
    %cst_23 = arith.constant dense<0.000000e+00> : vector<18xf32>
    %37 = vector.multi_reduction <add>, %30, %cst_23 [1] : vector<18x128xf32> to vector<18xf32>
    %38 = vector.shape_cast %37 : vector<18xf32> to vector<18x1xf32>
    %cst_24 = arith.constant 1.280000e+02 : f32
    %39 = vector.broadcast %cst_24 : f32 to vector<18x1xf32>
    %40 = arith.divf %38, %39 : vector<18x1xf32>
    %41 = vector.broadcast %40 : vector<18x1xf32> to vector<18x128xf32>
    %42 = arith.subf %30, %41 : vector<18x128xf32>
    %43 = arith.mulf %42, %42 : vector<18x128xf32>
    %cst_25 = arith.constant dense<0.000000e+00> : vector<18xf32>
    %44 = vector.multi_reduction <add>, %43, %cst_25 [1] : vector<18x128xf32> to vector<18xf32>
    %45 = vector.shape_cast %44 : vector<18xf32> to vector<18x1xf32>
    %cst_26 = arith.constant 1.280000e+02 : f32
    %46 = vector.broadcast %cst_26 : f32 to vector<18x1xf32>
    %47 = arith.divf %45, %46 : vector<18x1xf32>
    %48 = vector.broadcast %40 : vector<18x1xf32> to vector<18x128xf32>
    %49 = arith.subf %30, %48 : vector<18x128xf32>
    %cst_27 = arith.constant 9.99999974E-6 : f32
    %50 = vector.broadcast %cst_27 : f32 to vector<18x1xf32>
    %51 = arith.addf %47, %50 : vector<18x1xf32>
    %52 = math.rsqrt %51 : vector<18x1xf32>
    %53 = vector.broadcast %52 : vector<18x1xf32> to vector<18x128xf32>
    %54 = arith.mulf %49, %53 : vector<18x128xf32>
    %55 = vector.broadcast %35 : vector<1x128xf32> to vector<18x128xf32>
    %56 = arith.mulf %54, %55 : vector<18x128xf32>
    %57 = vector.broadcast %36 : vector<1x128xf32> to vector<18x128xf32>
    %58 = arith.addf %56, %57 : vector<18x128xf32>
    %c0_28 = arith.constant 0 : index
    %c0_29 = arith.constant 0 : index
    %59 = vector.load %arg8[%c0_28, %c0_29] : memref<128x128xbf16, #tpu.memory_space<vmem>>, vector<128x128xbf16>
    %60 = arith.truncf %58 : vector<18x128xf32> to vector<18x128xbf16>
    %cst_30 = arith.constant dense<0.000000e+00> : vector<18x128xf32>
    %61 = tpu.matmul %60, %59, %cst_30 {dimension_numbers = #tpu.dot_dimension_numbers<[1], [0], [0], [1], [0, 0, 1, 1], [], []>} : vector<18x128xbf16>, vector<128x128xbf16>, vector<18x128xf32> -> vector<18x128xf32>
    %c0_31 = arith.constant 0 : index
    %c0_32 = arith.constant 0 : index
    %62 = vector.load %arg9[%c0_31, %c0_32] : memref<1x128xf32, #tpu.memory_space<vmem>>, vector<1x128xf32>
    %63 = vector.broadcast %62 : vector<1x128xf32> to vector<18x128xf32>
    %64 = arith.addf %61, %63 : vector<18x128xf32>
    %65 = vector.broadcast %32 : vector<18x1xf32> to vector<18x128xf32>
    %66 = arith.mulf %64, %65 : vector<18x128xf32>
    %cst_33 = arith.constant 0.000000e+00 : f32
    %67 = vector.broadcast %cst_33 : f32 to vector<20x128xf32>
    %c0_34 = arith.constant 0 : index
    %c0_35 = arith.constant 0 : index
    %68 = vector.load %arg34[%c0_34, %c0_35] : memref<20x128xf32, #tpu.memory_space<vmem>>, vector<20x128xf32>
    tpu.vector_store %arg34[%c0_34, %c0_35], %67 {strides = array<i32>} : memref<20x128xf32, #tpu.memory_space<vmem>>, vector<20x128xf32>,
    %c1 = arith.constant 1 : index
    %c0_36 = arith.constant 0 : index
    %69 = vector.load %arg34[%c1, %c0_36] : memref<20x128xf32, #tpu.memory_space<vmem>>, vector<18x128xf32>
    tpu.vector_store %arg34[%c1, %c0_36], %66 {strides = array<i32>} : memref<20x128xf32, #tpu.memory_space<vmem>>, vector<18x128xf32>,
    %cst_37 = arith.constant 0.000000e+00 : f32
    %70 = vector.broadcast %cst_37 : f32 to vector<18x128xf32>
    %c0_38 = arith.constant 0 : index
    %c0_39 = arith.constant 0 : index
    %71 = vector.load %arg34[%c0_38, %c0_39] : memref<20x128xf32, #tpu.memory_space<vmem>>, vector<18x128xf32>
    %c0_40 = arith.constant 0 : index
    %c0_41 = arith.constant 0 : index
    %72 = vector.load %arg10[%c0_40, %c0_41] : memref<384x128xbf16, #tpu.memory_space<vmem>>, vector<128x128xbf16>
    %73 = arith.truncf %71 : vector<18x128xf32> to vector<18x128xbf16>
    %cst_42 = arith.constant dense<0.000000e+00> : vector<18x128xf32>
    %74 = tpu.matmul %73, %72, %cst_42 {dimension_numbers = #tpu.dot_dimension_numbers<[1], [0], [0], [1], [0, 0, 1, 1], [], []>} : vector<18x128xbf16>, vector<128x128xbf16>, vector<18x128xf32> -> vector<18x128xf32>
    %75 = arith.addf %70, %74 : vector<18x128xf32>
    %c1_43 = arith.constant 1 : index
    %c0_44 = arith.constant 0 : index
    %76 = vector.load %arg34[%c1_43, %c0_44] : memref<20x128xf32, #tpu.memory_space<vmem>>, vector<18x128xf32>
    %c128_45 = arith.constant 128 : index
    %c0_46 = arith.constant 0 : index
    %77 = vector.load %arg10[%c128_45, %c0_46] : memref<384x128xbf16, #tpu.memory_space<vmem>>, vector<128x128xbf16>
    %78 = arith.truncf %76 : vector<18x128xf32> to vector<18x128xbf16>
    %cst_47 = arith.constant dense<0.000000e+00> : vector<18x128xf32>
    %79 = tpu.matmul %78, %77, %cst_47 {dimension_numbers = #tpu.dot_dimension_numbers<[1], [0], [0], [1], [0, 0, 1, 1], [], []>} : vector<18x128xbf16>, vector<128x128xbf16>, vector<18x128xf32> -> vector<18x128xf32>
    %80 = arith.addf %75, %79 : vector<18x128xf32>
    %c2 = arith.constant 2 : index
    %c0_48 = arith.constant 0 : index
    %81 = vector.load %arg34[%c2, %c0_48] : memref<20x128xf32, #tpu.memory_space<vmem>>, vector<18x128xf32>
    %c256_49 = arith.constant 256 : index
    %c0_50 = arith.constant 0 : index
    %82 = vector.load %arg10[%c256_49, %c0_50] : memref<384x128xbf16, #tpu.memory_space<vmem>>, vector<128x128xbf16>
    %83 = arith.truncf %81 : vector<18x128xf32> to vector<18x128xbf16>
    %cst_51 = arith.constant dense<0.000000e+00> : vector<18x128xf32>
    %84 = tpu.matmul %83, %82, %cst_51 {dimension_numbers = #tpu.dot_dimension_numbers<[1], [0], [0], [1], [0, 0, 1, 1], [], []>} : vector<18x128xbf16>, vector<128x128xbf16>, vector<18x128xf32> -> vector<18x128xf32>
    %85 = arith.addf %80, %84 : vector<18x128xf32>
    %c0_52 = arith.constant 0 : index
    %c0_53 = arith.constant 0 : index
    %86 = vector.load %arg11[%c0_52, %c0_53] : memref<1x128xf32, #tpu.memory_space<vmem>>, vector<1x128xf32>
    %87 = vector.broadcast %86 : vector<1x128xf32> to vector<18x128xf32>
    %88 = arith.addf %85, %87 : vector<18x128xf32>
    %89 = arith.mulf %88, %88 : vector<18x128xf32>
    %90 = arith.mulf %88, %89 : vector<18x128xf32>
    %cst_54 = arith.constant 4.471500e-02 : f32
    %91 = vector.broadcast %cst_54 : f32 to vector<18x128xf32>
    %92 = arith.mulf %91, %90 : vector<18x128xf32>
    %93 = arith.addf %88, %92 : vector<18x128xf32>
    %cst_55 = arith.constant 0.797884583 : f32
    %94 = vector.broadcast %cst_55 : f32 to vector<18x128xf32>
    %95 = arith.mulf %94, %93 : vector<18x128xf32>
    %96 = math.tanh %95 : vector<18x128xf32>
    %cst_56 = arith.constant 1.000000e+00 : f32
    %97 = vector.broadcast %cst_56 : f32 to vector<18x128xf32>
    %98 = arith.addf %97, %96 : vector<18x128xf32>
    %cst_57 = arith.constant 5.000000e-01 : f32
    %99 = vector.broadcast %cst_57 : f32 to vector<18x128xf32>
    %100 = arith.mulf %99, %98 : vector<18x128xf32>
    %101 = arith.mulf %88, %100 : vector<18x128xf32>
    %102 = arith.addf %66, %101 : vector<18x128xf32>
    %c0_58 = arith.constant 0 : index
    %c0_59 = arith.constant 0 : index
    %103 = vector.load %arg12[%c0_58, %c0_59] : memref<1x128xf32, #tpu.memory_space<vmem>>, vector<1x128xf32>
    %c0_60 = arith.constant 0 : index
    %c0_61 = arith.constant 0 : index
    %104 = vector.load %arg13[%c0_60, %c0_61] : memref<1x128xf32, #tpu.memory_space<vmem>>, vector<1x128xf32>
    %cst_62 = arith.constant dense<0.000000e+00> : vector<18xf32>
    %105 = vector.multi_reduction <add>, %102, %cst_62 [1] : vector<18x128xf32> to vector<18xf32>
    %106 = vector.shape_cast %105 : vector<18xf32> to vector<18x1xf32>
    %cst_63 = arith.constant 1.280000e+02 : f32
    %107 = vector.broadcast %cst_63 : f32 to vector<18x1xf32>
    %108 = arith.divf %106, %107 : vector<18x1xf32>
    %109 = vector.broadcast %108 : vector<18x1xf32> to vector<18x128xf32>
    %110 = arith.subf %102, %109 : vector<18x128xf32>
    %111 = arith.mulf %110, %110 : vector<18x128xf32>
    %cst_64 = arith.constant dense<0.000000e+00> : vector<18xf32>
    %112 = vector.multi_reduction <add>, %111, %cst_64 [1] : vector<18x128xf32> to vector<18xf32>
    %113 = vector.shape_cast %112 : vector<18xf32> to vector<18x1xf32>
    %cst_65 = arith.constant 1.280000e+02 : f32
    %114 = vector.broadcast %cst_65 : f32 to vector<18x1xf32>
    %115 = arith.divf %113, %114 : vector<18x1xf32>
    %116 = vector.broadcast %108 : vector<18x1xf32> to vector<18x128xf32>
    %117 = arith.subf %102, %116 : vector<18x128xf32>
    %cst_66 = arith.constant 9.99999974E-6 : f32
    %118 = vector.broadcast %cst_66 : f32 to vector<18x1xf32>
    %119 = arith.addf %115, %118 : vector<18x1xf32>
    %120 = math.rsqrt %119 : vector<18x1xf32>
    %121 = vector.broadcast %120 : vector<18x1xf32> to vector<18x128xf32>
    %122 = arith.mulf %117, %121 : vector<18x128xf32>
    %123 = vector.broadcast %103 : vector<1x128xf32> to vector<18x128xf32>
    %124 = arith.mulf %122, %123 : vector<18x128xf32>
    %125 = vector.broadcast %104 : vector<1x128xf32> to vector<18x128xf32>
    %126 = arith.addf %124, %125 : vector<18x128xf32>
    %c0_67 = arith.constant 0 : index
    %c0_68 = arith.constant 0 : index
    %c0_69 = arith.constant 0 : index
    %127 = vector.load %arg14[%c0_67, %c0_68, %c0_69] : memref<2x128x384xbf16, #tpu.memory_space<vmem>>, vector<1x128x384xbf16>
    %128 = vector.shape_cast %127 : vector<1x128x384xbf16> to vector<128x384xbf16>
    %129 = arith.truncf %126 : vector<18x128xf32> to vector<18x128xbf16>
    %cst_70 = arith.constant dense<0.000000e+00> : vector<18x384xf32>
    %130 = tpu.matmul %129, %128, %cst_70 {dimension_numbers = #tpu.dot_dimension_numbers<[1], [0], [0], [1], [0, 0, 1, 1], [], []>} : vector<18x128xbf16>, vector<128x384xbf16>, vector<18x384xf32> -> vector<18x384xf32>
    %c0_71 = arith.constant 0 : index
    %c0_72 = arith.constant 0 : index
    %c0_73 = arith.constant 0 : index
    %131 = vector.load %arg15[%c0_71, %c0_72, %c0_73] : memref<2x1x384xf32, #tpu.memory_space<vmem>>, vector<1x1x384xf32>
    %132 = vector.shape_cast %131 : vector<1x1x384xf32> to vector<1x384xf32>
    %133 = vector.broadcast %132 : vector<1x384xf32> to vector<18x384xf32>
    %134 = arith.addf %130, %133 : vector<18x384xf32>
    %c0_74 = arith.constant 0 : index
    %c0_75 = arith.constant 0 : index
    %c0_76 = arith.constant 0 : index
    %135 = vector.load %arg16[%c0_74, %c0_75, %c0_76] : memref<2x128x128xbf16, #tpu.memory_space<vmem>>, vector<1x128x128xbf16>
    %136 = vector.shape_cast %135 : vector<1x128x128xbf16> to vector<128x128xbf16>
    %c0_77 = arith.constant 0 : index
    %c0_78 = arith.constant 0 : index
    %c0_79 = arith.constant 0 : index
    %137 = vector.load %arg17[%c0_77, %c0_78, %c0_79] : memref<2x1x128xf32, #tpu.memory_space<vmem>>, vector<1x1x128xf32>
    %138 = vector.shape_cast %137 : vector<1x1x128xf32> to vector<1x128xf32>
    %139 = vector.extract_strided_slice %134 {offsets = [0, 0], sizes = [18, 32], strides = [1, 1]} : vector<18x384xf32> to vector<18x32xf32>
    %140 = vector.extract_strided_slice %134 {offsets = [0, 128], sizes = [18, 32], strides = [1, 1]} : vector<18x384xf32> to vector<18x32xf32>
    %141 = vector.extract_strided_slice %134 {offsets = [0, 256], sizes = [18, 32], strides = [1, 1]} : vector<18x384xf32> to vector<18x32xf32>
    %142 = arith.truncf %139 : vector<18x32xf32> to vector<18x32xbf16>
    %143 = arith.truncf %140 : vector<18x32xf32> to vector<18x32xbf16>
    %cst_80 = arith.constant dense<0.000000e+00> : vector<18x18xf32>
    %144 = tpu.matmul %142, %143, %cst_80 {dimension_numbers = #tpu.dot_dimension_numbers<[1], [1], [0], [0], [0, 0, 1, 0], [], []>} : vector<18x32xbf16>, vector<18x32xbf16>, vector<18x18xf32> -> vector<18x18xf32>
    %cst_81 = arith.constant 0.176776692 : f32
    %145 = vector.broadcast %cst_81 : f32 to vector<18x18xf32>
    %146 = arith.mulf %144, %145 : vector<18x18xf32>
    %147 = vector.broadcast %34 : vector<1x18xf32> to vector<18x18xf32>
    %148 = arith.addf %146, %147 : vector<18x18xf32>
    %cst_82 = arith.constant dense<0xFF800000> : vector<18xf32>
    %149 = vector.multi_reduction <maximumf>, %148, %cst_82 [1] : vector<18x18xf32> to vector<18xf32>
    %150 = vector.shape_cast %149 : vector<18xf32> to vector<18x1xf32>
    %151 = vector.broadcast %150 : vector<18x1xf32> to vector<18x18xf32>
    %152 = arith.subf %148, %151 : vector<18x18xf32>
    %153 = math.exp %152 : vector<18x18xf32>
    %cst_83 = arith.constant dense<0.000000e+00> : vector<18xf32>
    %154 = vector.multi_reduction <add>, %153, %cst_83 [1] : vector<18x18xf32> to vector<18xf32>
    %155 = vector.shape_cast %154 : vector<18xf32> to vector<18x1xf32>
    %156 = tpu.reciprocal %155 {approx = true} : vector<18x1xf32> -> vector<18x1xf32>
    %157 = vector.broadcast %156 : vector<18x1xf32> to vector<18x18xf32>
    %158 = arith.mulf %153, %157 : vector<18x18xf32>
    %159 = arith.truncf %158 : vector<18x18xf32> to vector<18x18xbf16>
    %160 = arith.truncf %141 : vector<18x32xf32> to vector<18x32xbf16>
    %cst_84 = arith.constant dense<0.000000e+00> : vector<18x32xf32>
    %161 = tpu.matmul %159, %160, %cst_84 {dimension_numbers = #tpu.dot_dimension_numbers<[1], [0], [0], [1], [0, 0, 1, 1], [], []>} : vector<18x18xbf16>, vector<18x32xbf16>, vector<18x32xf32> -> vector<18x32xf32>
    %162 = vector.extract_strided_slice %136 {offsets = [0, 0], sizes = [32, 128], strides = [1, 1]} : vector<128x128xbf16> to vector<32x128xbf16>
    %163 = arith.truncf %161 : vector<18x32xf32> to vector<18x32xbf16>
    %cst_85 = arith.constant dense<0.000000e+00> : vector<18x128xf32>
    %164 = tpu.matmul %163, %162, %cst_85 {dimension_numbers = #tpu.dot_dimension_numbers<[1], [0], [0], [1], [0, 0, 1, 1], [], []>} : vector<18x32xbf16>, vector<32x128xbf16>, vector<18x128xf32> -> vector<18x128xf32>
    %165 = vector.broadcast %138 : vector<1x128xf32> to vector<18x128xf32>
    %166 = arith.addf %165, %164 : vector<18x128xf32>
    %167 = vector.extract_strided_slice %134 {offsets = [0, 32], sizes = [18, 32], strides = [1, 1]} : vector<18x384xf32> to vector<18x32xf32>
    %168 = vector.extract_strided_slice %134 {offsets = [0, 160], sizes = [18, 32], strides = [1, 1]} : vector<18x384xf32> to vector<18x32xf32>
    %169 = vector.extract_strided_slice %134 {offsets = [0, 288], sizes = [18, 32], strides = [1, 1]} : vector<18x384xf32> to vector<18x32xf32>
    %170 = arith.truncf %167 : vector<18x32xf32> to vector<18x32xbf16>
    %171 = arith.truncf %168 : vector<18x32xf32> to vector<18x32xbf16>
    %cst_86 = arith.constant dense<0.000000e+00> : vector<18x18xf32>
    %172 = tpu.matmul %170, %171, %cst_86 {dimension_numbers = #tpu.dot_dimension_numbers<[1], [1], [0], [0], [0, 0, 1, 0], [], []>} : vector<18x32xbf16>, vector<18x32xbf16>, vector<18x18xf32> -> vector<18x18xf32>
    %cst_87 = arith.constant 0.176776692 : f32
    %173 = vector.broadcast %cst_87 : f32 to vector<18x18xf32>
    %174 = arith.mulf %172, %173 : vector<18x18xf32>
    %175 = vector.broadcast %34 : vector<1x18xf32> to vector<18x18xf32>
    %176 = arith.addf %174, %175 : vector<18x18xf32>
    %cst_88 = arith.constant dense<0xFF800000> : vector<18xf32>
    %177 = vector.multi_reduction <maximumf>, %176, %cst_88 [1] : vector<18x18xf32> to vector<18xf32>
    %178 = vector.shape_cast %177 : vector<18xf32> to vector<18x1xf32>
    %179 = vector.broadcast %178 : vector<18x1xf32> to vector<18x18xf32>
    %180 = arith.subf %176, %179 : vector<18x18xf32>
    %181 = math.exp %180 : vector<18x18xf32>
    %cst_89 = arith.constant dense<0.000000e+00> : vector<18xf32>
    %182 = vector.multi_reduction <add>, %181, %cst_89 [1] : vector<18x18xf32> to vector<18xf32>
    %183 = vector.shape_cast %182 : vector<18xf32> to vector<18x1xf32>
    %184 = tpu.reciprocal %183 {approx = true} : vector<18x1xf32> -> vector<18x1xf32>
    %185 = vector.broadcast %184 : vector<18x1xf32> to vector<18x18xf32>
    %186 = arith.mulf %181, %185 : vector<18x18xf32>
    %187 = arith.truncf %186 : vector<18x18xf32> to vector<18x18xbf16>
    %188 = arith.truncf %169 : vector<18x32xf32> to vector<18x32xbf16>
    %cst_90 = arith.constant dense<0.000000e+00> : vector<18x32xf32>
    %189 = tpu.matmul %187, %188, %cst_90 {dimension_numbers = #tpu.dot_dimension_numbers<[1], [0], [0], [1], [0, 0, 1, 1], [], []>} : vector<18x18xbf16>, vector<18x32xbf16>, vector<18x32xf32> -> vector<18x32xf32>
    %190 = vector.extract_strided_slice %136 {offsets = [32, 0], sizes = [32, 128], strides = [1, 1]} : vector<128x128xbf16> to vector<32x128xbf16>
    %191 = arith.truncf %189 : vector<18x32xf32> to vector<18x32xbf16>
    %cst_91 = arith.constant dense<0.000000e+00> : vector<18x128xf32>
    %192 = tpu.matmul %191, %190, %cst_91 {dimension_numbers = #tpu.dot_dimension_numbers<[1], [0], [0], [1], [0, 0, 1, 1], [], []>} : vector<18x32xbf16>, vector<32x128xbf16>, vector<18x128xf32> -> vector<18x128xf32>
    %193 = arith.addf %166, %192 : vector<18x128xf32>
    %194 = vector.extract_strided_slice %134 {offsets = [0, 64], sizes = [18, 32], strides = [1, 1]} : vector<18x384xf32> to vector<18x32xf32>
    %195 = vector.extract_strided_slice %134 {offsets = [0, 192], sizes = [18, 32], strides = [1, 1]} : vector<18x384xf32> to vector<18x32xf32>
    %196 = vector.extract_strided_slice %134 {offsets = [0, 320], sizes = [18, 32], strides = [1, 1]} : vector<18x384xf32> to vector<18x32xf32>
    %197 = arith.truncf %194 : vector<18x32xf32> to vector<18x32xbf16>
    %198 = arith.truncf %195 : vector<18x32xf32> to vector<18x32xbf16>
    %cst_92 = arith.constant dense<0.000000e+00> : vector<18x18xf32>
    %199 = tpu.matmul %197, %198, %cst_92 {dimension_numbers = #tpu.dot_dimension_numbers<[1], [1], [0], [0], [0, 0, 1, 0], [], []>} : vector<18x32xbf16>, vector<18x32xbf16>, vector<18x18xf32> -> vector<18x18xf32>
    %cst_93 = arith.constant 0.176776692 : f32
    %200 = vector.broadcast %cst_93 : f32 to vector<18x18xf32>
    %201 = arith.mulf %199, %200 : vector<18x18xf32>
    %202 = vector.broadcast %34 : vector<1x18xf32> to vector<18x18xf32>
    %203 = arith.addf %201, %202 : vector<18x18xf32>
    %cst_94 = arith.constant dense<0xFF800000> : vector<18xf32>
    %204 = vector.multi_reduction <maximumf>, %203, %cst_94 [1] : vector<18x18xf32> to vector<18xf32>
    %205 = vector.shape_cast %204 : vector<18xf32> to vector<18x1xf32>
    %206 = vector.broadcast %205 : vector<18x1xf32> to vector<18x18xf32>
    %207 = arith.subf %203, %206 : vector<18x18xf32>
    %208 = math.exp %207 : vector<18x18xf32>
    %cst_95 = arith.constant dense<0.000000e+00> : vector<18xf32>
    %209 = vector.multi_reduction <add>, %208, %cst_95 [1] : vector<18x18xf32> to vector<18xf32>
    %210 = vector.shape_cast %209 : vector<18xf32> to vector<18x1xf32>
    %211 = tpu.reciprocal %210 {approx = true} : vector<18x1xf32> -> vector<18x1xf32>
    %212 = vector.broadcast %211 : vector<18x1xf32> to vector<18x18xf32>
    %213 = arith.mulf %208, %212 : vector<18x18xf32>
    %214 = arith.truncf %213 : vector<18x18xf32> to vector<18x18xbf16>
    %215 = arith.truncf %196 : vector<18x32xf32> to vector<18x32xbf16>
    %cst_96 = arith.constant dense<0.000000e+00> : vector<18x32xf32>
    %216 = tpu.matmul %214, %215, %cst_96 {dimension_numbers = #tpu.dot_dimension_numbers<[1], [0], [0], [1], [0, 0, 1, 1], [], []>} : vector<18x18xbf16>, vector<18x32xbf16>, vector<18x32xf32> -> vector<18x32xf32>
    %217 = vector.extract_strided_slice %136 {offsets = [64, 0], sizes = [32, 128], strides = [1, 1]} : vector<128x128xbf16> to vector<32x128xbf16>
    %218 = arith.truncf %216 : vector<18x32xf32> to vector<18x32xbf16>
    %cst_97 = arith.constant dense<0.000000e+00> : vector<18x128xf32>
    %219 = tpu.matmul %218, %217, %cst_97 {dimension_numbers = #tpu.dot_dimension_numbers<[1], [0], [0], [1], [0, 0, 1, 1], [], []>} : vector<18x32xbf16>, vector<32x128xbf16>, vector<18x128xf32> -> vector<18x128xf32>
    %220 = arith.addf %193, %219 : vector<18x128xf32>
    %221 = vector.extract_strided_slice %134 {offsets = [0, 96], sizes = [18, 32], strides = [1, 1]} : vector<18x384xf32> to vector<18x32xf32>
    %222 = vector.extract_strided_slice %134 {offsets = [0, 224], sizes = [18, 32], strides = [1, 1]} : vector<18x384xf32> to vector<18x32xf32>
    %223 = vector.extract_strided_slice %134 {offsets = [0, 352], sizes = [18, 32], strides = [1, 1]} : vector<18x384xf32> to vector<18x32xf32>
    %224 = arith.truncf %221 : vector<18x32xf32> to vector<18x32xbf16>
    %225 = arith.truncf %222 : vector<18x32xf32> to vector<18x32xbf16>
    %cst_98 = arith.constant dense<0.000000e+00> : vector<18x18xf32>
    %226 = tpu.matmul %224, %225, %cst_98 {dimension_numbers = #tpu.dot_dimension_numbers<[1], [1], [0], [0], [0, 0, 1, 0], [], []>} : vector<18x32xbf16>, vector<18x32xbf16>, vector<18x18xf32> -> vector<18x18xf32>
    %cst_99 = arith.constant 0.176776692 : f32
    %227 = vector.broadcast %cst_99 : f32 to vector<18x18xf32>
    %228 = arith.mulf %226, %227 : vector<18x18xf32>
    %229 = vector.broadcast %34 : vector<1x18xf32> to vector<18x18xf32>
    %230 = arith.addf %228, %229 : vector<18x18xf32>
    %cst_100 = arith.constant dense<0xFF800000> : vector<18xf32>
    %231 = vector.multi_reduction <maximumf>, %230, %cst_100 [1] : vector<18x18xf32> to vector<18xf32>
    %232 = vector.shape_cast %231 : vector<18xf32> to vector<18x1xf32>
    %233 = vector.broadcast %232 : vector<18x1xf32> to vector<18x18xf32>
    %234 = arith.subf %230, %233 : vector<18x18xf32>
    %235 = math.exp %234 : vector<18x18xf32>
    %cst_101 = arith.constant dense<0.000000e+00> : vector<18xf32>
    %236 = vector.multi_reduction <add>, %235, %cst_101 [1] : vector<18x18xf32> to vector<18xf32>
    %237 = vector.shape_cast %236 : vector<18xf32> to vector<18x1xf32>
    %238 = tpu.reciprocal %237 {approx = true} : vector<18x1xf32> -> vector<18x1xf32>
    %239 = vector.broadcast %238 : vector<18x1xf32> to vector<18x18xf32>
    %240 = arith.mulf %235, %239 : vector<18x18xf32>
    %241 = arith.truncf %240 : vector<18x18xf32> to vector<18x18xbf16>
    %242 = arith.truncf %223 : vector<18x32xf32> to vector<18x32xbf16>
    %cst_102 = arith.constant dense<0.000000e+00> : vector<18x32xf32>
    %243 = tpu.matmul %241, %242, %cst_102 {dimension_numbers = #tpu.dot_dimension_numbers<[1], [0], [0], [1], [0, 0, 1, 1], [], []>} : vector<18x18xbf16>, vector<18x32xbf16>, vector<18x32xf32> -> vector<18x32xf32>
    %244 = vector.extract_strided_slice %136 {offsets = [96, 0], sizes = [32, 128], strides = [1, 1]} : vector<128x128xbf16> to vector<32x128xbf16>
    %245 = arith.truncf %243 : vector<18x32xf32> to vector<18x32xbf16>
    %cst_103 = arith.constant dense<0.000000e+00> : vector<18x128xf32>
    %246 = tpu.matmul %245, %244, %cst_103 {dimension_numbers = #tpu.dot_dimension_numbers<[1], [0], [0], [1], [0, 0, 1, 1], [], []>} : vector<18x32xbf16>, vector<32x128xbf16>, vector<18x128xf32> -> vector<18x128xf32>
    %247 = arith.addf %220, %246 : vector<18x128xf32>
    %248 = arith.addf %126, %247 : vector<18x128xf32>
    %c0_104 = arith.constant 0 : index
    %c0_105 = arith.constant 0 : index
    %c0_106 = arith.constant 0 : index
    %249 = vector.load %arg18[%c0_104, %c0_105, %c0_106] : memref<2x1x128xf32, #tpu.memory_space<vmem>>, vector<1x1x128xf32>
    %250 = vector.shape_cast %249 : vector<1x1x128xf32> to vector<1x128xf32>
    %c0_107 = arith.constant 0 : index
    %c0_108 = arith.constant 0 : index
    %c0_109 = arith.constant 0 : index
    %251 = vector.load %arg19[%c0_107, %c0_108, %c0_109] : memref<2x1x128xf32, #tpu.memory_space<vmem>>, vector<1x1x128xf32>
    %252 = vector.shape_cast %251 : vector<1x1x128xf32> to vector<1x128xf32>
    %cst_110 = arith.constant dense<0.000000e+00> : vector<18xf32>
    %253 = vector.multi_reduction <add>, %248, %cst_110 [1] : vector<18x128xf32> to vector<18xf32>
    %254 = vector.shape_cast %253 : vector<18xf32> to vector<18x1xf32>
    %cst_111 = arith.constant 1.280000e+02 : f32
    %255 = vector.broadcast %cst_111 : f32 to vector<18x1xf32>
    %256 = arith.divf %254, %255 : vector<18x1xf32>
    %257 = vector.broadcast %256 : vector<18x1xf32> to vector<18x128xf32>
    %258 = arith.subf %248, %257 : vector<18x128xf32>
    %259 = arith.mulf %258, %258 : vector<18x128xf32>
    %cst_112 = arith.constant dense<0.000000e+00> : vector<18xf32>
    %260 = vector.multi_reduction <add>, %259, %cst_112 [1] : vector<18x128xf32> to vector<18xf32>
    %261 = vector.shape_cast %260 : vector<18xf32> to vector<18x1xf32>
    %cst_113 = arith.constant 1.280000e+02 : f32
    %262 = vector.broadcast %cst_113 : f32 to vector<18x1xf32>
    %263 = arith.divf %261, %262 : vector<18x1xf32>
    %264 = vector.broadcast %256 : vector<18x1xf32> to vector<18x128xf32>
    %265 = arith.subf %248, %264 : vector<18x128xf32>
    %cst_114 = arith.constant 9.99999974E-6 : f32
    %266 = vector.broadcast %cst_114 : f32 to vector<18x1xf32>
    %267 = arith.addf %263, %266 : vector<18x1xf32>
    %268 = math.rsqrt %267 : vector<18x1xf32>
    %269 = vector.broadcast %268 : vector<18x1xf32> to vector<18x128xf32>
    %270 = arith.mulf %265, %269 : vector<18x128xf32>
    %271 = vector.broadcast %250 : vector<1x128xf32> to vector<18x128xf32>
    %272 = arith.mulf %270, %271 : vector<18x128xf32>
    %273 = vector.broadcast %252 : vector<1x128xf32> to vector<18x128xf32>
    %274 = arith.addf %272, %273 : vector<18x128xf32>
    %c0_115 = arith.constant 0 : index
    %c0_116 = arith.constant 0 : index
    %c0_117 = arith.constant 0 : index
    %275 = vector.load %arg20[%c0_115, %c0_116, %c0_117] : memref<2x128x256xbf16, #tpu.memory_space<vmem>>, vector<1x128x256xbf16>
    %276 = vector.shape_cast %275 : vector<1x128x256xbf16> to vector<128x256xbf16>
    %277 = arith.truncf %274 : vector<18x128xf32> to vector<18x128xbf16>
    %cst_118 = arith.constant dense<0.000000e+00> : vector<18x256xf32>
    %278 = tpu.matmul %277, %276, %cst_118 {dimension_numbers = #tpu.dot_dimension_numbers<[1], [0], [0], [1], [0, 0, 1, 1], [], []>} : vector<18x128xbf16>, vector<128x256xbf16>, vector<18x256xf32> -> vector<18x256xf32>
    %c0_119 = arith.constant 0 : index
    %c0_120 = arith.constant 0 : index
    %c0_121 = arith.constant 0 : index
    %279 = vector.load %arg21[%c0_119, %c0_120, %c0_121] : memref<2x1x256xf32, #tpu.memory_space<vmem>>, vector<1x1x256xf32>
    %280 = vector.shape_cast %279 : vector<1x1x256xf32> to vector<1x256xf32>
    %281 = vector.broadcast %280 : vector<1x256xf32> to vector<18x256xf32>
    %282 = arith.addf %278, %281 : vector<18x256xf32>
    %283 = arith.mulf %282, %282 : vector<18x256xf32>
    %284 = arith.mulf %282, %283 : vector<18x256xf32>
    %cst_122 = arith.constant 4.471500e-02 : f32
    %285 = vector.broadcast %cst_122 : f32 to vector<18x256xf32>
    %286 = arith.mulf %285, %284 : vector<18x256xf32>
    %287 = arith.addf %282, %286 : vector<18x256xf32>
    %cst_123 = arith.constant 0.797884583 : f32
    %288 = vector.broadcast %cst_123 : f32 to vector<18x256xf32>
    %289 = arith.mulf %288, %287 : vector<18x256xf32>
    %290 = math.tanh %289 : vector<18x256xf32>
    %cst_124 = arith.constant 1.000000e+00 : f32
    %291 = vector.broadcast %cst_124 : f32 to vector<18x256xf32>
    %292 = arith.addf %291, %290 : vector<18x256xf32>
    %cst_125 = arith.constant 5.000000e-01 : f32
    %293 = vector.broadcast %cst_125 : f32 to vector<18x256xf32>
    %294 = arith.mulf %293, %292 : vector<18x256xf32>
    %295 = arith.mulf %282, %294 : vector<18x256xf32>
    %c0_126 = arith.constant 0 : index
    %c0_127 = arith.constant 0 : index
    %c0_128 = arith.constant 0 : index
    %296 = vector.load %arg22[%c0_126, %c0_127, %c0_128] : memref<2x256x128xbf16, #tpu.memory_space<vmem>>, vector<1x256x128xbf16>
    %297 = vector.shape_cast %296 : vector<1x256x128xbf16> to vector<256x128xbf16>
    %298 = arith.truncf %295 : vector<18x256xf32> to vector<18x256xbf16>
    %cst_129 = arith.constant dense<0.000000e+00> : vector<18x128xf32>
    %299 = tpu.matmul %298, %297, %cst_129 {dimension_numbers = #tpu.dot_dimension_numbers<[1], [0], [0], [1], [0, 0, 1, 1], [], []>} : vector<18x256xbf16>, vector<256x128xbf16>, vector<18x128xf32> -> vector<18x128xf32>
    %c0_130 = arith.constant 0 : index
    %c0_131 = arith.constant 0 : index
    %c0_132 = arith.constant 0 : index
    %300 = vector.load %arg23[%c0_130, %c0_131, %c0_132] : memref<2x1x128xf32, #tpu.memory_space<vmem>>, vector<1x1x128xf32>
    %301 = vector.shape_cast %300 : vector<1x1x128xf32> to vector<1x128xf32>
    %302 = vector.broadcast %301 : vector<1x128xf32> to vector<18x128xf32>
    %303 = arith.addf %299, %302 : vector<18x128xf32>
    %304 = arith.addf %274, %303 : vector<18x128xf32>
    %c0_133 = arith.constant 0 : index
    %c0_134 = arith.constant 0 : index
    %c0_135 = arith.constant 0 : index
    %305 = vector.load %arg24[%c0_133, %c0_134, %c0_135] : memref<2x1x128xf32, #tpu.memory_space<vmem>>, vector<1x1x128xf32>
    %306 = vector.shape_cast %305 : vector<1x1x128xf32> to vector<1x128xf32>
    %c0_136 = arith.constant 0 : index
    %c0_137 = arith.constant 0 : index
    %c0_138 = arith.constant 0 : index
    %307 = vector.load %arg25[%c0_136, %c0_137, %c0_138] : memref<2x1x128xf32, #tpu.memory_space<vmem>>, vector<1x1x128xf32>
    %308 = vector.shape_cast %307 : vector<1x1x128xf32> to vector<1x128xf32>
    %cst_139 = arith.constant dense<0.000000e+00> : vector<18xf32>
    %309 = vector.multi_reduction <add>, %304, %cst_139 [1] : vector<18x128xf32> to vector<18xf32>
    %310 = vector.shape_cast %309 : vector<18xf32> to vector<18x1xf32>
    %cst_140 = arith.constant 1.280000e+02 : f32
    %311 = vector.broadcast %cst_140 : f32 to vector<18x1xf32>
    %312 = arith.divf %310, %311 : vector<18x1xf32>
    %313 = vector.broadcast %312 : vector<18x1xf32> to vector<18x128xf32>
    %314 = arith.subf %304, %313 : vector<18x128xf32>
    %315 = arith.mulf %314, %314 : vector<18x128xf32>
    %cst_141 = arith.constant dense<0.000000e+00> : vector<18xf32>
    %316 = vector.multi_reduction <add>, %315, %cst_141 [1] : vector<18x128xf32> to vector<18xf32>
    %317 = vector.shape_cast %316 : vector<18xf32> to vector<18x1xf32>
    %cst_142 = arith.constant 1.280000e+02 : f32
    %318 = vector.broadcast %cst_142 : f32 to vector<18x1xf32>
    %319 = arith.divf %317, %318 : vector<18x1xf32>
    %320 = vector.broadcast %312 : vector<18x1xf32> to vector<18x128xf32>
    %321 = arith.subf %304, %320 : vector<18x128xf32>
    %cst_143 = arith.constant 9.99999974E-6 : f32
    %322 = vector.broadcast %cst_143 : f32 to vector<18x1xf32>
    %323 = arith.addf %319, %322 : vector<18x1xf32>
    %324 = math.rsqrt %323 : vector<18x1xf32>
    %325 = vector.broadcast %324 : vector<18x1xf32> to vector<18x128xf32>
    %326 = arith.mulf %321, %325 : vector<18x128xf32>
    %327 = vector.broadcast %306 : vector<1x128xf32> to vector<18x128xf32>
    %328 = arith.mulf %326, %327 : vector<18x128xf32>
    %329 = vector.broadcast %308 : vector<1x128xf32> to vector<18x128xf32>
    %330 = arith.addf %328, %329 : vector<18x128xf32>
    %c1_144 = arith.constant 1 : index
    %c0_145 = arith.constant 0 : index
    %c0_146 = arith.constant 0 : index
    %331 = vector.load %arg14[%c1_144, %c0_145, %c0_146] : memref<2x128x384xbf16, #tpu.memory_space<vmem>>, vector<1x128x384xbf16>
    %332 = vector.shape_cast %331 : vector<1x128x384xbf16> to vector<128x384xbf16>
    %333 = arith.truncf %330 : vector<18x128xf32> to vector<18x128xbf16>
    %cst_147 = arith.constant dense<0.000000e+00> : vector<18x384xf32>
    %334 = tpu.matmul %333, %332, %cst_147 {dimension_numbers = #tpu.dot_dimension_numbers<[1], [0], [0], [1], [0, 0, 1, 1], [], []>} : vector<18x128xbf16>, vector<128x384xbf16>, vector<18x384xf32> -> vector<18x384xf32>
    %c1_148 = arith.constant 1 : index
    %c0_149 = arith.constant 0 : index
    %c0_150 = arith.constant 0 : index
    %335 = vector.load %arg15[%c1_148, %c0_149, %c0_150] : memref<2x1x384xf32, #tpu.memory_space<vmem>>, vector<1x1x384xf32>
    %336 = vector.shape_cast %335 : vector<1x1x384xf32> to vector<1x384xf32>
    %337 = vector.broadcast %336 : vector<1x384xf32> to vector<18x384xf32>
    %338 = arith.addf %334, %337 : vector<18x384xf32>
    %c1_151 = arith.constant 1 : index
    %c0_152 = arith.constant 0 : index
    %c0_153 = arith.constant 0 : index
    %339 = vector.load %arg16[%c1_151, %c0_152, %c0_153] : memref<2x128x128xbf16, #tpu.memory_space<vmem>>, vector<1x128x128xbf16>
    %340 = vector.shape_cast %339 : vector<1x128x128xbf16> to vector<128x128xbf16>
    %c1_154 = arith.constant 1 : index
    %c0_155 = arith.constant 0 : index
    %c0_156 = arith.constant 0 : index
    %341 = vector.load %arg17[%c1_154, %c0_155, %c0_156] : memref<2x1x128xf32, #tpu.memory_space<vmem>>, vector<1x1x128xf32>
    %342 = vector.shape_cast %341 : vector<1x1x128xf32> to vector<1x128xf32>
    %343 = vector.extract_strided_slice %338 {offsets = [0, 0], sizes = [18, 32], strides = [1, 1]} : vector<18x384xf32> to vector<18x32xf32>
    %344 = vector.extract_strided_slice %338 {offsets = [0, 128], sizes = [18, 32], strides = [1, 1]} : vector<18x384xf32> to vector<18x32xf32>
    %345 = vector.extract_strided_slice %338 {offsets = [0, 256], sizes = [18, 32], strides = [1, 1]} : vector<18x384xf32> to vector<18x32xf32>
    %346 = arith.truncf %343 : vector<18x32xf32> to vector<18x32xbf16>
    %347 = arith.truncf %344 : vector<18x32xf32> to vector<18x32xbf16>
    %cst_157 = arith.constant dense<0.000000e+00> : vector<18x18xf32>
    %348 = tpu.matmul %346, %347, %cst_157 {dimension_numbers = #tpu.dot_dimension_numbers<[1], [1], [0], [0], [0, 0, 1, 0], [], []>} : vector<18x32xbf16>, vector<18x32xbf16>, vector<18x18xf32> -> vector<18x18xf32>
    %cst_158 = arith.constant 0.176776692 : f32
    %349 = vector.broadcast %cst_158 : f32 to vector<18x18xf32>
    %350 = arith.mulf %348, %349 : vector<18x18xf32>
    %351 = vector.broadcast %34 : vector<1x18xf32> to vector<18x18xf32>
    %352 = arith.addf %350, %351 : vector<18x18xf32>
    %cst_159 = arith.constant dense<0xFF800000> : vector<18xf32>
    %353 = vector.multi_reduction <maximumf>, %352, %cst_159 [1] : vector<18x18xf32> to vector<18xf32>
    %354 = vector.shape_cast %353 : vector<18xf32> to vector<18x1xf32>
    %355 = vector.broadcast %354 : vector<18x1xf32> to vector<18x18xf32>
    %356 = arith.subf %352, %355 : vector<18x18xf32>
    %357 = math.exp %356 : vector<18x18xf32>
    %cst_160 = arith.constant dense<0.000000e+00> : vector<18xf32>
    %358 = vector.multi_reduction <add>, %357, %cst_160 [1] : vector<18x18xf32> to vector<18xf32>
    %359 = vector.shape_cast %358 : vector<18xf32> to vector<18x1xf32>
    %360 = tpu.reciprocal %359 {approx = true} : vector<18x1xf32> -> vector<18x1xf32>
    %361 = vector.broadcast %360 : vector<18x1xf32> to vector<18x18xf32>
    %362 = arith.mulf %357, %361 : vector<18x18xf32>
    %363 = arith.truncf %362 : vector<18x18xf32> to vector<18x18xbf16>
    %364 = arith.truncf %345 : vector<18x32xf32> to vector<18x32xbf16>
    %cst_161 = arith.constant dense<0.000000e+00> : vector<18x32xf32>
    %365 = tpu.matmul %363, %364, %cst_161 {dimension_numbers = #tpu.dot_dimension_numbers<[1], [0], [0], [1], [0, 0, 1, 1], [], []>} : vector<18x18xbf16>, vector<18x32xbf16>, vector<18x32xf32> -> vector<18x32xf32>
    %366 = vector.extract_strided_slice %340 {offsets = [0, 0], sizes = [32, 128], strides = [1, 1]} : vector<128x128xbf16> to vector<32x128xbf16>
    %367 = arith.truncf %365 : vector<18x32xf32> to vector<18x32xbf16>
    %cst_162 = arith.constant dense<0.000000e+00> : vector<18x128xf32>
    %368 = tpu.matmul %367, %366, %cst_162 {dimension_numbers = #tpu.dot_dimension_numbers<[1], [0], [0], [1], [0, 0, 1, 1], [], []>} : vector<18x32xbf16>, vector<32x128xbf16>, vector<18x128xf32> -> vector<18x128xf32>
    %369 = vector.broadcast %342 : vector<1x128xf32> to vector<18x128xf32>
    %370 = arith.addf %369, %368 : vector<18x128xf32>
    %371 = vector.extract_strided_slice %338 {offsets = [0, 32], sizes = [18, 32], strides = [1, 1]} : vector<18x384xf32> to vector<18x32xf32>
    %372 = vector.extract_strided_slice %338 {offsets = [0, 160], sizes = [18, 32], strides = [1, 1]} : vector<18x384xf32> to vector<18x32xf32>
    %373 = vector.extract_strided_slice %338 {offsets = [0, 288], sizes = [18, 32], strides = [1, 1]} : vector<18x384xf32> to vector<18x32xf32>
    %374 = arith.truncf %371 : vector<18x32xf32> to vector<18x32xbf16>
    %375 = arith.truncf %372 : vector<18x32xf32> to vector<18x32xbf16>
    %cst_163 = arith.constant dense<0.000000e+00> : vector<18x18xf32>
    %376 = tpu.matmul %374, %375, %cst_163 {dimension_numbers = #tpu.dot_dimension_numbers<[1], [1], [0], [0], [0, 0, 1, 0], [], []>} : vector<18x32xbf16>, vector<18x32xbf16>, vector<18x18xf32> -> vector<18x18xf32>
    %cst_164 = arith.constant 0.176776692 : f32
    %377 = vector.broadcast %cst_164 : f32 to vector<18x18xf32>
    %378 = arith.mulf %376, %377 : vector<18x18xf32>
    %379 = vector.broadcast %34 : vector<1x18xf32> to vector<18x18xf32>
    %380 = arith.addf %378, %379 : vector<18x18xf32>
    %cst_165 = arith.constant dense<0xFF800000> : vector<18xf32>
    %381 = vector.multi_reduction <maximumf>, %380, %cst_165 [1] : vector<18x18xf32> to vector<18xf32>
    %382 = vector.shape_cast %381 : vector<18xf32> to vector<18x1xf32>
    %383 = vector.broadcast %382 : vector<18x1xf32> to vector<18x18xf32>
    %384 = arith.subf %380, %383 : vector<18x18xf32>
    %385 = math.exp %384 : vector<18x18xf32>
    %cst_166 = arith.constant dense<0.000000e+00> : vector<18xf32>
    %386 = vector.multi_reduction <add>, %385, %cst_166 [1] : vector<18x18xf32> to vector<18xf32>
    %387 = vector.shape_cast %386 : vector<18xf32> to vector<18x1xf32>
    %388 = tpu.reciprocal %387 {approx = true} : vector<18x1xf32> -> vector<18x1xf32>
    %389 = vector.broadcast %388 : vector<18x1xf32> to vector<18x18xf32>
    %390 = arith.mulf %385, %389 : vector<18x18xf32>
    %391 = arith.truncf %390 : vector<18x18xf32> to vector<18x18xbf16>
    %392 = arith.truncf %373 : vector<18x32xf32> to vector<18x32xbf16>
    %cst_167 = arith.constant dense<0.000000e+00> : vector<18x32xf32>
    %393 = tpu.matmul %391, %392, %cst_167 {dimension_numbers = #tpu.dot_dimension_numbers<[1], [0], [0], [1], [0, 0, 1, 1], [], []>} : vector<18x18xbf16>, vector<18x32xbf16>, vector<18x32xf32> -> vector<18x32xf32>
    %394 = vector.extract_strided_slice %340 {offsets = [32, 0], sizes = [32, 128], strides = [1, 1]} : vector<128x128xbf16> to vector<32x128xbf16>
    %395 = arith.truncf %393 : vector<18x32xf32> to vector<18x32xbf16>
    %cst_168 = arith.constant dense<0.000000e+00> : vector<18x128xf32>
    %396 = tpu.matmul %395, %394, %cst_168 {dimension_numbers = #tpu.dot_dimension_numbers<[1], [0], [0], [1], [0, 0, 1, 1], [], []>} : vector<18x32xbf16>, vector<32x128xbf16>, vector<18x128xf32> -> vector<18x128xf32>
    %397 = arith.addf %370, %396 : vector<18x128xf32>
    %398 = vector.extract_strided_slice %338 {offsets = [0, 64], sizes = [18, 32], strides = [1, 1]} : vector<18x384xf32> to vector<18x32xf32>
    %399 = vector.extract_strided_slice %338 {offsets = [0, 192], sizes = [18, 32], strides = [1, 1]} : vector<18x384xf32> to vector<18x32xf32>
    %400 = vector.extract_strided_slice %338 {offsets = [0, 320], sizes = [18, 32], strides = [1, 1]} : vector<18x384xf32> to vector<18x32xf32>
    %401 = arith.truncf %398 : vector<18x32xf32> to vector<18x32xbf16>
    %402 = arith.truncf %399 : vector<18x32xf32> to vector<18x32xbf16>
    %cst_169 = arith.constant dense<0.000000e+00> : vector<18x18xf32>
    %403 = tpu.matmul %401, %402, %cst_169 {dimension_numbers = #tpu.dot_dimension_numbers<[1], [1], [0], [0], [0, 0, 1, 0], [], []>} : vector<18x32xbf16>, vector<18x32xbf16>, vector<18x18xf32> -> vector<18x18xf32>
    %cst_170 = arith.constant 0.176776692 : f32
    %404 = vector.broadcast %cst_170 : f32 to vector<18x18xf32>
    %405 = arith.mulf %403, %404 : vector<18x18xf32>
    %406 = vector.broadcast %34 : vector<1x18xf32> to vector<18x18xf32>
    %407 = arith.addf %405, %406 : vector<18x18xf32>
    %cst_171 = arith.constant dense<0xFF800000> : vector<18xf32>
    %408 = vector.multi_reduction <maximumf>, %407, %cst_171 [1] : vector<18x18xf32> to vector<18xf32>
    %409 = vector.shape_cast %408 : vector<18xf32> to vector<18x1xf32>
    %410 = vector.broadcast %409 : vector<18x1xf32> to vector<18x18xf32>
    %411 = arith.subf %407, %410 : vector<18x18xf32>
    %412 = math.exp %411 : vector<18x18xf32>
    %cst_172 = arith.constant dense<0.000000e+00> : vector<18xf32>
    %413 = vector.multi_reduction <add>, %412, %cst_172 [1] : vector<18x18xf32> to vector<18xf32>
    %414 = vector.shape_cast %413 : vector<18xf32> to vector<18x1xf32>
    %415 = tpu.reciprocal %414 {approx = true} : vector<18x1xf32> -> vector<18x1xf32>
    %416 = vector.broadcast %415 : vector<18x1xf32> to vector<18x18xf32>
    %417 = arith.mulf %412, %416 : vector<18x18xf32>
    %418 = arith.truncf %417 : vector<18x18xf32> to vector<18x18xbf16>
    %419 = arith.truncf %400 : vector<18x32xf32> to vector<18x32xbf16>
    %cst_173 = arith.constant dense<0.000000e+00> : vector<18x32xf32>
    %420 = tpu.matmul %418, %419, %cst_173 {dimension_numbers = #tpu.dot_dimension_numbers<[1], [0], [0], [1], [0, 0, 1, 1], [], []>} : vector<18x18xbf16>, vector<18x32xbf16>, vector<18x32xf32> -> vector<18x32xf32>
    %421 = vector.extract_strided_slice %340 {offsets = [64, 0], sizes = [32, 128], strides = [1, 1]} : vector<128x128xbf16> to vector<32x128xbf16>
    %422 = arith.truncf %420 : vector<18x32xf32> to vector<18x32xbf16>
    %cst_174 = arith.constant dense<0.000000e+00> : vector<18x128xf32>
    %423 = tpu.matmul %422, %421, %cst_174 {dimension_numbers = #tpu.dot_dimension_numbers<[1], [0], [0], [1], [0, 0, 1, 1], [], []>} : vector<18x32xbf16>, vector<32x128xbf16>, vector<18x128xf32> -> vector<18x128xf32>
    %424 = arith.addf %397, %423 : vector<18x128xf32>
    %425 = vector.extract_strided_slice %338 {offsets = [0, 96], sizes = [18, 32], strides = [1, 1]} : vector<18x384xf32> to vector<18x32xf32>
    %426 = vector.extract_strided_slice %338 {offsets = [0, 224], sizes = [18, 32], strides = [1, 1]} : vector<18x384xf32> to vector<18x32xf32>
    %427 = vector.extract_strided_slice %338 {offsets = [0, 352], sizes = [18, 32], strides = [1, 1]} : vector<18x384xf32> to vector<18x32xf32>
    %428 = arith.truncf %425 : vector<18x32xf32> to vector<18x32xbf16>
    %429 = arith.truncf %426 : vector<18x32xf32> to vector<18x32xbf16>
    %cst_175 = arith.constant dense<0.000000e+00> : vector<18x18xf32>
    %430 = tpu.matmul %428, %429, %cst_175 {dimension_numbers = #tpu.dot_dimension_numbers<[1], [1], [0], [0], [0, 0, 1, 0], [], []>} : vector<18x32xbf16>, vector<18x32xbf16>, vector<18x18xf32> -> vector<18x18xf32>
    %cst_176 = arith.constant 0.176776692 : f32
    %431 = vector.broadcast %cst_176 : f32 to vector<18x18xf32>
    %432 = arith.mulf %430, %431 : vector<18x18xf32>
    %433 = vector.broadcast %34 : vector<1x18xf32> to vector<18x18xf32>
    %434 = arith.addf %432, %433 : vector<18x18xf32>
    %cst_177 = arith.constant dense<0xFF800000> : vector<18xf32>
    %435 = vector.multi_reduction <maximumf>, %434, %cst_177 [1] : vector<18x18xf32> to vector<18xf32>
    %436 = vector.shape_cast %435 : vector<18xf32> to vector<18x1xf32>
    %437 = vector.broadcast %436 : vector<18x1xf32> to vector<18x18xf32>
    %438 = arith.subf %434, %437 : vector<18x18xf32>
    %439 = math.exp %438 : vector<18x18xf32>
    %cst_178 = arith.constant dense<0.000000e+00> : vector<18xf32>
    %440 = vector.multi_reduction <add>, %439, %cst_178 [1] : vector<18x18xf32> to vector<18xf32>
    %441 = vector.shape_cast %440 : vector<18xf32> to vector<18x1xf32>
    %442 = tpu.reciprocal %441 {approx = true} : vector<18x1xf32> -> vector<18x1xf32>
    %443 = vector.broadcast %442 : vector<18x1xf32> to vector<18x18xf32>
    %444 = arith.mulf %439, %443 : vector<18x18xf32>
    %445 = arith.truncf %444 : vector<18x18xf32> to vector<18x18xbf16>
    %446 = arith.truncf %427 : vector<18x32xf32> to vector<18x32xbf16>
    %cst_179 = arith.constant dense<0.000000e+00> : vector<18x32xf32>
    %447 = tpu.matmul %445, %446, %cst_179 {dimension_numbers = #tpu.dot_dimension_numbers<[1], [0], [0], [1], [0, 0, 1, 1], [], []>} : vector<18x18xbf16>, vector<18x32xbf16>, vector<18x32xf32> -> vector<18x32xf32>
    %448 = vector.extract_strided_slice %340 {offsets = [96, 0], sizes = [32, 128], strides = [1, 1]} : vector<128x128xbf16> to vector<32x128xbf16>
    %449 = arith.truncf %447 : vector<18x32xf32> to vector<18x32xbf16>
    %cst_180 = arith.constant dense<0.000000e+00> : vector<18x128xf32>
    %450 = tpu.matmul %449, %448, %cst_180 {dimension_numbers = #tpu.dot_dimension_numbers<[1], [0], [0], [1], [0, 0, 1, 1], [], []>} : vector<18x32xbf16>, vector<32x128xbf16>, vector<18x128xf32> -> vector<18x128xf32>
    %451 = arith.addf %424, %450 : vector<18x128xf32>
    %452 = arith.addf %330, %451 : vector<18x128xf32>
    %c1_181 = arith.constant 1 : index
    %c0_182 = arith.constant 0 : index
    %c0_183 = arith.constant 0 : index
    %453 = vector.load %arg18[%c1_181, %c0_182, %c0_183] : memref<2x1x128xf32, #tpu.memory_space<vmem>>, vector<1x1x128xf32>
    %454 = vector.shape_cast %453 : vector<1x1x128xf32> to vector<1x128xf32>
    %c1_184 = arith.constant 1 : index
    %c0_185 = arith.constant 0 : index
    %c0_186 = arith.constant 0 : index
    %455 = vector.load %arg19[%c1_184, %c0_185, %c0_186] : memref<2x1x128xf32, #tpu.memory_space<vmem>>, vector<1x1x128xf32>
    %456 = vector.shape_cast %455 : vector<1x1x128xf32> to vector<1x128xf32>
    %cst_187 = arith.constant dense<0.000000e+00> : vector<18xf32>
    %457 = vector.multi_reduction <add>, %452, %cst_187 [1] : vector<18x128xf32> to vector<18xf32>
    %458 = vector.shape_cast %457 : vector<18xf32> to vector<18x1xf32>
    %cst_188 = arith.constant 1.280000e+02 : f32
    %459 = vector.broadcast %cst_188 : f32 to vector<18x1xf32>
    %460 = arith.divf %458, %459 : vector<18x1xf32>
    %461 = vector.broadcast %460 : vector<18x1xf32> to vector<18x128xf32>
    %462 = arith.subf %452, %461 : vector<18x128xf32>
    %463 = arith.mulf %462, %462 : vector<18x128xf32>
    %cst_189 = arith.constant dense<0.000000e+00> : vector<18xf32>
    %464 = vector.multi_reduction <add>, %463, %cst_189 [1] : vector<18x128xf32> to vector<18xf32>
    %465 = vector.shape_cast %464 : vector<18xf32> to vector<18x1xf32>
    %cst_190 = arith.constant 1.280000e+02 : f32
    %466 = vector.broadcast %cst_190 : f32 to vector<18x1xf32>
    %467 = arith.divf %465, %466 : vector<18x1xf32>
    %468 = vector.broadcast %460 : vector<18x1xf32> to vector<18x128xf32>
    %469 = arith.subf %452, %468 : vector<18x128xf32>
    %cst_191 = arith.constant 9.99999974E-6 : f32
    %470 = vector.broadcast %cst_191 : f32 to vector<18x1xf32>
    %471 = arith.addf %467, %470 : vector<18x1xf32>
    %472 = math.rsqrt %471 : vector<18x1xf32>
    %473 = vector.broadcast %472 : vector<18x1xf32> to vector<18x128xf32>
    %474 = arith.mulf %469, %473 : vector<18x128xf32>
    %475 = vector.broadcast %454 : vector<1x128xf32> to vector<18x128xf32>
    %476 = arith.mulf %474, %475 : vector<18x128xf32>
    %477 = vector.broadcast %456 : vector<1x128xf32> to vector<18x128xf32>
    %478 = arith.addf %476, %477 : vector<18x128xf32>
    %c1_192 = arith.constant 1 : index
    %c0_193 = arith.constant 0 : index
    %c0_194 = arith.constant 0 : index
    %479 = vector.load %arg20[%c1_192, %c0_193, %c0_194] : memref<2x128x256xbf16, #tpu.memory_space<vmem>>, vector<1x128x256xbf16>
    %480 = vector.shape_cast %479 : vector<1x128x256xbf16> to vector<128x256xbf16>
    %481 = arith.truncf %478 : vector<18x128xf32> to vector<18x128xbf16>
    %cst_195 = arith.constant dense<0.000000e+00> : vector<18x256xf32>
    %482 = tpu.matmul %481, %480, %cst_195 {dimension_numbers = #tpu.dot_dimension_numbers<[1], [0], [0], [1], [0, 0, 1, 1], [], []>} : vector<18x128xbf16>, vector<128x256xbf16>, vector<18x256xf32> -> vector<18x256xf32>
    %c1_196 = arith.constant 1 : index
    %c0_197 = arith.constant 0 : index
    %c0_198 = arith.constant 0 : index
    %483 = vector.load %arg21[%c1_196, %c0_197, %c0_198] : memref<2x1x256xf32, #tpu.memory_space<vmem>>, vector<1x1x256xf32>
    %484 = vector.shape_cast %483 : vector<1x1x256xf32> to vector<1x256xf32>
    %485 = vector.broadcast %484 : vector<1x256xf32> to vector<18x256xf32>
    %486 = arith.addf %482, %485 : vector<18x256xf32>
    %487 = arith.mulf %486, %486 : vector<18x256xf32>
    %488 = arith.mulf %486, %487 : vector<18x256xf32>
    %cst_199 = arith.constant 4.471500e-02 : f32
    %489 = vector.broadcast %cst_199 : f32 to vector<18x256xf32>
    %490 = arith.mulf %489, %488 : vector<18x256xf32>
    %491 = arith.addf %486, %490 : vector<18x256xf32>
    %cst_200 = arith.constant 0.797884583 : f32
    %492 = vector.broadcast %cst_200 : f32 to vector<18x256xf32>
    %493 = arith.mulf %492, %491 : vector<18x256xf32>
    %494 = math.tanh %493 : vector<18x256xf32>
    %cst_201 = arith.constant 1.000000e+00 : f32
    %495 = vector.broadcast %cst_201 : f32 to vector<18x256xf32>
    %496 = arith.addf %495, %494 : vector<18x256xf32>
    %cst_202 = arith.constant 5.000000e-01 : f32
    %497 = vector.broadcast %cst_202 : f32 to vector<18x256xf32>
    %498 = arith.mulf %497, %496 : vector<18x256xf32>
    %499 = arith.mulf %486, %498 : vector<18x256xf32>
    %c1_203 = arith.constant 1 : index
    %c0_204 = arith.constant 0 : index
    %c0_205 = arith.constant 0 : index
    %500 = vector.load %arg22[%c1_203, %c0_204, %c0_205] : memref<2x256x128xbf16, #tpu.memory_space<vmem>>, vector<1x256x128xbf16>
    %501 = vector.shape_cast %500 : vector<1x256x128xbf16> to vector<256x128xbf16>
    %502 = arith.truncf %499 : vector<18x256xf32> to vector<18x256xbf16>
    %cst_206 = arith.constant dense<0.000000e+00> : vector<18x128xf32>
    %503 = tpu.matmul %502, %501, %cst_206 {dimension_numbers = #tpu.dot_dimension_numbers<[1], [0], [0], [1], [0, 0, 1, 1], [], []>} : vector<18x256xbf16>, vector<256x128xbf16>, vector<18x128xf32> -> vector<18x128xf32>
    %c1_207 = arith.constant 1 : index
    %c0_208 = arith.constant 0 : index
    %c0_209 = arith.constant 0 : index
    %504 = vector.load %arg23[%c1_207, %c0_208, %c0_209] : memref<2x1x128xf32, #tpu.memory_space<vmem>>, vector<1x1x128xf32>
    %505 = vector.shape_cast %504 : vector<1x1x128xf32> to vector<1x128xf32>
    %506 = vector.broadcast %505 : vector<1x128xf32> to vector<18x128xf32>
    %507 = arith.addf %503, %506 : vector<18x128xf32>
    %508 = arith.addf %478, %507 : vector<18x128xf32>
    %c1_210 = arith.constant 1 : index
    %c0_211 = arith.constant 0 : index
    %c0_212 = arith.constant 0 : index
    %509 = vector.load %arg24[%c1_210, %c0_211, %c0_212] : memref<2x1x128xf32, #tpu.memory_space<vmem>>, vector<1x1x128xf32>
    %510 = vector.shape_cast %509 : vector<1x1x128xf32> to vector<1x128xf32>
    %c1_213 = arith.constant 1 : index
    %c0_214 = arith.constant 0 : index
    %c0_215 = arith.constant 0 : index
    %511 = vector.load %arg25[%c1_213, %c0_214, %c0_215] : memref<2x1x128xf32, #tpu.memory_space<vmem>>, vector<1x1x128xf32>
    %512 = vector.shape_cast %511 : vector<1x1x128xf32> to vector<1x128xf32>
    %cst_216 = arith.constant dense<0.000000e+00> : vector<18xf32>
    %513 = vector.multi_reduction <add>, %508, %cst_216 [1] : vector<18x128xf32> to vector<18xf32>
    %514 = vector.shape_cast %513 : vector<18xf32> to vector<18x1xf32>
    %cst_217 = arith.constant 1.280000e+02 : f32
    %515 = vector.broadcast %cst_217 : f32 to vector<18x1xf32>
    %516 = arith.divf %514, %515 : vector<18x1xf32>
    %517 = vector.broadcast %516 : vector<18x1xf32> to vector<18x128xf32>
    %518 = arith.subf %508, %517 : vector<18x128xf32>
    %519 = arith.mulf %518, %518 : vector<18x128xf32>
    %cst_218 = arith.constant dense<0.000000e+00> : vector<18xf32>
    %520 = vector.multi_reduction <add>, %519, %cst_218 [1] : vector<18x128xf32> to vector<18xf32>
    %521 = vector.shape_cast %520 : vector<18xf32> to vector<18x1xf32>
    %cst_219 = arith.constant 1.280000e+02 : f32
    %522 = vector.broadcast %cst_219 : f32 to vector<18x1xf32>
    %523 = arith.divf %521, %522 : vector<18x1xf32>
    %524 = vector.broadcast %516 : vector<18x1xf32> to vector<18x128xf32>
    %525 = arith.subf %508, %524 : vector<18x128xf32>
    %cst_220 = arith.constant 9.99999974E-6 : f32
    %526 = vector.broadcast %cst_220 : f32 to vector<18x1xf32>
    %527 = arith.addf %523, %526 : vector<18x1xf32>
    %528 = math.rsqrt %527 : vector<18x1xf32>
    %529 = vector.broadcast %528 : vector<18x1xf32> to vector<18x128xf32>
    %530 = arith.mulf %525, %529 : vector<18x128xf32>
    %531 = vector.broadcast %510 : vector<1x128xf32> to vector<18x128xf32>
    %532 = arith.mulf %530, %531 : vector<18x128xf32>
    %533 = vector.broadcast %512 : vector<1x128xf32> to vector<18x128xf32>
    %534 = arith.addf %532, %533 : vector<18x128xf32>
    %c0_221 = arith.constant 0 : index
    %c0_222 = arith.constant 0 : index
    %c0_223 = arith.constant 0 : index
    %535 = vector.load %arg32[%c0_221, %c0_222, %c0_223] : memref<1x18x128xf32, #tpu.memory_space<vmem>>, vector<1x18x128xf32>
    %536 = vector.shape_cast %535 : vector<1x18x128xf32> to vector<18x128xf32>
    %537 = vector.shape_cast %534 : vector<18x128xf32> to vector<1x18x128xf32>
    tpu.vector_store %arg32[%c0_221, %c0_222, %c0_223], %537 {strides = array<i32>} : memref<1x18x128xf32, #tpu.memory_space<vmem>>, vector<1x18x128xf32>,
    %c0_224 = arith.constant 0 : index
    %c0_225 = arith.constant 0 : index
    %538 = vector.load %arg26[%c0_224, %c0_225] : memref<128x128xbf16, #tpu.memory_space<vmem>>, vector<128x128xbf16>
    %539 = arith.truncf %534 : vector<18x128xf32> to vector<18x128xbf16>
    %cst_226 = arith.constant dense<0.000000e+00> : vector<18x128xf32>
    %540 = tpu.matmul %539, %538, %cst_226 {dimension_numbers = #tpu.dot_dimension_numbers<[1], [0], [0], [1], [0, 0, 1, 1], [], []>} : vector<18x128xbf16>, vector<128x128xbf16>, vector<18x128xf32> -> vector<18x128xf32>
    %c0_227 = arith.constant 0 : index
    %c0_228 = arith.constant 0 : index
    %541 = vector.load %arg27[%c0_227, %c0_228] : memref<1x128xf32, #tpu.memory_space<vmem>>, vector<1x128xf32>
    %542 = vector.broadcast %541 : vector<1x128xf32> to vector<18x128xf32>
    %543 = arith.addf %540, %542 : vector<18x128xf32>
    %cst_229 = arith.constant 0.000000e+00 : f32
    %544 = vector.broadcast %cst_229 : f32 to vector<18x128xf32>
    %545 = arith.maximumf %543, %544 : vector<18x128xf32>
    %c0_230 = arith.constant 0 : index
    %c0_231 = arith.constant 0 : index
    %546 = vector.load %arg28[%c0_230, %c0_231] : memref<1x128xf32, #tpu.memory_space<vmem>>, vector<1x128xf32>
    %547 = vector.broadcast %546 : vector<1x128xf32> to vector<18x128xf32>
    %548 = arith.mulf %545, %547 : vector<18x128xf32>
    %cst_232 = arith.constant dense<0.000000e+00> : vector<18xf32>
    %549 = vector.multi_reduction <add>, %548, %cst_232 [1] : vector<18x128xf32> to vector<18xf32>
    %550 = vector.shape_cast %549 : vector<18xf32> to vector<18x1xf32>
    %c0_233 = arith.constant 0 : index
    %c0_234 = arith.constant 0 : index
    %551 = vector.load %arg29[%c0_233, %c0_234] : memref<1x1xf32, #tpu.memory_space<vmem>>, vector<1x1xf32>
    %552 = vector.broadcast %551 : vector<1x1xf32> to vector<18x1xf32>
    %553 = arith.addf %550, %552 : vector<18x1xf32>
    %c0_235 = arith.constant 0 : index
    %c0_236 = arith.constant 0 : index
    %c0_237 = arith.constant 0 : index
    %554 = vector.load %arg4[%c0_235, %c0_236, %c0_237] : memref<1x18x1xf32, #tpu.memory_space<vmem>>, vector<1x18x1xf32>
    %555 = vector.shape_cast %554 : vector<1x18x1xf32> to vector<18x1xf32>
    %556 = arith.addf %553, %555 : vector<18x1xf32>
    %cst_238 = arith.constant dense<0xFF800000> : vector<1xf32>
    %557 = vector.multi_reduction <maximumf>, %556, %cst_238 [0] : vector<18x1xf32> to vector<1xf32>
    %558 = vector.shape_cast %557 : vector<1xf32> to vector<1x1xf32>
    %559 = vector.broadcast %558 : vector<1x1xf32> to vector<18x1xf32>
    %560 = arith.subf %556, %559 : vector<18x1xf32>
    %561 = math.exp %560 : vector<18x1xf32>
    %cst_239 = arith.constant dense<0.000000e+00> : vector<1xf32>
    %562 = vector.multi_reduction <add>, %561, %cst_239 [0] : vector<18x1xf32> to vector<1xf32>
    %563 = vector.shape_cast %562 : vector<1xf32> to vector<1x1xf32>
    %564 = tpu.reciprocal %563 {approx = true} : vector<1x1xf32> -> vector<1x1xf32>
    %565 = vector.broadcast %564 : vector<1x1xf32> to vector<18x1xf32>
    %566 = arith.mulf %561, %565 : vector<18x1xf32>
    %567 = vector.broadcast %566 : vector<18x1xf32> to vector<18x128xf32>
    %568 = arith.mulf %567, %534 : vector<18x128xf32>
    %cst_240 = arith.constant dense<0.000000e+00> : vector<128xf32>
    %569 = vector.multi_reduction <add>, %568, %cst_240 [0] : vector<18x128xf32> to vector<128xf32>
    %570 = vector.shape_cast %569 : vector<128xf32> to vector<1x128xf32>
    %c0_241 = arith.constant 0 : index
    %c0_242 = arith.constant 0 : index
    %571 = vector.load %arg30[%c0_241, %c0_242] : memref<128x128xbf16, #tpu.memory_space<vmem>>, vector<128x128xbf16>
    %572 = arith.truncf %570 : vector<1x128xf32> to vector<1x128xbf16>
    %cst_243 = arith.constant dense<0.000000e+00> : vector<1x128xf32>
    %573 = tpu.matmul %572, %571, %cst_243 {dimension_numbers = #tpu.dot_dimension_numbers<[1], [0], [0], [1], [0, 0, 1, 1], [], []>} : vector<1x128xbf16>, vector<128x128xbf16>, vector<1x128xf32> -> vector<1x128xf32>
    %c0_244 = arith.constant 0 : index
    %c0_245 = arith.constant 0 : index
    %574 = vector.load %arg31[%c0_244, %c0_245] : memref<1x128xf32, #tpu.memory_space<vmem>>, vector<1x128xf32>
    %575 = arith.addf %573, %574 : vector<1x128xf32>
    %c0_246 = arith.constant 0 : index
    %c0_247 = arith.constant 0 : index
    %c0_248 = arith.constant 0 : index
    %576 = vector.load %arg33[%c0_246, %c0_247, %c0_248] : memref<1x1x128xf32, #tpu.memory_space<vmem>>, vector<1x1x128xf32>
    %577 = vector.shape_cast %576 : vector<1x1x128xf32> to vector<1x128xf32>
    %578 = vector.shape_cast %575 : vector<1x128xf32> to vector<1x1x128xf32>
    tpu.vector_store %arg33[%c0_246, %c0_247, %c0_248], %578 {strides = array<i32>} : memref<1x1x128xf32, #tpu.memory_space<vmem>>, vector<1x1x128xf32>,
    return
  }
  func.func @transform_0(%arg0: i32) -> (i32, i32, i32) {
    %c0_i32 = arith.constant 0 : i32
    %c0_i32_0 = arith.constant 0 : i32
    %c0_i32_1 = arith.constant 0 : i32
    return %arg0, %c0_i32, %c0_i32_0 : i32, i32, i32
  }
  func.func @transform_1(%arg0: i32) -> (i32, i32, i32) {
    %c0_i32 = arith.constant 0 : i32
    %c0_i32_0 = arith.constant 0 : i32
    %c0_i32_1 = arith.constant 0 : i32
    return %arg0, %c0_i32, %c0_i32_0 : i32, i32, i32
  }
  func.func @transform_2(%arg0: i32) -> (i32, i32, i32) {
    %c0_i32 = arith.constant 0 : i32
    %c0_i32_0 = arith.constant 0 : i32
    %c0_i32_1 = arith.constant 0 : i32
    return %arg0, %c0_i32, %c0_i32_0 : i32, i32, i32
  }
  func.func @transform_3(%arg0: i32) -> (i32, i32, i32) {
    %c0_i32 = arith.constant 0 : i32
    %c0_i32_0 = arith.constant 0 : i32
    %c0_i32_1 = arith.constant 0 : i32
    return %arg0, %c0_i32, %c0_i32_0 : i32, i32, i32
  }
  func.func @transform_4(%arg0: i32) -> (i32, i32) {
    %c0_i32 = arith.constant 0 : i32
    %c0_i32_0 = arith.constant 0 : i32
    %c0_i32_1 = arith.constant 0 : i32
    return %c0_i32, %c0_i32_0 : i32, i32
  }
  func.func @transform_5(%arg0: i32) -> (i32, i32) {
    %c0_i32 = arith.constant 0 : i32
    %c0_i32_0 = arith.constant 0 : i32
    %c0_i32_1 = arith.constant 0 : i32
    return %c0_i32, %c0_i32_0 : i32, i32
  }
  func.func @transform_6(%arg0: i32) -> (i32, i32) {
    %c0_i32 = arith.constant 0 : i32
    %c0_i32_0 = arith.constant 0 : i32
    %c0_i32_1 = arith.constant 0 : i32
    return %c0_i32, %c0_i32_0 : i32, i32
  }
  func.func @transform_7(%arg0: i32) -> (i32, i32) {
    %c0_i32 = arith.constant 0 : i32
    %c0_i32_0 = arith.constant 0 : i32
    %c0_i32_1 = arith.constant 0 : i32
    return %c0_i32, %c0_i32_0 : i32, i32
  }
  func.func @transform_8(%arg0: i32) -> (i32, i32) {
    %c0_i32 = arith.constant 0 : i32
    %c0_i32_0 = arith.constant 0 : i32
    %c0_i32_1 = arith.constant 0 : i32
    return %c0_i32, %c0_i32_0 : i32, i32
  }
  func.func @transform_9(%arg0: i32) -> (i32, i32) {
    %c0_i32 = arith.constant 0 : i32
    %c0_i32_0 = arith.constant 0 : i32
    %c0_i32_1 = arith.constant 0 : i32
    return %c0_i32, %c0_i32_0 : i32, i32
  }
  func.func @transform_10(%arg0: i32) -> (i32, i32) {
    %c0_i32 = arith.constant 0 : i32
    %c0_i32_0 = arith.constant 0 : i32
    %c0_i32_1 = arith.constant 0 : i32
    return %c0_i32, %c0_i32_0 : i32, i32
  }
  func.func @transform_11(%arg0: i32) -> (i32, i32) {
    %c0_i32 = arith.constant 0 : i32
    %c0_i32_0 = arith.constant 0 : i32
    %c0_i32_1 = arith.constant 0 : i32
    return %c0_i32, %c0_i32_0 : i32, i32
  }
  func.func @transform_12(%arg0: i32) -> (i32, i32) {
    %c0_i32 = arith.constant 0 : i32
    %c0_i32_0 = arith.constant 0 : i32
    %c0_i32_1 = arith.constant 0 : i32
    return %c0_i32, %c0_i32_0 : i32, i32
  }
  func.func @transform_13(%arg0: i32) -> (i32, i32, i32) {
    %c0_i32 = arith.constant 0 : i32
    %c0_i32_0 = arith.constant 0 : i32
    %c0_i32_1 = arith.constant 0 : i32
    %c0_i32_2 = arith.constant 0 : i32
    return %c0_i32, %c0_i32_0, %c0_i32_1 : i32, i32, i32
  }
  func.func @transform_14(%arg0: i32) -> (i32, i32, i32) {
    %c0_i32 = arith.constant 0 : i32
    %c0_i32_0 = arith.constant 0 : i32
    %c0_i32_1 = arith.constant 0 : i32
    %c0_i32_2 = arith.constant 0 : i32
    return %c0_i32, %c0_i32_0, %c0_i32_1 : i32, i32, i32
  }
  func.func @transform_15(%arg0: i32) -> (i32, i32, i32) {
    %c0_i32 = arith.constant 0 : i32
    %c0_i32_0 = arith.constant 0 : i32
    %c0_i32_1 = arith.constant 0 : i32
    %c0_i32_2 = arith.constant 0 : i32
    return %c0_i32, %c0_i32_0, %c0_i32_1 : i32, i32, i32
  }
  func.func @transform_16(%arg0: i32) -> (i32, i32, i32) {
    %c0_i32 = arith.constant 0 : i32
    %c0_i32_0 = arith.constant 0 : i32
    %c0_i32_1 = arith.constant 0 : i32
    %c0_i32_2 = arith.constant 0 : i32
    return %c0_i32, %c0_i32_0, %c0_i32_1 : i32, i32, i32
  }
  func.func @transform_17(%arg0: i32) -> (i32, i32, i32) {
    %c0_i32 = arith.constant 0 : i32
    %c0_i32_0 = arith.constant 0 : i32
    %c0_i32_1 = arith.constant 0 : i32
    %c0_i32_2 = arith.constant 0 : i32
    return %c0_i32, %c0_i32_0, %c0_i32_1 : i32, i32, i32
  }
  func.func @transform_18(%arg0: i32) -> (i32, i32, i32) {
    %c0_i32 = arith.constant 0 : i32
    %c0_i32_0 = arith.constant 0 : i32
    %c0_i32_1 = arith.constant 0 : i32
    %c0_i32_2 = arith.constant 0 : i32
    return %c0_i32, %c0_i32_0, %c0_i32_1 : i32, i32, i32
  }
  func.func @transform_19(%arg0: i32) -> (i32, i32, i32) {
    %c0_i32 = arith.constant 0 : i32
    %c0_i32_0 = arith.constant 0 : i32
    %c0_i32_1 = arith.constant 0 : i32
    %c0_i32_2 = arith.constant 0 : i32
    return %c0_i32, %c0_i32_0, %c0_i32_1 : i32, i32, i32
  }
  func.func @transform_20(%arg0: i32) -> (i32, i32, i32) {
    %c0_i32 = arith.constant 0 : i32
    %c0_i32_0 = arith.constant 0 : i32
    %c0_i32_1 = arith.constant 0 : i32
    %c0_i32_2 = arith.constant 0 : i32
    return %c0_i32, %c0_i32_0, %c0_i32_1 : i32, i32, i32
  }
  func.func @transform_21(%arg0: i32) -> (i32, i32, i32) {
    %c0_i32 = arith.constant 0 : i32
    %c0_i32_0 = arith.constant 0 : i32
    %c0_i32_1 = arith.constant 0 : i32
    %c0_i32_2 = arith.constant 0 : i32
    return %c0_i32, %c0_i32_0, %c0_i32_1 : i32, i32, i32
  }
  func.func @transform_22(%arg0: i32) -> (i32, i32, i32) {
    %c0_i32 = arith.constant 0 : i32
    %c0_i32_0 = arith.constant 0 : i32
    %c0_i32_1 = arith.constant 0 : i32
    %c0_i32_2 = arith.constant 0 : i32
    return %c0_i32, %c0_i32_0, %c0_i32_1 : i32, i32, i32
  }
  func.func @transform_23(%arg0: i32) -> (i32, i32, i32) {
    %c0_i32 = arith.constant 0 : i32
    %c0_i32_0 = arith.constant 0 : i32
    %c0_i32_1 = arith.constant 0 : i32
    %c0_i32_2 = arith.constant 0 : i32
    return %c0_i32, %c0_i32_0, %c0_i32_1 : i32, i32, i32
  }
  func.func @transform_24(%arg0: i32) -> (i32, i32, i32) {
    %c0_i32 = arith.constant 0 : i32
    %c0_i32_0 = arith.constant 0 : i32
    %c0_i32_1 = arith.constant 0 : i32
    %c0_i32_2 = arith.constant 0 : i32
    return %c0_i32, %c0_i32_0, %c0_i32_1 : i32, i32, i32
  }
  func.func @transform_25(%arg0: i32) -> (i32, i32) {
    %c0_i32 = arith.constant 0 : i32
    %c0_i32_0 = arith.constant 0 : i32
    %c0_i32_1 = arith.constant 0 : i32
    return %c0_i32, %c0_i32_0 : i32, i32
  }
  func.func @transform_26(%arg0: i32) -> (i32, i32) {
    %c0_i32 = arith.constant 0 : i32
    %c0_i32_0 = arith.constant 0 : i32
    %c0_i32_1 = arith.constant 0 : i32
    return %c0_i32, %c0_i32_0 : i32, i32
  }
  func.func @transform_27(%arg0: i32) -> (i32, i32) {
    %c0_i32 = arith.constant 0 : i32
    %c0_i32_0 = arith.constant 0 : i32
    %c0_i32_1 = arith.constant 0 : i32
    return %c0_i32, %c0_i32_0 : i32, i32
  }
  func.func @transform_28(%arg0: i32) -> (i32, i32) {
    %c0_i32 = arith.constant 0 : i32
    %c0_i32_0 = arith.constant 0 : i32
    %c0_i32_1 = arith.constant 0 : i32
    return %c0_i32, %c0_i32_0 : i32, i32
  }
  func.func @transform_29(%arg0: i32) -> (i32, i32) {
    %c0_i32 = arith.constant 0 : i32
    %c0_i32_0 = arith.constant 0 : i32
    %c0_i32_1 = arith.constant 0 : i32
    return %c0_i32, %c0_i32_0 : i32, i32
  }
  func.func @transform_30(%arg0: i32) -> (i32, i32) {
    %c0_i32 = arith.constant 0 : i32
    %c0_i32_0 = arith.constant 0 : i32
    %c0_i32_1 = arith.constant 0 : i32
    return %c0_i32, %c0_i32_0 : i32, i32
  }
  func.func @transform_31(%arg0: i32) -> (i32, i32, i32) {
    %c0_i32 = arith.constant 0 : i32
    %c0_i32_0 = arith.constant 0 : i32
    %c0_i32_1 = arith.constant 0 : i32
    return %arg0, %c0_i32, %c0_i32_0 : i32, i32, i32
  }
  func.func @transform_32(%arg0: i32) -> (i32, i32, i32) {
    %c0_i32 = arith.constant 0 : i32
    %c0_i32_0 = arith.constant 0 : i32
    %c0_i32_1 = arith.constant 0 : i32
    return %arg0, %c0_i32, %c0_i32_0 : i32, i32, i32
  }
}

</mosaic_0001>

<llo_original>
// kernel: wav2vec2_forward.3
$region0: #{wav2vec2_forward.3}
  #allocation0 [shape = 'u32[]', space=smem, size = 0x4, offset = 0x4, fixed_abs, tag = 'smem constant byte address 0x4 - core index']
  #allocation1 [shape = 'u32[72,128]{1,0:T(1,128)}', space=vmem, size = 0x9000, scoped, tag = 'internal scratch']
  %s0 = inlined_call_operand.vmem [shape: f32[2,80,2], index: 0, kind: input, shape index: {}]
  %s1 = inlined_call_operand.vmem [shape: bf16[5,128], index: 1, kind: input, shape index: {}]
  %s2 = inlined_call_operand.vmem [shape: f32[2,78,128], index: 2, kind: output, shape index: {}]
  %s3 = sld [smem:[#allocation0]]
  $region41: #{wav2vec2_forward.3} parent=0
    _
  %s5 = ssub.s32 1, %s3
  %s6 = scalar_select 0, %s5, %s3
  loop: start=0, step=1, limit=4
  $region2: #{wav2vec2_forward.3} parent=0 // loop_pre_header
    _
  $region3: #{wav2vec2_forward.3} parent=0 // loop_header
    %s8 = sphi 0, %s12
    %p9 = scmp.ge.s32.totalorder %s8, 4
    %s18 = sphi 0, %s20
    %s21 = sphi 0, %s18
    %s22 = sphi 0, %s21
    %s38 = sphi 0, %s22
    %s42 = sphi 0, %s42
    %s44 = sphi 0, %s42
    %s45 = sphi 0, %s44
    %s59 = sphi 0, %s45
    %s65 = sphi 0, %s67
    %s68 = sphi 0, %s65
    %s69 = sphi 0, %s68
    %s85 = sphi 0, %s69
  $region4: #{wav2vec2_forward.3} parent=0 // loop_header_branch
    %11 = sbr.rel (%p9) target = $region8
  $region5: #{wav2vec2_forward.3} parent=0 // loop_body
    %s13 = ssub.s32 %s8, 1
    %s14 = ssub.s32 %s8, 2
    %s15 = sadd.s32 %s8, 1
    %s16 = ssub.s32 %s8, %s15
    %p17 = scmp.eq.s32.totalorder %s16, 0
    %s19 = sadd.s32 %s18, 1
    %s20 = scalar_select %p17, %s18, %s19
    %p23 = pneg %p17
    %p24 = scmp.eq.s32.totalorder %s8, 1
    %p25 = por %p23, %p24
    %p26 = scmp.ne.s32.totalorder %s18, %s21
    %p27 = scmp.eq.s32.totalorder %s8, 0
    %p28 = por %p26, %p27
    %p29 = scmp.ne.s32.totalorder %s18, %s21
    %p30 = scmp.eq.s32.totalorder %s13, 1
    %p31 = por %p29, %p30
    %p32 = scmp.ne.s32.totalorder %s21, %s22
    %p33 = scmp.eq.s32.totalorder %s13, 0
    %p34 = por %p32, %p33
    %p35 = scmp.ne.s32.totalorder %s21, %s22
    %p36 = scmp.eq.s32.totalorder %s14, 1
    %p37 = por %p35, %p36
    %p39 = scmp.ne.s32.totalorder %s22, %s38
    %p40 = scmp.eq.s32.totalorder %s14, 0
    %p41 = por %p39, %p40
    %s43 = sadd.s32 %s42, 1
    %p46 = scmp.eq.s32.totalorder %s8, 1
    %p47 = scmp.ne.s32.totalorder %s42, %s44
    %p48 = scmp.eq.s32.totalorder %s8, 0
    %p49 = por %p47, %p48
    %p50 = scmp.ne.s32.totalorder %s42, %s44
    %p51 = scmp.eq.s32.totalorder %s13, 1
    %p52 = por %p50, %p51
    %p53 = scmp.ne.s32.totalorder %s44, %s45
    %p54 = scmp.eq.s32.totalorder %s13, 0
    %p55 = por %p53, %p54
    %p56 = scmp.ne.s32.totalorder %s44, %s45
    %p57 = scmp.eq.s32.totalorder %s14, 1
    %p58 = por %p56, %p57
    %p60 = scmp.ne.s32.totalorder %s45, %s59
    %p61 = scmp.eq.s32.totalorder %s14, 0
    %p62 = por %p60, %p61
    %s63 = ssub.s32 %s8, %s15
    %p64 = scmp.eq.s32.totalorder %s63, 0
    %s66 = sadd.s32 %s65, 1
    %s67 = scalar_select %p64, %s65, %s66
    %p70 = pneg %p64
    %p71 = scmp.eq.s32.totalorder %s8, 1
    %p72 = por %p70, %p71
    %p73 = scmp.ne.s32.totalorder %s65, %s68
    %p74 = scmp.eq.s32.totalorder %s8, 0
    %p75 = por %p73, %p74
    %p76 = scmp.ne.s32.totalorder %s65, %s68
    %p77 = scmp.eq.s32.totalorder %s13, 1
    %p78 = por %p76, %p77
    %p79 = scmp.ne.s32.totalorder %s68, %s69
    %p80 = scmp.eq.s32.totalorder %s13, 0
    %p81 = por %p79, %p80
    %p82 = scmp.ne.s32.totalorder %s68, %s69
    %p83 = scmp.eq.s32.totalorder %s14, 1
    %p84 = por %p82, %p83
    %p86 = scmp.ne.s32.totalorder %s69, %s85
    %p87 = scmp.eq.s32.totalorder %s14, 0
    %p88 = por %p86, %p87
    %p89 = scmp.le.s32.totalorder 1, %s8
    %p90 = scmp.lt.s32.totalorder %s8, 3
    %p91 = pnand %p89, %p90
    %p92 = pneg %p91
    // Predicated region
    $region9: #{wav2vec2_forward.3} parent=5 // pred_check
      _
    $region10: #{wav2vec2_forward.3} parent=5 // pred_check_branch
      %94 = sbr.rel (%p91) target = $region12
    $region11: #{wav2vec2_forward.3} parent=5 // pred_region
      %s95 = ssub.s32 %s8, 1
      // Predicated region
      $region13: #{wav2vec2_forward.3} parent=11 // pred_check
        %p96 = pneg %p55
      $region14: #{wav2vec2_forward.3} parent=11 // pred_check_branch
        %98 = sbr.rel (%p96) target = $region16
      $region15: #{wav2vec2_forward.3} parent=11 // pred_region
        _
      $region16: #{wav2vec2_forward.3} parent=11 // pred_fallthru
        _
    $region12: #{wav2vec2_forward.3} parent=5 // pred_fallthru
      _
    %p99 = scmp.lt.s32.totalorder %s8, 2
    // Predicated region
    $region17: #{wav2vec2_forward.3} parent=5 // pred_check
      %p100 = pneg %p99
    $region18: #{wav2vec2_forward.3} parent=5 // pred_check_branch
      %102 = sbr.rel (%p100) target = $region20
    $region19: #{wav2vec2_forward.3} parent=5 // pred_region
      // Predicated region
      $region21: #{wav2vec2_forward.3} parent=19 // pred_check
        %p103 = pneg %p28
      $region22: #{wav2vec2_forward.3} parent=19 // pred_check_branch
        %105 = sbr.rel (%p103) target = $region24
      $region23: #{wav2vec2_forward.3} parent=19 // pred_region
        %p106 = scmp.lt.s32.totalorder %s8, 1
        %s107 = scalar_select %p106, %s8, 1
        %s108 = smul.addr %s107, 10
        %s109 = smul.addr %s108, 8
        %s110 = scalar_lea.vmem %s0, %s109
      $region24: #{wav2vec2_forward.3} parent=19 // pred_fallthru
        _
    $region20: #{wav2vec2_forward.3} parent=5 // pred_fallthru
      _
    %p111 = scmp.le.s32.totalorder 1, %s8
    %p112 = scmp.lt.s32.totalorder %s8, 3
    %p113 = pnand %p111, %p112
    %p114 = pneg %p113
    // Predicated region
    $region25: #{wav2vec2_forward.3} parent=5 // pred_check
      _
    $region26: #{wav2vec2_forward.3} parent=5 // pred_check_branch
      %116 = sbr.rel (%p113) target = $region28
    $region27: #{wav2vec2_forward.3} parent=5 // pred_region
      %s117 = ssub.s32 %s8, 1
      %p118 = scmp.lt.s32.totalorder %s13, 1
      %s119 = scalar_select %p118, %s13, 1
      %s120 = smul.addr %s119, 10
      %s121 = smul.addr %s120, 8
      %s122 = scalar_lea.vmem %s0, %s121
      %p123 = pneg %p34
      %p124 = pneg %p31
      %p125 = pneg %p55
      %p126 = pneg %p52
      %p127 = pneg %p81
      %p128 = pneg %p78
      %p129 = scmp.lt.s32.totalorder %s13, 1
      %s130 = scalar_select %p129, %s13, 1
      %s131 = smul.addr %s130, 10
      %s132 = smul.addr %s131, 8
      %s133 = scalar_lea.vmem %s2, %s132
      %p134 = scmp.lt.s32.totalorder %s13, 1
      %s135 = scalar_select %p134, %s13, 1
      %s136 = smul.addr %s135, 10
      %s137 = smul.addr %s136, 8
      %s138 = scalar_lea.vmem %s0, %s137
      %p139 = scmp.lt.s32.totalorder %s13, 1
      %s140 = scalar_select %p139, %s13, 1
      %s141 = smul.addr %s140, 10
      %s142 = smul.addr %s141, 8
      %s143 = scalar_lea.vmem %s2, %s142
      %v144 = vld [vmem:[%s138] sm:$0xff]
      %v145 = vld [vmem:[%s138 + $0x8] sm:$0xff]
      %v146 = vld [vmem:[%s138 + $0x10] sm:$0xff]
      %v147 = vld [vmem:[%s138 + $0x18] sm:$0xff]
      %v148 = vld [vmem:[%s138 + $0x20] sm:$0xff]
      %v149 = vld [vmem:[%s138 + $0x28] sm:$0xff]
      %v150 = vld [vmem:[%s138 + $0x30] sm:$0xff]
      %v151 = vld [vmem:[%s138 + $0x38] sm:$0xff]
      %v152 = vld [vmem:[%s138 + $0x40] sm:$0xff]
      %v153 = vld [vmem:[%s138 + $0x48] sm:$0xff]
      %v154 = vld [vmem:[%s1] sm:$0x1]
      %v155 = vunpack.c.l.bf16 %v154
      %157 = vset.pattern.permute.xlu0 0
      %158 = vperm.xlu0 %157, %v144
      %v159 = vpop.permute.xlu0 %158
      %162 = vset.pattern.permute.xlu0 0
      %163 = vperm.xlu0 %162, %v145
      %v164 = vpop.permute.xlu0 %163
      %167 = vset.pattern.permute.xlu0 0
      %168 = vperm.xlu0 %167, %v146
      %v169 = vpop.permute.xlu0 %168
      %172 = vset.pattern.permute.xlu0 0
      %173 = vperm.xlu0 %172, %v147
      %v174 = vpop.permute.xlu0 %173
      %177 = vset.pattern.permute.xlu0 0
      %178 = vperm.xlu0 %177, %v148
      %v179 = vpop.permute.xlu0 %178
      %182 = vset.pattern.permute.xlu0 0
      %183 = vperm.xlu0 %182, %v149
      %v184 = vpop.permute.xlu0 %183
      %187 = vset.pattern.permute.xlu0 0
      %188 = vperm.xlu0 %187, %v150
      %v189 = vpop.permute.xlu0 %188
      %192 = vset.pattern.permute.xlu0 0
      %193 = vperm.xlu0 %192, %v151
      %v194 = vpop.permute.xlu0 %193
      %197 = vset.pattern.permute.xlu0 0
      %198 = vperm.xlu0 %197, %v152
      %v199 = vpop.permute.xlu0 %198
      %202 = vset.pattern.permute.xlu0 0
      %203 = vperm.xlu0 %202, %v153
      %v204 = vpop.permute.xlu0 %203
      %v206 = vperm.slane %v155, 0
      %v207 = vmul.f32 %v159, %v206
      %v208 = vmul.f32 %v164, %v206
      %v209 = vmul.f32 %v169, %v206
      %v210 = vmul.f32 %v174, %v206
      %v211 = vmul.f32 %v179, %v206
      %v212 = vmul.f32 %v184, %v206
      %v213 = vmul.f32 %v189, %v206
      %v214 = vmul.f32 %v194, %v206
      %v215 = vmul.f32 %v199, %v206
      %v216 = vmul.f32 %v204, %v206
      %v217 = vadd.f32 %v207, 0.0
      %v218 = vadd.f32 %v208, 0.0
      %v219 = vadd.f32 %v209, 0.0
      %v220 = vadd.f32 %v210, 0.0
      %v221 = vadd.f32 %v211, 0.0
      %v222 = vadd.f32 %v212, 0.0
      %v223 = vadd.f32 %v213, 0.0
      %v224 = vadd.f32 %v214, 0.0
      %v225 = vadd.f32 %v215, 0.0
      %v226 = vadd.f32 %v216, 0.0
      %227 = vset.pattern.permute.xlu0 1
      %228 = vperm.xlu0 %227, %v144
      %v229 = vpop.permute.xlu0 %228
      %231 = vset.pattern.permute.xlu0 1
      %232 = vperm.xlu0 %231, %v145
      %v233 = vpop.permute.xlu0 %232
      %235 = vset.pattern.permute.xlu0 1
      %236 = vperm.xlu0 %235, %v146
      %v237 = vpop.permute.xlu0 %236
      %239 = vset.pattern.permute.xlu0 1
      %240 = vperm.xlu0 %239, %v147
      %v241 = vpop.permute.xlu0 %240
      %243 = vset.pattern.permute.xlu0 1
      %244 = vperm.xlu0 %243, %v148
      %v245 = vpop.permute.xlu0 %244
      %247 = vset.pattern.permute.xlu0 1
      %248 = vperm.xlu0 %247, %v149
      %v249 = vpop.permute.xlu0 %248
      %251 = vset.pattern.permute.xlu0 1
      %252 = vperm.xlu0 %251, %v150
      %v253 = vpop.permute.xlu0 %252
      %255 = vset.pattern.permute.xlu0 1
      %256 = vperm.xlu0 %255, %v151
      %v257 = vpop.permute.xlu0 %256
      %259 = vset.pattern.permute.xlu0 1
      %260 = vperm.xlu0 %259, %v152
      %v261 = vpop.permute.xlu0 %260
      %263 = vset.pattern.permute.xlu0 1
      %264 = vperm.xlu0 %263, %v153
      %v265 = vpop.permute.xlu0 %264
      %v267 = vperm.slane %v155, 1
      %v268 = vmul.f32 %v229, %v267
      %v269 = vmul.f32 %v233, %v267
      %v270 = vmul.f32 %v237, %v267
      %v271 = vmul.f32 %v241, %v267
      %v272 = vmul.f32 %v245, %v267
      %v273 = vmul.f32 %v249, %v267
      %v274 = vmul.f32 %v253, %v267
      %v275 = vmul.f32 %v257, %v267
      %v276 = vmul.f32 %v261, %v267
      %v277 = vmul.f32 %v265, %v267
      %v278 = vadd.f32 %v217, %v268
      %v279 = vadd.f32 %v218, %v269
      %v280 = vadd.f32 %v219, %v270
      %v281 = vadd.f32 %v220, %v271
      %v282 = vadd.f32 %v221, %v272
      %v283 = vadd.f32 %v222, %v273
      %v284 = vadd.f32 %v223, %v274
      %v285 = vadd.f32 %v224, %v275
      %v286 = vadd.f32 %v225, %v276
      %v287 = vadd.f32 %v226, %v277
      %v288 = vld [vmem:[%s1] sm:$0x2]
      %v289 = vunpack.c.l.bf16 %v288
      %v290 = vperm.slane %v289, 2
      %v291 = vmul.f32 %v159, %v290
      %v292 = vmul.f32 %v164, %v290
      %v293 = vmul.f32 %v169, %v290
      %v294 = vmul.f32 %v174, %v290
      %v295 = vmul.f32 %v179, %v290
      %v296 = vmul.f32 %v184, %v290
      %v297 = vmul.f32 %v189, %v290
      %v298 = vmul.f32 %v194, %v290
      %v299 = vmul.f32 %v199, %v290
      %v300 = vmul.f32 %v204, %v290
      %vm311 = vcmask 1046528
      %v312 = vrot.slane %v291, 1
      %v313 = vrot.slane %v292, 1
      %v314 = vsel %vm311, %v312, %v313
      %v315 = vrot.slane %v293, 1
      %v316 = vsel %vm311, %v313, %v315
      %v317 = vrot.slane %v294, 1
      %v318 = vsel %vm311, %v315, %v317
      %v319 = vrot.slane %v295, 1
      %v320 = vsel %vm311, %v317, %v319
      %v321 = vrot.slane %v296, 1
      %v322 = vsel %vm311, %v319, %v321
      %v323 = vrot.slane %v297, 1
      %v324 = vsel %vm311, %v321, %v323
      %v325 = vrot.slane %v298, 1
      %v326 = vsel %vm311, %v323, %v325
      %v327 = vrot.slane %v299, 1
      %v328 = vsel %vm311, %v325, %v327
      %v329 = vrot.slane %v300, 1
      %v330 = vsel %vm311, %v327, %v329
      %v341 = vadd.f32 %v278, %v314
      %v342 = vadd.f32 %v279, %v316
      %v343 = vadd.f32 %v280, %v318
      %v344 = vadd.f32 %v281, %v320
      %v345 = vadd.f32 %v282, %v322
      %v346 = vadd.f32 %v283, %v324
      %v347 = vadd.f32 %v284, %v326
      %v348 = vadd.f32 %v285, %v328
      %v349 = vadd.f32 %v286, %v330
      %v350 = vadd.f32 %v287, %v329
      %v351 = vperm.slane %v289, 3
      %v352 = vmul.f32 %v229, %v351
      %v353 = vmul.f32 %v233, %v351
      %v354 = vmul.f32 %v237, %v351
      %v355 = vmul.f32 %v241, %v351
      %v356 = vmul.f32 %v245, %v351
      %v357 = vmul.f32 %v249, %v351
      %v358 = vmul.f32 %v253, %v351
      %v359 = vmul.f32 %v257, %v351
      %v360 = vmul.f32 %v261, %v351
      %v361 = vmul.f32 %v265, %v351
      %v372 = vrot.slane %v352, 1
      %v373 = vrot.slane %v353, 1
      %v374 = vsel %vm311, %v372, %v373
      %v375 = vrot.slane %v354, 1
      %v376 = vsel %vm311, %v373, %v375
      %v377 = vrot.slane %v355, 1
      %v378 = vsel %vm311, %v375, %v377
      %v379 = vrot.slane %v356, 1
      %v380 = vsel %vm311, %v377, %v379
      %v381 = vrot.slane %v357, 1
      %v382 = vsel %vm311, %v379, %v381
      %v383 = vrot.slane %v358, 1
      %v384 = vsel %vm311, %v381, %v383
      %v385 = vrot.slane %v359, 1
      %v386 = vsel %vm311, %v383, %v385
      %v387 = vrot.slane %v360, 1
      %v388 = vsel %vm311, %v385, %v387
      %v389 = vrot.slane %v361, 1
      %v390 = vsel %vm311, %v387, %v389
      %v401 = vadd.f32 %v341, %v374
      %v402 = vadd.f32 %v342, %v376
      %v403 = vadd.f32 %v343, %v378
      %v404 = vadd.f32 %v344, %v380
      %v405 = vadd.f32 %v345, %v382
      %v406 = vadd.f32 %v346, %v384
      %v407 = vadd.f32 %v347, %v386
      %v408 = vadd.f32 %v348, %v388
      %v409 = vadd.f32 %v349, %v390
      %v410 = vadd.f32 %v350, %v389
      %v411 = vld [vmem:[%s1] sm:$0x4]
      %v412 = vunpack.c.l.bf16 %v411
      %v413 = vperm.slane %v412, 4
      %v414 = vmul.f32 %v159, %v413
      %v415 = vmul.f32 %v164, %v413
      %v416 = vmul.f32 %v169, %v413
      %v417 = vmul.f32 %v174, %v413
      %v418 = vmul.f32 %v179, %v413
      %v419 = vmul.f32 %v184, %v413
      %v420 = vmul.f32 %v189, %v413
      %v421 = vmul.f32 %v194, %v413
      %v422 = vmul.f32 %v199, %v413
      %v423 = vmul.f32 %v204, %v413
      %vm434 = vcmask 1045504
      %v435 = vrot.slane %v414, 2
      %v436 = vrot.slane %v415, 2
      %v437 = vsel %vm434, %v435, %v436
      %v438 = vrot.slane %v416, 2
      %v439 = vsel %vm434, %v436, %v438
      %v440 = vrot.slane %v417, 2
      %v441 = vsel %vm434, %v438, %v440
      %v442 = vrot.slane %v418, 2
      %v443 = vsel %vm434, %v440, %v442
      %v444 = vrot.slane %v419, 2
      %v445 = vsel %vm434, %v442, %v444
      %v446 = vrot.slane %v420, 2
      %v447 = vsel %vm434, %v444, %v446
      %v448 = vrot.slane %v421, 2
      %v449 = vsel %vm434, %v446, %v448
      %v450 = vrot.slane %v422, 2
      %v451 = vsel %vm434, %v448, %v450
      %v452 = vrot.slane %v423, 2
      %v453 = vsel %vm434, %v450, %v452
      %v464 = vadd.f32 %v401, %v437
      %v465 = vadd.f32 %v402, %v439
      %v466 = vadd.f32 %v403, %v441
      %v467 = vadd.f32 %v404, %v443
      %v468 = vadd.f32 %v405, %v445
      %v469 = vadd.f32 %v406, %v447
      %v470 = vadd.f32 %v407, %v449
      %v471 = vadd.f32 %v408, %v451
      %v472 = vadd.f32 %v409, %v453
      %v473 = vadd.f32 %v410, %v452
      %v474 = vmul.f32 %v464, %v464
      %v475 = vmul.f32 %v465, %v465
      %v476 = vmul.f32 %v466, %v466
      %v477 = vmul.f32 %v467, %v467
      %v478 = vmul.f32 %v468, %v468
      %v479 = vmul.f32 %v469, %v469
      %v480 = vmul.f32 %v470, %v470
      %v481 = vmul.f32 %v471, %v471
      %v482 = vmul.f32 %v472, %v472
      %v483 = vmul.f32 %v473, %v473
      %v484 = vmul.f32 %v464, %v474
      %v485 = vmul.f32 %v465, %v475
      %v486 = vmul.f32 %v466, %v476
      %v487 = vmul.f32 %v467, %v477
      %v488 = vmul.f32 %v468, %v478
      %v489 = vmul.f32 %v469, %v479
      %v490 = vmul.f32 %v470, %v480
      %v491 = vmul.f32 %v471, %v481
      %v492 = vmul.f32 %v472, %v482
      %v493 = vmul.f32 %v473, %v483
      %v494 = vmul.f32 %v484, 0.044715
      %v495 = vmul.f32 %v485, 0.044715
      %v496 = vmul.f32 %v486, 0.044715
      %v497 = vmul.f32 %v487, 0.044715
      %v498 = vmul.f32 %v488, 0.044715
      %v499 = vmul.f32 %v489, 0.044715
      %v500 = vmul.f32 %v490, 0.044715
      %v501 = vmul.f32 %v491, 0.044715
      %v502 = vmul.f32 %v492, 0.044715
      %v503 = vmul.f32 %v493, 0.044715
      %v504 = vadd.f32 %v464, %v494
      %v505 = vadd.f32 %v465, %v495
      %v506 = vadd.f32 %v466, %v496
      %v507 = vadd.f32 %v467, %v497
      %v508 = vadd.f32 %v468, %v498
      %v509 = vadd.f32 %v469, %v499
      %v510 = vadd.f32 %v470, %v500
      %v511 = vadd.f32 %v471, %v501
      %v512 = vadd.f32 %v472, %v502
      %v513 = vadd.f32 %v473, %v503
      %v514 = vmul.f32 %v504, 0.7978846
      %v515 = vmul.f32 %v505, 0.7978846
      %v516 = vmul.f32 %v506, 0.7978846
      %v517 = vmul.f32 %v507, 0.7978846
      %v518 = vmul.f32 %v508, 0.7978846
      %v519 = vmul.f32 %v509, 0.7978846
      %v520 = vmul.f32 %v510, 0.7978846
      %v521 = vmul.f32 %v511, 0.7978846
      %v522 = vmul.f32 %v512, 0.7978846
      %v523 = vmul.f32 %v513, 0.7978846
      %v524 = vtanh.pop %v514
      %v525 = vtanh.pop %v515
      %v526 = vtanh.pop %v516
      %v527 = vtanh.pop %v517
      %v528 = vtanh.pop %v518
      %v529 = vtanh.pop %v519
      %v530 = vtanh.pop %v520
      %v531 = vtanh.pop %v521
      %v532 = vtanh.pop %v522
      %v533 = vtanh.pop %v523
      %v534 = vadd.f32 %v524, 1.0
      %v535 = vadd.f32 %v525, 1.0
      %v536 = vadd.f32 %v526, 1.0
      %v537 = vadd.f32 %v527, 1.0
      %v538 = vadd.f32 %v528, 1.0
      %v539 = vadd.f32 %v529, 1.0
      %v540 = vadd.f32 %v530, 1.0
      %v541 = vadd.f32 %v531, 1.0
      %v542 = vadd.f32 %v532, 1.0
      %v543 = vadd.f32 %v533, 1.0
      %v544 = vmul.f32 %v534, 0.5
      %v545 = vmul.f32 %v535, 0.5
      %v546 = vmul.f32 %v536, 0.5
      %v547 = vmul.f32 %v537, 0.5
      %v548 = vmul.f32 %v538, 0.5
      %v549 = vmul.f32 %v539, 0.5
      %v550 = vmul.f32 %v540, 0.5
      %v551 = vmul.f32 %v541, 0.5
      %v552 = vmul.f32 %v542, 0.5
      %v553 = vmul.f32 %v543, 0.5
      %v554 = vmul.f32 %v464, %v544
      %v555 = vmul.f32 %v465, %v545
      %v556 = vmul.f32 %v466, %v546
      %v557 = vmul.f32 %v467, %v547
      %v558 = vmul.f32 %v468, %v548
      %v559 = vmul.f32 %v469, %v549
      %v560 = vmul.f32 %v470, %v550
      %v561 = vmul.f32 %v471, %v551
      %v562 = vmul.f32 %v472, %v552
      %v563 = vmul.f32 %v473, %v553
      %564 = vst [vmem:[%s143] sm:$0xff] %v554
      %565 = vst [vmem:[%s143 + $0x8] sm:$0xff] %v555
      %566 = vst [vmem:[%s143 + $0x10] sm:$0xff] %v556
      %567 = vst [vmem:[%s143 + $0x18] sm:$0xff] %v557
      %568 = vst [vmem:[%s143 + $0x20] sm:$0xff] %v558
      %569 = vst [vmem:[%s143 + $0x28] sm:$0xff] %v559
      %570 = vst [vmem:[%s143 + $0x30] sm:$0xff] %v560
      %571 = vst [vmem:[%s143 + $0x38] sm:$0xff] %v561
      %572 = vst [vmem:[%s143 + $0x40] sm:$0xff] %v562
      %573 = vst [vmem:[%s143 + $0x48] sm:$0x3f] %v563
      %p574 = scmp.lt.s32.totalorder %s13, 1
      %s575 = scalar_select %p574, %s13, 1
      %s576 = smul.addr %s575, 10
      %s577 = smul.addr %s576, 8
      %s578 = scalar_lea.vmem %s2, %s577
      // Predicated region
      $region29: #{wav2vec2_forward.3} parent=27 // pred_check
        %p579 = pneg %p78
      $region30: #{wav2vec2_forward.3} parent=27 // pred_check_branch
        %581 = sbr.rel (%p579) target = $region32
      $region31: #{wav2vec2_forward.3} parent=27 // pred_region
        _
      $region32: #{wav2vec2_forward.3} parent=27 // pred_fallthru
        _
    $region28: #{wav2vec2_forward.3} parent=5 // pred_fallthru
      _
    %p582 = scmp.le.s32.totalorder 2, %s8
    // Predicated region
    $region33: #{wav2vec2_forward.3} parent=5 // pred_check
      %p583 = pneg %p582
    $region34: #{wav2vec2_forward.3} parent=5 // pred_check_branch
      %585 = sbr.rel (%p583) target = $region36
    $region35: #{wav2vec2_forward.3} parent=5 // pred_region
      %s586 = ssub.s32 %s8, 2
      // Predicated region
      $region37: #{wav2vec2_forward.3} parent=35 // pred_check
        %p587 = pneg %p84
      $region38: #{wav2vec2_forward.3} parent=35 // pred_check_branch
        %589 = sbr.rel (%p587) target = $region40
      $region39: #{wav2vec2_forward.3} parent=35 // pred_region
        %p590 = scmp.lt.s32.totalorder %s14, 1
        %s591 = scalar_select %p590, %s14, 1
        %s592 = smul.addr %s591, 10
        %s593 = smul.addr %s592, 8
        %s594 = scalar_lea.vmem %s2, %s593
      $region40: #{wav2vec2_forward.3} parent=35 // pred_fallthru
        _
    $region36: #{wav2vec2_forward.3} parent=5 // pred_fallthru
      _
  $region6: #{wav2vec2_forward.3} parent=0 // loop_footer
    %s12 = sadd.s32 1, %s8
  $region7: #{wav2vec2_forward.3} parent=0 // loop_footer_branch
    %7 = sbr.rel target = $region3
  $region8: #{wav2vec2_forward.3} parent=0 // loop_exit
    _

// kernel: wav2vec2_forward.4
$region0: #{wav2vec2_forward.4}
  #allocation0 [shape = 'u32[]', space=smem, size = 0x4, offset = 0x4, fixed_abs, tag = 'smem constant byte address 0x4 - core index']
  #allocation1 [shape = 'u32[72,128]{1,0:T(1,128)}', space=vmem, size = 0x9000, scoped, tag = 'internal scratch']
  %s0 = inlined_call_operand.vmem [shape: f32[2,39,256], index: 0, kind: input, shape index: {}]
  %s1 = inlined_call_operand.hbm [shape: bf16[384,128], index: 1, kind: input, shape index: {}]
  %s2 = inlined_call_operand.vmem [shape: f32[2,38,128], index: 2, kind: output, shape index: {}]
  %s3 = sld [smem:[#allocation0]]
  $region45: #{wav2vec2_forward.4} parent=0
    _
  %s5 = ssub.s32 1, %s3
  %s6 = scalar_select 0, %s5, %s3
  $region1: #{wav2vec2_forward.4} parent=0
    #allocation2 [shape = 'u8[98304]{0}', space=vmem, size = 0x18000, scoped, tag = 'input window, operand 1, single buffered']
    #allocation3 [shape = 's32[2]{0}', space=sflag, size = 0x8, scoped, tag = 'scoped memory for wav2vec2_forward.4']
    %7 = vsyncpa [#allocation3], 0
    loop: start=0, step=1, limit=4
    $region2: #{wav2vec2_forward.4} parent=1 // loop_pre_header
      _
    $region3: #{wav2vec2_forward.4} parent=1 // loop_header
      %s9 = sphi 0, %s13
      %p10 = scmp.ge.s32.totalorder %s9, 4
      %s19 = sphi 0, %s21
      %s22 = sphi 0, %s19
      %s23 = sphi 0, %s22
      %s39 = sphi 0, %s23
      %s43 = sphi 0, %s43
      %s45 = sphi 0, %s43
      %s46 = sphi 0, %s45
      %s60 = sphi 0, %s46
      %s66 = sphi 0, %s68
      %s69 = sphi 0, %s66
      %s70 = sphi 0, %s69
      %s86 = sphi 0, %s70
    $region4: #{wav2vec2_forward.4} parent=1 // loop_header_branch
      %12 = sbr.rel (%p10) target = $region8
    $region5: #{wav2vec2_forward.4} parent=1 // loop_body
      %s14 = ssub.s32 %s9, 1
      %s15 = ssub.s32 %s9, 2
      %s16 = sadd.s32 %s9, 1
      %s17 = ssub.s32 %s9, %s16
      %p18 = scmp.eq.s32.totalorder %s17, 0
      %s20 = sadd.s32 %s19, 1
      %s21 = scalar_select %p18, %s19, %s20
      %p24 = pneg %p18
      %p25 = scmp.eq.s32.totalorder %s9, 1
      %p26 = por %p24, %p25
      %p27 = scmp.ne.s32.totalorder %s19, %s22
      %p28 = scmp.eq.s32.totalorder %s9, 0
      %p29 = por %p27, %p28
      %p30 = scmp.ne.s32.totalorder %s19, %s22
      %p31 = scmp.eq.s32.totalorder %s14, 1
      %p32 = por %p30, %p31
      %p33 = scmp.ne.s32.totalorder %s22, %s23
      %p34 = scmp.eq.s32.totalorder %s14, 0
      %p35 = por %p33, %p34
      %p36 = scmp.ne.s32.totalorder %s22, %s23
      %p37 = scmp.eq.s32.totalorder %s15, 1
      %p38 = por %p36, %p37
      %p40 = scmp.ne.s32.totalorder %s23, %s39
      %p41 = scmp.eq.s32.totalorder %s15, 0
      %p42 = por %p40, %p41
      %s44 = sadd.s32 %s43, 1
      %p47 = scmp.eq.s32.totalorder %s9, 1
      %p48 = scmp.ne.s32.totalorder %s43, %s45
      %p49 = scmp.eq.s32.totalorder %s9, 0
      %p50 = por %p48, %p49
      %p51 = scmp.ne.s32.totalorder %s43, %s45
      %p52 = scmp.eq.s32.totalorder %s14, 1
      %p53 = por %p51, %p52
      %p54 = scmp.ne.s32.totalorder %s45, %s46
      %p55 = scmp.eq.s32.totalorder %s14, 0
      %p56 = por %p54, %p55
      %p57 = scmp.ne.s32.totalorder %s45, %s46
      %p58 = scmp.eq.s32.totalorder %s15, 1
      %p59 = por %p57, %p58
      %p61 = scmp.ne.s32.totalorder %s46, %s60
      %p62 = scmp.eq.s32.totalorder %s15, 0
      %p63 = por %p61, %p62
      %s64 = ssub.s32 %s9, %s16
      %p65 = scmp.eq.s32.totalorder %s64, 0
      %s67 = sadd.s32 %s66, 1
      %s68 = scalar_select %p65, %s66, %s67
      %p71 = pneg %p65
      %p72 = scmp.eq.s32.totalorder %s9, 1
      %p73 = por %p71, %p72
      %p74 = scmp.ne.s32.totalorder %s66, %s69
      %p75 = scmp.eq.s32.totalorder %s9, 0
      %p76 = por %p74, %p75
      %p77 = scmp.ne.s32.totalorder %s66, %s69
      %p78 = scmp.eq.s32.totalorder %s14, 1
      %p79 = por %p77, %p78
      %p80 = scmp.ne.s32.totalorder %s69, %s70
      %p81 = scmp.eq.s32.totalorder %s14, 0
      %p82 = por %p80, %p81
      %p83 = scmp.ne.s32.totalorder %s69, %s70
      %p84 = scmp.eq.s32.totalorder %s15, 1
      %p85 = por %p83, %p84
      %p87 = scmp.ne.s32.totalorder %s70, %s86
      %p88 = scmp.eq.s32.totalorder %s15, 0
      %p89 = por %p87, %p88
      %p90 = scmp.le.s32.totalorder 1, %s9
      %p91 = scmp.lt.s32.totalorder %s9, 3
      %p92 = pnand %p90, %p91
      %p93 = pneg %p92
      // Predicated region
      $region9: #{wav2vec2_forward.4} parent=5 // pred_check
        _
      $region10: #{wav2vec2_forward.4} parent=5 // pred_check_branch
        %95 = sbr.rel (%p92) target = $region12
      $region11: #{wav2vec2_forward.4} parent=5 // pred_region
        %s96 = ssub.s32 %s9, 1
        // Predicated region
        $region13: #{wav2vec2_forward.4} parent=11 // pred_check
          %p97 = pneg %p56
        $region14: #{wav2vec2_forward.4} parent=11 // pred_check_branch
          %99 = sbr.rel (%p97) target = $region16
        $region15: #{wav2vec2_forward.4} parent=11 // pred_region
          %101 = vsyncadd [#allocation3], 0
          %s102 = sshll.u32 %s1, 4
          %s103 = int_to_ptr.hbm [resolvable:$true] %s102
          %s104 = sshll.u32 [#allocation2], 4
          %s105 = int_to_ptr.vmem [resolvable:$true] %s104
          %110 = dma.hbm_to_vmem [thread:$0]  %s103, 3072, %s105, [#allocation3], 64, 64, 4
        $region16: #{wav2vec2_forward.4} parent=11 // pred_fallthru
          _
      $region12: #{wav2vec2_forward.4} parent=5 // pred_fallthru
        _
      %p111 = scmp.lt.s32.totalorder %s9, 2
      // Predicated region
      $region17: #{wav2vec2_forward.4} parent=5 // pred_check
        %p112 = pneg %p111
      $region18: #{wav2vec2_forward.4} parent=5 // pred_check_branch
        %114 = sbr.rel (%p112) target = $region20
      $region19: #{wav2vec2_forward.4} parent=5 // pred_region
        // Predicated region
        $region21: #{wav2vec2_forward.4} parent=19 // pred_check
          %p115 = pneg %p29
        $region22: #{wav2vec2_forward.4} parent=19 // pred_check_branch
          %117 = sbr.rel (%p115) target = $region24
        $region23: #{wav2vec2_forward.4} parent=19 // pred_region
          %p118 = scmp.lt.s32.totalorder %s9, 1
          %s119 = scalar_select %p118, %s9, 1
          %s120 = smul.addr %s119, 10
          %s121 = smul.addr %s120, 8
          %s122 = scalar_lea.vmem %s0, %s121
        $region24: #{wav2vec2_forward.4} parent=19 // pred_fallthru
          _
      $region20: #{wav2vec2_forward.4} parent=5 // pred_fallthru
        _
      %p123 = scmp.le.s32.totalorder 1, %s9
      %p124 = scmp.lt.s32.totalorder %s9, 3
      %p125 = pnand %p123, %p124
      %p126 = pneg %p125
      // Predicated region
      $region25: #{wav2vec2_forward.4} parent=5 // pred_check
        _
      $region26: #{wav2vec2_forward.4} parent=5 // pred_check_branch
        %128 = sbr.rel (%p125) target = $region28
      $region27: #{wav2vec2_forward.4} parent=5 // pred_region
        %s129 = ssub.s32 %s9, 1
        // Predicated region
        $region29: #{wav2vec2_forward.4} parent=27 // pred_check
          %p130 = pneg %p56
        $region30: #{wav2vec2_forward.4} parent=27 // pred_check_branch
          %132 = sbr.rel (%p130) target = $region32
        $region31: #{wav2vec2_forward.4} parent=27 // pred_region
          %134 = dma.done [#allocation3], 3072
        $region32: #{wav2vec2_forward.4} parent=27 // pred_fallthru
          _
        %p135 = scmp.lt.s32.totalorder %s14, 1
        %s136 = scalar_select %p135, %s14, 1
        %s137 = smul.addr %s136, 10
        %s138 = smul.addr %s137, 8
        %s139 = scalar_lea.vmem %s0, %s138
        %p140 = pneg %p35
        %p141 = pneg %p32
        %p142 = pneg %p56
        %p143 = pneg %p53
        %p144 = pneg %p82
        %p145 = pneg %p79
        %p146 = scmp.lt.s32.totalorder %s14, 1
        %s147 = scalar_select %p146, %s14, 1
        %s148 = smul.addr %s147, 5
        %s149 = smul.addr %s148, 8
        %s150 = scalar_lea.vmem %s2, %s149
        %p151 = scmp.lt.s32.totalorder %s14, 1
        %s152 = scalar_select %p151, %s14, 1
        %s153 = smul.addr %s152, 10
        %s154 = smul.addr %s153, 8
        %s155 = scalar_lea.vmem %s0, %s154
        %p156 = scmp.lt.s32.totalorder %s14, 1
        %s157 = scalar_select %p156, %s14, 1
        %s158 = smul.addr %s157, 5
        %s159 = smul.addr %s158, 8
        %s160 = scalar_lea.vmem %s2, %s159
        %v161 = vld [vmem:[%s155] sm:$0xff]
        %v162 = vld [vmem:[%s155 + $0x8] sm:$0xff]
        %v163 = vld [vmem:[%s155 + $0x10] sm:$0xff]
        %v164 = vld [vmem:[%s155 + $0x18] sm:$0xff]
        %v165 = vld [vmem:[%s155 + $0x20] sm:$0xff]
        %v166 = vld [vmem:[%s155 + $0x28] sm:$0xff]
        %v167 = vld [vmem:[%s155 + $0x30] sm:$0xff]
        %v168 = vld [vmem:[%s155 + $0x38] sm:$0xff]
        %v169 = vld [vmem:[%s155 + $0x40] sm:$0x7f]
        %v170 = vld [vmem:[%s155 + $0x48] sm:$0x7f]
        %v171 = vld [vmem:[#allocation2] sm:$0xf]
        %v172 = vld [vmem:[#allocation2 + $0x4] sm:$0xf]
        %v173 = vld [vmem:[#allocation2 + $0x8] sm:$0xf]
        %v174 = vld [vmem:[#allocation2 + $0xc] sm:$0xf]
        %v175 = vld [vmem:[#allocation2 + $0x10] sm:$0xf]
        %v176 = vld [vmem:[#allocation2 + $0x14] sm:$0xf]
        %v177 = vld [vmem:[#allocation2 + $0x18] sm:$0xf]
        %v178 = vld [vmem:[#allocation2 + $0x1c] sm:$0xf]
        %v179 = vld [vmem:[#allocation2 + $0x20] sm:$0xf]
        %v180 = vld [vmem:[#allocation2 + $0x24] sm:$0xf]
        %v181 = vld [vmem:[#allocation2 + $0x28] sm:$0xf]
        %v182 = vld [vmem:[#allocation2 + $0x2c] sm:$0xf]
        %v183 = vld [vmem:[#allocation2 + $0x30] sm:$0xf]
        %v184 = vld [vmem:[#allocation2 + $0x34] sm:$0xf]
        %v185 = vld [vmem:[#allocation2 + $0x38] sm:$0xf]
        %v186 = vld [vmem:[#allocation2 + $0x3c] sm:$0xf]
        %v187 = vpack.c.bf16 %v163, %v161
        %v188 = vpack.c.bf16 %v167, %v165
        %v189 = vpack.c.bf16 %v169, %v169
        %v190 = vld [vmem:[#allocation2 + $0x40] sm:$0xf]
        %v191 = vld [vmem:[#allocation2 + $0x44] sm:$0xf]
        %v192 = vld [vmem:[#allocation2 + $0x48] sm:$0xf]
        %v193 = vld [vmem:[#allocation2 + $0x4c] sm:$0xf]
        %v194 = vld [vmem:[#allocation2 + $0x50] sm:$0xf]
        %v195 = vld [vmem:[#allocation2 + $0x54] sm:$0xf]
        %v196 = vld [vmem:[#allocation2 + $0x58] sm:$0xf]
        %v197 = vld [vmem:[#allocation2 + $0x5c] sm:$0xf]
        %v198 = vld [vmem:[#allocation2 + $0x60] sm:$0xf]
        %v199 = vld [vmem:[#allocation2 + $0x64] sm:$0xf]
        %v200 = vld [vmem:[#allocation2 + $0x68] sm:$0xf]
        %v201 = vld [vmem:[#allocation2 + $0x6c] sm:$0xf]
        %v202 = vld [vmem:[#allocation2 + $0x70] sm:$0xf]
        %v203 = vld [vmem:[#allocation2 + $0x74] sm:$0xf]
        %v204 = vld [vmem:[#allocation2 + $0x78] sm:$0xf]
        %v205 = vld [vmem:[#allocation2 + $0x7c] sm:$0xf]
        %v206 = vpack.c.bf16 %v164, %v162
        %v207 = vpack.c.bf16 %v168, %v166
        %v208 = vpack.c.bf16 %v170, %v170
        %v225 = vunpack.c.l.b16 %v190
        %v226 = vunpack.c.l.b16 %v191
        %v227 = vunpack.c.l.b16 %v192
        %v228 = vunpack.c.l.b16 %v193
        %v229 = vunpack.c.l.b16 %v194
        %v230 = vunpack.c.l.b16 %v195
        %v231 = vunpack.c.l.b16 %v196
        %v232 = vunpack.c.l.b16 %v197
        %v233 = vunpack.c.l.b16 %v198
        %v234 = vunpack.c.l.b16 %v199
        %v235 = vunpack.c.l.b16 %v200
        %v236 = vunpack.c.l.b16 %v201
        %v237 = vunpack.c.l.b16 %v202
        %v238 = vunpack.c.l.b16 %v203
        %v239 = vunpack.c.l.b16 %v204
        %v240 = vunpack.c.l.b16 %v205
        %v241 = vpack.c.b16 %v226, %v225
        %v242 = vpack.c.b16 %v228, %v227
        %v243 = vpack.c.b16 %v230, %v229
        %v244 = vpack.c.b16 %v232, %v231
        %v245 = vpack.c.b16 %v234, %v233
        %v246 = vpack.c.b16 %v236, %v235
        %v247 = vpack.c.b16 %v238, %v237
        %v248 = vpack.c.b16 %v240, %v239
        %257 = vmatpush.bf16.msra.mxu0 %v248
        %258 = vmatpush.bf16.msra.mxu0 %v247
        %259 = vmatpush.bf16.msra.mxu0 %v246
        %260 = vmatpush.bf16.msra.mxu0 %v245
        %261 = vmatpush.bf16.msra.mxu0 %v244
        %262 = vmatpush.bf16.msra.mxu0 %v243
        %263 = vmatpush.bf16.msra.mxu0 %v242
        %264 = vmatpush.bf16.msra.mxu0 %v241
        %265 = vmatmul.bf16.gmra.mxu0 %v206
        %v266 = vpop.f32.mrf.mxu0
        %v267 = vadd.f32 0.0, %v266
        %v268 = vpop.f32.mrf.mxu0
        %v269 = vadd.f32 0.0, %v268
        %270 = vmatmul.bf16.gmra.mxu0 %v207
        %v271 = vpop.f32.mrf.mxu0
        %v272 = vadd.f32 0.0, %v271
        %v273 = vpop.f32.mrf.mxu0
        %v274 = vadd.f32 0.0, %v273
        %275 = vmatmul.bf16.gmra.mxu0 %v208
        %v276 = vpop.f32.mrf.mxu0
        %v277 = vadd.f32 0.0, %v276
        %v278 = vpop.f32.mrf.mxu0
        %279 = vdwg.mxu0
        %v296 = vunpack.c.l.b16 %v171
        %v297 = vunpack.c.l.b16 %v172
        %v298 = vunpack.c.l.b16 %v173
        %v299 = vunpack.c.l.b16 %v174
        %v300 = vunpack.c.l.b16 %v175
        %v301 = vunpack.c.l.b16 %v176
        %v302 = vunpack.c.l.b16 %v177
        %v303 = vunpack.c.l.b16 %v178
        %v304 = vunpack.c.l.b16 %v179
        %v305 = vunpack.c.l.b16 %v180
        %v306 = vunpack.c.l.b16 %v181
        %v307 = vunpack.c.l.b16 %v182
        %v308 = vunpack.c.l.b16 %v183
        %v309 = vunpack.c.l.b16 %v184
        %v310 = vunpack.c.l.b16 %v185
        %v311 = vunpack.c.l.b16 %v186
        %v312 = vpack.c.b16 %v297, %v296
        %v313 = vpack.c.b16 %v299, %v298
        %v314 = vpack.c.b16 %v301, %v300
        %v315 = vpack.c.b16 %v303, %v302
        %v316 = vpack.c.b16 %v305, %v304
        %v317 = vpack.c.b16 %v307, %v306
        %v318 = vpack.c.b16 %v309, %v308
        %v319 = vpack.c.b16 %v311, %v310
        %328 = vmatpush.bf16.msra.mxu0 %v319
        %329 = vmatpush.bf16.msra.mxu0 %v318
        %330 = vmatpush.bf16.msra.mxu0 %v317
        %331 = vmatpush.bf16.msra.mxu0 %v316
        %332 = vmatpush.bf16.msra.mxu0 %v315
        %333 = vmatpush.bf16.msra.mxu0 %v314
        %334 = vmatpush.bf16.msra.mxu0 %v313
        %335 = vmatpush.bf16.msra.mxu0 %v312
        %336 = vmatmul.bf16.gmra.mxu0 %v187
        %v337 = vpop.f32.mrf.mxu0
        %v338 = vadd.f32 %v267, %v337
        %v339 = vpop.f32.mrf.mxu0
        %v340 = vadd.f32 %v269, %v339
        %341 = vmatmul.bf16.gmra.mxu0 %v188
        %v342 = vpop.f32.mrf.mxu0
        %v343 = vadd.f32 %v272, %v342
        %v344 = vpop.f32.mrf.mxu0
        %v345 = vadd.f32 %v274, %v344
        %346 = vmatmul.bf16.gmra.mxu0 %v189
        %v347 = vpop.f32.mrf.mxu0
        %v348 = vadd.f32 %v277, %v347
        %v349 = vpop.f32.mrf.mxu0
        %350 = vdwg.mxu0
        %v351 = vld [vmem:[#allocation2 + $0x80] sm:$0xf]
        %v352 = vld [vmem:[#allocation2 + $0x84] sm:$0xf]
        %v353 = vld [vmem:[#allocation2 + $0x88] sm:$0xf]
        %v354 = vld [vmem:[#allocation2 + $0x8c] sm:$0xf]
        %v355 = vld [vmem:[#allocation2 + $0x90] sm:$0xf]
        %v356 = vld [vmem:[#allocation2 + $0x94] sm:$0xf]
        %v357 = vld [vmem:[#allocation2 + $0x98] sm:$0xf]
        %v358 = vld [vmem:[#allocation2 + $0x9c] sm:$0xf]
        %v359 = vld [vmem:[#allocation2 + $0xa0] sm:$0xf]
        %v360 = vld [vmem:[#allocation2 + $0xa4] sm:$0xf]
        %v361 = vld [vmem:[#allocation2 + $0xa8] sm:$0xf]
        %v362 = vld [vmem:[#allocation2 + $0xac] sm:$0xf]
        %v363 = vld [vmem:[#allocation2 + $0xb0] sm:$0xf]
        %v364 = vld [vmem:[#allocation2 + $0xb4] sm:$0xf]
        %v365 = vld [vmem:[#allocation2 + $0xb8] sm:$0xf]
        %v366 = vld [vmem:[#allocation2 + $0xbc] sm:$0xf]
        %vm367 = vsmask.f32 7424
        %v369 = vshrl.u32 %v187, 16
        %v371 = vshll.u32 %v187, 16
        %v373 = vrot.slane %v371, 1
        %v374 = vor.u32 %v369, %v373
        %v376 = vshll.u32 %v188, 16
        %v378 = vrot.slane %v376, 1
        %v379 = vsel %vm367, %v374, %v378
        %v380 = vshrl.u32 %v188, 16
        %v382 = vor.u32 %v380, %v378
        %v384 = vshll.u32 %v189, 16
        %v386 = vrot.slane %v384, 1
        %v387 = vsel %vm367, %v382, %v386
        %v388 = vshrl.u32 %v189, 16
        %v390 = vor.u32 %v388, %v386
        %v410 = vunpack.c.l.b16 %v351
        %v411 = vunpack.c.l.b16 %v352
        %v412 = vunpack.c.l.b16 %v353
        %v413 = vunpack.c.l.b16 %v354
        %v414 = vunpack.c.l.b16 %v355
        %v415 = vunpack.c.l.b16 %v356
        %v416 = vunpack.c.l.b16 %v357
        %v417 = vunpack.c.l.b16 %v358
        %v418 = vunpack.c.l.b16 %v359
        %v419 = vunpack.c.l.b16 %v360
        %v420 = vunpack.c.l.b16 %v361
        %v421 = vunpack.c.l.b16 %v362
        %v422 = vunpack.c.l.b16 %v363
        %v423 = vunpack.c.l.b16 %v364
        %v424 = vunpack.c.l.b16 %v365
        %v425 = vunpack.c.l.b16 %v366
        %v426 = vpack.c.b16 %v411, %v410
        %v427 = vpack.c.b16 %v413, %v412
        %v428 = vpack.c.b16 %v415, %v414
        %v429 = vpack.c.b16 %v417, %v416
        %v430 = vpack.c.b16 %v419, %v418
        %v431 = vpack.c.b16 %v421, %v420
        %v432 = vpack.c.b16 %v423, %v422
        %v433 = vpack.c.b16 %v425, %v424
        %442 = vmatpush.bf16.msra.mxu0 %v433
        %443 = vmatpush.bf16.msra.mxu0 %v432
        %444 = vmatpush.bf16.msra.mxu0 %v431
        %445 = vmatpush.bf16.msra.mxu0 %v430
        %446 = vmatpush.bf16.msra.mxu0 %v429
        %447 = vmatpush.bf16.msra.mxu0 %v428
        %448 = vmatpush.bf16.msra.mxu0 %v427
        %449 = vmatpush.bf16.msra.mxu0 %v426
        %450 = vmatmul.bf16.gmra.mxu0 %v379
        %v451 = vpop.f32.mrf.mxu0
        %v452 = vadd.f32 0.0, %v451
        %v453 = vpop.f32.mrf.mxu0
        %v454 = vadd.f32 0.0, %v453
        %455 = vmatmul.bf16.gmra.mxu0 %v387
        %v456 = vpop.f32.mrf.mxu0
        %v457 = vadd.f32 0.0, %v456
        %v458 = vpop.f32.mrf.mxu0
        %v459 = vadd.f32 0.0, %v458
        %460 = vmatmul.bf16.gmra.mxu0 %v390
        %v461 = vpop.f32.mrf.mxu0
        %v462 = vadd.f32 0.0, %v461
        %v463 = vpop.f32.mrf.mxu0
        %464 = vdwg.mxu0
        %v465 = vadd.f32 %v338, %v452
        %v466 = vadd.f32 %v340, %v454
        %v467 = vadd.f32 %v343, %v457
        %v468 = vadd.f32 %v345, %v459
        %v469 = vadd.f32 %v348, %v462
        %v470 = vmul.f32 %v465, %v465
        %v471 = vmul.f32 %v466, %v466
        %v472 = vmul.f32 %v467, %v467
        %v473 = vmul.f32 %v468, %v468
        %v474 = vmul.f32 %v469, %v469
        %v475 = vmul.f32 %v465, %v470
        %v476 = vmul.f32 %v466, %v471
        %v477 = vmul.f32 %v467, %v472
        %v478 = vmul.f32 %v468, %v473
        %v479 = vmul.f32 %v469, %v474
        %v480 = vmul.f32 %v475, 0.044715
        %v481 = vmul.f32 %v476, 0.044715
        %v482 = vmul.f32 %v477, 0.044715
        %v483 = vmul.f32 %v478, 0.044715
        %v484 = vmul.f32 %v479, 0.044715
        %v485 = vadd.f32 %v465, %v480
        %v486 = vadd.f32 %v466, %v481
        %v487 = vadd.f32 %v467, %v482
        %v488 = vadd.f32 %v468, %v483
        %v489 = vadd.f32 %v469, %v484
        %v490 = vmul.f32 %v485, 0.7978846
        %v491 = vmul.f32 %v486, 0.7978846
        %v492 = vmul.f32 %v487, 0.7978846
        %v493 = vmul.f32 %v488, 0.7978846
        %v494 = vmul.f32 %v489, 0.7978846
        %v495 = vtanh.pop %v490
        %v496 = vtanh.pop %v491
        %v497 = vtanh.pop %v492
        %v498 = vtanh.pop %v493
        %v499 = vtanh.pop %v494
        %v500 = vadd.f32 %v495, 1.0
        %v501 = vadd.f32 %v496, 1.0
        %v502 = vadd.f32 %v497, 1.0
        %v503 = vadd.f32 %v498, 1.0
        %v504 = vadd.f32 %v499, 1.0
        %v505 = vmul.f32 %v500, 0.5
        %v506 = vmul.f32 %v501, 0.5
        %v507 = vmul.f32 %v502, 0.5
        %v508 = vmul.f32 %v503, 0.5
        %v509 = vmul.f32 %v504, 0.5
        %v510 = vmul.f32 %v465, %v505
        %v511 = vmul.f32 %v466, %v506
        %v512 = vmul.f32 %v467, %v507
        %v513 = vmul.f32 %v468, %v508
        %v514 = vmul.f32 %v469, %v509
        %515 = vst [vmem:[%s160] sm:$0xff] %v510
        %516 = vst [vmem:[%s160 + $0x8] sm:$0xff] %v511
        %517 = vst [vmem:[%s160 + $0x10] sm:$0xff] %v512
        %518 = vst [vmem:[%s160 + $0x18] sm:$0xff] %v513
        %519 = vst [vmem:[%s160 + $0x20] sm:$0x3f] %v514
        %p520 = scmp.lt.s32.totalorder %s14, 1
        %s521 = scalar_select %p520, %s14, 1
        %s522 = smul.addr %s521, 5
        %s523 = smul.addr %s522, 8
        %s524 = scalar_lea.vmem %s2, %s523
        // Predicated region
        $region33: #{wav2vec2_forward.4} parent=27 // pred_check
          %p525 = pneg %p79
        $region34: #{wav2vec2_forward.4} parent=27 // pred_check_branch
          %527 = sbr.rel (%p525) target = $region36
        $region35: #{wav2vec2_forward.4} parent=27 // pred_region
          _
        $region36: #{wav2vec2_forward.4} parent=27 // pred_fallthru
          _
      $region28: #{wav2vec2_forward.4} parent=5 // pred_fallthru
        _
      %p528 = scmp.le.s32.totalorder 2, %s9
      // Predicated region
      $region37: #{wav2vec2_forward.4} parent=5 // pred_check
        %p529 = pneg %p528
      $region38: #{wav2vec2_forward.4} parent=5 // pred_check_branch
        %531 = sbr.rel (%p529) target = $region40
      $region39: #{wav2vec2_forward.4} parent=5 // pred_region
        %s532 = ssub.s32 %s9, 2
        // Predicated region
        $region41: #{wav2vec2_forward.4} parent=39 // pred_check
          %p533 = pneg %p85
        $region42: #{wav2vec2_forward.4} parent=39 // pred_check_branch
          %535 = sbr.rel (%p533) target = $region44
        $region43: #{wav2vec2_forward.4} parent=39 // pred_region
          %p536 = scmp.lt.s32.totalorder %s15, 1
          %s537 = scalar_select %p536, %s15, 1
          %s538 = smul.addr %s537, 5
          %s539 = smul.addr %s538, 8
          %s540 = scalar_lea.vmem %s2, %s539
        $region44: #{wav2vec2_forward.4} parent=39 // pred_fallthru
          _
      $region40: #{wav2vec2_forward.4} parent=5 // pred_fallthru
        _
    $region6: #{wav2vec2_forward.4} parent=1 // loop_footer
      %s13 = sadd.s32 1, %s9
    $region7: #{wav2vec2_forward.4} parent=1 // loop_footer_branch
      %8 = sbr.rel target = $region3
    $region8: #{wav2vec2_forward.4} parent=1 // loop_exit
      _
    %541 = vsyncpa [#allocation3], 1
    %s542 = scalar_lea.sflag [#allocation3], 1
    %543 = vsyncpa %s542, 1

// kernel: wav2vec2_forward.5
$region0: #{wav2vec2_forward.5}
  #allocation0 [shape = 'u32[]', space=smem, size = 0x4, offset = 0x4, fixed_abs, tag = 'smem constant byte address 0x4 - core index']
  #allocation1 [shape = 'u32[72,128]{1,0:T(1,128)}', space=vmem, size = 0x9000, scoped, tag = 'internal scratch']
  #allocation2 [shape = 'f32[20,128]{1,0:T(8,128)}', space=vmem, size = 0x3000, scoped, tag = 'scratch operand']
  #allocation3 [shape = 'f32[1,1]{1,0:T(1,128)S(1)}', space=vmem, size = 0x200, scoped, tag = 'scoped memory for wav2vec2_forward.5']
  %s0 = inlined_call_operand.smem [shape: u32[33], index: -1, kind: input, shape index: {}]
  %s1 = sld [smem:[%s0]]
  %s2 = scalar_lea.smem %s0, 1
  %s3 = sld [smem:[%s2]]
  %s4 = scalar_lea.smem %s0, 2
  %s5 = sld [smem:[%s4]]
  %s6 = scalar_lea.smem %s0, 3
  %s7 = sld [smem:[%s6]]
  %s8 = scalar_lea.smem %s0, 4
  %s9 = sld [smem:[%s8]]
  %s10 = scalar_lea.smem %s0, 5
  %s11 = sld [smem:[%s10]]
  %s12 = scalar_lea.smem %s0, 6
  %s13 = sld [smem:[%s12]]
  %s14 = scalar_lea.smem %s0, 7
  %s15 = sld [smem:[%s14]]
  %s16 = scalar_lea.smem %s0, 8
  %s17 = sld [smem:[%s16]]
  %s18 = scalar_lea.smem %s0, 9
  %s19 = sld [smem:[%s18]]
  %s20 = scalar_lea.smem %s0, 10
  %s21 = sld [smem:[%s20]]
  %s22 = scalar_lea.smem %s0, 11
  %s23 = sld [smem:[%s22]]
  %s24 = scalar_lea.smem %s0, 12
  %s25 = sld [smem:[%s24]]
  %s26 = scalar_lea.smem %s0, 13
  %s27 = sld [smem:[%s26]]
  %s28 = scalar_lea.smem %s0, 14
  %s29 = sld [smem:[%s28]]
  %s30 = scalar_lea.smem %s0, 15
  %s31 = sld [smem:[%s30]]
  %s32 = scalar_lea.smem %s0, 16
  %s33 = sld [smem:[%s32]]
  %s34 = scalar_lea.smem %s0, 17
  %s35 = sld [smem:[%s34]]
  %s36 = scalar_lea.smem %s0, 18
  %s37 = sld [smem:[%s36]]
  %s38 = scalar_lea.smem %s0, 19
  %s39 = sld [smem:[%s38]]
  %s40 = scalar_lea.smem %s0, 20
  %s41 = sld [smem:[%s40]]
  %s42 = scalar_lea.smem %s0, 21
  %s43 = sld [smem:[%s42]]
  %s44 = scalar_lea.smem %s0, 22
  %s45 = sld [smem:[%s44]]
  %s46 = scalar_lea.smem %s0, 23
  %s47 = sld [smem:[%s46]]
  %s48 = scalar_lea.smem %s0, 24
  %s49 = sld [smem:[%s48]]
  %s50 = scalar_lea.smem %s0, 25
  %s51 = sld [smem:[%s50]]
  %s52 = scalar_lea.smem %s0, 26
  %s53 = sld [smem:[%s52]]
  %s54 = scalar_lea.smem %s0, 27
  %s55 = sld [smem:[%s54]]
  %s56 = scalar_lea.smem %s0, 28
  %s57 = sld [smem:[%s56]]
  %s58 = scalar_lea.smem %s0, 29
  %s59 = sld [smem:[%s58]]
  %s60 = scalar_lea.smem %s0, 30
  %s61 = sld [smem:[%s60]]
  %s62 = scalar_lea.smem %s0, 31
  %s63 = sld [smem:[%s62]]
  %s64 = scalar_lea.smem %s0, 32
  %s65 = sld [smem:[%s64]]
  %66 = xla_tuple %s63, %s65
  %s67 = sld [smem:[#allocation0]]
  $region233: #{wav2vec2_forward.5} parent=0
    _
  %s69 = ssub.s32 1, %s67
  %s70 = scalar_select 0, %s69, %s67
  %v71 = vstv %s57
  %72 = vst [vmem:[#allocation3] sm:$0x1] %v71
  $region1: #{wav2vec2_forward.5} parent=0
    #allocation4 [shape = 'u8[98304]{0}', space=vmem, size = 0x18000, scoped, tag = 'input window, operand 4, single buffered']
    #allocation5 [shape = 's32[2]{0}', space=sflag, size = 0x8, scoped, tag = 'scoped memory for wav2vec2_forward.5']
    #allocation6 [shape = 's32[2]{0}', space=sflag, size = 0x8, scoped, tag = 'scoped memory for wav2vec2_forward.5']
    #allocation7 [shape = 'u8[32768]{0}', space=vmem, size = 0x8000, scoped, tag = 'input window, operand 7, single buffered']
    #allocation8 [shape = 's32[1]{0}', space=sflag, size = 0x4, scoped, tag = 'scoped memory for wav2vec2_forward.5']
    #allocation9 [shape = 'u8[98304]{0}', space=vmem, size = 0x18000, scoped, tag = 'input window, operand 9, single buffered']
    #allocation10 [shape = 'u8[3072]{0}', space=vmem, size = 0xc00, scoped, tag = 'input window, operand 14, single buffered']
    #allocation11 [shape = 's32[1]{0}', space=sflag, size = 0x4, scoped, tag = 'scoped memory for wav2vec2_forward.5']
    #allocation12 [shape = 'u8[1024]{0}', space=vmem, size = 0x400, scoped, tag = 'input window, operand 16, single buffered']
    #allocation13 [shape = 'u8[1024]{0}', space=vmem, size = 0x400, scoped, tag = 'input window, operand 17, single buffered']
    #allocation14 [shape = 's32[1]{0}', space=sflag, size = 0x4, scoped, tag = 'scoped memory for wav2vec2_forward.5']
    #allocation15 [shape = 'u8[1024]{0}', space=vmem, size = 0x400, scoped, tag = 'input window, operand 18, single buffered']
    #allocation16 [shape = 'u8[2048]{0}', space=vmem, size = 0x800, scoped, tag = 'input window, operand 20, single buffered']
    #allocation17 [shape = 's32[1]{0}', space=sflag, size = 0x4, scoped, tag = 'scoped memory for wav2vec2_forward.5']
    #allocation18 [shape = 'u8[131072]{0}', space=vmem, size = 0x20000, scoped, tag = 'input window, operand 21, single buffered']
    #allocation19 [shape = 'u8[1024]{0}', space=vmem, size = 0x400, scoped, tag = 'input window, operand 22, single buffered']
    #allocation20 [shape = 's32[1]{0}', space=sflag, size = 0x4, scoped, tag = 'scoped memory for wav2vec2_forward.5']
    #allocation21 [shape = 'u8[1024]{0}', space=vmem, size = 0x400, scoped, tag = 'input window, operand 23, single buffered']
    #allocation22 [shape = 'u8[1024]{0}', space=vmem, size = 0x400, scoped, tag = 'input window, operand 24, single buffered']
    #allocation23 [shape = 's32[1]{0}', space=sflag, size = 0x4, scoped, tag = 'scoped memory for wav2vec2_forward.5']
    #allocation24 [shape = 'u8[32768]{0}', space=vmem, size = 0x8000, scoped, tag = 'input window, operand 25, single buffered']
    #allocation25 [shape = 'u8[512]{0}', space=vmem, size = 0x400, scoped, tag = 'input window, operand 26, single buffered']
    #allocation26 [shape = 's32[1]{0}', space=sflag, size = 0x4, scoped, tag = 'scoped memory for wav2vec2_forward.5']
    #allocation27 [shape = 'u8[512]{0}', space=vmem, size = 0x400, scoped, tag = 'input window, operand 27, single buffered']
    #allocation28 [shape = 'u8[32768]{0}', space=vmem, size = 0x8000, scoped, tag = 'input window, operand 29, single buffered']
    #allocation29 [shape = 's32[1]{0}', space=sflag, size = 0x4, scoped, tag = 'scoped memory for wav2vec2_forward.5']
    #allocation30 [shape = 'u8[512]{0}', space=vmem, size = 0x400, scoped, tag = 'input window, operand 30, single buffered']
    #allocation31 [shape = 'u8[1024]{0}', space=vmem, size = 0x400, scoped, tag = 'output window, operand 1']
    %73 = vsyncpa [#allocation5], 0
    %74 = vsyncpa [#allocation8], 0
    %75 = vsyncpa [#allocation11], 0
    %76 = vsyncpa [#allocation14], 0
    %77 = vsyncpa [#allocation17], 0
    %78 = vsyncpa [#allocation20], 0
    %79 = vsyncpa [#allocation23], 0
    %80 = vsyncpa [#allocation26], 0
    %81 = vsyncpa [#allocation29], 0
    %82 = vsyncpa [#allocation6], 0
    %s83 = scalar_lea.sflag [#allocation6], 1
    %84 = vsyncpa %s83, 0
    loop: start=0, step=1, limit=4
    $region2: #{wav2vec2_forward.5} parent=1 // loop_pre_header
      _
    $region3: #{wav2vec2_forward.5} parent=1 // loop_header
      %s86 = sphi 0, %s90
      %p87 = scmp.ge.s32.totalorder %s86, 4
      %s96 = sphi 0, %s98
      %s99 = sphi 0, %s96
      %s100 = sphi 0, %s99
      %s116 = sphi 0, %s100
      %s122 = sphi 0, %s124
      %s125 = sphi 0, %s122
      %s126 = sphi 0, %s125
      %s142 = sphi 0, %s126
      %s148 = sphi 0, %s150
      %s151 = sphi 0, %s148
      %s152 = sphi 0, %s151
      %s168 = sphi 0, %s152
      %s174 = sphi 0, %s176
      %s177 = sphi 0, %s174
      %s178 = sphi 0, %s177
      %s194 = sphi 0, %s178
      %s198 = sphi 0, %s198
      %s200 = sphi 0, %s198
      %s201 = sphi 0, %s200
      %s215 = sphi 0, %s201
      %s219 = sphi 0, %s219
      %s221 = sphi 0, %s219
      %s222 = sphi 0, %s221
      %s236 = sphi 0, %s222
      %s240 = sphi 0, %s240
      %s242 = sphi 0, %s240
      %s243 = sphi 0, %s242
      %s257 = sphi 0, %s243
      %s261 = sphi 0, %s261
      %s263 = sphi 0, %s261
      %s264 = sphi 0, %s263
      %s278 = sphi 0, %s264
      %s282 = sphi 0, %s282
      %s284 = sphi 0, %s282
      %s285 = sphi 0, %s284
      %s299 = sphi 0, %s285
      %s303 = sphi 0, %s303
      %s305 = sphi 0, %s303
      %s306 = sphi 0, %s305
      %s320 = sphi 0, %s306
      %s324 = sphi 0, %s324
      %s326 = sphi 0, %s324
      %s327 = sphi 0, %s326
      %s341 = sphi 0, %s327
      %s345 = sphi 0, %s345
      %s347 = sphi 0, %s345
      %s348 = sphi 0, %s347
      %s362 = sphi 0, %s348
      %s366 = sphi 0, %s366
      %s368 = sphi 0, %s366
      %s369 = sphi 0, %s368
      %s383 = sphi 0, %s369
      %s387 = sphi 0, %s387
      %s389 = sphi 0, %s387
      %s390 = sphi 0, %s389
      %s404 = sphi 0, %s390
      %s408 = sphi 0, %s408
      %s410 = sphi 0, %s408
      %s411 = sphi 0, %s410
      %s425 = sphi 0, %s411
      %s429 = sphi 0, %s429
      %s431 = sphi 0, %s429
      %s432 = sphi 0, %s431
      %s446 = sphi 0, %s432
      %s450 = sphi 0, %s450
      %s452 = sphi 0, %s450
      %s453 = sphi 0, %s452
      %s467 = sphi 0, %s453
      %s471 = sphi 0, %s471
      %s473 = sphi 0, %s471
      %s474 = sphi 0, %s473
      %s488 = sphi 0, %s474
      %s492 = sphi 0, %s492
      %s494 = sphi 0, %s492
      %s495 = sphi 0, %s494
      %s509 = sphi 0, %s495
      %s513 = sphi 0, %s513
      %s515 = sphi 0, %s513
      %s516 = sphi 0, %s515
      %s530 = sphi 0, %s516
      %s534 = sphi 0, %s534
      %s536 = sphi 0, %s534
      %s537 = sphi 0, %s536
      %s551 = sphi 0, %s537
      %s555 = sphi 0, %s555
      %s557 = sphi 0, %s555
      %s558 = sphi 0, %s557
      %s572 = sphi 0, %s558
      %s576 = sphi 0, %s576
      %s578 = sphi 0, %s576
      %s579 = sphi 0, %s578
      %s593 = sphi 0, %s579
      %s597 = sphi 0, %s597
      %s599 = sphi 0, %s597
      %s600 = sphi 0, %s599
      %s614 = sphi 0, %s600
      %s618 = sphi 0, %s618
      %s620 = sphi 0, %s618
      %s621 = sphi 0, %s620
      %s635 = sphi 0, %s621
      %s639 = sphi 0, %s639
      %s641 = sphi 0, %s639
      %s642 = sphi 0, %s641
      %s656 = sphi 0, %s642
      %s660 = sphi 0, %s660
      %s662 = sphi 0, %s660
      %s663 = sphi 0, %s662
      %s677 = sphi 0, %s663
      %s681 = sphi 0, %s681
      %s683 = sphi 0, %s681
      %s684 = sphi 0, %s683
      %s698 = sphi 0, %s684
      %s702 = sphi 0, %s702
      %s704 = sphi 0, %s702
      %s705 = sphi 0, %s704
      %s719 = sphi 0, %s705
      %s723 = sphi 0, %s723
      %s725 = sphi 0, %s723
      %s726 = sphi 0, %s725
      %s740 = sphi 0, %s726
      %s744 = sphi 0, %s744
      %s746 = sphi 0, %s744
      %s747 = sphi 0, %s746
      %s761 = sphi 0, %s747
      %s767 = sphi 0, %s769
      %s770 = sphi 0, %s767
      %s771 = sphi 0, %s770
      %s787 = sphi 0, %s771
      %s793 = sphi 0, %s795
      %s796 = sphi 0, %s793
      %s797 = sphi 0, %s796
      %s813 = sphi 0, %s797
    $region4: #{wav2vec2_forward.5} parent=1 // loop_header_branch
      %89 = sbr.rel (%p87) target = $region8
    $region5: #{wav2vec2_forward.5} parent=1 // loop_body
      %s91 = ssub.s32 %s86, 1
      %s92 = ssub.s32 %s86, 2
      %s93 = sadd.s32 %s86, 1
      %s94 = ssub.s32 %s86, %s93
      %p95 = scmp.eq.s32.totalorder %s94, 0
      %s97 = sadd.s32 %s96, 1
      %s98 = scalar_select %p95, %s96, %s97
      %p101 = pneg %p95
      %p102 = scmp.eq.s32.totalorder %s86, 1
      %p103 = por %p101, %p102
      %p104 = scmp.ne.s32.totalorder %s96, %s99
      %p105 = scmp.eq.s32.totalorder %s86, 0
      %p106 = por %p104, %p105
      %p107 = scmp.ne.s32.totalorder %s96, %s99
      %p108 = scmp.eq.s32.totalorder %s91, 1
      %p109 = por %p107, %p108
      %p110 = scmp.ne.s32.totalorder %s99, %s100
      %p111 = scmp.eq.s32.totalorder %s91, 0
      %p112 = por %p110, %p111
      %p113 = scmp.ne.s32.totalorder %s99, %s100
      %p114 = scmp.eq.s32.totalorder %s92, 1
      %p115 = por %p113, %p114
      %p117 = scmp.ne.s32.totalorder %s100, %s116
      %p118 = scmp.eq.s32.totalorder %s92, 0
      %p119 = por %p117, %p118
      %s120 = ssub.s32 %s86, %s93
      %p121 = scmp.eq.s32.totalorder %s120, 0
      %s123 = sadd.s32 %s122, 1
      %s124 = scalar_select %p121, %s122, %s123
      %p127 = pneg %p121
      %p128 = scmp.eq.s32.totalorder %s86, 1
      %p129 = por %p127, %p128
      %p130 = scmp.ne.s32.totalorder %s122, %s125
      %p131 = scmp.eq.s32.totalorder %s86, 0
      %p132 = por %p130, %p131
      %p133 = scmp.ne.s32.totalorder %s122, %s125
      %p134 = scmp.eq.s32.totalorder %s91, 1
      %p135 = por %p133, %p134
      %p136 = scmp.ne.s32.totalorder %s125, %s126
      %p137 = scmp.eq.s32.totalorder %s91, 0
      %p138 = por %p136, %p137
      %p139 = scmp.ne.s32.totalorder %s125, %s126
      %p140 = scmp.eq.s32.totalorder %s92, 1
      %p141 = por %p139, %p140
      %p143 = scmp.ne.s32.totalorder %s126, %s142
      %p144 = scmp.eq.s32.totalorder %s92, 0
      %p145 = por %p143, %p144
      %s146 = ssub.s32 %s86, %s93
      %p147 = scmp.eq.s32.totalorder %s146, 0
      %s149 = sadd.s32 %s148, 1
      %s150 = scalar_select %p147, %s148, %s149
      %p153 = pneg %p147
      %p154 = scmp.eq.s32.totalorder %s86, 1
      %p155 = por %p153, %p154
      %p156 = scmp.ne.s32.totalorder %s148, %s151
      %p157 = scmp.eq.s32.totalorder %s86, 0
      %p158 = por %p156, %p157
      %p159 = scmp.ne.s32.totalorder %s148, %s151
      %p160 = scmp.eq.s32.totalorder %s91, 1
      %p161 = por %p159, %p160
      %p162 = scmp.ne.s32.totalorder %s151, %s152
      %p163 = scmp.eq.s32.totalorder %s91, 0
      %p164 = por %p162, %p163
      %p165 = scmp.ne.s32.totalorder %s151, %s152
      %p166 = scmp.eq.s32.totalorder %s92, 1
      %p167 = por %p165, %p166
      %p169 = scmp.ne.s32.totalorder %s152, %s168
      %p170 = scmp.eq.s32.totalorder %s92, 0
      %p171 = por %p169, %p170
      %s172 = ssub.s32 %s86, %s93
      %p173 = scmp.eq.s32.totalorder %s172, 0
      %s175 = sadd.s32 %s174, 1
      %s176 = scalar_select %p173, %s174, %s175
      %p179 = pneg %p173
      %p180 = scmp.eq.s32.totalorder %s86, 1
      %p181 = por %p179, %p180
      %p182 = scmp.ne.s32.totalorder %s174, %s177
      %p183 = scmp.eq.s32.totalorder %s86, 0
      %p184 = por %p182, %p183
      %p185 = scmp.ne.s32.totalorder %s174, %s177
      %p186 = scmp.eq.s32.totalorder %s91, 1
      %p187 = por %p185, %p186
      %p188 = scmp.ne.s32.totalorder %s177, %s178
      %p189 = scmp.eq.s32.totalorder %s91, 0
      %p190 = por %p188, %p189
      %p191 = scmp.ne.s32.totalorder %s177, %s178
      %p192 = scmp.eq.s32.totalorder %s92, 1
      %p193 = por %p191, %p192
      %p195 = scmp.ne.s32.totalorder %s178, %s194
      %p196 = scmp.eq.s32.totalorder %s92, 0
      %p197 = por %p195, %p196
      %s199 = sadd.s32 %s198, 1
      %p202 = scmp.eq.s32.totalorder %s86, 1
      %p203 = scmp.ne.s32.totalorder %s198, %s200
      %p204 = scmp.eq.s32.totalorder %s86, 0
      %p205 = por %p203, %p204
      %p206 = scmp.ne.s32.totalorder %s198, %s200
      %p207 = scmp.eq.s32.totalorder %s91, 1
      %p208 = por %p206, %p207
      %p209 = scmp.ne.s32.totalorder %s200, %s201
      %p210 = scmp.eq.s32.totalorder %s91, 0
      %p211 = por %p209, %p210
      %p212 = scmp.ne.s32.totalorder %s200, %s201
      %p213 = scmp.eq.s32.totalorder %s92, 1
      %p214 = por %p212, %p213
      %p216 = scmp.ne.s32.totalorder %s201, %s215
      %p217 = scmp.eq.s32.totalorder %s92, 0
      %p218 = por %p216, %p217
      %s220 = sadd.s32 %s219, 1
      %p223 = scmp.eq.s32.totalorder %s86, 1
      %p224 = scmp.ne.s32.totalorder %s219, %s221
      %p225 = scmp.eq.s32.totalorder %s86, 0
      %p226 = por %p224, %p225
      %p227 = scmp.ne.s32.totalorder %s219, %s221
      %p228 = scmp.eq.s32.totalorder %s91, 1
      %p229 = por %p227, %p228
      %p230 = scmp.ne.s32.totalorder %s221, %s222
      %p231 = scmp.eq.s32.totalorder %s91, 0
      %p232 = por %p230, %p231
      %p233 = scmp.ne.s32.totalorder %s221, %s222
      %p234 = scmp.eq.s32.totalorder %s92, 1
      %p235 = por %p233, %p234
      %p237 = scmp.ne.s32.totalorder %s222, %s236
      %p238 = scmp.eq.s32.totalorder %s92, 0
      %p239 = por %p237, %p238
      %s241 = sadd.s32 %s240, 1
      %p244 = scmp.eq.s32.totalorder %s86, 1
      %p245 = scmp.ne.s32.totalorder %s240, %s242
      %p246 = scmp.eq.s32.totalorder %s86, 0
      %p247 = por %p245, %p246
      %p248 = scmp.ne.s32.totalorder %s240, %s242
      %p249 = scmp.eq.s32.totalorder %s91, 1
      %p250 = por %p248, %p249
      %p251 = scmp.ne.s32.totalorder %s242, %s243
      %p252 = scmp.eq.s32.totalorder %s91, 0
      %p253 = por %p251, %p252
      %p254 = scmp.ne.s32.totalorder %s242, %s243
      %p255 = scmp.eq.s32.totalorder %s92, 1
      %p256 = por %p254, %p255
      %p258 = scmp.ne.s32.totalorder %s243, %s257
      %p259 = scmp.eq.s32.totalorder %s92, 0
      %p260 = por %p258, %p259
      %s262 = sadd.s32 %s261, 1
      %p265 = scmp.eq.s32.totalorder %s86, 1
      %p266 = scmp.ne.s32.totalorder %s261, %s263
      %p267 = scmp.eq.s32.totalorder %s86, 0
      %p268 = por %p266, %p267
      %p269 = scmp.ne.s32.totalorder %s261, %s263
      %p270 = scmp.eq.s32.totalorder %s91, 1
      %p271 = por %p269, %p270
      %p272 = scmp.ne.s32.totalorder %s263, %s264
      %p273 = scmp.eq.s32.totalorder %s91, 0
      %p274 = por %p272, %p273
      %p275 = scmp.ne.s32.totalorder %s263, %s264
      %p276 = scmp.eq.s32.totalorder %s92, 1
      %p277 = por %p275, %p276
      %p279 = scmp.ne.s32.totalorder %s264, %s278
      %p280 = scmp.eq.s32.totalorder %s92, 0
      %p281 = por %p279, %p280
      %s283 = sadd.s32 %s282, 1
      %p286 = scmp.eq.s32.totalorder %s86, 1
      %p287 = scmp.ne.s32.totalorder %s282, %s284
      %p288 = scmp.eq.s32.totalorder %s86, 0
      %p289 = por %p287, %p288
      %p290 = scmp.ne.s32.totalorder %s282, %s284
      %p291 = scmp.eq.s32.totalorder %s91, 1
      %p292 = por %p290, %p291
      %p293 = scmp.ne.s32.totalorder %s284, %s285
      %p294 = scmp.eq.s32.totalorder %s91, 0
      %p295 = por %p293, %p294
      %p296 = scmp.ne.s32.totalorder %s284, %s285
      %p297 = scmp.eq.s32.totalorder %s92, 1
      %p298 = por %p296, %p297
      %p300 = scmp.ne.s32.totalorder %s285, %s299
      %p301 = scmp.eq.s32.totalorder %s92, 0
      %p302 = por %p300, %p301
      %s304 = sadd.s32 %s303, 1
      %p307 = scmp.eq.s32.totalorder %s86, 1
      %p308 = scmp.ne.s32.totalorder %s303, %s305
      %p309 = scmp.eq.s32.totalorder %s86, 0
      %p310 = por %p308, %p309
      %p311 = scmp.ne.s32.totalorder %s303, %s305
      %p312 = scmp.eq.s32.totalorder %s91, 1
      %p313 = por %p311, %p312
      %p314 = scmp.ne.s32.totalorder %s305, %s306
      %p315 = scmp.eq.s32.totalorder %s91, 0
      %p316 = por %p314, %p315
      %p317 = scmp.ne.s32.totalorder %s305, %s306
      %p318 = scmp.eq.s32.totalorder %s92, 1
      %p319 = por %p317, %p318
      %p321 = scmp.ne.s32.totalorder %s306, %s320
      %p322 = scmp.eq.s32.totalorder %s92, 0
      %p323 = por %p321, %p322
      %s325 = sadd.s32 %s324, 1
      %p328 = scmp.eq.s32.totalorder %s86, 1
      %p329 = scmp.ne.s32.totalorder %s324, %s326
      %p330 = scmp.eq.s32.totalorder %s86, 0
      %p331 = por %p329, %p330
      %p332 = scmp.ne.s32.totalorder %s324, %s326
      %p333 = scmp.eq.s32.totalorder %s91, 1
      %p334 = por %p332, %p333
      %p335 = scmp.ne.s32.totalorder %s326, %s327
      %p336 = scmp.eq.s32.totalorder %s91, 0
      %p337 = por %p335, %p336
      %p338 = scmp.ne.s32.totalorder %s326, %s327
      %p339 = scmp.eq.s32.totalorder %s92, 1
      %p340 = por %p338, %p339
      %p342 = scmp.ne.s32.totalorder %s327, %s341
      %p343 = scmp.eq.s32.totalorder %s92, 0
      %p344 = por %p342, %p343
      %s346 = sadd.s32 %s345, 1
      %p349 = scmp.eq.s32.totalorder %s86, 1
      %p350 = scmp.ne.s32.totalorder %s345, %s347
      %p351 = scmp.eq.s32.totalorder %s86, 0
      %p352 = por %p350, %p351
      %p353 = scmp.ne.s32.totalorder %s345, %s347
      %p354 = scmp.eq.s32.totalorder %s91, 1
      %p355 = por %p353, %p354
      %p356 = scmp.ne.s32.totalorder %s347, %s348
      %p357 = scmp.eq.s32.totalorder %s91, 0
      %p358 = por %p356, %p357
      %p359 = scmp.ne.s32.totalorder %s347, %s348
      %p360 = scmp.eq.s32.totalorder %s92, 1
      %p361 = por %p359, %p360
      %p363 = scmp.ne.s32.totalorder %s348, %s362
      %p364 = scmp.eq.s32.totalorder %s92, 0
      %p365 = por %p363, %p364
      %s367 = sadd.s32 %s366, 1
      %p370 = scmp.eq.s32.totalorder %s86, 1
      %p371 = scmp.ne.s32.totalorder %s366, %s368
      %p372 = scmp.eq.s32.totalorder %s86, 0
      %p373 = por %p371, %p372
      %p374 = scmp.ne.s32.totalorder %s366, %s368
      %p375 = scmp.eq.s32.totalorder %s91, 1
      %p376 = por %p374, %p375
      %p377 = scmp.ne.s32.totalorder %s368, %s369
      %p378 = scmp.eq.s32.totalorder %s91, 0
      %p379 = por %p377, %p378
      %p380 = scmp.ne.s32.totalorder %s368, %s369
      %p381 = scmp.eq.s32.totalorder %s92, 1
      %p382 = por %p380, %p381
      %p384 = scmp.ne.s32.totalorder %s369, %s383
      %p385 = scmp.eq.s32.totalorder %s92, 0
      %p386 = por %p384, %p385
      %s388 = sadd.s32 %s387, 1
      %p391 = scmp.eq.s32.totalorder %s86, 1
      %p392 = scmp.ne.s32.totalorder %s387, %s389
      %p393 = scmp.eq.s32.totalorder %s86, 0
      %p394 = por %p392, %p393
      %p395 = scmp.ne.s32.totalorder %s387, %s389
      %p396 = scmp.eq.s32.totalorder %s91, 1
      %p397 = por %p395, %p396
      %p398 = scmp.ne.s32.totalorder %s389, %s390
      %p399 = scmp.eq.s32.totalorder %s91, 0
      %p400 = por %p398, %p399
      %p401 = scmp.ne.s32.totalorder %s389, %s390
      %p402 = scmp.eq.s32.totalorder %s92, 1
      %p403 = por %p401, %p402
      %p405 = scmp.ne.s32.totalorder %s390, %s404
      %p406 = scmp.eq.s32.totalorder %s92, 0
      %p407 = por %p405, %p406
      %s409 = sadd.s32 %s408, 1
      %p412 = scmp.eq.s32.totalorder %s86, 1
      %p413 = scmp.ne.s32.totalorder %s408, %s410
      %p414 = scmp.eq.s32.totalorder %s86, 0
      %p415 = por %p413, %p414
      %p416 = scmp.ne.s32.totalorder %s408, %s410
      %p417 = scmp.eq.s32.totalorder %s91, 1
      %p418 = por %p416, %p417
      %p419 = scmp.ne.s32.totalorder %s410, %s411
      %p420 = scmp.eq.s32.totalorder %s91, 0
      %p421 = por %p419, %p420
      %p422 = scmp.ne.s32.totalorder %s410, %s411
      %p423 = scmp.eq.s32.totalorder %s92, 1
      %p424 = por %p422, %p423
      %p426 = scmp.ne.s32.totalorder %s411, %s425
      %p427 = scmp.eq.s32.totalorder %s92, 0
      %p428 = por %p426, %p427
      %s430 = sadd.s32 %s429, 1
      %p433 = scmp.eq.s32.totalorder %s86, 1
      %p434 = scmp.ne.s32.totalorder %s429, %s431
      %p435 = scmp.eq.s32.totalorder %s86, 0
      %p436 = por %p434, %p435
      %p437 = scmp.ne.s32.totalorder %s429, %s431
      %p438 = scmp.eq.s32.totalorder %s91, 1
      %p439 = por %p437, %p438
      %p440 = scmp.ne.s32.totalorder %s431, %s432
      %p441 = scmp.eq.s32.totalorder %s91, 0
      %p442 = por %p440, %p441
      %p443 = scmp.ne.s32.totalorder %s431, %s432
      %p444 = scmp.eq.s32.totalorder %s92, 1
      %p445 = por %p443, %p444
      %p447 = scmp.ne.s32.totalorder %s432, %s446
      %p448 = scmp.eq.s32.totalorder %s92, 0
      %p449 = por %p447, %p448
      %s451 = sadd.s32 %s450, 1
      %p454 = scmp.eq.s32.totalorder %s86, 1
      %p455 = scmp.ne.s32.totalorder %s450, %s452
      %p456 = scmp.eq.s32.totalorder %s86, 0
      %p457 = por %p455, %p456
      %p458 = scmp.ne.s32.totalorder %s450, %s452
      %p459 = scmp.eq.s32.totalorder %s91, 1
      %p460 = por %p458, %p459
      %p461 = scmp.ne.s32.totalorder %s452, %s453
      %p462 = scmp.eq.s32.totalorder %s91, 0
      %p463 = por %p461, %p462
      %p464 = scmp.ne.s32.totalorder %s452, %s453
      %p465 = scmp.eq.s32.totalorder %s92, 1
      %p466 = por %p464, %p465
      %p468 = scmp.ne.s32.totalorder %s453, %s467
      %p469 = scmp.eq.s32.totalorder %s92, 0
      %p470 = por %p468, %p469
      %s472 = sadd.s32 %s471, 1
      %p475 = scmp.eq.s32.totalorder %s86, 1
      %p476 = scmp.ne.s32.totalorder %s471, %s473
      %p477 = scmp.eq.s32.totalorder %s86, 0
      %p478 = por %p476, %p477
      %p479 = scmp.ne.s32.totalorder %s471, %s473
      %p480 = scmp.eq.s32.totalorder %s91, 1
      %p481 = por %p479, %p480
      %p482 = scmp.ne.s32.totalorder %s473, %s474
      %p483 = scmp.eq.s32.totalorder %s91, 0
      %p484 = por %p482, %p483
      %p485 = scmp.ne.s32.totalorder %s473, %s474
      %p486 = scmp.eq.s32.totalorder %s92, 1
      %p487 = por %p485, %p486
      %p489 = scmp.ne.s32.totalorder %s474, %s488
      %p490 = scmp.eq.s32.totalorder %s92, 0
      %p491 = por %p489, %p490
      %s493 = sadd.s32 %s492, 1
      %p496 = scmp.eq.s32.totalorder %s86, 1
      %p497 = scmp.ne.s32.totalorder %s492, %s494
      %p498 = scmp.eq.s32.totalorder %s86, 0
      %p499 = por %p497, %p498
      %p500 = scmp.ne.s32.totalorder %s492, %s494
      %p501 = scmp.eq.s32.totalorder %s91, 1
      %p502 = por %p500, %p501
      %p503 = scmp.ne.s32.totalorder %s494, %s495
      %p504 = scmp.eq.s32.totalorder %s91, 0
      %p505 = por %p503, %p504
      %p506 = scmp.ne.s32.totalorder %s494, %s495
      %p507 = scmp.eq.s32.totalorder %s92, 1
      %p508 = por %p506, %p507
      %p510 = scmp.ne.s32.totalorder %s495, %s509
      %p511 = scmp.eq.s32.totalorder %s92, 0
      %p512 = por %p510, %p511
      %s514 = sadd.s32 %s513, 1
      %p517 = scmp.eq.s32.totalorder %s86, 1
      %p518 = scmp.ne.s32.totalorder %s513, %s515
      %p519 = scmp.eq.s32.totalorder %s86, 0
      %p520 = por %p518, %p519
      %p521 = scmp.ne.s32.totalorder %s513, %s515
      %p522 = scmp.eq.s32.totalorder %s91, 1
      %p523 = por %p521, %p522
      %p524 = scmp.ne.s32.totalorder %s515, %s516
      %p525 = scmp.eq.s32.totalorder %s91, 0
      %p526 = por %p524, %p525
      %p527 = scmp.ne.s32.totalorder %s515, %s516
      %p528 = scmp.eq.s32.totalorder %s92, 1
      %p529 = por %p527, %p528
      %p531 = scmp.ne.s32.totalorder %s516, %s530
      %p532 = scmp.eq.s32.totalorder %s92, 0
      %p533 = por %p531, %p532
      %s535 = sadd.s32 %s534, 1
      %p538 = scmp.eq.s32.totalorder %s86, 1
      %p539 = scmp.ne.s32.totalorder %s534, %s536
      %p540 = scmp.eq.s32.totalorder %s86, 0
      %p541 = por %p539, %p540
      %p542 = scmp.ne.s32.totalorder %s534, %s536
      %p543 = scmp.eq.s32.totalorder %s91, 1
      %p544 = por %p542, %p543
      %p545 = scmp.ne.s32.totalorder %s536, %s537
      %p546 = scmp.eq.s32.totalorder %s91, 0
      %p547 = por %p545, %p546
      %p548 = scmp.ne.s32.totalorder %s536, %s537
      %p549 = scmp.eq.s32.totalorder %s92, 1
      %p550 = por %p548, %p549
      %p552 = scmp.ne.s32.totalorder %s537, %s551
      %p553 = scmp.eq.s32.totalorder %s92, 0
      %p554 = por %p552, %p553
      %s556 = sadd.s32 %s555, 1
      %p559 = scmp.eq.s32.totalorder %s86, 1
      %p560 = scmp.ne.s32.totalorder %s555, %s557
      %p561 = scmp.eq.s32.totalorder %s86, 0
      %p562 = por %p560, %p561
      %p563 = scmp.ne.s32.totalorder %s555, %s557
      %p564 = scmp.eq.s32.totalorder %s91, 1
      %p565 = por %p563, %p564
      %p566 = scmp.ne.s32.totalorder %s557, %s558
      %p567 = scmp.eq.s32.totalorder %s91, 0
      %p568 = por %p566, %p567
      %p569 = scmp.ne.s32.totalorder %s557, %s558
      %p570 = scmp.eq.s32.totalorder %s92, 1
      %p571 = por %p569, %p570
      %p573 = scmp.ne.s32.totalorder %s558, %s572
      %p574 = scmp.eq.s32.totalorder %s92, 0
      %p575 = por %p573, %p574
      %s577 = sadd.s32 %s576, 1
      %p580 = scmp.eq.s32.totalorder %s86, 1
      %p581 = scmp.ne.s32.totalorder %s576, %s578
      %p582 = scmp.eq.s32.totalorder %s86, 0
      %p583 = por %p581, %p582
      %p584 = scmp.ne.s32.totalorder %s576, %s578
      %p585 = scmp.eq.s32.totalorder %s91, 1
      %p586 = por %p584, %p585
      %p587 = scmp.ne.s32.totalorder %s578, %s579
      %p588 = scmp.eq.s32.totalorder %s91, 0
      %p589 = por %p587, %p588
      %p590 = scmp.ne.s32.totalorder %s578, %s579
      %p591 = scmp.eq.s32.totalorder %s92, 1
      %p592 = por %p590, %p591
      %p594 = scmp.ne.s32.totalorder %s579, %s593
      %p595 = scmp.eq.s32.totalorder %s92, 0
      %p596 = por %p594, %p595
      %s598 = sadd.s32 %s597, 1
      %p601 = scmp.eq.s32.totalorder %s86, 1
      %p602 = scmp.ne.s32.totalorder %s597, %s599
      %p603 = scmp.eq.s32.totalorder %s86, 0
      %p604 = por %p602, %p603
      %p605 = scmp.ne.s32.totalorder %s597, %s599
      %p606 = scmp.eq.s32.totalorder %s91, 1
      %p607 = por %p605, %p606
      %p608 = scmp.ne.s32.totalorder %s599, %s600
      %p609 = scmp.eq.s32.totalorder %s91, 0
      %p610 = por %p608, %p609
      %p611 = scmp.ne.s32.totalorder %s599, %s600
      %p612 = scmp.eq.s32.totalorder %s92, 1
      %p613 = por %p611, %p612
      %p615 = scmp.ne.s32.totalorder %s600, %s614
      %p616 = scmp.eq.s32.totalorder %s92, 0
      %p617 = por %p615, %p616
      %s619 = sadd.s32 %s618, 1
      %p622 = scmp.eq.s32.totalorder %s86, 1
      %p623 = scmp.ne.s32.totalorder %s618, %s620
      %p624 = scmp.eq.s32.totalorder %s86, 0
      %p625 = por %p623, %p624
      %p626 = scmp.ne.s32.totalorder %s618, %s620
      %p627 = scmp.eq.s32.totalorder %s91, 1
      %p628 = por %p626, %p627
      %p629 = scmp.ne.s32.totalorder %s620, %s621
      %p630 = scmp.eq.s32.totalorder %s91, 0
      %p631 = por %p629, %p630
      %p632 = scmp.ne.s32.totalorder %s620, %s621
      %p633 = scmp.eq.s32.totalorder %s92, 1
      %p634 = por %p632, %p633
      %p636 = scmp.ne.s32.totalorder %s621, %s635
      %p637 = scmp.eq.s32.totalorder %s92, 0
      %p638 = por %p636, %p637
      %s640 = sadd.s32 %s639, 1
      %p643 = scmp.eq.s32.totalorder %s86, 1
      %p644 = scmp.ne.s32.totalorder %s639, %s641
      %p645 = scmp.eq.s32.totalorder %s86, 0
      %p646 = por %p644, %p645
      %p647 = scmp.ne.s32.totalorder %s639, %s641
      %p648 = scmp.eq.s32.totalorder %s91, 1
      %p649 = por %p647, %p648
      %p650 = scmp.ne.s32.totalorder %s641, %s642
      %p651 = scmp.eq.s32.totalorder %s91, 0
      %p652 = por %p650, %p651
      %p653 = scmp.ne.s32.totalorder %s641, %s642
      %p654 = scmp.eq.s32.totalorder %s92, 1
      %p655 = por %p653, %p654
      %p657 = scmp.ne.s32.totalorder %s642, %s656
      %p658 = scmp.eq.s32.totalorder %s92, 0
      %p659 = por %p657, %p658
      %s661 = sadd.s32 %s660, 1
      %p664 = scmp.eq.s32.totalorder %s86, 1
      %p665 = scmp.ne.s32.totalorder %s660, %s662
      %p666 = scmp.eq.s32.totalorder %s86, 0
      %p667 = por %p665, %p666
      %p668 = scmp.ne.s32.totalorder %s660, %s662
      %p669 = scmp.eq.s32.totalorder %s91, 1
      %p670 = por %p668, %p669
      %p671 = scmp.ne.s32.totalorder %s662, %s663
      %p672 = scmp.eq.s32.totalorder %s91, 0
      %p673 = por %p671, %p672
      %p674 = scmp.ne.s32.totalorder %s662, %s663
      %p675 = scmp.eq.s32.totalorder %s92, 1
      %p676 = por %p674, %p675
      %p678 = scmp.ne.s32.totalorder %s663, %s677
      %p679 = scmp.eq.s32.totalorder %s92, 0
      %p680 = por %p678, %p679
      %s682 = sadd.s32 %s681, 1
      %p685 = scmp.eq.s32.totalorder %s86, 1
      %p686 = scmp.ne.s32.totalorder %s681, %s683
      %p687 = scmp.eq.s32.totalorder %s86, 0
      %p688 = por %p686, %p687
      %p689 = scmp.ne.s32.totalorder %s681, %s683
      %p690 = scmp.eq.s32.totalorder %s91, 1
      %p691 = por %p689, %p690
      %p692 = scmp.ne.s32.totalorder %s683, %s684
      %p693 = scmp.eq.s32.totalorder %s91, 0
      %p694 = por %p692, %p693
      %p695 = scmp.ne.s32.totalorder %s683, %s684
      %p696 = scmp.eq.s32.totalorder %s92, 1
      %p697 = por %p695, %p696
      %p699 = scmp.ne.s32.totalorder %s684, %s698
      %p700 = scmp.eq.s32.totalorder %s92, 0
      %p701 = por %p699, %p700
      %s703 = sadd.s32 %s702, 1
      %p706 = scmp.eq.s32.totalorder %s86, 1
      %p707 = scmp.ne.s32.totalorder %s702, %s704
      %p708 = scmp.eq.s32.totalorder %s86, 0
      %p709 = por %p707, %p708
      %p710 = scmp.ne.s32.totalorder %s702, %s704
      %p711 = scmp.eq.s32.totalorder %s91, 1
      %p712 = por %p710, %p711
      %p713 = scmp.ne.s32.totalorder %s704, %s705
      %p714 = scmp.eq.s32.totalorder %s91, 0
      %p715 = por %p713, %p714
      %p716 = scmp.ne.s32.totalorder %s704, %s705
      %p717 = scmp.eq.s32.totalorder %s92, 1
      %p718 = por %p716, %p717
      %p720 = scmp.ne.s32.totalorder %s705, %s719
      %p721 = scmp.eq.s32.totalorder %s92, 0
      %p722 = por %p720, %p721
      %s724 = sadd.s32 %s723, 1
      %p727 = scmp.eq.s32.totalorder %s86, 1
      %p728 = scmp.ne.s32.totalorder %s723, %s725
      %p729 = scmp.eq.s32.totalorder %s86, 0
      %p730 = por %p728, %p729
      %p731 = scmp.ne.s32.totalorder %s723, %s725
      %p732 = scmp.eq.s32.totalorder %s91, 1
      %p733 = por %p731, %p732
      %p734 = scmp.ne.s32.totalorder %s725, %s726
      %p735 = scmp.eq.s32.totalorder %s91, 0
      %p736 = por %p734, %p735
      %p737 = scmp.ne.s32.totalorder %s725, %s726
      %p738 = scmp.eq.s32.totalorder %s92, 1
      %p739 = por %p737, %p738
      %p741 = scmp.ne.s32.totalorder %s726, %s740
      %p742 = scmp.eq.s32.totalorder %s92, 0
      %p743 = por %p741, %p742
      %s745 = sadd.s32 %s744, 1
      %p748 = scmp.eq.s32.totalorder %s86, 1
      %p749 = scmp.ne.s32.totalorder %s744, %s746
      %p750 = scmp.eq.s32.totalorder %s86, 0
      %p751 = por %p749, %p750
      %p752 = scmp.ne.s32.totalorder %s744, %s746
      %p753 = scmp.eq.s32.totalorder %s91, 1
      %p754 = por %p752, %p753
      %p755 = scmp.ne.s32.totalorder %s746, %s747
      %p756 = scmp.eq.s32.totalorder %s91, 0
      %p757 = por %p755, %p756
      %p758 = scmp.ne.s32.totalorder %s746, %s747
      %p759 = scmp.eq.s32.totalorder %s92, 1
      %p760 = por %p758, %p759
      %p762 = scmp.ne.s32.totalorder %s747, %s761
      %p763 = scmp.eq.s32.totalorder %s92, 0
      %p764 = por %p762, %p763
      %s765 = ssub.s32 %s86, %s93
      %p766 = scmp.eq.s32.totalorder %s765, 0
      %s768 = sadd.s32 %s767, 1
      %s769 = scalar_select %p766, %s767, %s768
      %p772 = pneg %p766
      %p773 = scmp.eq.s32.totalorder %s86, 1
      %p774 = por %p772, %p773
      %p775 = scmp.ne.s32.totalorder %s767, %s770
      %p776 = scmp.eq.s32.totalorder %s86, 0
      %p777 = por %p775, %p776
      %p778 = scmp.ne.s32.totalorder %s767, %s770
      %p779 = scmp.eq.s32.totalorder %s91, 1
      %p780 = por %p778, %p779
      %p781 = scmp.ne.s32.totalorder %s770, %s771
      %p782 = scmp.eq.s32.totalorder %s91, 0
      %p783 = por %p781, %p782
      %p784 = scmp.ne.s32.totalorder %s770, %s771
      %p785 = scmp.eq.s32.totalorder %s92, 1
      %p786 = por %p784, %p785
      %p788 = scmp.ne.s32.totalorder %s771, %s787
      %p789 = scmp.eq.s32.totalorder %s92, 0
      %p790 = por %p788, %p789
      %s791 = ssub.s32 %s86, %s93
      %p792 = scmp.eq.s32.totalorder %s791, 0
      %s794 = sadd.s32 %s793, 1
      %s795 = scalar_select %p792, %s793, %s794
      %p798 = pneg %p792
      %p799 = scmp.eq.s32.totalorder %s86, 1
      %p800 = por %p798, %p799
      %p801 = scmp.ne.s32.totalorder %s793, %s796
      %p802 = scmp.eq.s32.totalorder %s86, 0
      %p803 = por %p801, %p802
      %p804 = scmp.ne.s32.totalorder %s793, %s796
      %p805 = scmp.eq.s32.totalorder %s91, 1
      %p806 = por %p804, %p805
      %p807 = scmp.ne.s32.totalorder %s796, %s797
      %p808 = scmp.eq.s32.totalorder %s91, 0
      %p809 = por %p807, %p808
      %p810 = scmp.ne.s32.totalorder %s796, %s797
      %p811 = scmp.eq.s32.totalorder %s92, 1
      %p812 = por %p810, %p811
      %p814 = scmp.ne.s32.totalorder %s797, %s813
      %p815 = scmp.eq.s32.totalorder %s92, 0
      %p816 = por %p814, %p815
      %p817 = scmp.le.s32.totalorder 1, %s86
      %p818 = scmp.lt.s32.totalorder %s86, 3
      %p819 = pnand %p817, %p818
      %p820 = pneg %p819
      // Predicated region
      $region9: #{wav2vec2_forward.5} parent=5 // pred_check
        _
      $region10: #{wav2vec2_forward.5} parent=5 // pred_check_branch
        %822 = sbr.rel (%p819) target = $region12
      $region11: #{wav2vec2_forward.5} parent=5 // pred_region
        %s823 = ssub.s32 %s86, 1
        // Predicated region
        $region13: #{wav2vec2_forward.5} parent=11 // pred_check
          %p824 = pneg %p211
        $region14: #{wav2vec2_forward.5} parent=11 // pred_check_branch
          %826 = sbr.rel (%p824) target = $region16
        $region15: #{wav2vec2_forward.5} parent=11 // pred_region
          %828 = vsyncadd [#allocation5], 0
          %s829 = sshll.u32 %s9, 4
          %s830 = int_to_ptr.hbm [resolvable:$true] %s829
          %s831 = sshll.u32 [#allocation4], 4
          %s832 = int_to_ptr.vmem [resolvable:$true] %s831
          %837 = dma.hbm_to_vmem [thread:$0]  %s830, 3072, %s832, [#allocation5], 64, 64, 4
        $region16: #{wav2vec2_forward.5} parent=11 // pred_fallthru
          _
        // Predicated region
        $region17: #{wav2vec2_forward.5} parent=11 // pred_check
          %p838 = pneg %p232
        $region18: #{wav2vec2_forward.5} parent=11 // pred_check_branch
          %840 = sbr.rel (%p838) target = $region20
        $region19: #{wav2vec2_forward.5} parent=11 // pred_region
          _
        $region20: #{wav2vec2_forward.5} parent=11 // pred_fallthru
          _
        // Predicated region
        $region21: #{wav2vec2_forward.5} parent=11 // pred_check
          %p841 = pneg %p253
        $region22: #{wav2vec2_forward.5} parent=11 // pred_check_branch
          %843 = sbr.rel (%p841) target = $region24
        $region23: #{wav2vec2_forward.5} parent=11 // pred_region
          _
        $region24: #{wav2vec2_forward.5} parent=11 // pred_fallthru
          _
        // Predicated region
        $region25: #{wav2vec2_forward.5} parent=11 // pred_check
          %p844 = pneg %p274
        $region26: #{wav2vec2_forward.5} parent=11 // pred_check_branch
          %846 = sbr.rel (%p844) target = $region28
        $region27: #{wav2vec2_forward.5} parent=11 // pred_region
          %848 = vsyncadd [#allocation8], 0
          %s849 = sshll.u32 %s15, 4
          %s850 = int_to_ptr.hbm [resolvable:$true] %s849
          %s851 = sshll.u32 [#allocation7], 4
          %s852 = int_to_ptr.vmem [resolvable:$true] %s851
          %857 = dma.hbm_to_vmem [thread:$0]  %s850, 1024, %s852, [#allocation8], 64, 64, 4
        $region28: #{wav2vec2_forward.5} parent=11 // pred_fallthru
          _
        // Predicated region
        $region29: #{wav2vec2_forward.5} parent=11 // pred_check
          %p858 = pneg %p295
        $region30: #{wav2vec2_forward.5} parent=11 // pred_check_branch
          %860 = sbr.rel (%p858) target = $region32
        $region31: #{wav2vec2_forward.5} parent=11 // pred_region
          _
        $region32: #{wav2vec2_forward.5} parent=11 // pred_fallthru
          _
        // Predicated region
        $region33: #{wav2vec2_forward.5} parent=11 // pred_check
          %p861 = pneg %p316
        $region34: #{wav2vec2_forward.5} parent=11 // pred_check_branch
          %863 = sbr.rel (%p861) target = $region36
        $region35: #{wav2vec2_forward.5} parent=11 // pred_region
          %865 = vsyncadd [#allocation8], 0
          %s866 = sshll.u32 %s19, 4
          %s867 = int_to_ptr.hbm [resolvable:$true] %s866
          %s868 = sshll.u32 [#allocation9], 4
          %s869 = int_to_ptr.vmem [resolvable:$true] %s868
          %874 = dma.hbm_to_vmem [thread:$0]  %s867, 3072, %s869, [#allocation8], 64, 64, 4
        $region36: #{wav2vec2_forward.5} parent=11 // pred_fallthru
          _
        // Predicated region
        $region37: #{wav2vec2_forward.5} parent=11 // pred_check
          %p875 = pneg %p337
        $region38: #{wav2vec2_forward.5} parent=11 // pred_check_branch
          %877 = sbr.rel (%p875) target = $region40
        $region39: #{wav2vec2_forward.5} parent=11 // pred_region
          _
        $region40: #{wav2vec2_forward.5} parent=11 // pred_fallthru
          _
        // Predicated region
        $region41: #{wav2vec2_forward.5} parent=11 // pred_check
          %p878 = pneg %p358
        $region42: #{wav2vec2_forward.5} parent=11 // pred_check_branch
          %880 = sbr.rel (%p878) target = $region44
        $region43: #{wav2vec2_forward.5} parent=11 // pred_region
          _
        $region44: #{wav2vec2_forward.5} parent=11 // pred_fallthru
          _
        // Predicated region
        $region45: #{wav2vec2_forward.5} parent=11 // pred_check
          %p881 = pneg %p379
        $region46: #{wav2vec2_forward.5} parent=11 // pred_check_branch
          %883 = sbr.rel (%p881) target = $region48
        $region47: #{wav2vec2_forward.5} parent=11 // pred_region
          _
        $region48: #{wav2vec2_forward.5} parent=11 // pred_fallthru
          _
        // Predicated region
        $region49: #{wav2vec2_forward.5} parent=11 // pred_check
          %p884 = pneg %p400
        $region50: #{wav2vec2_forward.5} parent=11 // pred_check_branch
          %886 = sbr.rel (%p884) target = $region52
        $region51: #{wav2vec2_forward.5} parent=11 // pred_region
          _
        $region52: #{wav2vec2_forward.5} parent=11 // pred_fallthru
          _
        // Predicated region
        $region53: #{wav2vec2_forward.5} parent=11 // pred_check
          %p887 = pneg %p421
        $region54: #{wav2vec2_forward.5} parent=11 // pred_check_branch
          %889 = sbr.rel (%p887) target = $region56
        $region55: #{wav2vec2_forward.5} parent=11 // pred_region
          %891 = vsyncadd [#allocation11], 0
          %s892 = sshll.u32 %s29, 4
          %s893 = int_to_ptr.hbm [resolvable:$true] %s892
          %s894 = sshll.u32 [#allocation10], 4
          %s895 = int_to_ptr.vmem [resolvable:$true] %s894
          %900 = dma.hbm_to_vmem [thread:$0]  %s893, 96, %s895, [#allocation11], 48, 48, 3
        $region56: #{wav2vec2_forward.5} parent=11 // pred_fallthru
          _
        // Predicated region
        $region57: #{wav2vec2_forward.5} parent=11 // pred_check
          %p901 = pneg %p442
        $region58: #{wav2vec2_forward.5} parent=11 // pred_check_branch
          %903 = sbr.rel (%p901) target = $region60
        $region59: #{wav2vec2_forward.5} parent=11 // pred_region
          _
        $region60: #{wav2vec2_forward.5} parent=11 // pred_fallthru
          _
        // Predicated region
        $region61: #{wav2vec2_forward.5} parent=11 // pred_check
          %p904 = pneg %p463
        $region62: #{wav2vec2_forward.5} parent=11 // pred_check_branch
          %906 = sbr.rel (%p904) target = $region64
        $region63: #{wav2vec2_forward.5} parent=11 // pred_region
          %908 = vsyncadd [#allocation11], 0
          %s909 = sshll.u32 %s33, 4
          %s910 = int_to_ptr.hbm [resolvable:$true] %s909
          %s911 = sshll.u32 [#allocation12], 4
          %s912 = int_to_ptr.vmem [resolvable:$true] %s911
          %917 = dma.hbm_to_vmem [thread:$0]  %s910, 32, %s912, [#allocation11], 16, 16, 1
        $region64: #{wav2vec2_forward.5} parent=11 // pred_fallthru
          _
        // Predicated region
        $region65: #{wav2vec2_forward.5} parent=11 // pred_check
          %p918 = pneg %p484
        $region66: #{wav2vec2_forward.5} parent=11 // pred_check_branch
          %920 = sbr.rel (%p918) target = $region68
        $region67: #{wav2vec2_forward.5} parent=11 // pred_region
          %922 = vsyncadd [#allocation14], 0
          %s923 = sshll.u32 %s35, 4
          %s924 = int_to_ptr.hbm [resolvable:$true] %s923
          %s925 = sshll.u32 [#allocation13], 4
          %s926 = int_to_ptr.vmem [resolvable:$true] %s925
          %931 = dma.hbm_to_vmem [thread:$0]  %s924, 32, %s926, [#allocation14], 16, 16, 1
        $region68: #{wav2vec2_forward.5} parent=11 // pred_fallthru
          _
        // Predicated region
        $region69: #{wav2vec2_forward.5} parent=11 // pred_check
          %p932 = pneg %p505
        $region70: #{wav2vec2_forward.5} parent=11 // pred_check_branch
          %934 = sbr.rel (%p932) target = $region72
        $region71: #{wav2vec2_forward.5} parent=11 // pred_region
          %936 = vsyncadd [#allocation14], 0
          %s937 = sshll.u32 %s37, 4
          %s938 = int_to_ptr.hbm [resolvable:$true] %s937
          %s939 = sshll.u32 [#allocation15], 4
          %s940 = int_to_ptr.vmem [resolvable:$true] %s939
          %945 = dma.hbm_to_vmem [thread:$0]  %s938, 32, %s940, [#allocation14], 16, 16, 1
        $region72: #{wav2vec2_forward.5} parent=11 // pred_fallthru
          _
        // Predicated region
        $region73: #{wav2vec2_forward.5} parent=11 // pred_check
          %p946 = pneg %p526
        $region74: #{wav2vec2_forward.5} parent=11 // pred_check_branch
          %948 = sbr.rel (%p946) target = $region76
        $region75: #{wav2vec2_forward.5} parent=11 // pred_region
          _
        $region76: #{wav2vec2_forward.5} parent=11 // pred_fallthru
          _
        // Predicated region
        $region77: #{wav2vec2_forward.5} parent=11 // pred_check
          %p949 = pneg %p547
        $region78: #{wav2vec2_forward.5} parent=11 // pred_check_branch
          %951 = sbr.rel (%p949) target = $region80
        $region79: #{wav2vec2_forward.5} parent=11 // pred_region
          %953 = vsyncadd [#allocation17], 0
          %s954 = sshll.u32 %s41, 4
          %s955 = int_to_ptr.hbm [resolvable:$true] %s954
          %s956 = sshll.u32 [#allocation16], 4
          %s957 = int_to_ptr.vmem [resolvable:$true] %s956
          %962 = dma.hbm_to_vmem [thread:$0]  %s955, 64, %s957, [#allocation17], 32, 32, 2
        $region80: #{wav2vec2_forward.5} parent=11 // pred_fallthru
          _
        // Predicated region
        $region81: #{wav2vec2_forward.5} parent=11 // pred_check
          %p963 = pneg %p568
        $region82: #{wav2vec2_forward.5} parent=11 // pred_check_branch
          %965 = sbr.rel (%p963) target = $region84
        $region83: #{wav2vec2_forward.5} parent=11 // pred_region
          %967 = vsyncadd [#allocation17], 0
          %s968 = sshll.u32 %s43, 4
          %s969 = int_to_ptr.hbm [resolvable:$true] %s968
          %s970 = sshll.u32 [#allocation18], 4
          %s971 = int_to_ptr.vmem [resolvable:$true] %s970
          %976 = dma.hbm_to_vmem [thread:$0]  %s969, 4096, %s971, [#allocation17], 64, 64, 4
        $region84: #{wav2vec2_forward.5} parent=11 // pred_fallthru
          _
        // Predicated region
        $region85: #{wav2vec2_forward.5} parent=11 // pred_check
          %p977 = pneg %p589
        $region86: #{wav2vec2_forward.5} parent=11 // pred_check_branch
          %979 = sbr.rel (%p977) target = $region88
        $region87: #{wav2vec2_forward.5} parent=11 // pred_region
          %981 = vsyncadd [#allocation20], 0
          %s982 = sshll.u32 %s45, 4
          %s983 = int_to_ptr.hbm [resolvable:$true] %s982
          %s984 = sshll.u32 [#allocation19], 4
          %s985 = int_to_ptr.vmem [resolvable:$true] %s984
          %990 = dma.hbm_to_vmem [thread:$0]  %s983, 32, %s985, [#allocation20], 16, 16, 1
        $region88: #{wav2vec2_forward.5} parent=11 // pred_fallthru
          _
        // Predicated region
        $region89: #{wav2vec2_forward.5} parent=11 // pred_check
          %p991 = pneg %p610
        $region90: #{wav2vec2_forward.5} parent=11 // pred_check_branch
          %993 = sbr.rel (%p991) target = $region92
        $region91: #{wav2vec2_forward.5} parent=11 // pred_region
          %995 = vsyncadd [#allocation20], 0
          %s996 = sshll.u32 %s47, 4
          %s997 = int_to_ptr.hbm [resolvable:$true] %s996
          %s998 = sshll.u32 [#allocation21], 4
          %s999 = int_to_ptr.vmem [resolvable:$true] %s998
          %1004 = dma.hbm_to_vmem [thread:$0]  %s997, 32, %s999, [#allocation20], 16, 16, 1
        $region92: #{wav2vec2_forward.5} parent=11 // pred_fallthru
          _
        // Predicated region
        $region93: #{wav2vec2_forward.5} parent=11 // pred_check
          %p1005 = pneg %p631
        $region94: #{wav2vec2_forward.5} parent=11 // pred_check_branch
          %1007 = sbr.rel (%p1005) target = $region96
        $region95: #{wav2vec2_forward.5} parent=11 // pred_region
          %1009 = vsyncadd [#allocation23], 0
          %s1010 = sshll.u32 %s49, 4
          %s1011 = int_to_ptr.hbm [resolvable:$true] %s1010
          %s1012 = sshll.u32 [#allocation22], 4
          %s1013 = int_to_ptr.vmem [resolvable:$true] %s1012
          %1018 = dma.hbm_to_vmem [thread:$0]  %s1011, 32, %s1013, [#allocation23], 16, 16, 1
        $region96: #{wav2vec2_forward.5} parent=11 // pred_fallthru
          _
        // Predicated region
        $region97: #{wav2vec2_forward.5} parent=11 // pred_check
          %p1019 = pneg %p652
        $region98: #{wav2vec2_forward.5} parent=11 // pred_check_branch
          %1021 = sbr.rel (%p1019) target = $region100
        $region99: #{wav2vec2_forward.5} parent=11 // pred_region
          %1023 = vsyncadd [#allocation23], 0
          %s1024 = sshll.u32 %s51, 4
          %s1025 = int_to_ptr.hbm [resolvable:$true] %s1024
          %s1026 = sshll.u32 [#allocation24], 4
          %s1027 = int_to_ptr.vmem [resolvable:$true] %s1026
          %1032 = dma.hbm_to_vmem [thread:$0]  %s1025, 1024, %s1027, [#allocation23], 64, 64, 4
        $region100: #{wav2vec2_forward.5} parent=11 // pred_fallthru
          _
        // Predicated region
        $region101: #{wav2vec2_forward.5} parent=11 // pred_check
          %p1033 = pneg %p673
        $region102: #{wav2vec2_forward.5} parent=11 // pred_check_branch
          %1035 = sbr.rel (%p1033) target = $region104
        $region103: #{wav2vec2_forward.5} parent=11 // pred_region
          %1037 = vsyncadd [#allocation26], 0
          %s1039 = sshll.u32 %s53, 4
          %s1040 = int_to_ptr.hbm [resolvable:$true] %s1039
          %s1041 = sshll.u32 [#allocation25], 4
          %s1042 = int_to_ptr.vmem [resolvable:$true] %s1041
          %1044 = dma.hbm_to_vmem [thread:$0]  %s1040, 16, %s1042, [#allocation26]
        $region104: #{wav2vec2_forward.5} parent=11 // pred_fallthru
          _
        // Predicated region
        $region105: #{wav2vec2_forward.5} parent=11 // pred_check
          %p1045 = pneg %p694
        $region106: #{wav2vec2_forward.5} parent=11 // pred_check_branch
          %1047 = sbr.rel (%p1045) target = $region108
        $region107: #{wav2vec2_forward.5} parent=11 // pred_region
          %1049 = vsyncadd [#allocation26], 0
          %s1051 = sshll.u32 %s55, 4
          %s1052 = int_to_ptr.hbm [resolvable:$true] %s1051
          %s1053 = sshll.u32 [#allocation27], 4
          %s1054 = int_to_ptr.vmem [resolvable:$true] %s1053
          %1056 = dma.hbm_to_vmem [thread:$0]  %s1052, 16, %s1054, [#allocation26]
        $region108: #{wav2vec2_forward.5} parent=11 // pred_fallthru
          _
        // Predicated region
        $region109: #{wav2vec2_forward.5} parent=11 // pred_check
          %p1057 = pneg %p715
        $region110: #{wav2vec2_forward.5} parent=11 // pred_check_branch
          %1059 = sbr.rel (%p1057) target = $region112
        $region111: #{wav2vec2_forward.5} parent=11 // pred_region
          _
        $region112: #{wav2vec2_forward.5} parent=11 // pred_fallthru
          _
        // Predicated region
        $region113: #{wav2vec2_forward.5} parent=11 // pred_check
          %p1060 = pneg %p736
        $region114: #{wav2vec2_forward.5} parent=11 // pred_check_branch
          %1062 = sbr.rel (%p1060) target = $region116
        $region115: #{wav2vec2_forward.5} parent=11 // pred_region
          %1064 = vsyncadd [#allocation29], 0
          %s1065 = sshll.u32 %s59, 4
          %s1066 = int_to_ptr.hbm [resolvable:$true] %s1065
          %s1067 = sshll.u32 [#allocation28], 4
          %s1068 = int_to_ptr.vmem [resolvable:$true] %s1067
          %1073 = dma.hbm_to_vmem [thread:$0]  %s1066, 1024, %s1068, [#allocation29], 64, 64, 4
        $region116: #{wav2vec2_forward.5} parent=11 // pred_fallthru
          _
        // Predicated region
        $region117: #{wav2vec2_forward.5} parent=11 // pred_check
          %p1074 = pneg %p757
        $region118: #{wav2vec2_forward.5} parent=11 // pred_check_branch
          %1076 = sbr.rel (%p1074) target = $region120
        $region119: #{wav2vec2_forward.5} parent=11 // pred_region
          %1078 = vsyncadd [#allocation29], 0
          %s1080 = sshll.u32 %s61, 4
          %s1081 = int_to_ptr.hbm [resolvable:$true] %s1080
          %s1082 = sshll.u32 [#allocation30], 4
          %s1083 = int_to_ptr.vmem [resolvable:$true] %s1082
          %1085 = dma.hbm_to_vmem [thread:$0]  %s1081, 16, %s1083, [#allocation29]
        $region120: #{wav2vec2_forward.5} parent=11 // pred_fallthru
          _
      $region12: #{wav2vec2_forward.5} parent=5 // pred_fallthru
        _
      %p1086 = scmp.lt.s32.totalorder %s86, 2
      // Predicated region
      $region121: #{wav2vec2_forward.5} parent=5 // pred_check
        %p1087 = pneg %p1086
      $region122: #{wav2vec2_forward.5} parent=5 // pred_check_branch
        %1089 = sbr.rel (%p1087) target = $region124
      $region123: #{wav2vec2_forward.5} parent=5 // pred_region
        // Predicated region
        $region125: #{wav2vec2_forward.5} parent=123 // pred_check
          %p1090 = pneg %p106
        $region126: #{wav2vec2_forward.5} parent=123 // pred_check_branch
          %1092 = sbr.rel (%p1090) target = $region128
        $region127: #{wav2vec2_forward.5} parent=123 // pred_region
          %p1093 = scmp.lt.s32.totalorder %s86, 1
          %s1094 = scalar_select %p1093, %s86, 1
          %s1095 = smul.addr %s1094, 6
          %s1096 = smul.addr %s1095, 8
          %s1097 = scalar_lea.vmem %s1, %s1096
        $region128: #{wav2vec2_forward.5} parent=123 // pred_fallthru
          _
        // Predicated region
        $region129: #{wav2vec2_forward.5} parent=123 // pred_check
          %p1098 = pneg %p132
        $region130: #{wav2vec2_forward.5} parent=123 // pred_check_branch
          %1100 = sbr.rel (%p1098) target = $region132
        $region131: #{wav2vec2_forward.5} parent=123 // pred_region
          %p1101 = scmp.lt.s32.totalorder %s86, 1
          %s1102 = scalar_select %p1101, %s86, 1
          %s1103 = smul.addr %s1102, 3
          %s1104 = smul.addr %s1103, 8
          %s1105 = scalar_lea.vmem %s3, %s1104
        $region132: #{wav2vec2_forward.5} parent=123 // pred_fallthru
          _
        // Predicated region
        $region133: #{wav2vec2_forward.5} parent=123 // pred_check
          %p1106 = pneg %p158
        $region134: #{wav2vec2_forward.5} parent=123 // pred_check_branch
          %1108 = sbr.rel (%p1106) target = $region136
        $region135: #{wav2vec2_forward.5} parent=123 // pred_region
          %p1109 = scmp.lt.s32.totalorder %s86, 1
          %s1110 = scalar_select %p1109, %s86, 1
          %s1111 = scalar_lea.vmem %s5, %s1110
        $region136: #{wav2vec2_forward.5} parent=123 // pred_fallthru
          _
        // Predicated region
        $region137: #{wav2vec2_forward.5} parent=123 // pred_check
          %p1112 = pneg %p184
        $region138: #{wav2vec2_forward.5} parent=123 // pred_check_branch
          %1114 = sbr.rel (%p1112) target = $region140
        $region139: #{wav2vec2_forward.5} parent=123 // pred_region
          %p1115 = scmp.lt.s32.totalorder %s86, 1
          %s1116 = scalar_select %p1115, %s86, 1
          %s1117 = smul.addr %s1116, 3
          %s1118 = smul.addr %s1117, 8
          %s1119 = scalar_lea.vmem %s7, %s1118
        $region140: #{wav2vec2_forward.5} parent=123 // pred_fallthru
          _
      $region124: #{wav2vec2_forward.5} parent=5 // pred_fallthru
        _
      %p1120 = scmp.le.s32.totalorder 1, %s86
      %p1121 = scmp.lt.s32.totalorder %s86, 3
      %p1122 = pnand %p1120, %p1121
      %p1123 = pneg %p1122
      // Predicated region
      $region141: #{wav2vec2_forward.5} parent=5 // pred_check
        _
      $region142: #{wav2vec2_forward.5} parent=5 // pred_check_branch
        %1125 = sbr.rel (%p1122) target = $region144
      $region143: #{wav2vec2_forward.5} parent=5 // pred_region
        %s1126 = ssub.s32 %s86, 1
        // Predicated region
        $region145: #{wav2vec2_forward.5} parent=143 // pred_check
          %p1127 = pneg %p211
        $region146: #{wav2vec2_forward.5} parent=143 // pred_check_branch
          %1129 = sbr.rel (%p1127) target = $region148
        $region147: #{wav2vec2_forward.5} parent=143 // pred_region
          %1131 = dma.done [#allocation5], 3072
        $region148: #{wav2vec2_forward.5} parent=143 // pred_fallthru
          _
        // Predicated region
        $region149: #{wav2vec2_forward.5} parent=143 // pred_check
          %p1132 = pneg %p274
        $region150: #{wav2vec2_forward.5} parent=143 // pred_check_branch
          %1134 = sbr.rel (%p1132) target = $region152
        $region151: #{wav2vec2_forward.5} parent=143 // pred_region
          %1136 = dma.done [#allocation8], 1024
        $region152: #{wav2vec2_forward.5} parent=143 // pred_fallthru
          _
        // Predicated region
        $region153: #{wav2vec2_forward.5} parent=143 // pred_check
          %p1137 = pneg %p316
        $region154: #{wav2vec2_forward.5} parent=143 // pred_check_branch
          %1139 = sbr.rel (%p1137) target = $region156
        $region155: #{wav2vec2_forward.5} parent=143 // pred_region
          %1141 = dma.done [#allocation8], 3072
        $region156: #{wav2vec2_forward.5} parent=143 // pred_fallthru
          _
        // Predicated region
        $region157: #{wav2vec2_forward.5} parent=143 // pred_check
          %p1142 = pneg %p421
        $region158: #{wav2vec2_forward.5} parent=143 // pred_check_branch
          %1144 = sbr.rel (%p1142) target = $region160
        $region159: #{wav2vec2_forward.5} parent=143 // pred_region
          %1146 = dma.done [#allocation11], 96
        $region160: #{wav2vec2_forward.5} parent=143 // pred_fallthru
          _
        // Predicated region
        $region161: #{wav2vec2_forward.5} parent=143 // pred_check
          %p1147 = pneg %p463
        $region162: #{wav2vec2_forward.5} parent=143 // pred_check_branch
          %1149 = sbr.rel (%p1147) target = $region164
        $region163: #{wav2vec2_forward.5} parent=143 // pred_region
          %1151 = dma.done [#allocation11], 32
        $region164: #{wav2vec2_forward.5} parent=143 // pred_fallthru
          _
        // Predicated region
        $region165: #{wav2vec2_forward.5} parent=143 // pred_check
          %p1152 = pneg %p484
        $region166: #{wav2vec2_forward.5} parent=143 // pred_check_branch
          %1154 = sbr.rel (%p1152) target = $region168
        $region167: #{wav2vec2_forward.5} parent=143 // pred_region
          %1156 = dma.done [#allocation14], 32
        $region168: #{wav2vec2_forward.5} parent=143 // pred_fallthru
          _
        // Predicated region
        $region169: #{wav2vec2_forward.5} parent=143 // pred_check
          %p1157 = pneg %p505
        $region170: #{wav2vec2_forward.5} parent=143 // pred_check_branch
          %1159 = sbr.rel (%p1157) target = $region172
        $region171: #{wav2vec2_forward.5} parent=143 // pred_region
          %1161 = dma.done [#allocation14], 32
        $region172: #{wav2vec2_forward.5} parent=143 // pred_fallthru
          _
        // Predicated region
        $region173: #{wav2vec2_forward.5} parent=143 // pred_check
          %p1162 = pneg %p547
        $region174: #{wav2vec2_forward.5} parent=143 // pred_check_branch
          %1164 = sbr.rel (%p1162) target = $region176
        $region175: #{wav2vec2_forward.5} parent=143 // pred_region
          %1166 = dma.done [#allocation17], 64
        $region176: #{wav2vec2_forward.5} parent=143 // pred_fallthru
          _
        // Predicated region
        $region177: #{wav2vec2_forward.5} parent=143 // pred_check
          %p1167 = pneg %p568
        $region178: #{wav2vec2_forward.5} parent=143 // pred_check_branch
          %1169 = sbr.rel (%p1167) target = $region180
        $region179: #{wav2vec2_forward.5} parent=143 // pred_region
          %1171 = dma.done [#allocation17], 4096
        $region180: #{wav2vec2_forward.5} parent=143 // pred_fallthru
          _
        // Predicated region
        $region181: #{wav2vec2_forward.5} parent=143 // pred_check
          %p1172 = pneg %p589
        $region182: #{wav2vec2_forward.5} parent=143 // pred_check_branch
          %1174 = sbr.rel (%p1172) target = $region184
        $region183: #{wav2vec2_forward.5} parent=143 // pred_region
          %1176 = dma.done [#allocation20], 32
        $region184: #{wav2vec2_forward.5} parent=143 // pred_fallthru
          _
        // Predicated region
        $region185: #{wav2vec2_forward.5} parent=143 // pred_check
          %p1177 = pneg %p610
        $region186: #{wav2vec2_forward.5} parent=143 // pred_check_branch
          %1179 = sbr.rel (%p1177) target = $region188
        $region187: #{wav2vec2_forward.5} parent=143 // pred_region
          %1181 = dma.done [#allocation20], 32
        $region188: #{wav2vec2_forward.5} parent=143 // pred_fallthru
          _
        // Predicated region
        $region189: #{wav2vec2_forward.5} parent=143 // pred_check
          %p1182 = pneg %p631
        $region190: #{wav2vec2_forward.5} parent=143 // pred_check_branch
          %1184 = sbr.rel (%p1182) target = $region192
        $region191: #{wav2vec2_forward.5} parent=143 // pred_region
          %1186 = dma.done [#allocation23], 32
        $region192: #{wav2vec2_forward.5} parent=143 // pred_fallthru
          _
        // Predicated region
        $region193: #{wav2vec2_forward.5} parent=143 // pred_check
          %p1187 = pneg %p652
        $region194: #{wav2vec2_forward.5} parent=143 // pred_check_branch
          %1189 = sbr.rel (%p1187) target = $region196
        $region195: #{wav2vec2_forward.5} parent=143 // pred_region
          %1191 = dma.done [#allocation23], 1024
        $region196: #{wav2vec2_forward.5} parent=143 // pred_fallthru
          _
        // Predicated region
        $region197: #{wav2vec2_forward.5} parent=143 // pred_check
          %p1192 = pneg %p673
        $region198: #{wav2vec2_forward.5} parent=143 // pred_check_branch
          %1194 = sbr.rel (%p1192) target = $region200
        $region199: #{wav2vec2_forward.5} parent=143 // pred_region
          %1196 = dma.done [#allocation26], 16
        $region200: #{wav2vec2_forward.5} parent=143 // pred_fallthru
          _
        // Predicated region
        $region201: #{wav2vec2_forward.5} parent=143 // pred_check
          %p1197 = pneg %p694
        $region202: #{wav2vec2_forward.5} parent=143 // pred_check_branch
          %1199 = sbr.rel (%p1197) target = $region204
        $region203: #{wav2vec2_forward.5} parent=143 // pred_region
          %1201 = dma.done [#allocation26], 16
        $region204: #{wav2vec2_forward.5} parent=143 // pred_fallthru
          _
        // Predicated region
        $region205: #{wav2vec2_forward.5} parent=143 // pred_check
          %p1202 = pneg %p736
        $region206: #{wav2vec2_forward.5} parent=143 // pred_check_branch
          %1204 = sbr.rel (%p1202) target = $region208
        $region207: #{wav2vec2_forward.5} parent=143 // pred_region
          %1206 = dma.done [#allocation29], 1024
        $region208: #{wav2vec2_forward.5} parent=143 // pred_fallthru
          _
        // Predicated region
        $region209: #{wav2vec2_forward.5} parent=143 // pred_check
          %p1207 = pneg %p757
        $region210: #{wav2vec2_forward.5} parent=143 // pred_check_branch
          %1209 = sbr.rel (%p1207) target = $region212
        $region211: #{wav2vec2_forward.5} parent=143 // pred_region
          %1211 = dma.done [#allocation29], 16
        $region212: #{wav2vec2_forward.5} parent=143 // pred_fallthru
          _
        %p1212 = scmp.lt.s32.totalorder %s91, 1
        %s1213 = scalar_select %p1212, %s91, 1
        %s1214 = smul.addr %s1213, 6
        %s1215 = smul.addr %s1214, 8
        %s1216 = scalar_lea.vmem %s1, %s1215
        %p1217 = pneg %p112
        %p1218 = pneg %p109
        %p1219 = scmp.lt.s32.totalorder %s91, 1
        %s1220 = scalar_select %p1219, %s91, 1
        %s1221 = smul.addr %s1220, 3
        %s1222 = smul.addr %s1221, 8
        %s1223 = scalar_lea.vmem %s3, %s1222
        %p1224 = pneg %p138
        %p1225 = pneg %p135
        %p1226 = scmp.lt.s32.totalorder %s91, 1
        %s1227 = scalar_select %p1226, %s91, 1
        %s1228 = scalar_lea.vmem %s5, %s1227
        %p1229 = pneg %p164
        %p1230 = pneg %p161
        %p1231 = scmp.lt.s32.totalorder %s91, 1
        %s1232 = scalar_select %p1231, %s91, 1
        %s1233 = smul.addr %s1232, 3
        %s1234 = smul.addr %s1233, 8
        %s1235 = scalar_lea.vmem %s7, %s1234
        %p1236 = pneg %p190
        %p1237 = pneg %p187
        %p1238 = pneg %p211
        %p1239 = pneg %p208
        %p1240 = pneg %p232
        %p1241 = pneg %p229
        %p1242 = pneg %p253
        %p1243 = pneg %p250
        %p1244 = pneg %p274
        %p1245 = pneg %p271
        %p1246 = pneg %p295
        %p1247 = pneg %p292
        %p1248 = pneg %p316
        %p1249 = pneg %p313
        %p1250 = pneg %p337
        %p1251 = pneg %p334
        %p1252 = pneg %p358
        %p1253 = pneg %p355
        %p1254 = pneg %p379
        %p1255 = pneg %p376
        %p1256 = pneg %p400
        %p1257 = pneg %p397
        %p1258 = pneg %p421
        %p1259 = pneg %p418
        %p1260 = pneg %p442
        %p1261 = pneg %p439
        %p1262 = pneg %p463
        %p1263 = pneg %p460
        %p1264 = pneg %p484
        %p1265 = pneg %p481
        %p1266 = pneg %p505
        %p1267 = pneg %p502
        %p1268 = pneg %p526
        %p1269 = pneg %p523
        %p1270 = pneg %p547
        %p1271 = pneg %p544
        %p1272 = pneg %p568
        %p1273 = pneg %p565
        %p1274 = pneg %p589
        %p1275 = pneg %p586
        %p1276 = pneg %p610
        %p1277 = pneg %p607
        %p1278 = pneg %p631
        %p1279 = pneg %p628
        %p1280 = pneg %p652
        %p1281 = pneg %p649
        %p1282 = pneg %p673
        %p1283 = pneg %p670
        %p1284 = pneg %p694
        %p1285 = pneg %p691
        %p1286 = pneg %p715
        %p1287 = pneg %p712
        %p1288 = pneg %p736
        %p1289 = pneg %p733
        %p1290 = pneg %p757
        %p1291 = pneg %p754
        %p1292 = pneg %p783
        %p1293 = pneg %p780
        %p1294 = scmp.lt.s32.totalorder %s91, 1
        %s1295 = scalar_select %p1294, %s91, 1
        %s1296 = smul.addr %s1295, 3
        %s1297 = smul.addr %s1296, 8
        %s1298 = scalar_lea.vmem %s63, %s1297
        %p1299 = pneg %p809
        %p1300 = pneg %p806
        %s1301 = sand.u32 %s796, 1
        %s1302 = scalar_lea.sflag [#allocation6], %s1301
        %s1303 = sand.u32 %s796, 1
        %s1304 = scalar_lea.vmem [#allocation31], %s1303
        %p1305 = scmp.lt.s32.totalorder %s91, 1
        %s1306 = scalar_select %p1305, %s91, 1
        %s1307 = smul.addr %s1306, 6
        %s1308 = smul.addr %s1307, 8
        %s1309 = scalar_lea.vmem %s1, %s1308
        %p1310 = scmp.lt.s32.totalorder %s91, 1
        %s1311 = scalar_select %p1310, %s91, 1
        %s1312 = smul.addr %s1311, 3
        %s1313 = smul.addr %s1312, 8
        %s1314 = scalar_lea.vmem %s3, %s1313
        %p1315 = scmp.lt.s32.totalorder %s91, 1
        %s1316 = scalar_select %p1315, %s91, 1
        %s1317 = scalar_lea.vmem %s5, %s1316
        %p1318 = scmp.lt.s32.totalorder %s91, 1
        %s1319 = scalar_select %p1318, %s91, 1
        %s1320 = smul.addr %s1319, 3
        %s1321 = smul.addr %s1320, 8
        %s1322 = scalar_lea.vmem %s7, %s1321
        %p1323 = scmp.lt.s32.totalorder %s91, 1
        %s1324 = scalar_select %p1323, %s91, 1
        %s1325 = smul.addr %s1324, 3
        %s1326 = smul.addr %s1325, 8
        %s1327 = scalar_lea.vmem %s63, %s1326
        %v1329 = vld [vmem:[%s1309] sm:$0xff]
        %v1330 = vld [vmem:[%s1309 + $0x8] sm:$0xff]
        %v1331 = vld [vmem:[%s1309 + $0x10] sm:$0xff]
        %v1332 = vld [vmem:[%s1309 + $0x18] sm:$0xff]
        %v1333 = vld [vmem:[%s1309 + $0x20] sm:$0x7]
        %v1334 = vld [vmem:[%s1309 + $0x28] sm:$0x7]
        %v1335 = vld [vmem:[#allocation4] sm:$0xf]
        %v1336 = vld [vmem:[#allocation4 + $0x4] sm:$0xf]
        %v1337 = vld [vmem:[#allocation4 + $0x8] sm:$0xf]
        %v1338 = vld [vmem:[#allocation4 + $0xc] sm:$0xf]
        %v1339 = vld [vmem:[#allocation4 + $0x10] sm:$0xf]
        %v1340 = vld [vmem:[#allocation4 + $0x14] sm:$0xf]
        %v1341 = vld [vmem:[#allocation4 + $0x18] sm:$0xf]
        %v1342 = vld [vmem:[#allocation4 + $0x1c] sm:$0xf]
        %v1343 = vld [vmem:[#allocation4 + $0x20] sm:$0xf]
        %v1344 = vld [vmem:[#allocation4 + $0x24] sm:$0xf]
        %v1345 = vld [vmem:[#allocation4 + $0x28] sm:$0xf]
        %v1346 = vld [vmem:[#allocation4 + $0x2c] sm:$0xf]
        %v1347 = vld [vmem:[#allocation4 + $0x30] sm:$0xf]
        %v1348 = vld [vmem:[#allocation4 + $0x34] sm:$0xf]
        %v1349 = vld [vmem:[#allocation4 + $0x38] sm:$0xf]
        %v1350 = vld [vmem:[#allocation4 + $0x3c] sm:$0xf]
        %v1351 = vpack.c.bf16 %v1331, %v1329
        %v1352 = vpack.c.bf16 %v1333, %v1333
        %v1353 = vld [vmem:[#allocation4 + $0x40] sm:$0xf]
        %v1354 = vld [vmem:[#allocation4 + $0x44] sm:$0xf]
        %v1355 = vld [vmem:[#allocation4 + $0x48] sm:$0xf]
        %v1356 = vld [vmem:[#allocation4 + $0x4c] sm:$0xf]
        %v1357 = vld [vmem:[#allocation4 + $0x50] sm:$0xf]
        %v1358 = vld [vmem:[#allocation4 + $0x54] sm:$0xf]
        %v1359 = vld [vmem:[#allocation4 + $0x58] sm:$0xf]
        %v1360 = vld [vmem:[#allocation4 + $0x5c] sm:$0xf]
        %v1361 = vld [vmem:[#allocation4 + $0x60] sm:$0xf]
        %v1362 = vld [vmem:[#allocation4 + $0x64] sm:$0xf]
        %v1363 = vld [vmem:[#allocation4 + $0x68] sm:$0xf]
        %v1364 = vld [vmem:[#allocation4 + $0x6c] sm:$0xf]
        %v1365 = vld [vmem:[#allocation4 + $0x70] sm:$0xf]
        %v1366 = vld [vmem:[#allocation4 + $0x74] sm:$0xf]
        %v1367 = vld [vmem:[#allocation4 + $0x78] sm:$0xf]
        %v1368 = vld [vmem:[#allocation4 + $0x7c] sm:$0xf]
        %v1369 = vpack.c.bf16 %v1332, %v1330
        %v1370 = vpack.c.bf16 %v1334, %v1334
        %v1387 = vunpack.c.l.b16 %v1353
        %v1388 = vunpack.c.l.b16 %v1354
        %v1389 = vunpack.c.l.b16 %v1355
        %v1390 = vunpack.c.l.b16 %v1356
        %v1391 = vunpack.c.l.b16 %v1357
        %v1392 = vunpack.c.l.b16 %v1358
        %v1393 = vunpack.c.l.b16 %v1359
        %v1394 = vunpack.c.l.b16 %v1360
        %v1395 = vunpack.c.l.b16 %v1361
        %v1396 = vunpack.c.l.b16 %v1362
        %v1397 = vunpack.c.l.b16 %v1363
        %v1398 = vunpack.c.l.b16 %v1364
        %v1399 = vunpack.c.l.b16 %v1365
        %v1400 = vunpack.c.l.b16 %v1366
        %v1401 = vunpack.c.l.b16 %v1367
        %v1402 = vunpack.c.l.b16 %v1368
        %v1403 = vpack.c.b16 %v1388, %v1387
        %v1404 = vpack.c.b16 %v1390, %v1389
        %v1405 = vpack.c.b16 %v1392, %v1391
        %v1406 = vpack.c.b16 %v1394, %v1393
        %v1407 = vpack.c.b16 %v1396, %v1395
        %v1408 = vpack.c.b16 %v1398, %v1397
        %v1409 = vpack.c.b16 %v1400, %v1399
        %v1410 = vpack.c.b16 %v1402, %v1401
        %1419 = vmatpush.bf16.msra.mxu0 %v1410
        %1420 = vmatpush.bf16.msra.mxu0 %v1409
        %1421 = vmatpush.bf16.msra.mxu0 %v1408
        %1422 = vmatpush.bf16.msra.mxu0 %v1407
        %1423 = vmatpush.bf16.msra.mxu0 %v1406
        %1424 = vmatpush.bf16.msra.mxu0 %v1405
        %1425 = vmatpush.bf16.msra.mxu0 %v1404
        %1426 = vmatpush.bf16.msra.mxu0 %v1403
        %1427 = vmatmul.bf16.gmra.mxu0 %v1369
        %v1428 = vpop.f32.mrf.mxu0
        %v1429 = vadd.f32 0.0, %v1428
        %v1430 = vpop.f32.mrf.mxu0
        %v1431 = vadd.f32 0.0, %v1430
        %1432 = vmatmul.bf16.gmra.mxu0 %v1370
        %v1433 = vpop.f32.mrf.mxu0
        %v1434 = vadd.f32 0.0, %v1433
        %v1435 = vpop.f32.mrf.mxu0
        %1436 = vdwg.mxu0
        %v1453 = vunpack.c.l.b16 %v1335
        %v1454 = vunpack.c.l.b16 %v1336
        %v1455 = vunpack.c.l.b16 %v1337
        %v1456 = vunpack.c.l.b16 %v1338
        %v1457 = vunpack.c.l.b16 %v1339
        %v1458 = vunpack.c.l.b16 %v1340
        %v1459 = vunpack.c.l.b16 %v1341
        %v1460 = vunpack.c.l.b16 %v1342
        %v1461 = vunpack.c.l.b16 %v1343
        %v1462 = vunpack.c.l.b16 %v1344
        %v1463 = vunpack.c.l.b16 %v1345
        %v1464 = vunpack.c.l.b16 %v1346
        %v1465 = vunpack.c.l.b16 %v1347
        %v1466 = vunpack.c.l.b16 %v1348
        %v1467 = vunpack.c.l.b16 %v1349
        %v1468 = vunpack.c.l.b16 %v1350
        %v1469 = vpack.c.b16 %v1454, %v1453
        %v1470 = vpack.c.b16 %v1456, %v1455
        %v1471 = vpack.c.b16 %v1458, %v1457
        %v1472 = vpack.c.b16 %v1460, %v1459
        %v1473 = vpack.c.b16 %v1462, %v1461
        %v1474 = vpack.c.b16 %v1464, %v1463
        %v1475 = vpack.c.b16 %v1466, %v1465
        %v1476 = vpack.c.b16 %v1468, %v1467
        %1485 = vmatpush.bf16.msra.mxu0 %v1476
        %1486 = vmatpush.bf16.msra.mxu0 %v1475
        %1487 = vmatpush.bf16.msra.mxu0 %v1474
        %1488 = vmatpush.bf16.msra.mxu0 %v1473
        %1489 = vmatpush.bf16.msra.mxu0 %v1472
        %1490 = vmatpush.bf16.msra.mxu0 %v1471
        %1491 = vmatpush.bf16.msra.mxu0 %v1470
        %1492 = vmatpush.bf16.msra.mxu0 %v1469
        %1493 = vmatmul.bf16.gmra.mxu0 %v1351
        %v1494 = vpop.f32.mrf.mxu0
        %v1495 = vadd.f32 %v1429, %v1494
        %v1496 = vpop.f32.mrf.mxu0
        %v1497 = vadd.f32 %v1431, %v1496
        %1498 = vmatmul.bf16.gmra.mxu0 %v1352
        %v1499 = vpop.f32.mrf.mxu0
        %v1500 = vadd.f32 %v1434, %v1499
        %v1501 = vpop.f32.mrf.mxu0
        %1502 = vdwg.mxu0
        %v1503 = vld [vmem:[#allocation4 + $0x80] sm:$0xf]
        %v1504 = vld [vmem:[#allocation4 + $0x84] sm:$0xf]
        %v1505 = vld [vmem:[#allocation4 + $0x88] sm:$0xf]
        %v1506 = vld [vmem:[#allocation4 + $0x8c] sm:$0xf]
        %v1507 = vld [vmem:[#allocation4 + $0x90] sm:$0xf]
        %v1508 = vld [vmem:[#allocation4 + $0x94] sm:$0xf]
        %v1509 = vld [vmem:[#allocation4 + $0x98] sm:$0xf]
        %v1510 = vld [vmem:[#allocation4 + $0x9c] sm:$0xf]
        %v1511 = vld [vmem:[#allocation4 + $0xa0] sm:$0xf]
        %v1512 = vld [vmem:[#allocation4 + $0xa4] sm:$0xf]
        %v1513 = vld [vmem:[#allocation4 + $0xa8] sm:$0xf]
        %v1514 = vld [vmem:[#allocation4 + $0xac] sm:$0xf]
        %v1515 = vld [vmem:[#allocation4 + $0xb0] sm:$0xf]
        %v1516 = vld [vmem:[#allocation4 + $0xb4] sm:$0xf]
        %v1517 = vld [vmem:[#allocation4 + $0xb8] sm:$0xf]
        %v1518 = vld [vmem:[#allocation4 + $0xbc] sm:$0xf]
        %vm1519 = vsmask.f32 7424
        %v1521 = vshrl.u32 %v1351, 16
        %v1523 = vshll.u32 %v1351, 16
        %v1525 = vrot.slane %v1523, 1
        %v1526 = vor.u32 %v1521, %v1525
        %v1528 = vshll.u32 %v1352, 16
        %v1530 = vrot.slane %v1528, 1
        %v1531 = vsel %vm1519, %v1526, %v1530
        %v1532 = vshrl.u32 %v1352, 16
        %v1534 = vor.u32 %v1532, %v1530
        %v1553 = vunpack.c.l.b16 %v1503
        %v1554 = vunpack.c.l.b16 %v1504
        %v1555 = vunpack.c.l.b16 %v1505
        %v1556 = vunpack.c.l.b16 %v1506
        %v1557 = vunpack.c.l.b16 %v1507
        %v1558 = vunpack.c.l.b16 %v1508
        %v1559 = vunpack.c.l.b16 %v1509
        %v1560 = vunpack.c.l.b16 %v1510
        %v1561 = vunpack.c.l.b16 %v1511
        %v1562 = vunpack.c.l.b16 %v1512
        %v1563 = vunpack.c.l.b16 %v1513
        %v1564 = vunpack.c.l.b16 %v1514
        %v1565 = vunpack.c.l.b16 %v1515
        %v1566 = vunpack.c.l.b16 %v1516
        %v1567 = vunpack.c.l.b16 %v1517
        %v1568 = vunpack.c.l.b16 %v1518
        %v1569 = vpack.c.b16 %v1554, %v1553
        %v1570 = vpack.c.b16 %v1556, %v1555
        %v1571 = vpack.c.b16 %v1558, %v1557
        %v1572 = vpack.c.b16 %v1560, %v1559
        %v1573 = vpack.c.b16 %v1562, %v1561
        %v1574 = vpack.c.b16 %v1564, %v1563
        %v1575 = vpack.c.b16 %v1566, %v1565
        %v1576 = vpack.c.b16 %v1568, %v1567
        %1585 = vmatpush.bf16.msra.mxu0 %v1576
        %1586 = vmatpush.bf16.msra.mxu0 %v1575
        %1587 = vmatpush.bf16.msra.mxu0 %v1574
        %1588 = vmatpush.bf16.msra.mxu0 %v1573
        %1589 = vmatpush.bf16.msra.mxu0 %v1572
        %1590 = vmatpush.bf16.msra.mxu0 %v1571
        %1591 = vmatpush.bf16.msra.mxu0 %v1570
        %1592 = vmatpush.bf16.msra.mxu0 %v1569
        %1593 = vmatmul.bf16.gmra.mxu0 %v1531
        %v1594 = vpop.f32.mrf.mxu0
        %v1595 = vadd.f32 0.0, %v1594
        %v1596 = vpop.f32.mrf.mxu0
        %v1597 = vadd.f32 0.0, %v1596
        %1598 = vmatmul.bf16.gmra.mxu0 %v1534
        %v1599 = vpop.f32.mrf.mxu0
        %v1600 = vadd.f32 0.0, %v1599
        %v1601 = vpop.f32.mrf.mxu0
        %1602 = vdwg.mxu0
        %v1603 = vadd.f32 %v1495, %v1595
        %v1604 = vadd.f32 %v1497, %v1597
        %v1605 = vadd.f32 %v1500, %v1600
        %v1606 = vmul.f32 %v1603, %v1603
        %v1607 = vmul.f32 %v1604, %v1604
        %v1608 = vmul.f32 %v1605, %v1605
        %v1609 = vmul.f32 %v1603, %v1606
        %v1610 = vmul.f32 %v1604, %v1607
        %v1611 = vmul.f32 %v1605, %v1608
        %v1612 = vmul.f32 %v1609, 0.044715
        %v1613 = vmul.f32 %v1610, 0.044715
        %v1614 = vmul.f32 %v1611, 0.044715
        %v1615 = vadd.f32 %v1603, %v1612
        %v1616 = vadd.f32 %v1604, %v1613
        %v1617 = vadd.f32 %v1605, %v1614
        %v1618 = vmul.f32 %v1615, 0.7978846
        %v1619 = vmul.f32 %v1616, 0.7978846
        %v1620 = vmul.f32 %v1617, 0.7978846
        %v1621 = vtanh.pop %v1618
        %v1622 = vtanh.pop %v1619
        %v1623 = vtanh.pop %v1620
        %v1624 = vadd.f32 %v1621, 1.0
        %v1625 = vadd.f32 %v1622, 1.0
        %v1626 = vadd.f32 %v1623, 1.0
        %v1627 = vmul.f32 %v1624, 0.5
        %v1628 = vmul.f32 %v1625, 0.5
        %v1629 = vmul.f32 %v1626, 0.5
        %v1630 = vmul.f32 %v1603, %v1627
        %v1631 = vmul.f32 %v1604, %v1628
        %v1632 = vmul.f32 %v1605, %v1629
        %v1633 = vld [vmem:[%s1314] sm:$0xff]
        %v1634 = vld [vmem:[%s1314 + $0x8] sm:$0xff]
        %v1635 = vld [vmem:[%s1314 + $0x10] sm:$0x3]
        %v1636 = vld [vmem:[%s1317] sm:$0x1]
        %v1637 = vld [vmem:[%s11] sm:$0x1]
        %v1638 = vld [vmem:[%s13] sm:$0x1]
        %1639 = vadd.xlane.f32.xlu0 %v1630
        %v1640 = vpop.xlane.xlu0 %1639
        %1641 = vadd.xlane.f32.xlu0 %v1631
        %v1642 = vpop.xlane.xlu0 %1641
        %vm1643 = vcmask 1041408
        %v1644 = vsel %vm1643, %v1632, 0.0
        %1645 = vadd.xlane.f32.xlu0 %v1644
        %v1646 = vpop.xlane.xlu0 %1645
        %v1647 = vrcp.pop 128.0
        %v1648 = vmul.f32 128.0, %v1647
        %v1649 = vsub.f32 1.0, %v1648
        %v1650 = vmul.f32 %v1647, %v1649
        %v1651 = vadd.f32 %v1647, %v1650
        %vm1652 = vweird.f32 %v1647
        %v1653 = vsel %vm1652, %v1647, %v1651
        %v1654 = vmul.f32 %v1640, %v1653
        %v1655 = vmul.f32 %v1642, %v1653
        %v1656 = vmul.f32 %v1646, %v1653
        %v1657 = vsub.f32 %v1630, %v1654
        %v1658 = vsub.f32 %v1631, %v1655
        %v1659 = vsub.f32 %v1632, %v1656
        %v1660 = vmul.f32 %v1657, %v1657
        %v1661 = vmul.f32 %v1658, %v1658
        %v1662 = vmul.f32 %v1659, %v1659
        %1663 = vadd.xlane.f32.xlu0 %v1660
        %v1664 = vpop.xlane.xlu0 %1663
        %1665 = vadd.xlane.f32.xlu0 %v1661
        %v1666 = vpop.xlane.xlu0 %1665
        %v1667 = vsel %vm1643, %v1662, 0.0
        %1668 = vadd.xlane.f32.xlu0 %v1667
        %v1669 = vpop.xlane.xlu0 %1668
        %v1670 = vmul.f32 %v1664, %v1653
        %v1671 = vmul.f32 %v1666, %v1653
        %v1672 = vmul.f32 %v1669, %v1653
        %v1673 = vadd.f32 %v1670, 1e-05
        %v1674 = vadd.f32 %v1671, 1e-05
        %v1675 = vadd.f32 %v1672, 1e-05
        %v1676 = vrsqrt.pop %v1673
        %v1677 = vmul.f32 %v1676, %v1673
        %v1678 = vmul.f32 %v1677, %v1676
        %v1679 = vmul.f32 0.5, %v1678
        %v1680 = vsub.f32 1.5, %v1679
        %v1681 = vmul.f32 %v1676, %v1680
        %vm1682 = vweird.f32 %v1673
        %vm1683 = vweird.f32 %v1676
        %vm1684 = vmor %vm1682, %vm1683
        %v1685 = vsel %vm1684, %v1676, %v1681
        %v1686 = vrsqrt.pop %v1674
        %v1687 = vmul.f32 %v1686, %v1674
        %v1688 = vmul.f32 %v1687, %v1686
        %v1689 = vmul.f32 0.5, %v1688
        %v1690 = vsub.f32 1.5, %v1689
        %v1691 = vmul.f32 %v1686, %v1690
        %vm1692 = vweird.f32 %v1674
        %vm1693 = vweird.f32 %v1686
        %vm1694 = vmor %vm1692, %vm1693
        %v1695 = vsel %vm1694, %v1686, %v1691
        %v1696 = vrsqrt.pop %v1675
        %v1697 = vmul.f32 %v1696, %v1675
        %v1698 = vmul.f32 %v1697, %v1696
        %v1699 = vmul.f32 0.5, %v1698
        %v1700 = vsub.f32 1.5, %v1699
        %v1701 = vmul.f32 %v1696, %v1700
        %vm1702 = vweird.f32 %v1675
        %vm1703 = vweird.f32 %v1696
        %vm1704 = vmor %vm1702, %vm1703
        %v1705 = vsel %vm1704, %v1696, %v1701
        %v1706 = vmul.f32 %v1657, %v1685
        %v1707 = vmul.f32 %v1658, %v1695
        %v1708 = vmul.f32 %v1659, %v1705
        %v1710 = vperm.slane %v1637, 0
        %v1712 = vmul.f32 %v1706, %v1710
        %v1713 = vmul.f32 %v1707, %v1710
        %v1714 = vmul.f32 %v1708, %v1710
        %v1716 = vperm.slane %v1638, 0
        %v1718 = vadd.f32 %v1712, %v1716
        %v1719 = vadd.f32 %v1713, %v1716
        %v1720 = vadd.f32 %v1714, %v1716
        %v1721 = vld [vmem:[#allocation7] sm:$0xf]
        %v1722 = vld [vmem:[#allocation7 + $0x4] sm:$0xf]
        %v1723 = vld [vmem:[#allocation7 + $0x8] sm:$0xf]
        %v1724 = vld [vmem:[#allocation7 + $0xc] sm:$0xf]
        %v1725 = vld [vmem:[#allocation7 + $0x10] sm:$0xf]
        %v1726 = vld [vmem:[#allocation7 + $0x14] sm:$0xf]
        %v1727 = vld [vmem:[#allocation7 + $0x18] sm:$0xf]
        %v1728 = vld [vmem:[#allocation7 + $0x1c] sm:$0xf]
        %v1729 = vld [vmem:[#allocation7 + $0x20] sm:$0xf]
        %v1730 = vld [vmem:[#allocation7 + $0x24] sm:$0xf]
        %v1731 = vld [vmem:[#allocation7 + $0x28] sm:$0xf]
        %v1732 = vld [vmem:[#allocation7 + $0x2c] sm:$0xf]
        %v1733 = vld [vmem:[#allocation7 + $0x30] sm:$0xf]
        %v1734 = vld [vmem:[#allocation7 + $0x34] sm:$0xf]
        %v1735 = vld [vmem:[#allocation7 + $0x38] sm:$0xf]
        %v1736 = vld [vmem:[#allocation7 + $0x3c] sm:$0xf]
        %v1737 = vpack.c.bf16 %v1719, %v1718
        %v1738 = vpack.c.bf16 %v1720, %v1720
        %v1739 = vld [vmem:[%s17] sm:$0x1]
        %v1741 = vperm.slane %v1739, 0
        %v1759 = vunpack.c.l.b16 %v1721
        %v1760 = vunpack.c.l.b16 %v1722
        %v1761 = vunpack.c.l.b16 %v1723
        %v1762 = vunpack.c.l.b16 %v1724
        %v1763 = vunpack.c.l.b16 %v1725
        %v1764 = vunpack.c.l.b16 %v1726
        %v1765 = vunpack.c.l.b16 %v1727
        %v1766 = vunpack.c.l.b16 %v1728
        %v1767 = vunpack.c.l.b16 %v1729
        %v1768 = vunpack.c.l.b16 %v1730
        %v1769 = vunpack.c.l.b16 %v1731
        %v1770 = vunpack.c.l.b16 %v1732
        %v1771 = vunpack.c.l.b16 %v1733
        %v1772 = vunpack.c.l.b16 %v1734
        %v1773 = vunpack.c.l.b16 %v1735
        %v1774 = vunpack.c.l.b16 %v1736
        %v1775 = vpack.c.b16 %v1760, %v1759
        %v1776 = vpack.c.b16 %v1762, %v1761
        %v1777 = vpack.c.b16 %v1764, %v1763
        %v1778 = vpack.c.b16 %v1766, %v1765
        %v1779 = vpack.c.b16 %v1768, %v1767
        %v1780 = vpack.c.b16 %v1770, %v1769
        %v1781 = vpack.c.b16 %v1772, %v1771
        %v1782 = vpack.c.b16 %v1774, %v1773
        %1791 = vmatpush.bf16.msra.mxu0 %v1782
        %1792 = vmatpush.bf16.msra.mxu0 %v1781
        %1793 = vmatpush.bf16.msra.mxu0 %v1780
        %1794 = vmatpush.bf16.msra.mxu0 %v1779
        %1795 = vmatpush.bf16.msra.mxu0 %v1778
        %1796 = vmatpush.bf16.msra.mxu0 %v1777
        %1797 = vmatpush.bf16.msra.mxu0 %v1776
        %1798 = vmatpush.bf16.msra.mxu0 %v1775
        %1799 = vmatmul.bf16.gmra.mxu0 %v1737
        %v1800 = vpop.f32.mrf.mxu0
        %v1801 = vadd.f32 %v1741, %v1800
        %v1802 = vpop.f32.mrf.mxu0
        %v1803 = vadd.f32 %v1741, %v1802
        %1804 = vmatmul.bf16.gmra.mxu0 %v1738
        %v1805 = vpop.f32.mrf.mxu0
        %v1806 = vadd.f32 %v1741, %v1805
        %v1807 = vpop.f32.mrf.mxu0
        %1808 = vdwg.mxu0
        %1810 = vset.pattern.permute.xlu0 0
        %1811 = vperm.xlu0 %1810, %v1633
        %v1812 = vpop.permute.xlu0 %1811
        %1815 = vset.pattern.permute.xlu0 0
        %1816 = vperm.xlu0 %1815, %v1634
        %v1817 = vpop.permute.xlu0 %1816
        %1820 = vset.pattern.permute.xlu0 0
        %1821 = vperm.xlu0 %1820, %v1635
        %v1822 = vpop.permute.xlu0 %1821
        %v1824 = vmul.f32 %v1801, %v1812
        %v1825 = vmul.f32 %v1803, %v1817
        %v1826 = vmul.f32 %v1806, %v1822
        %1827 = vst [vmem:[#allocation2] sm:$0xff] 0.0
        %1828 = vst [vmem:[#allocation2 + $0x8] sm:$0xff] 0.0
        %1829 = vst [vmem:[#allocation2 + $0x10] sm:$0xf] 0.0
        %1830 = vst [vmem:[#allocation2 + $0x1] sm:$0xff] %v1824
        %1831 = vst [vmem:[#allocation2 + $0x9] sm:$0xff] %v1825
        %1832 = vst [vmem:[#allocation2 + $0x11] sm:$0x3] %v1826
        %v1833 = vld [vmem:[#allocation2] sm:$0xff]
        %v1834 = vld [vmem:[#allocation2 + $0x8] sm:$0xff]
        %v1835 = vld [vmem:[#allocation2 + $0x10] sm:$0x3]
        %v1836 = vld [vmem:[#allocation9] sm:$0xf]
        %v1837 = vld [vmem:[#allocation9 + $0x4] sm:$0xf]
        %v1838 = vld [vmem:[#allocation9 + $0x8] sm:$0xf]
        %v1839 = vld [vmem:[#allocation9 + $0xc] sm:$0xf]
        %v1840 = vld [vmem:[#allocation9 + $0x10] sm:$0xf]
        %v1841 = vld [vmem:[#allocation9 + $0x14] sm:$0xf]
        %v1842 = vld [vmem:[#allocation9 + $0x18] sm:$0xf]
        %v1843 = vld [vmem:[#allocation9 + $0x1c] sm:$0xf]
        %v1844 = vld [vmem:[#allocation9 + $0x20] sm:$0xf]
        %v1845 = vld [vmem:[#allocation9 + $0x24] sm:$0xf]
        %v1846 = vld [vmem:[#allocation9 + $0x28] sm:$0xf]
        %v1847 = vld [vmem:[#allocation9 + $0x2c] sm:$0xf]
        %v1848 = vld [vmem:[#allocation9 + $0x30] sm:$0xf]
        %v1849 = vld [vmem:[#allocation9 + $0x34] sm:$0xf]
        %v1850 = vld [vmem:[#allocation9 + $0x38] sm:$0xf]
        %v1851 = vld [vmem:[#allocation9 + $0x3c] sm:$0xf]
        %v1852 = vpack.c.bf16 %v1834, %v1833
        %v1853 = vpack.c.bf16 %v1835, %v1835
        %v1854 = vld [vmem:[#allocation2 + $0x1] sm:$0xff]
        %v1855 = vld [vmem:[#allocation2 + $0x9] sm:$0xff]
        %v1856 = vld [vmem:[#allocation2 + $0x11] sm:$0x3]
        %v1857 = vld [vmem:[#allocation9 + $0x40] sm:$0xf]
        %v1858 = vld [vmem:[#allocation9 + $0x44] sm:$0xf]
        %v1859 = vld [vmem:[#allocation9 + $0x48] sm:$0xf]
        %v1860 = vld [vmem:[#allocation9 + $0x4c] sm:$0xf]
        %v1861 = vld [vmem:[#allocation9 + $0x50] sm:$0xf]
        %v1862 = vld [vmem:[#allocation9 + $0x54] sm:$0xf]
        %v1863 = vld [vmem:[#allocation9 + $0x58] sm:$0xf]
        %v1864 = vld [vmem:[#allocation9 + $0x5c] sm:$0xf]
        %v1865 = vld [vmem:[#allocation9 + $0x60] sm:$0xf]
        %v1866 = vld [vmem:[#allocation9 + $0x64] sm:$0xf]
        %v1867 = vld [vmem:[#allocation9 + $0x68] sm:$0xf]
        %v1868 = vld [vmem:[#allocation9 + $0x6c] sm:$0xf]
        %v1869 = vld [vmem:[#allocation9 + $0x70] sm:$0xf]
        %v1870 = vld [vmem:[#allocation9 + $0x74] sm:$0xf]
        %v1871 = vld [vmem:[#allocation9 + $0x78] sm:$0xf]
        %v1872 = vld [vmem:[#allocation9 + $0x7c] sm:$0xf]
        %v1873 = vpack.c.bf16 %v1855, %v1854
        %v1874 = vpack.c.bf16 %v1856, %v1856
        %v1891 = vunpack.c.l.b16 %v1857
        %v1892 = vunpack.c.l.b16 %v1858
        %v1893 = vunpack.c.l.b16 %v1859
        %v1894 = vunpack.c.l.b16 %v1860
        %v1895 = vunpack.c.l.b16 %v1861
        %v1896 = vunpack.c.l.b16 %v1862
        %v1897 = vunpack.c.l.b16 %v1863
        %v1898 = vunpack.c.l.b16 %v1864
        %v1899 = vunpack.c.l.b16 %v1865
        %v1900 = vunpack.c.l.b16 %v1866
        %v1901 = vunpack.c.l.b16 %v1867
        %v1902 = vunpack.c.l.b16 %v1868
        %v1903 = vunpack.c.l.b16 %v1869
        %v1904 = vunpack.c.l.b16 %v1870
        %v1905 = vunpack.c.l.b16 %v1871
        %v1906 = vunpack.c.l.b16 %v1872
        %v1907 = vpack.c.b16 %v1892, %v1891
        %v1908 = vpack.c.b16 %v1894, %v1893
        %v1909 = vpack.c.b16 %v1896, %v1895
        %v1910 = vpack.c.b16 %v1898, %v1897
        %v1911 = vpack.c.b16 %v1900, %v1899
        %v1912 = vpack.c.b16 %v1902, %v1901
        %v1913 = vpack.c.b16 %v1904, %v1903
        %v1914 = vpack.c.b16 %v1906, %v1905
        %1923 = vmatpush.bf16.msra.mxu0 %v1914
        %1924 = vmatpush.bf16.msra.mxu0 %v1913
        %1925 = vmatpush.bf16.msra.mxu0 %v1912
        %1926 = vmatpush.bf16.msra.mxu0 %v1911
        %1927 = vmatpush.bf16.msra.mxu0 %v1910
        %1928 = vmatpush.bf16.msra.mxu0 %v1909
        %1929 = vmatpush.bf16.msra.mxu0 %v1908
        %1930 = vmatpush.bf16.msra.mxu0 %v1907
        %1931 = vmatmul.bf16.gmra.mxu0 %v1873
        %v1932 = vpop.f32.mrf.mxu0
        %v1933 = vadd.f32 0.0, %v1932
        %v1934 = vpop.f32.mrf.mxu0
        %v1935 = vadd.f32 0.0, %v1934
        %1936 = vmatmul.bf16.gmra.mxu0 %v1874
        %v1937 = vpop.f32.mrf.mxu0
        %v1938 = vadd.f32 0.0, %v1937
        %v1939 = vpop.f32.mrf.mxu0
        %1940 = vdwg.mxu0
        %v1957 = vunpack.c.l.b16 %v1836
        %v1958 = vunpack.c.l.b16 %v1837
        %v1959 = vunpack.c.l.b16 %v1838
        %v1960 = vunpack.c.l.b16 %v1839
        %v1961 = vunpack.c.l.b16 %v1840
        %v1962 = vunpack.c.l.b16 %v1841
        %v1963 = vunpack.c.l.b16 %v1842
        %v1964 = vunpack.c.l.b16 %v1843
        %v1965 = vunpack.c.l.b16 %v1844
        %v1966 = vunpack.c.l.b16 %v1845
        %v1967 = vunpack.c.l.b16 %v1846
        %v1968 = vunpack.c.l.b16 %v1847
        %v1969 = vunpack.c.l.b16 %v1848
        %v1970 = vunpack.c.l.b16 %v1849
        %v1971 = vunpack.c.l.b16 %v1850
        %v1972 = vunpack.c.l.b16 %v1851
        %v1973 = vpack.c.b16 %v1958, %v1957
        %v1974 = vpack.c.b16 %v1960, %v1959
        %v1975 = vpack.c.b16 %v1962, %v1961
        %v1976 = vpack.c.b16 %v1964, %v1963
        %v1977 = vpack.c.b16 %v1966, %v1965
        %v1978 = vpack.c.b16 %v1968, %v1967
        %v1979 = vpack.c.b16 %v1970, %v1969
        %v1980 = vpack.c.b16 %v1972, %v1971
        %1989 = vmatpush.bf16.msra.mxu0 %v1980
        %1990 = vmatpush.bf16.msra.mxu0 %v1979
        %1991 = vmatpush.bf16.msra.mxu0 %v1978
        %1992 = vmatpush.bf16.msra.mxu0 %v1977
        %1993 = vmatpush.bf16.msra.mxu0 %v1976
        %1994 = vmatpush.bf16.msra.mxu0 %v1975
        %1995 = vmatpush.bf16.msra.mxu0 %v1974
        %1996 = vmatpush.bf16.msra.mxu0 %v1973
        %1997 = vmatmul.bf16.gmra.mxu0 %v1852
        %v1998 = vpop.f32.mrf.mxu0
        %v1999 = vadd.f32 %v1933, %v1998
        %v2000 = vpop.f32.mrf.mxu0
        %v2001 = vadd.f32 %v1935, %v2000
        %2002 = vmatmul.bf16.gmra.mxu0 %v1853
        %v2003 = vpop.f32.mrf.mxu0
        %v2004 = vadd.f32 %v1938, %v2003
        %v2005 = vpop.f32.mrf.mxu0
        %2006 = vdwg.mxu0
        %v2007 = vld [vmem:[#allocation2 + $0x2] sm:$0xff]
        %v2008 = vld [vmem:[#allocation2 + $0xa] sm:$0xff]
        %v2009 = vld [vmem:[#allocation2 + $0x12] sm:$0x3]
        %v2010 = vld [vmem:[#allocation9 + $0x80] sm:$0xf]
        %v2011 = vld [vmem:[#allocation9 + $0x84] sm:$0xf]
        %v2012 = vld [vmem:[#allocation9 + $0x88] sm:$0xf]
        %v2013 = vld [vmem:[#allocation9 + $0x8c] sm:$0xf]
        %v2014 = vld [vmem:[#allocation9 + $0x90] sm:$0xf]
        %v2015 = vld [vmem:[#allocation9 + $0x94] sm:$0xf]
        %v2016 = vld [vmem:[#allocation9 + $0x98] sm:$0xf]
        %v2017 = vld [vmem:[#allocation9 + $0x9c] sm:$0xf]
        %v2018 = vld [vmem:[#allocation9 + $0xa0] sm:$0xf]
        %v2019 = vld [vmem:[#allocation9 + $0xa4] sm:$0xf]
        %v2020 = vld [vmem:[#allocation9 + $0xa8] sm:$0xf]
        %v2021 = vld [vmem:[#allocation9 + $0xac] sm:$0xf]
        %v2022 = vld [vmem:[#allocation9 + $0xb0] sm:$0xf]
        %v2023 = vld [vmem:[#allocation9 + $0xb4] sm:$0xf]
        %v2024 = vld [vmem:[#allocation9 + $0xb8] sm:$0xf]
        %v2025 = vld [vmem:[#allocation9 + $0xbc] sm:$0xf]
        %v2026 = vpack.c.bf16 %v2008, %v2007
        %v2027 = vpack.c.bf16 %v2009, %v2009
        %v2044 = vunpack.c.l.b16 %v2010
        %v2045 = vunpack.c.l.b16 %v2011
        %v2046 = vunpack.c.l.b16 %v2012
        %v2047 = vunpack.c.l.b16 %v2013
        %v2048 = vunpack.c.l.b16 %v2014
        %v2049 = vunpack.c.l.b16 %v2015
        %v2050 = vunpack.c.l.b16 %v2016
        %v2051 = vunpack.c.l.b16 %v2017
        %v2052 = vunpack.c.l.b16 %v2018
        %v2053 = vunpack.c.l.b16 %v2019
        %v2054 = vunpack.c.l.b16 %v2020
        %v2055 = vunpack.c.l.b16 %v2021
        %v2056 = vunpack.c.l.b16 %v2022
        %v2057 = vunpack.c.l.b16 %v2023
        %v2058 = vunpack.c.l.b16 %v2024
        %v2059 = vunpack.c.l.b16 %v2025
        %v2060 = vpack.c.b16 %v2045, %v2044
        %v2061 = vpack.c.b16 %v2047, %v2046
        %v2062 = vpack.c.b16 %v2049, %v2048
        %v2063 = vpack.c.b16 %v2051, %v2050
        %v2064 = vpack.c.b16 %v2053, %v2052
        %v2065 = vpack.c.b16 %v2055, %v2054
        %v2066 = vpack.c.b16 %v2057, %v2056
        %v2067 = vpack.c.b16 %v2059, %v2058
        %2076 = vmatpush.bf16.msra.mxu0 %v2067
        %2077 = vmatpush.bf16.msra.mxu0 %v2066
        %2078 = vmatpush.bf16.msra.mxu0 %v2065
        %2079 = vmatpush.bf16.msra.mxu0 %v2064
        %2080 = vmatpush.bf16.msra.mxu0 %v2063
        %2081 = vmatpush.bf16.msra.mxu0 %v2062
        %2082 = vmatpush.bf16.msra.mxu0 %v2061
        %2083 = vmatpush.bf16.msra.mxu0 %v2060
        %2084 = vmatmul.bf16.gmra.mxu0 %v2026
        %v2085 = vpop.f32.mrf.mxu0
        %v2086 = vadd.f32 0.0, %v2085
        %v2087 = vpop.f32.mrf.mxu0
        %v2088 = vadd.f32 0.0, %v2087
        %2089 = vmatmul.bf16.gmra.mxu0 %v2027
        %v2090 = vpop.f32.mrf.mxu0
        %v2091 = vadd.f32 0.0, %v2090
        %v2092 = vpop.f32.mrf.mxu0
        %2093 = vdwg.mxu0
        %v2094 = vadd.f32 %v1999, %v2086
        %v2095 = vadd.f32 %v2001, %v2088
        %v2096 = vadd.f32 %v2004, %v2091
        %v2097 = vld [vmem:[%s21] sm:$0x1]
        %v2099 = vperm.slane %v2097, 0
        %v2101 = vadd.f32 %v2094, %v2099
        %v2102 = vadd.f32 %v2095, %v2099
        %v2103 = vadd.f32 %v2096, %v2099
        %v2104 = vmul.f32 %v2101, %v2101
        %v2105 = vmul.f32 %v2102, %v2102
        %v2106 = vmul.f32 %v2103, %v2103
        %v2107 = vmul.f32 %v2101, %v2104
        %v2108 = vmul.f32 %v2102, %v2105
        %v2109 = vmul.f32 %v2103, %v2106
        %v2110 = vmul.f32 %v2107, 0.044715
        %v2111 = vmul.f32 %v2108, 0.044715
        %v2112 = vmul.f32 %v2109, 0.044715
        %v2113 = vadd.f32 %v2101, %v2110
        %v2114 = vadd.f32 %v2102, %v2111
        %v2115 = vadd.f32 %v2103, %v2112
        %v2116 = vmul.f32 %v2113, 0.7978846
        %v2117 = vmul.f32 %v2114, 0.7978846
        %v2118 = vmul.f32 %v2115, 0.7978846
        %v2119 = vtanh.pop %v2116
        %v2120 = vtanh.pop %v2117
        %v2121 = vtanh.pop %v2118
        %v2122 = vadd.f32 %v2119, 1.0
        %v2123 = vadd.f32 %v2120, 1.0
        %v2124 = vadd.f32 %v2121, 1.0
        %v2125 = vmul.f32 %v2122, 0.5
        %v2126 = vmul.f32 %v2123, 0.5
        %v2127 = vmul.f32 %v2124, 0.5
        %v2128 = vmul.f32 %v2101, %v2125
        %v2129 = vmul.f32 %v2102, %v2126
        %v2130 = vmul.f32 %v2103, %v2127
        %v2131 = vadd.f32 %v1824, %v2128
        %v2132 = vadd.f32 %v1825, %v2129
        %v2133 = vadd.f32 %v1826, %v2130
        %v2134 = vld [vmem:[%s23] sm:$0x1]
        %v2135 = vld [vmem:[%s25] sm:$0x1]
        %2136 = vadd.xlane.f32.xlu0 %v2131
        %v2137 = vpop.xlane.xlu0 %2136
        %2138 = vadd.xlane.f32.xlu0 %v2132
        %v2139 = vpop.xlane.xlu0 %2138
        %v2140 = vsel %vm1643, %v2133, 0.0
        %2141 = vadd.xlane.f32.xlu0 %v2140
        %v2142 = vpop.xlane.xlu0 %2141
        %v2143 = vmul.f32 %v2137, %v1653
        %v2144 = vmul.f32 %v2139, %v1653
        %v2145 = vmul.f32 %v2142, %v1653
        %v2146 = vsub.f32 %v2131, %v2143
        %v2147 = vsub.f32 %v2132, %v2144
        %v2148 = vsub.f32 %v2133, %v2145
        %v2149 = vmul.f32 %v2146, %v2146
        %v2150 = vmul.f32 %v2147, %v2147
        %v2151 = vmul.f32 %v2148, %v2148
        %2152 = vadd.xlane.f32.xlu0 %v2149
        %v2153 = vpop.xlane.xlu0 %2152
        %2154 = vadd.xlane.f32.xlu0 %v2150
        %v2155 = vpop.xlane.xlu0 %2154
        %v2156 = vsel %vm1643, %v2151, 0.0
        %2157 = vadd.xlane.f32.xlu0 %v2156
        %v2158 = vpop.xlane.xlu0 %2157
        %v2159 = vmul.f32 %v2153, %v1653
        %v2160 = vmul.f32 %v2155, %v1653
        %v2161 = vmul.f32 %v2158, %v1653
        %v2162 = vadd.f32 %v2159, 1e-05
        %v2163 = vadd.f32 %v2160, 1e-05
        %v2164 = vadd.f32 %v2161, 1e-05
        %v2165 = vrsqrt.pop %v2162
        %v2166 = vmul.f32 %v2165, %v2162
        %v2167 = vmul.f32 %v2166, %v2165
        %v2168 = vmul.f32 0.5, %v2167
        %v2169 = vsub.f32 1.5, %v2168
        %v2170 = vmul.f32 %v2165, %v2169
        %vm2171 = vweird.f32 %v2162
        %vm2172 = vweird.f32 %v2165
        %vm2173 = vmor %vm2171, %vm2172
        %v2174 = vsel %vm2173, %v2165, %v2170
        %v2175 = vrsqrt.pop %v2163
        %v2176 = vmul.f32 %v2175, %v2163
        %v2177 = vmul.f32 %v2176, %v2175
        %v2178 = vmul.f32 0.5, %v2177
        %v2179 = vsub.f32 1.5, %v2178
        %v2180 = vmul.f32 %v2175, %v2179
        %vm2181 = vweird.f32 %v2163
        %vm2182 = vweird.f32 %v2175
        %vm2183 = vmor %vm2181, %vm2182
        %v2184 = vsel %vm2183, %v2175, %v2180
        %v2185 = vrsqrt.pop %v2164
        %v2186 = vmul.f32 %v2185, %v2164
        %v2187 = vmul.f32 %v2186, %v2185
        %v2188 = vmul.f32 0.5, %v2187
        %v2189 = vsub.f32 1.5, %v2188
        %v2190 = vmul.f32 %v2185, %v2189
        %vm2191 = vweird.f32 %v2164
        %vm2192 = vweird.f32 %v2185
        %vm2193 = vmor %vm2191, %vm2192
        %v2194 = vsel %vm2193, %v2185, %v2190
        %v2195 = vmul.f32 %v2146, %v2174
        %v2196 = vmul.f32 %v2147, %v2184
        %v2197 = vmul.f32 %v2148, %v2194
        %v2199 = vperm.slane %v2134, 0
        %v2201 = vmul.f32 %v2195, %v2199
        %v2202 = vmul.f32 %v2196, %v2199
        %v2203 = vmul.f32 %v2197, %v2199
        %v2205 = vperm.slane %v2135, 0
        %v2207 = vadd.f32 %v2201, %v2205
        %v2208 = vadd.f32 %v2202, %v2205
        %v2209 = vadd.f32 %v2203, %v2205
        %v2210 = vld [vmem:[%s27] sm:$0xff]
        %v2211 = vld [vmem:[%s27 + $0x8] sm:$0xf]
        %v2212 = vld [vmem:[%s27 + $0xc] sm:$0xff]
        %v2213 = vld [vmem:[%s27 + $0x14] sm:$0xf]
        %v2214 = vld [vmem:[%s27 + $0x18] sm:$0xff]
        %v2215 = vld [vmem:[%s27 + $0x20] sm:$0xf]
        %v2216 = vld [vmem:[%s27 + $0x24] sm:$0xff]
        %v2217 = vld [vmem:[%s27 + $0x2c] sm:$0xf]
        %v2218 = vld [vmem:[%s27 + $0x30] sm:$0xff]
        %v2219 = vld [vmem:[%s27 + $0x38] sm:$0xf]
        %v2220 = vld [vmem:[%s27 + $0x3c] sm:$0xff]
        %v2221 = vld [vmem:[%s27 + $0x44] sm:$0xf]
        %v2222 = vld [vmem:[%s27 + $0x48] sm:$0xff]
        %v2223 = vld [vmem:[%s27 + $0x50] sm:$0xf]
        %v2224 = vld [vmem:[%s27 + $0x54] sm:$0xff]
        %v2225 = vld [vmem:[%s27 + $0x5c] sm:$0xf]
        %v2226 = vld [vmem:[%s27 + $0x60] sm:$0xff]
        %v2227 = vld [vmem:[%s27 + $0x68] sm:$0xf]
        %v2228 = vld [vmem:[%s27 + $0x6c] sm:$0xff]
        %v2229 = vld [vmem:[%s27 + $0x74] sm:$0xf]
        %v2230 = vld [vmem:[%s27 + $0x78] sm:$0xff]
        %v2231 = vld [vmem:[%s27 + $0x80] sm:$0xf]
        %v2232 = vld [vmem:[%s27 + $0x84] sm:$0xff]
        %v2233 = vld [vmem:[%s27 + $0x8c] sm:$0xf]
        %v2234 = vld [vmem:[%s27 + $0x90] sm:$0xff]
        %v2235 = vld [vmem:[%s27 + $0x98] sm:$0xf]
        %v2236 = vld [vmem:[%s27 + $0x9c] sm:$0xff]
        %v2237 = vld [vmem:[%s27 + $0xa4] sm:$0xf]
        %v2238 = vld [vmem:[%s27 + $0xa8] sm:$0xff]
        %v2239 = vld [vmem:[%s27 + $0xb0] sm:$0xf]
        %v2240 = vld [vmem:[%s27 + $0xb4] sm:$0xff]
        %v2241 = vld [vmem:[%s27 + $0xbc] sm:$0xf]
        %v2242 = vpack.c.bf16 %v2208, %v2207
        %v2243 = vpack.c.bf16 %v2209, %v2209
        %v2244 = vld [vmem:[#allocation10] sm:$0x7]
        %v2246 = vperm.slane %v2244, 0
        %v2247 = vperm.slane %v2244, 1
        %v2248 = vperm.slane %v2244, 2
        %v2284 = vunpack.c.l.b16 %v2210
        %v2285 = vunpack.c.h.b16 %v2210
        %v2286 = vunpack.c.l.b16 %v2211
        %v2287 = vunpack.c.l.b16 %v2212
        %v2288 = vunpack.c.h.b16 %v2212
        %v2289 = vunpack.c.l.b16 %v2213
        %v2290 = vunpack.c.l.b16 %v2214
        %v2291 = vunpack.c.h.b16 %v2214
        %v2292 = vunpack.c.l.b16 %v2215
        %v2293 = vunpack.c.l.b16 %v2216
        %v2294 = vunpack.c.h.b16 %v2216
        %v2295 = vunpack.c.l.b16 %v2217
        %v2296 = vunpack.c.l.b16 %v2218
        %v2297 = vunpack.c.h.b16 %v2218
        %v2298 = vunpack.c.l.b16 %v2219
        %v2299 = vunpack.c.l.b16 %v2220
        %v2300 = vunpack.c.h.b16 %v2220
        %v2301 = vunpack.c.l.b16 %v2221
        %v2302 = vunpack.c.l.b16 %v2222
        %v2303 = vunpack.c.h.b16 %v2222
        %v2304 = vunpack.c.l.b16 %v2223
        %v2305 = vunpack.c.l.b16 %v2224
        %v2306 = vunpack.c.h.b16 %v2224
        %v2307 = vunpack.c.l.b16 %v2225
        %v2308 = vunpack.c.l.b16 %v2226
        %v2309 = vunpack.c.h.b16 %v2226
        %v2310 = vunpack.c.l.b16 %v2227
        %v2311 = vunpack.c.l.b16 %v2228
        %v2312 = vunpack.c.h.b16 %v2228
        %v2313 = vunpack.c.l.b16 %v2229
        %v2314 = vunpack.c.l.b16 %v2230
        %v2315 = vunpack.c.h.b16 %v2230
        %v2316 = vunpack.c.l.b16 %v2231
        %v2317 = vunpack.c.l.b16 %v2232
        %v2318 = vunpack.c.h.b16 %v2232
        %v2319 = vunpack.c.l.b16 %v2233
        %v2320 = vunpack.c.l.b16 %v2234
        %v2321 = vunpack.c.h.b16 %v2234
        %v2322 = vunpack.c.l.b16 %v2235
        %v2323 = vunpack.c.l.b16 %v2236
        %v2324 = vunpack.c.h.b16 %v2236
        %v2325 = vunpack.c.l.b16 %v2237
        %v2326 = vunpack.c.l.b16 %v2238
        %v2327 = vunpack.c.h.b16 %v2238
        %v2328 = vunpack.c.l.b16 %v2239
        %v2329 = vunpack.c.l.b16 %v2240
        %v2330 = vunpack.c.h.b16 %v2240
        %v2331 = vunpack.c.l.b16 %v2241
        %v2332 = vpack.c.b16 %v2287, %v2284
        %v2333 = vpack.c.b16 %v2288, %v2285
        %v2334 = vpack.c.b16 %v2289, %v2286
        %v2335 = vpack.c.b16 %v2293, %v2290
        %v2336 = vpack.c.b16 %v2294, %v2291
        %v2337 = vpack.c.b16 %v2295, %v2292
        %v2338 = vpack.c.b16 %v2299, %v2296
        %v2339 = vpack.c.b16 %v2300, %v2297
        %v2340 = vpack.c.b16 %v2301, %v2298
        %v2341 = vpack.c.b16 %v2305, %v2302
        %v2342 = vpack.c.b16 %v2306, %v2303
        %v2343 = vpack.c.b16 %v2307, %v2304
        %v2344 = vpack.c.b16 %v2311, %v2308
        %v2345 = vpack.c.b16 %v2312, %v2309
        %v2346 = vpack.c.b16 %v2313, %v2310
        %v2347 = vpack.c.b16 %v2317, %v2314
        %v2348 = vpack.c.b16 %v2318, %v2315
        %v2349 = vpack.c.b16 %v2319, %v2316
        %v2350 = vpack.c.b16 %v2323, %v2320
        %v2351 = vpack.c.b16 %v2324, %v2321
        %v2352 = vpack.c.b16 %v2325, %v2322
        %v2353 = vpack.c.b16 %v2329, %v2326
        %v2354 = vpack.c.b16 %v2330, %v2327
        %v2355 = vpack.c.b16 %v2331, %v2328
        %2380 = vmatpush.bf16.msra.mxu0 %v2353
        %2381 = vmatpush.bf16.msra.mxu0 %v2350
        %2382 = vmatpush.bf16.msra.mxu0 %v2347
        %2383 = vmatpush.bf16.msra.mxu0 %v2344
        %2384 = vmatpush.bf16.msra.mxu0 %v2341
        %2385 = vmatpush.bf16.msra.mxu0 %v2338
        %2386 = vmatpush.bf16.msra.mxu0 %v2335
        %2387 = vmatpush.bf16.msra.mxu0 %v2332
        %2388 = vmatmul.bf16.gmra.mxu0 %v2242
        %v2389 = vpop.f32.mrf.mxu0
        %v2390 = vadd.f32 %v2246, %v2389
        %v2391 = vpop.f32.mrf.mxu0
        %v2392 = vadd.f32 %v2246, %v2391
        %2393 = vmatmul.bf16.gmra.mxu0 %v2243
        %v2394 = vpop.f32.mrf.mxu0
        %v2395 = vadd.f32 %v2246, %v2394
        %v2396 = vpop.f32.mrf.mxu0
        %2397 = vdwg.mxu0
        %2398 = vmatpush.bf16.msra.mxu0 %v2354
        %2399 = vmatpush.bf16.msra.mxu0 %v2351
        %2400 = vmatpush.bf16.msra.mxu0 %v2348
        %2401 = vmatpush.bf16.msra.mxu0 %v2345
        %2402 = vmatpush.bf16.msra.mxu0 %v2342
        %2403 = vmatpush.bf16.msra.mxu0 %v2339
        %2404 = vmatpush.bf16.msra.mxu0 %v2336
        %2405 = vmatpush.bf16.msra.mxu0 %v2333
        %2406 = vmatmul.bf16.gmra.mxu0 %v2242
        %v2407 = vpop.f32.mrf.mxu0
        %v2408 = vadd.f32 %v2247, %v2407
        %v2409 = vpop.f32.mrf.mxu0
        %v2410 = vadd.f32 %v2247, %v2409
        %2411 = vmatmul.bf16.gmra.mxu0 %v2243
        %v2412 = vpop.f32.mrf.mxu0
        %v2413 = vadd.f32 %v2247, %v2412
        %v2414 = vpop.f32.mrf.mxu0
        %2415 = vdwg.mxu0
        %2416 = vmatpush.bf16.msra.mxu0 %v2355
        %2417 = vmatpush.bf16.msra.mxu0 %v2352
        %2418 = vmatpush.bf16.msra.mxu0 %v2349
        %2419 = vmatpush.bf16.msra.mxu0 %v2346
        %2420 = vmatpush.bf16.msra.mxu0 %v2343
        %2421 = vmatpush.bf16.msra.mxu0 %v2340
        %2422 = vmatpush.bf16.msra.mxu0 %v2337
        %2423 = vmatpush.bf16.msra.mxu0 %v2334
        %2424 = vmatmul.bf16.gmra.mxu0 %v2242
        %v2425 = vpop.f32.mrf.mxu0
        %v2426 = vadd.f32 %v2248, %v2425
        %v2427 = vpop.f32.mrf.mxu0
        %v2428 = vadd.f32 %v2248, %v2427
        %2429 = vmatmul.bf16.gmra.mxu0 %v2243
        %v2430 = vpop.f32.mrf.mxu0
        %v2431 = vadd.f32 %v2248, %v2430
        %v2432 = vpop.f32.mrf.mxu0
        %2433 = vdwg.mxu0
        %v2434 = vld [vmem:[%s31] sm:$0xf]
        %v2435 = vld [vmem:[%s31 + $0x4] sm:$0xf]
        %v2436 = vld [vmem:[%s31 + $0x8] sm:$0xf]
        %v2437 = vld [vmem:[%s31 + $0xc] sm:$0xf]
        %v2438 = vld [vmem:[%s31 + $0x10] sm:$0xf]
        %v2439 = vld [vmem:[%s31 + $0x14] sm:$0xf]
        %v2440 = vld [vmem:[%s31 + $0x18] sm:$0xf]
        %v2441 = vld [vmem:[%s31 + $0x1c] sm:$0xf]
        %v2442 = vld [vmem:[%s31 + $0x20] sm:$0xf]
        %v2443 = vld [vmem:[%s31 + $0x24] sm:$0xf]
        %v2444 = vld [vmem:[%s31 + $0x28] sm:$0xf]
        %v2445 = vld [vmem:[%s31 + $0x2c] sm:$0xf]
        %v2446 = vld [vmem:[%s31 + $0x30] sm:$0xf]
        %v2447 = vld [vmem:[%s31 + $0x34] sm:$0xf]
        %v2448 = vld [vmem:[%s31 + $0x38] sm:$0xf]
        %v2449 = vld [vmem:[%s31 + $0x3c] sm:$0xf]
        %v2450 = vld [vmem:[#allocation12] sm:$0x1]
        %v2451 = vpack.c.bf16 %v2392, %v2390
        %v2452 = vpack.c.bf16 %v2395, %v2395
        %v2453 = vpack.c.bf16 %v2410, %v2408
        %v2454 = vpack.c.bf16 %v2413, %v2413
        %vm2455 = vcmask 261120
        %v2457 = vsel %vm2455, %v2451, 0
        %v2460 = vsel %vm2455, %v2452, 0
        %v2463 = vsel %vm2455, %v2453, 0
        %v2466 = vsel %vm2455, %v2454, 0
        %2468 = vmatpush.bf16.xpose.msra.mxu0 0
        %2469 = vmatpush.bf16.xpose.msra.mxu0 0
        %2470 = vmatpush.bf16.xpose.msra.mxu0 0
        %2471 = vmatpush.bf16.xpose.msra.mxu0 0
        %2472 = vmatpush.bf16.xpose.msra.mxu0 0
        %2473 = vmatpush.bf16.xpose.msra.mxu0 0
        %2474 = vmatpush.bf16.xpose.msra.mxu0 %v2466
        %2475 = vmatpush.bf16.xpose.msra.mxu0 %v2463
        %2476 = vmatmul.bf16.gmra.mxu0 %v2457
        %v2477 = vpop.f32.mrf.mxu0
        %v2478 = vadd.f32 0.0, %v2477
        %v2479 = vpop.f32.mrf.mxu0
        %v2480 = vadd.f32 0.0, %v2479
        %2481 = vmatmul.bf16.gmra.mxu0 %v2460
        %v2482 = vpop.f32.mrf.mxu0
        %v2483 = vadd.f32 0.0, %v2482
        %v2484 = vpop.f32.mrf.mxu0
        %2485 = vdwg.mxu0
        %v2486 = vmul.f32 %v2478, 0.17677669
        %v2487 = vmul.f32 %v2480, 0.17677669
        %v2488 = vmul.f32 %v2483, 0.17677669
        %v2490 = vperm.slane %v1636, 0
        %v2492 = vadd.f32 %v2486, %v2490
        %v2493 = vadd.f32 %v2487, %v2490
        %v2494 = vadd.f32 %v2488, %v2490
        %vm2495 = vcmask 146432
        %v2496 = vsel %vm2495, %v2492, -inf
        %2497 = vmax.xlane.f32.xlu0 %v2496
        %v2498 = vpop.xlane.xlu0 %2497
        %v2499 = vsel %vm2495, %v2493, -inf
        %2500 = vmax.xlane.f32.xlu0 %v2499
        %v2501 = vpop.xlane.xlu0 %2500
        %vm2502 = vcmask 140288
        %v2503 = vsel %vm2502, %v2494, -inf
        %2504 = vmax.xlane.f32.xlu0 %v2503
        %v2505 = vpop.xlane.xlu0 %2504
        %v2506 = vsub.f32 %v2492, %v2498
        %v2507 = vsub.f32 %v2493, %v2501
        %v2508 = vsub.f32 %v2494, %v2505
        %v2509 = vmul.f32 %v2506, 1.442695
        %v2510 = vpow.pop %v2509
        %v2511 = vmul.f32 %v2507, 1.442695
        %v2512 = vpow.pop %v2511
        %v2513 = vmul.f32 %v2508, 1.442695
        %v2514 = vpow.pop %v2513
        %v2515 = vsel %vm2495, %v2510, 0.0
        %2516 = vadd.xlane.f32.xlu0 %v2515
        %v2517 = vpop.xlane.xlu0 %2516
        %v2518 = vsel %vm2495, %v2512, 0.0
        %2519 = vadd.xlane.f32.xlu0 %v2518
        %v2520 = vpop.xlane.xlu0 %2519
        %v2521 = vsel %vm2502, %v2514, 0.0
        %2522 = vadd.xlane.f32.xlu0 %v2521
        %v2523 = vpop.xlane.xlu0 %2522
        %v2524 = vrcp.pop %v2517
        %v2525 = vrcp.pop %v2520
        %v2526 = vrcp.pop %v2523
        %v2527 = vmul.f32 %v2510, %v2524
        %v2528 = vmul.f32 %v2512, %v2525
        %v2529 = vmul.f32 %v2514, %v2526
        %v2530 = vpack.c.bf16 %v2528, %v2527
        %v2531 = vpack.c.bf16 %v2529, %v2529
        %v2532 = vpack.c.bf16 %v2428, %v2426
        %v2533 = vpack.c.bf16 %v2431, %v2431
        %v2535 = vsel %vm2495, %v2530, 0
        %v2538 = vsel %vm2495, %v2531, 0
        %vm2540 = vcmask 1040384
        %v2542 = vsel %vm2540, %v2533, 0
        %2544 = vmatpush.bf16.msra.mxu0 0
        %2545 = vmatpush.bf16.msra.mxu0 0
        %2546 = vmatpush.bf16.msra.mxu0 0
        %2547 = vmatpush.bf16.msra.mxu0 0
        %2548 = vmatpush.bf16.msra.mxu0 0
        %2549 = vmatpush.bf16.msra.mxu0 0
        %2550 = vmatpush.bf16.msra.mxu0 %v2542
        %2551 = vmatpush.bf16.msra.mxu0 %v2532
        %2552 = vmatmul.bf16.gmra.mxu0 %v2535
        %v2553 = vpop.f32.mrf.mxu0
        %v2554 = vadd.f32 0.0, %v2553
        %v2555 = vpop.f32.mrf.mxu0
        %v2556 = vadd.f32 0.0, %v2555
        %2557 = vmatmul.bf16.gmra.mxu0 %v2538
        %v2558 = vpop.f32.mrf.mxu0
        %v2559 = vadd.f32 0.0, %v2558
        %v2560 = vpop.f32.mrf.mxu0
        %2561 = vdwg.mxu0
        %v2562 = vpack.c.bf16 %v2556, %v2554
        %v2563 = vpack.c.bf16 %v2559, %v2559
        %v2568 = vunpack.c.l.b16 %v2434
        %v2569 = vunpack.c.l.b16 %v2435
        %v2570 = vunpack.c.l.b16 %v2436
        %v2571 = vunpack.c.l.b16 %v2437
        %v2572 = vpack.c.b16 %v2569, %v2568
        %v2573 = vpack.c.b16 %v2571, %v2570
        %v2577 = vsel %vm2455, %v2562, 0
        %v2580 = vsel %vm2455, %v2563, 0
        %2582 = vmatpush.bf16.msra.mxu0 0
        %2583 = vmatpush.bf16.msra.mxu0 0
        %2584 = vmatpush.bf16.msra.mxu0 0
        %2585 = vmatpush.bf16.msra.mxu0 0
        %2586 = vmatpush.bf16.msra.mxu0 0
        %2587 = vmatpush.bf16.msra.mxu0 0
        %2588 = vmatpush.bf16.msra.mxu0 %v2573
        %2589 = vmatpush.bf16.msra.mxu0 %v2572
        %2590 = vmatmul.bf16.gmra.mxu0 %v2577
        %v2591 = vpop.f32.mrf.mxu0
        %v2592 = vadd.f32 0.0, %v2591
        %v2593 = vpop.f32.mrf.mxu0
        %v2594 = vadd.f32 0.0, %v2593
        %2595 = vmatmul.bf16.gmra.mxu0 %v2580
        %v2596 = vpop.f32.mrf.mxu0
        %v2597 = vadd.f32 0.0, %v2596
        %v2598 = vpop.f32.mrf.mxu0
        %2599 = vdwg.mxu0
        %v2601 = vperm.slane %v2450, 0
        %v2603 = vadd.f32 %v2601, %v2592
        %v2604 = vadd.f32 %v2601, %v2594
        %v2605 = vadd.f32 %v2601, %v2597
        %2608 = vrot.lane.b32.xlu0 %v2451, 96
        %v2609 = vpop.permute.xlu0 %2608
        %2610 = vrot.lane.b32.xlu0 %v2452, 96
        %v2611 = vpop.permute.xlu0 %2610
        %2614 = vrot.lane.b32.xlu0 %v2453, 96
        %v2615 = vpop.permute.xlu0 %2614
        %2616 = vrot.lane.b32.xlu0 %v2454, 96
        %v2617 = vpop.permute.xlu0 %2616
        %v2619 = vsel %vm2455, %v2609, 0
        %v2622 = vsel %vm2455, %v2611, 0
        %v2625 = vsel %vm2455, %v2615, 0
        %v2628 = vsel %vm2455, %v2617, 0
        %2630 = vmatpush.bf16.xpose.msra.mxu0 0
        %2631 = vmatpush.bf16.xpose.msra.mxu0 0
        %2632 = vmatpush.bf16.xpose.msra.mxu0 0
        %2633 = vmatpush.bf16.xpose.msra.mxu0 0
        %2634 = vmatpush.bf16.xpose.msra.mxu0 0
        %2635 = vmatpush.bf16.xpose.msra.mxu0 0
        %2636 = vmatpush.bf16.xpose.msra.mxu0 %v2628
        %2637 = vmatpush.bf16.xpose.msra.mxu0 %v2625
        %2638 = vmatmul.bf16.gmra.mxu0 %v2619
        %v2639 = vpop.f32.mrf.mxu0
        %v2640 = vadd.f32 0.0, %v2639
        %v2641 = vpop.f32.mrf.mxu0
        %v2642 = vadd.f32 0.0, %v2641
        %2643 = vmatmul.bf16.gmra.mxu0 %v2622
        %v2644 = vpop.f32.mrf.mxu0
        %v2645 = vadd.f32 0.0, %v2644
        %v2646 = vpop.f32.mrf.mxu0
        %2647 = vdwg.mxu0
        %v2648 = vmul.f32 %v2640, 0.17677669
        %v2649 = vmul.f32 %v2642, 0.17677669
        %v2650 = vmul.f32 %v2645, 0.17677669
        %v2651 = vadd.f32 %v2648, %v2490
        %v2652 = vadd.f32 %v2649, %v2490
        %v2653 = vadd.f32 %v2650, %v2490
        %v2654 = vsel %vm2495, %v2651, -inf
        %2655 = vmax.xlane.f32.xlu0 %v2654
        %v2656 = vpop.xlane.xlu0 %2655
        %v2657 = vsel %vm2495, %v2652, -inf
        %2658 = vmax.xlane.f32.xlu0 %v2657
        %v2659 = vpop.xlane.xlu0 %2658
        %v2660 = vsel %vm2502, %v2653, -inf
        %2661 = vmax.xlane.f32.xlu0 %v2660
        %v2662 = vpop.xlane.xlu0 %2661
        %v2663 = vsub.f32 %v2651, %v2656
        %v2664 = vsub.f32 %v2652, %v2659
        %v2665 = vsub.f32 %v2653, %v2662
        %v2666 = vmul.f32 %v2663, 1.442695
        %v2667 = vpow.pop %v2666
        %v2668 = vmul.f32 %v2664, 1.442695
        %v2669 = vpow.pop %v2668
        %v2670 = vmul.f32 %v2665, 1.442695
        %v2671 = vpow.pop %v2670
        %v2672 = vsel %vm2495, %v2667, 0.0
        %2673 = vadd.xlane.f32.xlu0 %v2672
        %v2674 = vpop.xlane.xlu0 %2673
        %v2675 = vsel %vm2495, %v2669, 0.0
        %2676 = vadd.xlane.f32.xlu0 %v2675
        %v2677 = vpop.xlane.xlu0 %2676
        %v2678 = vsel %vm2502, %v2671, 0.0
        %2679 = vadd.xlane.f32.xlu0 %v2678
        %v2680 = vpop.xlane.xlu0 %2679
        %v2681 = vrcp.pop %v2674
        %v2682 = vrcp.pop %v2677
        %v2683 = vrcp.pop %v2680
        %v2684 = vmul.f32 %v2667, %v2681
        %v2685 = vmul.f32 %v2669, %v2682
        %v2686 = vmul.f32 %v2671, %v2683
        %v2687 = vpack.c.bf16 %v2685, %v2684
        %v2688 = vpack.c.bf16 %v2686, %v2686
        %2691 = vrot.lane.b32.xlu0 %v2532, 96
        %v2692 = vpop.permute.xlu0 %2691
        %2693 = vrot.lane.b32.xlu0 %v2533, 96
        %v2694 = vpop.permute.xlu0 %2693
        %v2697 = vsel %vm2495, %v2687, 0
        %v2700 = vsel %vm2495, %v2688, 0
        %v2703 = vsel %vm2540, %v2694, 0
        %2705 = vmatpush.bf16.msra.mxu0 0
        %2706 = vmatpush.bf16.msra.mxu0 0
        %2707 = vmatpush.bf16.msra.mxu0 0
        %2708 = vmatpush.bf16.msra.mxu0 0
        %2709 = vmatpush.bf16.msra.mxu0 0
        %2710 = vmatpush.bf16.msra.mxu0 0
        %2711 = vmatpush.bf16.msra.mxu0 %v2703
        %2712 = vmatpush.bf16.msra.mxu0 %v2692
        %2713 = vmatmul.bf16.gmra.mxu0 %v2697
        %v2714 = vpop.f32.mrf.mxu0
        %v2715 = vadd.f32 0.0, %v2714
        %v2716 = vpop.f32.mrf.mxu0
        %v2717 = vadd.f32 0.0, %v2716
        %2718 = vmatmul.bf16.gmra.mxu0 %v2700
        %v2719 = vpop.f32.mrf.mxu0
        %v2720 = vadd.f32 0.0, %v2719
        %v2721 = vpop.f32.mrf.mxu0
        %2722 = vdwg.mxu0
        %v2723 = vpack.c.bf16 %v2717, %v2715
        %v2724 = vpack.c.bf16 %v2720, %v2720
        %v2729 = vunpack.c.l.b16 %v2438
        %v2730 = vunpack.c.l.b16 %v2439
        %v2731 = vunpack.c.l.b16 %v2440
        %v2732 = vunpack.c.l.b16 %v2441
        %v2733 = vpack.c.b16 %v2730, %v2729
        %v2734 = vpack.c.b16 %v2732, %v2731
        %v2738 = vsel %vm2455, %v2723, 0
        %v2741 = vsel %vm2455, %v2724, 0
        %2743 = vmatpush.bf16.msra.mxu0 0
        %2744 = vmatpush.bf16.msra.mxu0 0
        %2745 = vmatpush.bf16.msra.mxu0 0
        %2746 = vmatpush.bf16.msra.mxu0 0
        %2747 = vmatpush.bf16.msra.mxu0 0
        %2748 = vmatpush.bf16.msra.mxu0 0
        %2749 = vmatpush.bf16.msra.mxu0 %v2734
        %2750 = vmatpush.bf16.msra.mxu0 %v2733
        %2751 = vmatmul.bf16.gmra.mxu0 %v2738
        %v2752 = vpop.f32.mrf.mxu0
        %v2753 = vadd.f32 0.0, %v2752
        %v2754 = vpop.f32.mrf.mxu0
        %v2755 = vadd.f32 0.0, %v2754
        %2756 = vmatmul.bf16.gmra.mxu0 %v2741
        %v2757 = vpop.f32.mrf.mxu0
        %v2758 = vadd.f32 0.0, %v2757
        %v2759 = vpop.f32.mrf.mxu0
        %2760 = vdwg.mxu0
        %v2761 = vadd.f32 %v2603, %v2753
        %v2762 = vadd.f32 %v2604, %v2755
        %v2763 = vadd.f32 %v2605, %v2758
        %2764 = vrot.lane.b32.xlu0 %v2451, 64
        %v2765 = vpop.permute.xlu0 %2764
        %2766 = vrot.lane.b32.xlu0 %v2452, 64
        %v2767 = vpop.permute.xlu0 %2766
        %2768 = vrot.lane.b32.xlu0 %v2453, 64
        %v2769 = vpop.permute.xlu0 %2768
        %2770 = vrot.lane.b32.xlu0 %v2454, 64
        %v2771 = vpop.permute.xlu0 %2770
        %v2773 = vsel %vm2455, %v2765, 0
        %v2776 = vsel %vm2455, %v2767, 0
        %v2779 = vsel %vm2455, %v2769, 0
        %v2782 = vsel %vm2455, %v2771, 0
        %2784 = vmatpush.bf16.xpose.msra.mxu0 0
        %2785 = vmatpush.bf16.xpose.msra.mxu0 0
        %2786 = vmatpush.bf16.xpose.msra.mxu0 0
        %2787 = vmatpush.bf16.xpose.msra.mxu0 0
        %2788 = vmatpush.bf16.xpose.msra.mxu0 0
        %2789 = vmatpush.bf16.xpose.msra.mxu0 0
        %2790 = vmatpush.bf16.xpose.msra.mxu0 %v2782
        %2791 = vmatpush.bf16.xpose.msra.mxu0 %v2779
        %2792 = vmatmul.bf16.gmra.mxu0 %v2773
        %v2793 = vpop.f32.mrf.mxu0
        %v2794 = vadd.f32 0.0, %v2793
        %v2795 = vpop.f32.mrf.mxu0
        %v2796 = vadd.f32 0.0, %v2795
        %2797 = vmatmul.bf16.gmra.mxu0 %v2776
        %v2798 = vpop.f32.mrf.mxu0
        %v2799 = vadd.f32 0.0, %v2798
        %v2800 = vpop.f32.mrf.mxu0
        %2801 = vdwg.mxu0
        %v2802 = vmul.f32 %v2794, 0.17677669
        %v2803 = vmul.f32 %v2796, 0.17677669
        %v2804 = vmul.f32 %v2799, 0.17677669
        %v2805 = vadd.f32 %v2802, %v2490
        %v2806 = vadd.f32 %v2803, %v2490
        %v2807 = vadd.f32 %v2804, %v2490
        %v2808 = vsel %vm2495, %v2805, -inf
        %2809 = vmax.xlane.f32.xlu0 %v2808
        %v2810 = vpop.xlane.xlu0 %2809
        %v2811 = vsel %vm2495, %v2806, -inf
        %2812 = vmax.xlane.f32.xlu0 %v2811
        %v2813 = vpop.xlane.xlu0 %2812
        %v2814 = vsel %vm2502, %v2807, -inf
        %2815 = vmax.xlane.f32.xlu0 %v2814
        %v2816 = vpop.xlane.xlu0 %2815
        %v2817 = vsub.f32 %v2805, %v2810
        %v2818 = vsub.f32 %v2806, %v2813
        %v2819 = vsub.f32 %v2807, %v2816
        %v2820 = vmul.f32 %v2817, 1.442695
        %v2821 = vpow.pop %v2820
        %v2822 = vmul.f32 %v2818, 1.442695
        %v2823 = vpow.pop %v2822
        %v2824 = vmul.f32 %v2819, 1.442695
        %v2825 = vpow.pop %v2824
        %v2826 = vsel %vm2495, %v2821, 0.0
        %2827 = vadd.xlane.f32.xlu0 %v2826
        %v2828 = vpop.xlane.xlu0 %2827
        %v2829 = vsel %vm2495, %v2823, 0.0
        %2830 = vadd.xlane.f32.xlu0 %v2829
        %v2831 = vpop.xlane.xlu0 %2830
        %v2832 = vsel %vm2502, %v2825, 0.0
        %2833 = vadd.xlane.f32.xlu0 %v2832
        %v2834 = vpop.xlane.xlu0 %2833
        %v2835 = vrcp.pop %v2828
        %v2836 = vrcp.pop %v2831
        %v2837 = vrcp.pop %v2834
        %v2838 = vmul.f32 %v2821, %v2835
        %v2839 = vmul.f32 %v2823, %v2836
        %v2840 = vmul.f32 %v2825, %v2837
        %v2841 = vpack.c.bf16 %v2839, %v2838
        %v2842 = vpack.c.bf16 %v2840, %v2840
        %2843 = vrot.lane.b32.xlu0 %v2532, 64
        %v2844 = vpop.permute.xlu0 %2843
        %2845 = vrot.lane.b32.xlu0 %v2533, 64
        %v2846 = vpop.permute.xlu0 %2845
        %v2849 = vsel %vm2495, %v2841, 0
        %v2852 = vsel %vm2495, %v2842, 0
        %v2855 = vsel %vm2540, %v2846, 0
        %2857 = vmatpush.bf16.msra.mxu0 0
        %2858 = vmatpush.bf16.msra.mxu0 0
        %2859 = vmatpush.bf16.msra.mxu0 0
        %2860 = vmatpush.bf16.msra.mxu0 0
        %2861 = vmatpush.bf16.msra.mxu0 0
        %2862 = vmatpush.bf16.msra.mxu0 0
        %2863 = vmatpush.bf16.msra.mxu0 %v2855
        %2864 = vmatpush.bf16.msra.mxu0 %v2844
        %2865 = vmatmul.bf16.gmra.mxu0 %v2849
        %v2866 = vpop.f32.mrf.mxu0
        %v2867 = vadd.f32 0.0, %v2866
        %v2868 = vpop.f32.mrf.mxu0
        %v2869 = vadd.f32 0.0, %v2868
        %2870 = vmatmul.bf16.gmra.mxu0 %v2852
        %v2871 = vpop.f32.mrf.mxu0
        %v2872 = vadd.f32 0.0, %v2871
        %v2873 = vpop.f32.mrf.mxu0
        %2874 = vdwg.mxu0
        %v2875 = vpack.c.bf16 %v2869, %v2867
        %v2876 = vpack.c.bf16 %v2872, %v2872
        %v2881 = vunpack.c.l.b16 %v2442
        %v2882 = vunpack.c.l.b16 %v2443
        %v2883 = vunpack.c.l.b16 %v2444
        %v2884 = vunpack.c.l.b16 %v2445
        %v2885 = vpack.c.b16 %v2882, %v2881
        %v2886 = vpack.c.b16 %v2884, %v2883
        %v2890 = vsel %vm2455, %v2875, 0
        %v2893 = vsel %vm2455, %v2876, 0
        %2895 = vmatpush.bf16.msra.mxu0 0
        %2896 = vmatpush.bf16.msra.mxu0 0
        %2897 = vmatpush.bf16.msra.mxu0 0
        %2898 = vmatpush.bf16.msra.mxu0 0
        %2899 = vmatpush.bf16.msra.mxu0 0
        %2900 = vmatpush.bf16.msra.mxu0 0
        %2901 = vmatpush.bf16.msra.mxu0 %v2886
        %2902 = vmatpush.bf16.msra.mxu0 %v2885
        %2903 = vmatmul.bf16.gmra.mxu0 %v2890
        %v2904 = vpop.f32.mrf.mxu0
        %v2905 = vadd.f32 0.0, %v2904
        %v2906 = vpop.f32.mrf.mxu0
        %v2907 = vadd.f32 0.0, %v2906
        %2908 = vmatmul.bf16.gmra.mxu0 %v2893
        %v2909 = vpop.f32.mrf.mxu0
        %v2910 = vadd.f32 0.0, %v2909
        %v2911 = vpop.f32.mrf.mxu0
        %2912 = vdwg.mxu0
        %v2913 = vadd.f32 %v2761, %v2905
        %v2914 = vadd.f32 %v2762, %v2907
        %v2915 = vadd.f32 %v2763, %v2910
        %2916 = vrot.lane.b32.xlu0 %v2451, 32
        %v2917 = vpop.permute.xlu0 %2916
        %2918 = vrot.lane.b32.xlu0 %v2452, 32
        %v2919 = vpop.permute.xlu0 %2918
        %2920 = vrot.lane.b32.xlu0 %v2453, 32
        %v2921 = vpop.permute.xlu0 %2920
        %2922 = vrot.lane.b32.xlu0 %v2454, 32
        %v2923 = vpop.permute.xlu0 %2922
        %v2925 = vsel %vm2455, %v2917, 0
        %v2928 = vsel %vm2455, %v2919, 0
        %v2931 = vsel %vm2455, %v2921, 0
        %v2934 = vsel %vm2455, %v2923, 0
        %2936 = vmatpush.bf16.xpose.msra.mxu0 0
        %2937 = vmatpush.bf16.xpose.msra.mxu0 0
        %2938 = vmatpush.bf16.xpose.msra.mxu0 0
        %2939 = vmatpush.bf16.xpose.msra.mxu0 0
        %2940 = vmatpush.bf16.xpose.msra.mxu0 0
        %2941 = vmatpush.bf16.xpose.msra.mxu0 0
        %2942 = vmatpush.bf16.xpose.msra.mxu0 %v2934
        %2943 = vmatpush.bf16.xpose.msra.mxu0 %v2931
        %2944 = vmatmul.bf16.gmra.mxu0 %v2925
        %v2945 = vpop.f32.mrf.mxu0
        %v2946 = vadd.f32 0.0, %v2945
        %v2947 = vpop.f32.mrf.mxu0
        %v2948 = vadd.f32 0.0, %v2947
        %2949 = vmatmul.bf16.gmra.mxu0 %v2928
        %v2950 = vpop.f32.mrf.mxu0
        %v2951 = vadd.f32 0.0, %v2950
        %v2952 = vpop.f32.mrf.mxu0
        %2953 = vdwg.mxu0
        %v2954 = vmul.f32 %v2946, 0.17677669
        %v2955 = vmul.f32 %v2948, 0.17677669
        %v2956 = vmul.f32 %v2951, 0.17677669
        %v2957 = vadd.f32 %v2954, %v2490
        %v2958 = vadd.f32 %v2955, %v2490
        %v2959 = vadd.f32 %v2956, %v2490
        %v2960 = vsel %vm2495, %v2957, -inf
        %2961 = vmax.xlane.f32.xlu0 %v2960
        %v2962 = vpop.xlane.xlu0 %2961
        %v2963 = vsel %vm2495, %v2958, -inf
        %2964 = vmax.xlane.f32.xlu0 %v2963
        %v2965 = vpop.xlane.xlu0 %2964
        %v2966 = vsel %vm2502, %v2959, -inf
        %2967 = vmax.xlane.f32.xlu0 %v2966
        %v2968 = vpop.xlane.xlu0 %2967
        %v2969 = vsub.f32 %v2957, %v2962
        %v2970 = vsub.f32 %v2958, %v2965
        %v2971 = vsub.f32 %v2959, %v2968
        %v2972 = vmul.f32 %v2969, 1.442695
        %v2973 = vpow.pop %v2972
        %v2974 = vmul.f32 %v2970, 1.442695
        %v2975 = vpow.pop %v2974
        %v2976 = vmul.f32 %v2971, 1.442695
        %v2977 = vpow.pop %v2976
        %v2978 = vsel %vm2495, %v2973, 0.0
        %2979 = vadd.xlane.f32.xlu0 %v2978
        %v2980 = vpop.xlane.xlu0 %2979
        %v2981 = vsel %vm2495, %v2975, 0.0
        %2982 = vadd.xlane.f32.xlu0 %v2981
        %v2983 = vpop.xlane.xlu0 %2982
        %v2984 = vsel %vm2502, %v2977, 0.0
        %2985 = vadd.xlane.f32.xlu0 %v2984
        %v2986 = vpop.xlane.xlu0 %2985
        %v2987 = vrcp.pop %v2980
        %v2988 = vrcp.pop %v2983
        %v2989 = vrcp.pop %v2986
        %v2990 = vmul.f32 %v2973, %v2987
        %v2991 = vmul.f32 %v2975, %v2988
        %v2992 = vmul.f32 %v2977, %v2989
        %v2993 = vpack.c.bf16 %v2991, %v2990
        %v2994 = vpack.c.bf16 %v2992, %v2992
        %2995 = vrot.lane.b32.xlu0 %v2532, 32
        %v2996 = vpop.permute.xlu0 %2995
        %2997 = vrot.lane.b32.xlu0 %v2533, 32
        %v2998 = vpop.permute.xlu0 %2997
        %v3001 = vsel %vm2495, %v2993, 0
        %v3004 = vsel %vm2495, %v2994, 0
        %v3007 = vsel %vm2540, %v2998, 0
        %3009 = vmatpush.bf16.msra.mxu0 0
        %3010 = vmatpush.bf16.msra.mxu0 0
        %3011 = vmatpush.bf16.msra.mxu0 0
        %3012 = vmatpush.bf16.msra.mxu0 0
        %3013 = vmatpush.bf16.msra.mxu0 0
        %3014 = vmatpush.bf16.msra.mxu0 0
        %3015 = vmatpush.bf16.msra.mxu0 %v3007
        %3016 = vmatpush.bf16.msra.mxu0 %v2996
        %3017 = vmatmul.bf16.gmra.mxu0 %v3001
        %v3018 = vpop.f32.mrf.mxu0
        %v3019 = vadd.f32 0.0, %v3018
        %v3020 = vpop.f32.mrf.mxu0
        %v3021 = vadd.f32 0.0, %v3020
        %3022 = vmatmul.bf16.gmra.mxu0 %v3004
        %v3023 = vpop.f32.mrf.mxu0
        %v3024 = vadd.f32 0.0, %v3023
        %v3025 = vpop.f32.mrf.mxu0
        %3026 = vdwg.mxu0
        %v3027 = vpack.c.bf16 %v3021, %v3019
        %v3028 = vpack.c.bf16 %v3024, %v3024
        %v3033 = vunpack.c.l.b16 %v2446
        %v3034 = vunpack.c.l.b16 %v2447
        %v3035 = vunpack.c.l.b16 %v2448
        %v3036 = vunpack.c.l.b16 %v2449
        %v3037 = vpack.c.b16 %v3034, %v3033
        %v3038 = vpack.c.b16 %v3036, %v3035
        %v3042 = vsel %vm2455, %v3027, 0
        %v3045 = vsel %vm2455, %v3028, 0
        %3047 = vmatpush.bf16.msra.mxu0 0
        %3048 = vmatpush.bf16.msra.mxu0 0
        %3049 = vmatpush.bf16.msra.mxu0 0
        %3050 = vmatpush.bf16.msra.mxu0 0
        %3051 = vmatpush.bf16.msra.mxu0 0
        %3052 = vmatpush.bf16.msra.mxu0 0
        %3053 = vmatpush.bf16.msra.mxu0 %v3038
        %3054 = vmatpush.bf16.msra.mxu0 %v3037
        %3055 = vmatmul.bf16.gmra.mxu0 %v3042
        %v3056 = vpop.f32.mrf.mxu0
        %v3057 = vadd.f32 0.0, %v3056
        %v3058 = vpop.f32.mrf.mxu0
        %v3059 = vadd.f32 0.0, %v3058
        %3060 = vmatmul.bf16.gmra.mxu0 %v3045
        %v3061 = vpop.f32.mrf.mxu0
        %v3062 = vadd.f32 0.0, %v3061
        %v3063 = vpop.f32.mrf.mxu0
        %3064 = vdwg.mxu0
        %v3065 = vadd.f32 %v2913, %v3057
        %v3066 = vadd.f32 %v2914, %v3059
        %v3067 = vadd.f32 %v2915, %v3062
        %v3068 = vadd.f32 %v2207, %v3065
        %v3069 = vadd.f32 %v2208, %v3066
        %v3070 = vadd.f32 %v2209, %v3067
        %v3071 = vld [vmem:[#allocation13] sm:$0x1]
        %v3072 = vld [vmem:[#allocation15] sm:$0x1]
        %3073 = vadd.xlane.f32.xlu0 %v3068
        %v3074 = vpop.xlane.xlu0 %3073
        %3075 = vadd.xlane.f32.xlu0 %v3069
        %v3076 = vpop.xlane.xlu0 %3075
        %v3077 = vsel %vm1643, %v3070, 0.0
        %3078 = vadd.xlane.f32.xlu0 %v3077
        %v3079 = vpop.xlane.xlu0 %3078
        %v3080 = vmul.f32 %v3074, %v1653
        %v3081 = vmul.f32 %v3076, %v1653
        %v3082 = vmul.f32 %v3079, %v1653
        %v3083 = vsub.f32 %v3068, %v3080
        %v3084 = vsub.f32 %v3069, %v3081
        %v3085 = vsub.f32 %v3070, %v3082
        %v3086 = vmul.f32 %v3083, %v3083
        %v3087 = vmul.f32 %v3084, %v3084
        %v3088 = vmul.f32 %v3085, %v3085
        %3089 = vadd.xlane.f32.xlu0 %v3086
        %v3090 = vpop.xlane.xlu0 %3089
        %3091 = vadd.xlane.f32.xlu0 %v3087
        %v3092 = vpop.xlane.xlu0 %3091
        %v3093 = vsel %vm1643, %v3088, 0.0
        %3094 = vadd.xlane.f32.xlu0 %v3093
        %v3095 = vpop.xlane.xlu0 %3094
        %v3096 = vmul.f32 %v3090, %v1653
        %v3097 = vmul.f32 %v3092, %v1653
        %v3098 = vmul.f32 %v3095, %v1653
        %v3099 = vadd.f32 %v3096, 1e-05
        %v3100 = vadd.f32 %v3097, 1e-05
        %v3101 = vadd.f32 %v3098, 1e-05
        %v3102 = vrsqrt.pop %v3099
        %v3103 = vmul.f32 %v3102, %v3099
        %v3104 = vmul.f32 %v3103, %v3102
        %v3105 = vmul.f32 0.5, %v3104
        %v3106 = vsub.f32 1.5, %v3105
        %v3107 = vmul.f32 %v3102, %v3106
        %vm3108 = vweird.f32 %v3099
        %vm3109 = vweird.f32 %v3102
        %vm3110 = vmor %vm3108, %vm3109
        %v3111 = vsel %vm3110, %v3102, %v3107
        %v3112 = vrsqrt.pop %v3100
        %v3113 = vmul.f32 %v3112, %v3100
        %v3114 = vmul.f32 %v3113, %v3112
        %v3115 = vmul.f32 0.5, %v3114
        %v3116 = vsub.f32 1.5, %v3115
        %v3117 = vmul.f32 %v3112, %v3116
        %vm3118 = vweird.f32 %v3100
        %vm3119 = vweird.f32 %v3112
        %vm3120 = vmor %vm3118, %vm3119
        %v3121 = vsel %vm3120, %v3112, %v3117
        %v3122 = vrsqrt.pop %v3101
        %v3123 = vmul.f32 %v3122, %v3101
        %v3124 = vmul.f32 %v3123, %v3122
        %v3125 = vmul.f32 0.5, %v3124
        %v3126 = vsub.f32 1.5, %v3125
        %v3127 = vmul.f32 %v3122, %v3126
        %vm3128 = vweird.f32 %v3101
        %vm3129 = vweird.f32 %v3122
        %vm3130 = vmor %vm3128, %vm3129
        %v3131 = vsel %vm3130, %v3122, %v3127
        %v3132 = vmul.f32 %v3083, %v3111
        %v3133 = vmul.f32 %v3084, %v3121
        %v3134 = vmul.f32 %v3085, %v3131
        %v3136 = vperm.slane %v3071, 0
        %v3138 = vmul.f32 %v3132, %v3136
        %v3139 = vmul.f32 %v3133, %v3136
        %v3140 = vmul.f32 %v3134, %v3136
        %v3142 = vperm.slane %v3072, 0
        %v3144 = vadd.f32 %v3138, %v3142
        %v3145 = vadd.f32 %v3139, %v3142
        %v3146 = vadd.f32 %v3140, %v3142
        %v3147 = vld [vmem:[%s39] sm:$0xff]
        %v3148 = vld [vmem:[%s39 + $0x8] sm:$0xff]
        %v3149 = vld [vmem:[%s39 + $0x10] sm:$0xff]
        %v3150 = vld [vmem:[%s39 + $0x18] sm:$0xff]
        %v3151 = vld [vmem:[%s39 + $0x20] sm:$0xff]
        %v3152 = vld [vmem:[%s39 + $0x28] sm:$0xff]
        %v3153 = vld [vmem:[%s39 + $0x30] sm:$0xff]
        %v3154 = vld [vmem:[%s39 + $0x38] sm:$0xff]
        %v3155 = vld [vmem:[%s39 + $0x40] sm:$0xff]
        %v3156 = vld [vmem:[%s39 + $0x48] sm:$0xff]
        %v3157 = vld [vmem:[%s39 + $0x50] sm:$0xff]
        %v3158 = vld [vmem:[%s39 + $0x58] sm:$0xff]
        %v3159 = vld [vmem:[%s39 + $0x60] sm:$0xff]
        %v3160 = vld [vmem:[%s39 + $0x68] sm:$0xff]
        %v3161 = vld [vmem:[%s39 + $0x70] sm:$0xff]
        %v3162 = vld [vmem:[%s39 + $0x78] sm:$0xff]
        %v3163 = vpack.c.bf16 %v3145, %v3144
        %v3164 = vpack.c.bf16 %v3146, %v3146
        %v3165 = vld [vmem:[#allocation16] sm:$0x3]
        %v3167 = vperm.slane %v3165, 0
        %v3168 = vperm.slane %v3165, 1
        %v3187 = vunpack.c.l.b16 %v3147
        %v3188 = vunpack.c.h.b16 %v3147
        %v3189 = vunpack.c.l.b16 %v3148
        %v3190 = vunpack.c.h.b16 %v3148
        %v3191 = vunpack.c.l.b16 %v3149
        %v3192 = vunpack.c.h.b16 %v3149
        %v3193 = vunpack.c.l.b16 %v3150
        %v3194 = vunpack.c.h.b16 %v3150
        %v3195 = vunpack.c.l.b16 %v3151
        %v3196 = vunpack.c.h.b16 %v3151
        %v3197 = vunpack.c.l.b16 %v3152
        %v3198 = vunpack.c.h.b16 %v3152
        %v3199 = vunpack.c.l.b16 %v3153
        %v3200 = vunpack.c.h.b16 %v3153
        %v3201 = vunpack.c.l.b16 %v3154
        %v3202 = vunpack.c.h.b16 %v3154
        %v3203 = vunpack.c.l.b16 %v3155
        %v3204 = vunpack.c.h.b16 %v3155
        %v3205 = vunpack.c.l.b16 %v3156
        %v3206 = vunpack.c.h.b16 %v3156
        %v3207 = vunpack.c.l.b16 %v3157
        %v3208 = vunpack.c.h.b16 %v3157
        %v3209 = vunpack.c.l.b16 %v3158
        %v3210 = vunpack.c.h.b16 %v3158
        %v3211 = vunpack.c.l.b16 %v3159
        %v3212 = vunpack.c.h.b16 %v3159
        %v3213 = vunpack.c.l.b16 %v3160
        %v3214 = vunpack.c.h.b16 %v3160
        %v3215 = vunpack.c.l.b16 %v3161
        %v3216 = vunpack.c.h.b16 %v3161
        %v3217 = vunpack.c.l.b16 %v3162
        %v3218 = vunpack.c.h.b16 %v3162
        %v3219 = vpack.c.b16 %v3189, %v3187
        %v3220 = vpack.c.b16 %v3190, %v3188
        %v3221 = vpack.c.b16 %v3193, %v3191
        %v3222 = vpack.c.b16 %v3194, %v3192
        %v3223 = vpack.c.b16 %v3197, %v3195
        %v3224 = vpack.c.b16 %v3198, %v3196
        %v3225 = vpack.c.b16 %v3201, %v3199
        %v3226 = vpack.c.b16 %v3202, %v3200
        %v3227 = vpack.c.b16 %v3205, %v3203
        %v3228 = vpack.c.b16 %v3206, %v3204
        %v3229 = vpack.c.b16 %v3209, %v3207
        %v3230 = vpack.c.b16 %v3210, %v3208
        %v3231 = vpack.c.b16 %v3213, %v3211
        %v3232 = vpack.c.b16 %v3214, %v3212
        %v3233 = vpack.c.b16 %v3217, %v3215
        %v3234 = vpack.c.b16 %v3218, %v3216
        %3251 = vmatpush.bf16.msra.mxu0 %v3233
        %3252 = vmatpush.bf16.msra.mxu0 %v3231
        %3253 = vmatpush.bf16.msra.mxu0 %v3229
        %3254 = vmatpush.bf16.msra.mxu0 %v3227
        %3255 = vmatpush.bf16.msra.mxu0 %v3225
        %3256 = vmatpush.bf16.msra.mxu0 %v3223
        %3257 = vmatpush.bf16.msra.mxu0 %v3221
        %3258 = vmatpush.bf16.msra.mxu0 %v3219
        %3259 = vmatmul.bf16.gmra.mxu0 %v3163
        %v3260 = vpop.f32.mrf.mxu0
        %v3261 = vadd.f32 %v3167, %v3260
        %v3262 = vpop.f32.mrf.mxu0
        %v3263 = vadd.f32 %v3167, %v3262
        %3264 = vmatmul.bf16.gmra.mxu0 %v3164
        %v3265 = vpop.f32.mrf.mxu0
        %v3266 = vadd.f32 %v3167, %v3265
        %v3267 = vpop.f32.mrf.mxu0
        %3268 = vdwg.mxu0
        %3269 = vmatpush.bf16.msra.mxu0 %v3234
        %3270 = vmatpush.bf16.msra.mxu0 %v3232
        %3271 = vmatpush.bf16.msra.mxu0 %v3230
        %3272 = vmatpush.bf16.msra.mxu0 %v3228
        %3273 = vmatpush.bf16.msra.mxu0 %v3226
        %3274 = vmatpush.bf16.msra.mxu0 %v3224
        %3275 = vmatpush.bf16.msra.mxu0 %v3222
        %3276 = vmatpush.bf16.msra.mxu0 %v3220
        %3277 = vmatmul.bf16.gmra.mxu0 %v3163
        %v3278 = vpop.f32.mrf.mxu0
        %v3279 = vadd.f32 %v3168, %v3278
        %v3280 = vpop.f32.mrf.mxu0
        %v3281 = vadd.f32 %v3168, %v3280
        %3282 = vmatmul.bf16.gmra.mxu0 %v3164
        %v3283 = vpop.f32.mrf.mxu0
        %v3284 = vadd.f32 %v3168, %v3283
        %v3285 = vpop.f32.mrf.mxu0
        %3286 = vdwg.mxu0
        %v3287 = vmul.f32 %v3261, %v3261
        %v3288 = vmul.f32 %v3279, %v3279
        %v3289 = vmul.f32 %v3263, %v3263
        %v3290 = vmul.f32 %v3281, %v3281
        %v3291 = vmul.f32 %v3266, %v3266
        %v3292 = vmul.f32 %v3284, %v3284
        %v3293 = vmul.f32 %v3261, %v3287
        %v3294 = vmul.f32 %v3279, %v3288
        %v3295 = vmul.f32 %v3263, %v3289
        %v3296 = vmul.f32 %v3281, %v3290
        %v3297 = vmul.f32 %v3266, %v3291
        %v3298 = vmul.f32 %v3284, %v3292
        %v3299 = vmul.f32 %v3293, 0.044715
        %v3300 = vmul.f32 %v3294, 0.044715
        %v3301 = vmul.f32 %v3295, 0.044715
        %v3302 = vmul.f32 %v3296, 0.044715
        %v3303 = vmul.f32 %v3297, 0.044715
        %v3304 = vmul.f32 %v3298, 0.044715
        %v3305 = vadd.f32 %v3261, %v3299
        %v3306 = vadd.f32 %v3279, %v3300
        %v3307 = vadd.f32 %v3263, %v3301
        %v3308 = vadd.f32 %v3281, %v3302
        %v3309 = vadd.f32 %v3266, %v3303
        %v3310 = vadd.f32 %v3284, %v3304
        %v3311 = vmul.f32 %v3305, 0.7978846
        %v3312 = vmul.f32 %v3306, 0.7978846
        %v3313 = vmul.f32 %v3307, 0.7978846
        %v3314 = vmul.f32 %v3308, 0.7978846
        %v3315 = vmul.f32 %v3309, 0.7978846
        %v3316 = vmul.f32 %v3310, 0.7978846
        %v3317 = vtanh.pop %v3311
        %v3318 = vtanh.pop %v3312
        %v3319 = vtanh.pop %v3313
        %v3320 = vtanh.pop %v3314
        %v3321 = vtanh.pop %v3315
        %v3322 = vtanh.pop %v3316
        %v3323 = vadd.f32 %v3317, 1.0
        %v3324 = vadd.f32 %v3318, 1.0
        %v3325 = vadd.f32 %v3319, 1.0
        %v3326 = vadd.f32 %v3320, 1.0
        %v3327 = vadd.f32 %v3321, 1.0
        %v3328 = vadd.f32 %v3322, 1.0
        %v3329 = vmul.f32 %v3323, 0.5
        %v3330 = vmul.f32 %v3324, 0.5
        %v3331 = vmul.f32 %v3325, 0.5
        %v3332 = vmul.f32 %v3326, 0.5
        %v3333 = vmul.f32 %v3327, 0.5
        %v3334 = vmul.f32 %v3328, 0.5
        %v3335 = vmul.f32 %v3261, %v3329
        %v3336 = vmul.f32 %v3279, %v3330
        %v3337 = vmul.f32 %v3263, %v3331
        %v3338 = vmul.f32 %v3281, %v3332
        %v3339 = vmul.f32 %v3266, %v3333
        %v3340 = vmul.f32 %v3284, %v3334
        %v3341 = vld [vmem:[#allocation18] sm:$0xf]
        %v3342 = vld [vmem:[#allocation18 + $0x4] sm:$0xf]
        %v3343 = vld [vmem:[#allocation18 + $0x8] sm:$0xf]
        %v3344 = vld [vmem:[#allocation18 + $0xc] sm:$0xf]
        %v3345 = vld [vmem:[#allocation18 + $0x10] sm:$0xf]
        %v3346 = vld [vmem:[#allocation18 + $0x14] sm:$0xf]
        %v3347 = vld [vmem:[#allocation18 + $0x18] sm:$0xf]
        %v3348 = vld [vmem:[#allocation18 + $0x1c] sm:$0xf]
        %v3349 = vld [vmem:[#allocation18 + $0x20] sm:$0xf]
        %v3350 = vld [vmem:[#allocation18 + $0x24] sm:$0xf]
        %v3351 = vld [vmem:[#allocation18 + $0x28] sm:$0xf]
        %v3352 = vld [vmem:[#allocation18 + $0x2c] sm:$0xf]
        %v3353 = vld [vmem:[#allocation18 + $0x30] sm:$0xf]
        %v3354 = vld [vmem:[#allocation18 + $0x34] sm:$0xf]
        %v3355 = vld [vmem:[#allocation18 + $0x38] sm:$0xf]
        %v3356 = vld [vmem:[#allocation18 + $0x3c] sm:$0xf]
        %v3357 = vld [vmem:[#allocation18 + $0x40] sm:$0xf]
        %v3358 = vld [vmem:[#allocation18 + $0x44] sm:$0xf]
        %v3359 = vld [vmem:[#allocation18 + $0x48] sm:$0xf]
        %v3360 = vld [vmem:[#allocation18 + $0x4c] sm:$0xf]
        %v3361 = vld [vmem:[#allocation18 + $0x50] sm:$0xf]
        %v3362 = vld [vmem:[#allocation18 + $0x54] sm:$0xf]
        %v3363 = vld [vmem:[#allocation18 + $0x58] sm:$0xf]
        %v3364 = vld [vmem:[#allocation18 + $0x5c] sm:$0xf]
        %v3365 = vld [vmem:[#allocation18 + $0x60] sm:$0xf]
        %v3366 = vld [vmem:[#allocation18 + $0x64] sm:$0xf]
        %v3367 = vld [vmem:[#allocation18 + $0x68] sm:$0xf]
        %v3368 = vld [vmem:[#allocation18 + $0x6c] sm:$0xf]
        %v3369 = vld [vmem:[#allocation18 + $0x70] sm:$0xf]
        %v3370 = vld [vmem:[#allocation18 + $0x74] sm:$0xf]
        %v3371 = vld [vmem:[#allocation18 + $0x78] sm:$0xf]
        %v3372 = vld [vmem:[#allocation18 + $0x7c] sm:$0xf]
        %v3373 = vpack.c.bf16 %v3337, %v3335
        %v3374 = vpack.c.bf16 %v3338, %v3336
        %v3375 = vpack.c.bf16 %v3339, %v3339
        %v3376 = vpack.c.bf16 %v3340, %v3340
        %v3377 = vld [vmem:[#allocation19] sm:$0x1]
        %v3379 = vperm.slane %v3377, 0
        %v3413 = vunpack.c.l.b16 %v3341
        %v3414 = vunpack.c.l.b16 %v3342
        %v3415 = vunpack.c.l.b16 %v3343
        %v3416 = vunpack.c.l.b16 %v3344
        %v3417 = vunpack.c.l.b16 %v3345
        %v3418 = vunpack.c.l.b16 %v3346
        %v3419 = vunpack.c.l.b16 %v3347
        %v3420 = vunpack.c.l.b16 %v3348
        %v3421 = vunpack.c.l.b16 %v3349
        %v3422 = vunpack.c.l.b16 %v3350
        %v3423 = vunpack.c.l.b16 %v3351
        %v3424 = vunpack.c.l.b16 %v3352
        %v3425 = vunpack.c.l.b16 %v3353
        %v3426 = vunpack.c.l.b16 %v3354
        %v3427 = vunpack.c.l.b16 %v3355
        %v3428 = vunpack.c.l.b16 %v3356
        %v3429 = vunpack.c.l.b16 %v3357
        %v3430 = vunpack.c.l.b16 %v3358
        %v3431 = vunpack.c.l.b16 %v3359
        %v3432 = vunpack.c.l.b16 %v3360
        %v3433 = vunpack.c.l.b16 %v3361
        %v3434 = vunpack.c.l.b16 %v3362
        %v3435 = vunpack.c.l.b16 %v3363
        %v3436 = vunpack.c.l.b16 %v3364
        %v3437 = vunpack.c.l.b16 %v3365
        %v3438 = vunpack.c.l.b16 %v3366
        %v3439 = vunpack.c.l.b16 %v3367
        %v3440 = vunpack.c.l.b16 %v3368
        %v3441 = vunpack.c.l.b16 %v3369
        %v3442 = vunpack.c.l.b16 %v3370
        %v3443 = vunpack.c.l.b16 %v3371
        %v3444 = vunpack.c.l.b16 %v3372
        %v3445 = vpack.c.b16 %v3414, %v3413
        %v3446 = vpack.c.b16 %v3416, %v3415
        %v3447 = vpack.c.b16 %v3418, %v3417
        %v3448 = vpack.c.b16 %v3420, %v3419
        %v3449 = vpack.c.b16 %v3422, %v3421
        %v3450 = vpack.c.b16 %v3424, %v3423
        %v3451 = vpack.c.b16 %v3426, %v3425
        %v3452 = vpack.c.b16 %v3428, %v3427
        %v3453 = vpack.c.b16 %v3430, %v3429
        %v3454 = vpack.c.b16 %v3432, %v3431
        %v3455 = vpack.c.b16 %v3434, %v3433
        %v3456 = vpack.c.b16 %v3436, %v3435
        %v3457 = vpack.c.b16 %v3438, %v3437
        %v3458 = vpack.c.b16 %v3440, %v3439
        %v3459 = vpack.c.b16 %v3442, %v3441
        %v3460 = vpack.c.b16 %v3444, %v3443
        %3477 = vmatpush.bf16.msra.mxu0 %v3452
        %3478 = vmatpush.bf16.msra.mxu0 %v3451
        %3479 = vmatpush.bf16.msra.mxu0 %v3450
        %3480 = vmatpush.bf16.msra.mxu0 %v3449
        %3481 = vmatpush.bf16.msra.mxu0 %v3448
        %3482 = vmatpush.bf16.msra.mxu0 %v3447
        %3483 = vmatpush.bf16.msra.mxu0 %v3446
        %3484 = vmatpush.bf16.msra.mxu0 %v3445
        %3485 = vmatmul.bf16.gmra.mxu0 %v3373
        %v3486 = vpop.f32.mrf.mxu0
        %v3487 = vadd.f32 %v3379, %v3486
        %v3488 = vpop.f32.mrf.mxu0
        %v3489 = vadd.f32 %v3379, %v3488
        %3490 = vmatmul.bf16.gmra.mxu0 %v3375
        %v3491 = vpop.f32.mrf.mxu0
        %v3492 = vadd.f32 %v3379, %v3491
        %v3493 = vpop.f32.mrf.mxu0
        %3494 = vdwg.mxu0
        %3495 = vmatpush.bf16.msra.mxu0 %v3460
        %3496 = vmatpush.bf16.msra.mxu0 %v3459
        %3497 = vmatpush.bf16.msra.mxu0 %v3458
        %3498 = vmatpush.bf16.msra.mxu0 %v3457
        %3499 = vmatpush.bf16.msra.mxu0 %v3456
        %3500 = vmatpush.bf16.msra.mxu0 %v3455
        %3501 = vmatpush.bf16.msra.mxu0 %v3454
        %3502 = vmatpush.bf16.msra.mxu0 %v3453
        %3503 = vmatmul.bf16.gmra.mxu0 %v3374
        %v3504 = vpop.f32.mrf.mxu0
        %v3505 = vadd.f32 %v3487, %v3504
        %v3506 = vpop.f32.mrf.mxu0
        %v3507 = vadd.f32 %v3489, %v3506
        %3508 = vmatmul.bf16.gmra.mxu0 %v3376
        %v3509 = vpop.f32.mrf.mxu0
        %v3510 = vadd.f32 %v3492, %v3509
        %v3511 = vpop.f32.mrf.mxu0
        %3512 = vdwg.mxu0
        %v3513 = vadd.f32 %v3144, %v3505
        %v3514 = vadd.f32 %v3145, %v3507
        %v3515 = vadd.f32 %v3146, %v3510
        %v3516 = vld [vmem:[#allocation21] sm:$0x1]
        %v3517 = vld [vmem:[#allocation22] sm:$0x1]
        %3518 = vadd.xlane.f32.xlu0 %v3513
        %v3519 = vpop.xlane.xlu0 %3518
        %3520 = vadd.xlane.f32.xlu0 %v3514
        %v3521 = vpop.xlane.xlu0 %3520
        %v3522 = vsel %vm1643, %v3515, 0.0
        %3523 = vadd.xlane.f32.xlu0 %v3522
        %v3524 = vpop.xlane.xlu0 %3523
        %v3525 = vmul.f32 %v3519, %v1653
        %v3526 = vmul.f32 %v3521, %v1653
        %v3527 = vmul.f32 %v3524, %v1653
        %v3528 = vsub.f32 %v3513, %v3525
        %v3529 = vsub.f32 %v3514, %v3526
        %v3530 = vsub.f32 %v3515, %v3527
        %v3531 = vmul.f32 %v3528, %v3528
        %v3532 = vmul.f32 %v3529, %v3529
        %v3533 = vmul.f32 %v3530, %v3530
        %3534 = vadd.xlane.f32.xlu0 %v3531
        %v3535 = vpop.xlane.xlu0 %3534
        %3536 = vadd.xlane.f32.xlu0 %v3532
        %v3537 = vpop.xlane.xlu0 %3536
        %v3538 = vsel %vm1643, %v3533, 0.0
        %3539 = vadd.xlane.f32.xlu0 %v3538
        %v3540 = vpop.xlane.xlu0 %3539
        %v3541 = vmul.f32 %v3535, %v1653
        %v3542 = vmul.f32 %v3537, %v1653
        %v3543 = vmul.f32 %v3540, %v1653
        %v3544 = vadd.f32 %v3541, 1e-05
        %v3545 = vadd.f32 %v3542, 1e-05
        %v3546 = vadd.f32 %v3543, 1e-05
        %v3547 = vrsqrt.pop %v3544
        %v3548 = vmul.f32 %v3547, %v3544
        %v3549 = vmul.f32 %v3548, %v3547
        %v3550 = vmul.f32 0.5, %v3549
        %v3551 = vsub.f32 1.5, %v3550
        %v3552 = vmul.f32 %v3547, %v3551
        %vm3553 = vweird.f32 %v3544
        %vm3554 = vweird.f32 %v3547
        %vm3555 = vmor %vm3553, %vm3554
        %v3556 = vsel %vm3555, %v3547, %v3552
        %v3557 = vrsqrt.pop %v3545
        %v3558 = vmul.f32 %v3557, %v3545
        %v3559 = vmul.f32 %v3558, %v3557
        %v3560 = vmul.f32 0.5, %v3559
        %v3561 = vsub.f32 1.5, %v3560
        %v3562 = vmul.f32 %v3557, %v3561
        %vm3563 = vweird.f32 %v3545
        %vm3564 = vweird.f32 %v3557
        %vm3565 = vmor %vm3563, %vm3564
        %v3566 = vsel %vm3565, %v3557, %v3562
        %v3567 = vrsqrt.pop %v3546
        %v3568 = vmul.f32 %v3567, %v3546
        %v3569 = vmul.f32 %v3568, %v3567
        %v3570 = vmul.f32 0.5, %v3569
        %v3571 = vsub.f32 1.5, %v3570
        %v3572 = vmul.f32 %v3567, %v3571
        %vm3573 = vweird.f32 %v3546
        %vm3574 = vweird.f32 %v3567
        %vm3575 = vmor %vm3573, %vm3574
        %v3576 = vsel %vm3575, %v3567, %v3572
        %v3577 = vmul.f32 %v3528, %v3556
        %v3578 = vmul.f32 %v3529, %v3566
        %v3579 = vmul.f32 %v3530, %v3576
        %v3581 = vperm.slane %v3516, 0
        %v3583 = vmul.f32 %v3577, %v3581
        %v3584 = vmul.f32 %v3578, %v3581
        %v3585 = vmul.f32 %v3579, %v3581
        %v3587 = vperm.slane %v3517, 0
        %v3589 = vadd.f32 %v3583, %v3587
        %v3590 = vadd.f32 %v3584, %v3587
        %v3591 = vadd.f32 %v3585, %v3587
        %s3592 = scalar_lea.vmem %s27, 192
        %v3593 = vld [vmem:[%s3592] sm:$0xff]
        %v3594 = vld [vmem:[%s3592 + $0x8] sm:$0xf]
        %v3595 = vld [vmem:[%s3592 + $0xc] sm:$0xff]
        %v3596 = vld [vmem:[%s3592 + $0x14] sm:$0xf]
        %v3597 = vld [vmem:[%s3592 + $0x18] sm:$0xff]
        %v3598 = vld [vmem:[%s3592 + $0x20] sm:$0xf]
        %v3599 = vld [vmem:[%s3592 + $0x24] sm:$0xff]
        %v3600 = vld [vmem:[%s3592 + $0x2c] sm:$0xf]
        %v3601 = vld [vmem:[%s3592 + $0x30] sm:$0xff]
        %v3602 = vld [vmem:[%s3592 + $0x38] sm:$0xf]
        %v3603 = vld [vmem:[%s3592 + $0x3c] sm:$0xff]
        %v3604 = vld [vmem:[%s3592 + $0x44] sm:$0xf]
        %v3605 = vld [vmem:[%s3592 + $0x48] sm:$0xff]
        %v3606 = vld [vmem:[%s3592 + $0x50] sm:$0xf]
        %v3607 = vld [vmem:[%s3592 + $0x54] sm:$0xff]
        %v3608 = vld [vmem:[%s3592 + $0x5c] sm:$0xf]
        %v3609 = vld [vmem:[%s3592 + $0x60] sm:$0xff]
        %v3610 = vld [vmem:[%s3592 + $0x68] sm:$0xf]
        %v3611 = vld [vmem:[%s3592 + $0x6c] sm:$0xff]
        %v3612 = vld [vmem:[%s3592 + $0x74] sm:$0xf]
        %v3613 = vld [vmem:[%s3592 + $0x78] sm:$0xff]
        %v3614 = vld [vmem:[%s3592 + $0x80] sm:$0xf]
        %v3615 = vld [vmem:[%s3592 + $0x84] sm:$0xff]
        %v3616 = vld [vmem:[%s3592 + $0x8c] sm:$0xf]
        %v3617 = vld [vmem:[%s3592 + $0x90] sm:$0xff]
        %v3618 = vld [vmem:[%s3592 + $0x98] sm:$0xf]
        %v3619 = vld [vmem:[%s3592 + $0x9c] sm:$0xff]
        %v3620 = vld [vmem:[%s3592 + $0xa4] sm:$0xf]
        %v3621 = vld [vmem:[%s3592 + $0xa8] sm:$0xff]
        %v3622 = vld [vmem:[%s3592 + $0xb0] sm:$0xf]
        %v3623 = vld [vmem:[%s3592 + $0xb4] sm:$0xff]
        %v3624 = vld [vmem:[%s3592 + $0xbc] sm:$0xf]
        %v3625 = vpack.c.bf16 %v3590, %v3589
        %v3626 = vpack.c.bf16 %v3591, %v3591
        %s3627 = scalar_lea.vmem [#allocation10], 3
        %v3628 = vld [vmem:[%s3627] sm:$0x7]
        %v3630 = vperm.slane %v3628, 0
        %v3631 = vperm.slane %v3628, 1
        %v3632 = vperm.slane %v3628, 2
        %v3668 = vunpack.c.l.b16 %v3593
        %v3669 = vunpack.c.h.b16 %v3593
        %v3670 = vunpack.c.l.b16 %v3594
        %v3671 = vunpack.c.l.b16 %v3595
        %v3672 = vunpack.c.h.b16 %v3595
        %v3673 = vunpack.c.l.b16 %v3596
        %v3674 = vunpack.c.l.b16 %v3597
        %v3675 = vunpack.c.h.b16 %v3597
        %v3676 = vunpack.c.l.b16 %v3598
        %v3677 = vunpack.c.l.b16 %v3599
        %v3678 = vunpack.c.h.b16 %v3599
        %v3679 = vunpack.c.l.b16 %v3600
        %v3680 = vunpack.c.l.b16 %v3601
        %v3681 = vunpack.c.h.b16 %v3601
        %v3682 = vunpack.c.l.b16 %v3602
        %v3683 = vunpack.c.l.b16 %v3603
        %v3684 = vunpack.c.h.b16 %v3603
        %v3685 = vunpack.c.l.b16 %v3604
        %v3686 = vunpack.c.l.b16 %v3605
        %v3687 = vunpack.c.h.b16 %v3605
        %v3688 = vunpack.c.l.b16 %v3606
        %v3689 = vunpack.c.l.b16 %v3607
        %v3690 = vunpack.c.h.b16 %v3607
        %v3691 = vunpack.c.l.b16 %v3608
        %v3692 = vunpack.c.l.b16 %v3609
        %v3693 = vunpack.c.h.b16 %v3609
        %v3694 = vunpack.c.l.b16 %v3610
        %v3695 = vunpack.c.l.b16 %v3611
        %v3696 = vunpack.c.h.b16 %v3611
        %v3697 = vunpack.c.l.b16 %v3612
        %v3698 = vunpack.c.l.b16 %v3613
        %v3699 = vunpack.c.h.b16 %v3613
        %v3700 = vunpack.c.l.b16 %v3614
        %v3701 = vunpack.c.l.b16 %v3615
        %v3702 = vunpack.c.h.b16 %v3615
        %v3703 = vunpack.c.l.b16 %v3616
        %v3704 = vunpack.c.l.b16 %v3617
        %v3705 = vunpack.c.h.b16 %v3617
        %v3706 = vunpack.c.l.b16 %v3618
        %v3707 = vunpack.c.l.b16 %v3619
        %v3708 = vunpack.c.h.b16 %v3619
        %v3709 = vunpack.c.l.b16 %v3620
        %v3710 = vunpack.c.l.b16 %v3621
        %v3711 = vunpack.c.h.b16 %v3621
        %v3712 = vunpack.c.l.b16 %v3622
        %v3713 = vunpack.c.l.b16 %v3623
        %v3714 = vunpack.c.h.b16 %v3623
        %v3715 = vunpack.c.l.b16 %v3624
        %v3716 = vpack.c.b16 %v3671, %v3668
        %v3717 = vpack.c.b16 %v3672, %v3669
        %v3718 = vpack.c.b16 %v3673, %v3670
        %v3719 = vpack.c.b16 %v3677, %v3674
        %v3720 = vpack.c.b16 %v3678, %v3675
        %v3721 = vpack.c.b16 %v3679, %v3676
        %v3722 = vpack.c.b16 %v3683, %v3680
        %v3723 = vpack.c.b16 %v3684, %v3681
        %v3724 = vpack.c.b16 %v3685, %v3682
        %v3725 = vpack.c.b16 %v3689, %v3686
        %v3726 = vpack.c.b16 %v3690, %v3687
        %v3727 = vpack.c.b16 %v3691, %v3688
        %v3728 = vpack.c.b16 %v3695, %v3692
        %v3729 = vpack.c.b16 %v3696, %v3693
        %v3730 = vpack.c.b16 %v3697, %v3694
        %v3731 = vpack.c.b16 %v3701, %v3698
        %v3732 = vpack.c.b16 %v3702, %v3699
        %v3733 = vpack.c.b16 %v3703, %v3700
        %v3734 = vpack.c.b16 %v3707, %v3704
        %v3735 = vpack.c.b16 %v3708, %v3705
        %v3736 = vpack.c.b16 %v3709, %v3706
        %v3737 = vpack.c.b16 %v3713, %v3710
        %v3738 = vpack.c.b16 %v3714, %v3711
        %v3739 = vpack.c.b16 %v3715, %v3712
        %3764 = vmatpush.bf16.msra.mxu0 %v3737
        %3765 = vmatpush.bf16.msra.mxu0 %v3734
        %3766 = vmatpush.bf16.msra.mxu0 %v3731
        %3767 = vmatpush.bf16.msra.mxu0 %v3728
        %3768 = vmatpush.bf16.msra.mxu0 %v3725
        %3769 = vmatpush.bf16.msra.mxu0 %v3722
        %3770 = vmatpush.bf16.msra.mxu0 %v3719
        %3771 = vmatpush.bf16.msra.mxu0 %v3716
        %3772 = vmatmul.bf16.gmra.mxu0 %v3625
        %v3773 = vpop.f32.mrf.mxu0
        %v3774 = vadd.f32 %v3630, %v3773
        %v3775 = vpop.f32.mrf.mxu0
        %v3776 = vadd.f32 %v3630, %v3775
        %3777 = vmatmul.bf16.gmra.mxu0 %v3626
        %v3778 = vpop.f32.mrf.mxu0
        %v3779 = vadd.f32 %v3630, %v3778
        %v3780 = vpop.f32.mrf.mxu0
        %3781 = vdwg.mxu0
        %3782 = vmatpush.bf16.msra.mxu0 %v3738
        %3783 = vmatpush.bf16.msra.mxu0 %v3735
        %3784 = vmatpush.bf16.msra.mxu0 %v3732
        %3785 = vmatpush.bf16.msra.mxu0 %v3729
        %3786 = vmatpush.bf16.msra.mxu0 %v3726
        %3787 = vmatpush.bf16.msra.mxu0 %v3723
        %3788 = vmatpush.bf16.msra.mxu0 %v3720
        %3789 = vmatpush.bf16.msra.mxu0 %v3717
        %3790 = vmatmul.bf16.gmra.mxu0 %v3625
        %v3791 = vpop.f32.mrf.mxu0
        %v3792 = vadd.f32 %v3631, %v3791
        %v3793 = vpop.f32.mrf.mxu0
        %v3794 = vadd.f32 %v3631, %v3793
        %3795 = vmatmul.bf16.gmra.mxu0 %v3626
        %v3796 = vpop.f32.mrf.mxu0
        %v3797 = vadd.f32 %v3631, %v3796
        %v3798 = vpop.f32.mrf.mxu0
        %3799 = vdwg.mxu0
        %3800 = vmatpush.bf16.msra.mxu0 %v3739
        %3801 = vmatpush.bf16.msra.mxu0 %v3736
        %3802 = vmatpush.bf16.msra.mxu0 %v3733
        %3803 = vmatpush.bf16.msra.mxu0 %v3730
        %3804 = vmatpush.bf16.msra.mxu0 %v3727
        %3805 = vmatpush.bf16.msra.mxu0 %v3724
        %3806 = vmatpush.bf16.msra.mxu0 %v3721
        %3807 = vmatpush.bf16.msra.mxu0 %v3718
        %3808 = vmatmul.bf16.gmra.mxu0 %v3625
        %v3809 = vpop.f32.mrf.mxu0
        %v3810 = vadd.f32 %v3632, %v3809
        %v3811 = vpop.f32.mrf.mxu0
        %v3812 = vadd.f32 %v3632, %v3811
        %3813 = vmatmul.bf16.gmra.mxu0 %v3626
        %v3814 = vpop.f32.mrf.mxu0
        %v3815 = vadd.f32 %v3632, %v3814
        %v3816 = vpop.f32.mrf.mxu0
        %3817 = vdwg.mxu0
        %s3818 = scalar_lea.vmem %s31, 64
        %v3819 = vld [vmem:[%s3818] sm:$0xf]
        %v3820 = vld [vmem:[%s3818 + $0x4] sm:$0xf]
        %v3821 = vld [vmem:[%s3818 + $0x8] sm:$0xf]
        %v3822 = vld [vmem:[%s3818 + $0xc] sm:$0xf]
        %v3823 = vld [vmem:[%s3818 + $0x10] sm:$0xf]
        %v3824 = vld [vmem:[%s3818 + $0x14] sm:$0xf]
        %v3825 = vld [vmem:[%s3818 + $0x18] sm:$0xf]
        %v3826 = vld [vmem:[%s3818 + $0x1c] sm:$0xf]
        %v3827 = vld [vmem:[%s3818 + $0x20] sm:$0xf]
        %v3828 = vld [vmem:[%s3818 + $0x24] sm:$0xf]
        %v3829 = vld [vmem:[%s3818 + $0x28] sm:$0xf]
        %v3830 = vld [vmem:[%s3818 + $0x2c] sm:$0xf]
        %v3831 = vld [vmem:[%s3818 + $0x30] sm:$0xf]
        %v3832 = vld [vmem:[%s3818 + $0x34] sm:$0xf]
        %v3833 = vld [vmem:[%s3818 + $0x38] sm:$0xf]
        %v3834 = vld [vmem:[%s3818 + $0x3c] sm:$0xf]
        %s3835 = scalar_lea.vmem [#allocation12], 1
        %v3836 = vld [vmem:[%s3835] sm:$0x1]
        %v3837 = vpack.c.bf16 %v3776, %v3774
        %v3838 = vpack.c.bf16 %v3779, %v3779
        %v3839 = vpack.c.bf16 %v3794, %v3792
        %v3840 = vpack.c.bf16 %v3797, %v3797
        %v3842 = vsel %vm2455, %v3837, 0
        %v3845 = vsel %vm2455, %v3838, 0
        %v3848 = vsel %vm2455, %v3839, 0
        %v3851 = vsel %vm2455, %v3840, 0
        %3853 = vmatpush.bf16.xpose.msra.mxu0 0
        %3854 = vmatpush.bf16.xpose.msra.mxu0 0
        %3855 = vmatpush.bf16.xpose.msra.mxu0 0
        %3856 = vmatpush.bf16.xpose.msra.mxu0 0
        %3857 = vmatpush.bf16.xpose.msra.mxu0 0
        %3858 = vmatpush.bf16.xpose.msra.mxu0 0
        %3859 = vmatpush.bf16.xpose.msra.mxu0 %v3851
        %3860 = vmatpush.bf16.xpose.msra.mxu0 %v3848
        %3861 = vmatmul.bf16.gmra.mxu0 %v3842
        %v3862 = vpop.f32.mrf.mxu0
        %v3863 = vadd.f32 0.0, %v3862
        %v3864 = vpop.f32.mrf.mxu0
        %v3865 = vadd.f32 0.0, %v3864
        %3866 = vmatmul.bf16.gmra.mxu0 %v3845
        %v3867 = vpop.f32.mrf.mxu0
        %v3868 = vadd.f32 0.0, %v3867
        %v3869 = vpop.f32.mrf.mxu0
        %3870 = vdwg.mxu0
        %v3871 = vmul.f32 %v3863, 0.17677669
        %v3872 = vmul.f32 %v3865, 0.17677669
        %v3873 = vmul.f32 %v3868, 0.17677669
        %v3874 = vadd.f32 %v3871, %v2490
        %v3875 = vadd.f32 %v3872, %v2490
        %v3876 = vadd.f32 %v3873, %v2490
        %v3877 = vsel %vm2495, %v3874, -inf
        %3878 = vmax.xlane.f32.xlu0 %v3877
        %v3879 = vpop.xlane.xlu0 %3878
        %v3880 = vsel %vm2495, %v3875, -inf
        %3881 = vmax.xlane.f32.xlu0 %v3880
        %v3882 = vpop.xlane.xlu0 %3881
        %v3883 = vsel %vm2502, %v3876, -inf
        %3884 = vmax.xlane.f32.xlu0 %v3883
        %v3885 = vpop.xlane.xlu0 %3884
        %v3886 = vsub.f32 %v3874, %v3879
        %v3887 = vsub.f32 %v3875, %v3882
        %v3888 = vsub.f32 %v3876, %v3885
        %v3889 = vmul.f32 %v3886, 1.442695
        %v3890 = vpow.pop %v3889
        %v3891 = vmul.f32 %v3887, 1.442695
        %v3892 = vpow.pop %v3891
        %v3893 = vmul.f32 %v3888, 1.442695
        %v3894 = vpow.pop %v3893
        %v3895 = vsel %vm2495, %v3890, 0.0
        %3896 = vadd.xlane.f32.xlu0 %v3895
        %v3897 = vpop.xlane.xlu0 %3896
        %v3898 = vsel %vm2495, %v3892, 0.0
        %3899 = vadd.xlane.f32.xlu0 %v3898
        %v3900 = vpop.xlane.xlu0 %3899
        %v3901 = vsel %vm2502, %v3894, 0.0
        %3902 = vadd.xlane.f32.xlu0 %v3901
        %v3903 = vpop.xlane.xlu0 %3902
        %v3904 = vrcp.pop %v3897
        %v3905 = vrcp.pop %v3900
        %v3906 = vrcp.pop %v3903
        %v3907 = vmul.f32 %v3890, %v3904
        %v3908 = vmul.f32 %v3892, %v3905
        %v3909 = vmul.f32 %v3894, %v3906
        %v3910 = vpack.c.bf16 %v3908, %v3907
        %v3911 = vpack.c.bf16 %v3909, %v3909
        %v3912 = vpack.c.bf16 %v3812, %v3810
        %v3913 = vpack.c.bf16 %v3815, %v3815
        %v3915 = vsel %vm2495, %v3910, 0
        %v3918 = vsel %vm2495, %v3911, 0
        %v3921 = vsel %vm2540, %v3913, 0
        %3923 = vmatpush.bf16.msra.mxu0 0
        %3924 = vmatpush.bf16.msra.mxu0 0
        %3925 = vmatpush.bf16.msra.mxu0 0
        %3926 = vmatpush.bf16.msra.mxu0 0
        %3927 = vmatpush.bf16.msra.mxu0 0
        %3928 = vmatpush.bf16.msra.mxu0 0
        %3929 = vmatpush.bf16.msra.mxu0 %v3921
        %3930 = vmatpush.bf16.msra.mxu0 %v3912
        %3931 = vmatmul.bf16.gmra.mxu0 %v3915
        %v3932 = vpop.f32.mrf.mxu0
        %v3933 = vadd.f32 0.0, %v3932
        %v3934 = vpop.f32.mrf.mxu0
        %v3935 = vadd.f32 0.0, %v3934
        %3936 = vmatmul.bf16.gmra.mxu0 %v3918
        %v3937 = vpop.f32.mrf.mxu0
        %v3938 = vadd.f32 0.0, %v3937
        %v3939 = vpop.f32.mrf.mxu0
        %3940 = vdwg.mxu0
        %v3941 = vpack.c.bf16 %v3935, %v3933
        %v3942 = vpack.c.bf16 %v3938, %v3938
        %v3947 = vunpack.c.l.b16 %v3819
        %v3948 = vunpack.c.l.b16 %v3820
        %v3949 = vunpack.c.l.b16 %v3821
        %v3950 = vunpack.c.l.b16 %v3822
        %v3951 = vpack.c.b16 %v3948, %v3947
        %v3952 = vpack.c.b16 %v3950, %v3949
        %v3956 = vsel %vm2455, %v3941, 0
        %v3959 = vsel %vm2455, %v3942, 0
        %3961 = vmatpush.bf16.msra.mxu0 0
        %3962 = vmatpush.bf16.msra.mxu0 0
        %3963 = vmatpush.bf16.msra.mxu0 0
        %3964 = vmatpush.bf16.msra.mxu0 0
        %3965 = vmatpush.bf16.msra.mxu0 0
        %3966 = vmatpush.bf16.msra.mxu0 0
        %3967 = vmatpush.bf16.msra.mxu0 %v3952
        %3968 = vmatpush.bf16.msra.mxu0 %v3951
        %3969 = vmatmul.bf16.gmra.mxu0 %v3956
        %v3970 = vpop.f32.mrf.mxu0
        %v3971 = vadd.f32 0.0, %v3970
        %v3972 = vpop.f32.mrf.mxu0
        %v3973 = vadd.f32 0.0, %v3972
        %3974 = vmatmul.bf16.gmra.mxu0 %v3959
        %v3975 = vpop.f32.mrf.mxu0
        %v3976 = vadd.f32 0.0, %v3975
        %v3977 = vpop.f32.mrf.mxu0
        %3978 = vdwg.mxu0
        %v3980 = vperm.slane %v3836, 0
        %v3982 = vadd.f32 %v3980, %v3971
        %v3983 = vadd.f32 %v3980, %v3973
        %v3984 = vadd.f32 %v3980, %v3976
        %3987 = vrot.lane.b32.xlu0 %v3837, 96
        %v3988 = vpop.permute.xlu0 %3987
        %3989 = vrot.lane.b32.xlu0 %v3838, 96
        %v3990 = vpop.permute.xlu0 %3989
        %3993 = vrot.lane.b32.xlu0 %v3839, 96
        %v3994 = vpop.permute.xlu0 %3993
        %3995 = vrot.lane.b32.xlu0 %v3840, 96
        %v3996 = vpop.permute.xlu0 %3995
        %v3998 = vsel %vm2455, %v3988, 0
        %v4001 = vsel %vm2455, %v3990, 0
        %v4004 = vsel %vm2455, %v3994, 0
        %v4007 = vsel %vm2455, %v3996, 0
        %4009 = vmatpush.bf16.xpose.msra.mxu0 0
        %4010 = vmatpush.bf16.xpose.msra.mxu0 0
        %4011 = vmatpush.bf16.xpose.msra.mxu0 0
        %4012 = vmatpush.bf16.xpose.msra.mxu0 0
        %4013 = vmatpush.bf16.xpose.msra.mxu0 0
        %4014 = vmatpush.bf16.xpose.msra.mxu0 0
        %4015 = vmatpush.bf16.xpose.msra.mxu0 %v4007
        %4016 = vmatpush.bf16.xpose.msra.mxu0 %v4004
        %4017 = vmatmul.bf16.gmra.mxu0 %v3998
        %v4018 = vpop.f32.mrf.mxu0
        %v4019 = vadd.f32 0.0, %v4018
        %v4020 = vpop.f32.mrf.mxu0
        %v4021 = vadd.f32 0.0, %v4020
        %4022 = vmatmul.bf16.gmra.mxu0 %v4001
        %v4023 = vpop.f32.mrf.mxu0
        %v4024 = vadd.f32 0.0, %v4023
        %v4025 = vpop.f32.mrf.mxu0
        %4026 = vdwg.mxu0
        %v4027 = vmul.f32 %v4019, 0.17677669
        %v4028 = vmul.f32 %v4021, 0.17677669
        %v4029 = vmul.f32 %v4024, 0.17677669
        %v4030 = vadd.f32 %v4027, %v2490
        %v4031 = vadd.f32 %v4028, %v2490
        %v4032 = vadd.f32 %v4029, %v2490
        %v4033 = vsel %vm2495, %v4030, -inf
        %4034 = vmax.xlane.f32.xlu0 %v4033
        %v4035 = vpop.xlane.xlu0 %4034
        %v4036 = vsel %vm2495, %v4031, -inf
        %4037 = vmax.xlane.f32.xlu0 %v4036
        %v4038 = vpop.xlane.xlu0 %4037
        %v4039 = vsel %vm2502, %v4032, -inf
        %4040 = vmax.xlane.f32.xlu0 %v4039
        %v4041 = vpop.xlane.xlu0 %4040
        %v4042 = vsub.f32 %v4030, %v4035
        %v4043 = vsub.f32 %v4031, %v4038
        %v4044 = vsub.f32 %v4032, %v4041
        %v4045 = vmul.f32 %v4042, 1.442695
        %v4046 = vpow.pop %v4045
        %v4047 = vmul.f32 %v4043, 1.442695
        %v4048 = vpow.pop %v4047
        %v4049 = vmul.f32 %v4044, 1.442695
        %v4050 = vpow.pop %v4049
        %v4051 = vsel %vm2495, %v4046, 0.0
        %4052 = vadd.xlane.f32.xlu0 %v4051
        %v4053 = vpop.xlane.xlu0 %4052
        %v4054 = vsel %vm2495, %v4048, 0.0
        %4055 = vadd.xlane.f32.xlu0 %v4054
        %v4056 = vpop.xlane.xlu0 %4055
        %v4057 = vsel %vm2502, %v4050, 0.0
        %4058 = vadd.xlane.f32.xlu0 %v4057
        %v4059 = vpop.xlane.xlu0 %4058
        %v4060 = vrcp.pop %v4053
        %v4061 = vrcp.pop %v4056
        %v4062 = vrcp.pop %v4059
        %v4063 = vmul.f32 %v4046, %v4060
        %v4064 = vmul.f32 %v4048, %v4061
        %v4065 = vmul.f32 %v4050, %v4062
        %v4066 = vpack.c.bf16 %v4064, %v4063
        %v4067 = vpack.c.bf16 %v4065, %v4065
        %4070 = vrot.lane.b32.xlu0 %v3912, 96
        %v4071 = vpop.permute.xlu0 %4070
        %4072 = vrot.lane.b32.xlu0 %v3913, 96
        %v4073 = vpop.permute.xlu0 %4072
        %v4076 = vsel %vm2495, %v4066, 0
        %v4079 = vsel %vm2495, %v4067, 0
        %v4082 = vsel %vm2540, %v4073, 0
        %4084 = vmatpush.bf16.msra.mxu0 0
        %4085 = vmatpush.bf16.msra.mxu0 0
        %4086 = vmatpush.bf16.msra.mxu0 0
        %4087 = vmatpush.bf16.msra.mxu0 0
        %4088 = vmatpush.bf16.msra.mxu0 0
        %4089 = vmatpush.bf16.msra.mxu0 0
        %4090 = vmatpush.bf16.msra.mxu0 %v4082
        %4091 = vmatpush.bf16.msra.mxu0 %v4071
        %4092 = vmatmul.bf16.gmra.mxu0 %v4076
        %v4093 = vpop.f32.mrf.mxu0
        %v4094 = vadd.f32 0.0, %v4093
        %v4095 = vpop.f32.mrf.mxu0
        %v4096 = vadd.f32 0.0, %v4095
        %4097 = vmatmul.bf16.gmra.mxu0 %v4079
        %v4098 = vpop.f32.mrf.mxu0
        %v4099 = vadd.f32 0.0, %v4098
        %v4100 = vpop.f32.mrf.mxu0
        %4101 = vdwg.mxu0
        %v4102 = vpack.c.bf16 %v4096, %v4094
        %v4103 = vpack.c.bf16 %v4099, %v4099
        %v4108 = vunpack.c.l.b16 %v3823
        %v4109 = vunpack.c.l.b16 %v3824
        %v4110 = vunpack.c.l.b16 %v3825
        %v4111 = vunpack.c.l.b16 %v3826
        %v4112 = vpack.c.b16 %v4109, %v4108
        %v4113 = vpack.c.b16 %v4111, %v4110
        %v4117 = vsel %vm2455, %v4102, 0
        %v4120 = vsel %vm2455, %v4103, 0
        %4122 = vmatpush.bf16.msra.mxu0 0
        %4123 = vmatpush.bf16.msra.mxu0 0
        %4124 = vmatpush.bf16.msra.mxu0 0
        %4125 = vmatpush.bf16.msra.mxu0 0
        %4126 = vmatpush.bf16.msra.mxu0 0
        %4127 = vmatpush.bf16.msra.mxu0 0
        %4128 = vmatpush.bf16.msra.mxu0 %v4113
        %4129 = vmatpush.bf16.msra.mxu0 %v4112
        %4130 = vmatmul.bf16.gmra.mxu0 %v4117
        %v4131 = vpop.f32.mrf.mxu0
        %v4132 = vadd.f32 0.0, %v4131
        %v4133 = vpop.f32.mrf.mxu0
        %v4134 = vadd.f32 0.0, %v4133
        %4135 = vmatmul.bf16.gmra.mxu0 %v4120
        %v4136 = vpop.f32.mrf.mxu0
        %v4137 = vadd.f32 0.0, %v4136
        %v4138 = vpop.f32.mrf.mxu0
        %4139 = vdwg.mxu0
        %v4140 = vadd.f32 %v3982, %v4132
        %v4141 = vadd.f32 %v3983, %v4134
        %v4142 = vadd.f32 %v3984, %v4137
        %4143 = vrot.lane.b32.xlu0 %v3837, 64
        %v4144 = vpop.permute.xlu0 %4143
        %4145 = vrot.lane.b32.xlu0 %v3838, 64
        %v4146 = vpop.permute.xlu0 %4145
        %4147 = vrot.lane.b32.xlu0 %v3839, 64
        %v4148 = vpop.permute.xlu0 %4147
        %4149 = vrot.lane.b32.xlu0 %v3840, 64
        %v4150 = vpop.permute.xlu0 %4149
        %v4152 = vsel %vm2455, %v4144, 0
        %v4155 = vsel %vm2455, %v4146, 0
        %v4158 = vsel %vm2455, %v4148, 0
        %v4161 = vsel %vm2455, %v4150, 0
        %4163 = vmatpush.bf16.xpose.msra.mxu0 0
        %4164 = vmatpush.bf16.xpose.msra.mxu0 0
        %4165 = vmatpush.bf16.xpose.msra.mxu0 0
        %4166 = vmatpush.bf16.xpose.msra.mxu0 0
        %4167 = vmatpush.bf16.xpose.msra.mxu0 0
        %4168 = vmatpush.bf16.xpose.msra.mxu0 0
        %4169 = vmatpush.bf16.xpose.msra.mxu0 %v4161
        %4170 = vmatpush.bf16.xpose.msra.mxu0 %v4158
        %4171 = vmatmul.bf16.gmra.mxu0 %v4152
        %v4172 = vpop.f32.mrf.mxu0
        %v4173 = vadd.f32 0.0, %v4172
        %v4174 = vpop.f32.mrf.mxu0
        %v4175 = vadd.f32 0.0, %v4174
        %4176 = vmatmul.bf16.gmra.mxu0 %v4155
        %v4177 = vpop.f32.mrf.mxu0
        %v4178 = vadd.f32 0.0, %v4177
        %v4179 = vpop.f32.mrf.mxu0
        %4180 = vdwg.mxu0
        %v4181 = vmul.f32 %v4173, 0.17677669
        %v4182 = vmul.f32 %v4175, 0.17677669
        %v4183 = vmul.f32 %v4178, 0.17677669
        %v4184 = vadd.f32 %v4181, %v2490
        %v4185 = vadd.f32 %v4182, %v2490
        %v4186 = vadd.f32 %v4183, %v2490
        %v4187 = vsel %vm2495, %v4184, -inf
        %4188 = vmax.xlane.f32.xlu0 %v4187
        %v4189 = vpop.xlane.xlu0 %4188
        %v4190 = vsel %vm2495, %v4185, -inf
        %4191 = vmax.xlane.f32.xlu0 %v4190
        %v4192 = vpop.xlane.xlu0 %4191
        %v4193 = vsel %vm2502, %v4186, -inf
        %4194 = vmax.xlane.f32.xlu0 %v4193
        %v4195 = vpop.xlane.xlu0 %4194
        %v4196 = vsub.f32 %v4184, %v4189
        %v4197 = vsub.f32 %v4185, %v4192
        %v4198 = vsub.f32 %v4186, %v4195
        %v4199 = vmul.f32 %v4196, 1.442695
        %v4200 = vpow.pop %v4199
        %v4201 = vmul.f32 %v4197, 1.442695
        %v4202 = vpow.pop %v4201
        %v4203 = vmul.f32 %v4198, 1.442695
        %v4204 = vpow.pop %v4203
        %v4205 = vsel %vm2495, %v4200, 0.0
        %4206 = vadd.xlane.f32.xlu0 %v4205
        %v4207 = vpop.xlane.xlu0 %4206
        %v4208 = vsel %vm2495, %v4202, 0.0
        %4209 = vadd.xlane.f32.xlu0 %v4208
        %v4210 = vpop.xlane.xlu0 %4209
        %v4211 = vsel %vm2502, %v4204, 0.0
        %4212 = vadd.xlane.f32.xlu0 %v4211
        %v4213 = vpop.xlane.xlu0 %4212
        %v4214 = vrcp.pop %v4207
        %v4215 = vrcp.pop %v4210
        %v4216 = vrcp.pop %v4213
        %v4217 = vmul.f32 %v4200, %v4214
        %v4218 = vmul.f32 %v4202, %v4215
        %v4219 = vmul.f32 %v4204, %v4216
        %v4220 = vpack.c.bf16 %v4218, %v4217
        %v4221 = vpack.c.bf16 %v4219, %v4219
        %4222 = vrot.lane.b32.xlu0 %v3912, 64
        %v4223 = vpop.permute.xlu0 %4222
        %4224 = vrot.lane.b32.xlu0 %v3913, 64
        %v4225 = vpop.permute.xlu0 %4224
        %v4228 = vsel %vm2495, %v4220, 0
        %v4231 = vsel %vm2495, %v4221, 0
        %v4234 = vsel %vm2540, %v4225, 0
        %4236 = vmatpush.bf16.msra.mxu0 0
        %4237 = vmatpush.bf16.msra.mxu0 0
        %4238 = vmatpush.bf16.msra.mxu0 0
        %4239 = vmatpush.bf16.msra.mxu0 0
        %4240 = vmatpush.bf16.msra.mxu0 0
        %4241 = vmatpush.bf16.msra.mxu0 0
        %4242 = vmatpush.bf16.msra.mxu0 %v4234
        %4243 = vmatpush.bf16.msra.mxu0 %v4223
        %4244 = vmatmul.bf16.gmra.mxu0 %v4228
        %v4245 = vpop.f32.mrf.mxu0
        %v4246 = vadd.f32 0.0, %v4245
        %v4247 = vpop.f32.mrf.mxu0
        %v4248 = vadd.f32 0.0, %v4247
        %4249 = vmatmul.bf16.gmra.mxu0 %v4231
        %v4250 = vpop.f32.mrf.mxu0
        %v4251 = vadd.f32 0.0, %v4250
        %v4252 = vpop.f32.mrf.mxu0
        %4253 = vdwg.mxu0
        %v4254 = vpack.c.bf16 %v4248, %v4246
        %v4255 = vpack.c.bf16 %v4251, %v4251
        %v4260 = vunpack.c.l.b16 %v3827
        %v4261 = vunpack.c.l.b16 %v3828
        %v4262 = vunpack.c.l.b16 %v3829
        %v4263 = vunpack.c.l.b16 %v3830
        %v4264 = vpack.c.b16 %v4261, %v4260
        %v4265 = vpack.c.b16 %v4263, %v4262
        %v4269 = vsel %vm2455, %v4254, 0
        %v4272 = vsel %vm2455, %v4255, 0
        %4274 = vmatpush.bf16.msra.mxu0 0
        %4275 = vmatpush.bf16.msra.mxu0 0
        %4276 = vmatpush.bf16.msra.mxu0 0
        %4277 = vmatpush.bf16.msra.mxu0 0
        %4278 = vmatpush.bf16.msra.mxu0 0
        %4279 = vmatpush.bf16.msra.mxu0 0
        %4280 = vmatpush.bf16.msra.mxu0 %v4265
        %4281 = vmatpush.bf16.msra.mxu0 %v4264
        %4282 = vmatmul.bf16.gmra.mxu0 %v4269
        %v4283 = vpop.f32.mrf.mxu0
        %v4284 = vadd.f32 0.0, %v4283
        %v4285 = vpop.f32.mrf.mxu0
        %v4286 = vadd.f32 0.0, %v4285
        %4287 = vmatmul.bf16.gmra.mxu0 %v4272
        %v4288 = vpop.f32.mrf.mxu0
        %v4289 = vadd.f32 0.0, %v4288
        %v4290 = vpop.f32.mrf.mxu0
        %4291 = vdwg.mxu0
        %v4292 = vadd.f32 %v4140, %v4284
        %v4293 = vadd.f32 %v4141, %v4286
        %v4294 = vadd.f32 %v4142, %v4289
        %4295 = vrot.lane.b32.xlu0 %v3837, 32
        %v4296 = vpop.permute.xlu0 %4295
        %4297 = vrot.lane.b32.xlu0 %v3838, 32
        %v4298 = vpop.permute.xlu0 %4297
        %4299 = vrot.lane.b32.xlu0 %v3839, 32
        %v4300 = vpop.permute.xlu0 %4299
        %4301 = vrot.lane.b32.xlu0 %v3840, 32
        %v4302 = vpop.permute.xlu0 %4301
        %v4304 = vsel %vm2455, %v4296, 0
        %v4307 = vsel %vm2455, %v4298, 0
        %v4310 = vsel %vm2455, %v4300, 0
        %v4313 = vsel %vm2455, %v4302, 0
        %4315 = vmatpush.bf16.xpose.msra.mxu0 0
        %4316 = vmatpush.bf16.xpose.msra.mxu0 0
        %4317 = vmatpush.bf16.xpose.msra.mxu0 0
        %4318 = vmatpush.bf16.xpose.msra.mxu0 0
        %4319 = vmatpush.bf16.xpose.msra.mxu0 0
        %4320 = vmatpush.bf16.xpose.msra.mxu0 0
        %4321 = vmatpush.bf16.xpose.msra.mxu0 %v4313
        %4322 = vmatpush.bf16.xpose.msra.mxu0 %v4310
        %4323 = vmatmul.bf16.gmra.mxu0 %v4304
        %v4324 = vpop.f32.mrf.mxu0
        %v4325 = vadd.f32 0.0, %v4324
        %v4326 = vpop.f32.mrf.mxu0
        %v4327 = vadd.f32 0.0, %v4326
        %4328 = vmatmul.bf16.gmra.mxu0 %v4307
        %v4329 = vpop.f32.mrf.mxu0
        %v4330 = vadd.f32 0.0, %v4329
        %v4331 = vpop.f32.mrf.mxu0
        %4332 = vdwg.mxu0
        %v4333 = vmul.f32 %v4325, 0.17677669
        %v4334 = vmul.f32 %v4327, 0.17677669
        %v4335 = vmul.f32 %v4330, 0.17677669
        %v4336 = vadd.f32 %v4333, %v2490
        %v4337 = vadd.f32 %v4334, %v2490
        %v4338 = vadd.f32 %v4335, %v2490
        %v4339 = vsel %vm2495, %v4336, -inf
        %4340 = vmax.xlane.f32.xlu0 %v4339
        %v4341 = vpop.xlane.xlu0 %4340
        %v4342 = vsel %vm2495, %v4337, -inf
        %4343 = vmax.xlane.f32.xlu0 %v4342
        %v4344 = vpop.xlane.xlu0 %4343
        %v4345 = vsel %vm2502, %v4338, -inf
        %4346 = vmax.xlane.f32.xlu0 %v4345
        %v4347 = vpop.xlane.xlu0 %4346
        %v4348 = vsub.f32 %v4336, %v4341
        %v4349 = vsub.f32 %v4337, %v4344
        %v4350 = vsub.f32 %v4338, %v4347
        %v4351 = vmul.f32 %v4348, 1.442695
        %v4352 = vpow.pop %v4351
        %v4353 = vmul.f32 %v4349, 1.442695
        %v4354 = vpow.pop %v4353
        %v4355 = vmul.f32 %v4350, 1.442695
        %v4356 = vpow.pop %v4355
        %v4357 = vsel %vm2495, %v4352, 0.0
        %4358 = vadd.xlane.f32.xlu0 %v4357
        %v4359 = vpop.xlane.xlu0 %4358
        %v4360 = vsel %vm2495, %v4354, 0.0
        %4361 = vadd.xlane.f32.xlu0 %v4360
        %v4362 = vpop.xlane.xlu0 %4361
        %v4363 = vsel %vm2502, %v4356, 0.0
        %4364 = vadd.xlane.f32.xlu0 %v4363
        %v4365 = vpop.xlane.xlu0 %4364
        %v4366 = vrcp.pop %v4359
        %v4367 = vrcp.pop %v4362
        %v4368 = vrcp.pop %v4365
        %v4369 = vmul.f32 %v4352, %v4366
        %v4370 = vmul.f32 %v4354, %v4367
        %v4371 = vmul.f32 %v4356, %v4368
        %v4372 = vpack.c.bf16 %v4370, %v4369
        %v4373 = vpack.c.bf16 %v4371, %v4371
        %4374 = vrot.lane.b32.xlu0 %v3912, 32
        %v4375 = vpop.permute.xlu0 %4374
        %4376 = vrot.lane.b32.xlu0 %v3913, 32
        %v4377 = vpop.permute.xlu0 %4376
        %v4380 = vsel %vm2495, %v4372, 0
        %v4383 = vsel %vm2495, %v4373, 0
        %v4386 = vsel %vm2540, %v4377, 0
        %4388 = vmatpush.bf16.msra.mxu0 0
        %4389 = vmatpush.bf16.msra.mxu0 0
        %4390 = vmatpush.bf16.msra.mxu0 0
        %4391 = vmatpush.bf16.msra.mxu0 0
        %4392 = vmatpush.bf16.msra.mxu0 0
        %4393 = vmatpush.bf16.msra.mxu0 0
        %4394 = vmatpush.bf16.msra.mxu0 %v4386
        %4395 = vmatpush.bf16.msra.mxu0 %v4375
        %4396 = vmatmul.bf16.gmra.mxu0 %v4380
        %v4397 = vpop.f32.mrf.mxu0
        %v4398 = vadd.f32 0.0, %v4397
        %v4399 = vpop.f32.mrf.mxu0
        %v4400 = vadd.f32 0.0, %v4399
        %4401 = vmatmul.bf16.gmra.mxu0 %v4383
        %v4402 = vpop.f32.mrf.mxu0
        %v4403 = vadd.f32 0.0, %v4402
        %v4404 = vpop.f32.mrf.mxu0
        %4405 = vdwg.mxu0
        %v4406 = vpack.c.bf16 %v4400, %v4398
        %v4407 = vpack.c.bf16 %v4403, %v4403
        %v4412 = vunpack.c.l.b16 %v3831
        %v4413 = vunpack.c.l.b16 %v3832
        %v4414 = vunpack.c.l.b16 %v3833
        %v4415 = vunpack.c.l.b16 %v3834
        %v4416 = vpack.c.b16 %v4413, %v4412
        %v4417 = vpack.c.b16 %v4415, %v4414
        %v4421 = vsel %vm2455, %v4406, 0
        %v4424 = vsel %vm2455, %v4407, 0
        %4426 = vmatpush.bf16.msra.mxu0 0
        %4427 = vmatpush.bf16.msra.mxu0 0
        %4428 = vmatpush.bf16.msra.mxu0 0
        %4429 = vmatpush.bf16.msra.mxu0 0
        %4430 = vmatpush.bf16.msra.mxu0 0
        %4431 = vmatpush.bf16.msra.mxu0 0
        %4432 = vmatpush.bf16.msra.mxu0 %v4417
        %4433 = vmatpush.bf16.msra.mxu0 %v4416
        %4434 = vmatmul.bf16.gmra.mxu0 %v4421
        %v4435 = vpop.f32.mrf.mxu0
        %v4436 = vadd.f32 0.0, %v4435
        %v4437 = vpop.f32.mrf.mxu0
        %v4438 = vadd.f32 0.0, %v4437
        %4439 = vmatmul.bf16.gmra.mxu0 %v4424
        %v4440 = vpop.f32.mrf.mxu0
        %v4441 = vadd.f32 0.0, %v4440
        %v4442 = vpop.f32.mrf.mxu0
        %4443 = vdwg.mxu0
        %v4444 = vadd.f32 %v4292, %v4436
        %v4445 = vadd.f32 %v4293, %v4438
        %v4446 = vadd.f32 %v4294, %v4441
        %v4447 = vadd.f32 %v3589, %v4444
        %v4448 = vadd.f32 %v3590, %v4445
        %v4449 = vadd.f32 %v3591, %v4446
        %s4450 = scalar_lea.vmem [#allocation13], 1
        %v4451 = vld [vmem:[%s4450] sm:$0x1]
        %s4452 = scalar_lea.vmem [#allocation15], 1
        %v4453 = vld [vmem:[%s4452] sm:$0x1]
        %4454 = vadd.xlane.f32.xlu0 %v4447
        %v4455 = vpop.xlane.xlu0 %4454
        %4456 = vadd.xlane.f32.xlu0 %v4448
        %v4457 = vpop.xlane.xlu0 %4456
        %v4458 = vsel %vm1643, %v4449, 0.0
        %4459 = vadd.xlane.f32.xlu0 %v4458
        %v4460 = vpop.xlane.xlu0 %4459
        %v4461 = vmul.f32 %v4455, %v1653
        %v4462 = vmul.f32 %v4457, %v1653
        %v4463 = vmul.f32 %v4460, %v1653
        %v4464 = vsub.f32 %v4447, %v4461
        %v4465 = vsub.f32 %v4448, %v4462
        %v4466 = vsub.f32 %v4449, %v4463
        %v4467 = vmul.f32 %v4464, %v4464
        %v4468 = vmul.f32 %v4465, %v4465
        %v4469 = vmul.f32 %v4466, %v4466
        %4470 = vadd.xlane.f32.xlu0 %v4467
        %v4471 = vpop.xlane.xlu0 %4470
        %4472 = vadd.xlane.f32.xlu0 %v4468
        %v4473 = vpop.xlane.xlu0 %4472
        %v4474 = vsel %vm1643, %v4469, 0.0
        %4475 = vadd.xlane.f32.xlu0 %v4474
        %v4476 = vpop.xlane.xlu0 %4475
        %v4477 = vmul.f32 %v4471, %v1653
        %v4478 = vmul.f32 %v4473, %v1653
        %v4479 = vmul.f32 %v4476, %v1653
        %v4480 = vadd.f32 %v4477, 1e-05
        %v4481 = vadd.f32 %v4478, 1e-05
        %v4482 = vadd.f32 %v4479, 1e-05
        %v4483 = vrsqrt.pop %v4480
        %v4484 = vmul.f32 %v4483, %v4480
        %v4485 = vmul.f32 %v4484, %v4483
        %v4486 = vmul.f32 0.5, %v4485
        %v4487 = vsub.f32 1.5, %v4486
        %v4488 = vmul.f32 %v4483, %v4487
        %vm4489 = vweird.f32 %v4480
        %vm4490 = vweird.f32 %v4483
        %vm4491 = vmor %vm4489, %vm4490
        %v4492 = vsel %vm4491, %v4483, %v4488
        %v4493 = vrsqrt.pop %v4481
        %v4494 = vmul.f32 %v4493, %v4481
        %v4495 = vmul.f32 %v4494, %v4493
        %v4496 = vmul.f32 0.5, %v4495
        %v4497 = vsub.f32 1.5, %v4496
        %v4498 = vmul.f32 %v4493, %v4497
        %vm4499 = vweird.f32 %v4481
        %vm4500 = vweird.f32 %v4493
        %vm4501 = vmor %vm4499, %vm4500
        %v4502 = vsel %vm4501, %v4493, %v4498
        %v4503 = vrsqrt.pop %v4482
        %v4504 = vmul.f32 %v4503, %v4482
        %v4505 = vmul.f32 %v4504, %v4503
        %v4506 = vmul.f32 0.5, %v4505
        %v4507 = vsub.f32 1.5, %v4506
        %v4508 = vmul.f32 %v4503, %v4507
        %vm4509 = vweird.f32 %v4482
        %vm4510 = vweird.f32 %v4503
        %vm4511 = vmor %vm4509, %vm4510
        %v4512 = vsel %vm4511, %v4503, %v4508
        %v4513 = vmul.f32 %v4464, %v4492
        %v4514 = vmul.f32 %v4465, %v4502
        %v4515 = vmul.f32 %v4466, %v4512
        %v4517 = vperm.slane %v4451, 0
        %v4519 = vmul.f32 %v4513, %v4517
        %v4520 = vmul.f32 %v4514, %v4517
        %v4521 = vmul.f32 %v4515, %v4517
        %v4523 = vperm.slane %v4453, 0
        %v4525 = vadd.f32 %v4519, %v4523
        %v4526 = vadd.f32 %v4520, %v4523
        %v4527 = vadd.f32 %v4521, %v4523
        %s4528 = scalar_lea.vmem %s39, 128
        %v4529 = vld [vmem:[%s4528] sm:$0xff]
        %v4530 = vld [vmem:[%s4528 + $0x8] sm:$0xff]
        %v4531 = vld [vmem:[%s4528 + $0x10] sm:$0xff]
        %v4532 = vld [vmem:[%s4528 + $0x18] sm:$0xff]
        %v4533 = vld [vmem:[%s4528 + $0x20] sm:$0xff]
        %v4534 = vld [vmem:[%s4528 + $0x28] sm:$0xff]
        %v4535 = vld [vmem:[%s4528 + $0x30] sm:$0xff]
        %v4536 = vld [vmem:[%s4528 + $0x38] sm:$0xff]
        %v4537 = vld [vmem:[%s4528 + $0x40] sm:$0xff]
        %v4538 = vld [vmem:[%s4528 + $0x48] sm:$0xff]
        %v4539 = vld [vmem:[%s4528 + $0x50] sm:$0xff]
        %v4540 = vld [vmem:[%s4528 + $0x58] sm:$0xff]
        %v4541 = vld [vmem:[%s4528 + $0x60] sm:$0xff]
        %v4542 = vld [vmem:[%s4528 + $0x68] sm:$0xff]
        %v4543 = vld [vmem:[%s4528 + $0x70] sm:$0xff]
        %v4544 = vld [vmem:[%s4528 + $0x78] sm:$0xff]
        %v4545 = vpack.c.bf16 %v4526, %v4525
        %v4546 = vpack.c.bf16 %v4527, %v4527
        %s4547 = scalar_lea.vmem [#allocation16], 2
        %v4548 = vld [vmem:[%s4547] sm:$0x3]
        %v4550 = vperm.slane %v4548, 0
        %v4551 = vperm.slane %v4548, 1
        %v4570 = vunpack.c.l.b16 %v4529
        %v4571 = vunpack.c.h.b16 %v4529
        %v4572 = vunpack.c.l.b16 %v4530
        %v4573 = vunpack.c.h.b16 %v4530
        %v4574 = vunpack.c.l.b16 %v4531
        %v4575 = vunpack.c.h.b16 %v4531
        %v4576 = vunpack.c.l.b16 %v4532
        %v4577 = vunpack.c.h.b16 %v4532
        %v4578 = vunpack.c.l.b16 %v4533
        %v4579 = vunpack.c.h.b16 %v4533
        %v4580 = vunpack.c.l.b16 %v4534
        %v4581 = vunpack.c.h.b16 %v4534
        %v4582 = vunpack.c.l.b16 %v4535
        %v4583 = vunpack.c.h.b16 %v4535
        %v4584 = vunpack.c.l.b16 %v4536
        %v4585 = vunpack.c.h.b16 %v4536
        %v4586 = vunpack.c.l.b16 %v4537
        %v4587 = vunpack.c.h.b16 %v4537
        %v4588 = vunpack.c.l.b16 %v4538
        %v4589 = vunpack.c.h.b16 %v4538
        %v4590 = vunpack.c.l.b16 %v4539
        %v4591 = vunpack.c.h.b16 %v4539
        %v4592 = vunpack.c.l.b16 %v4540
        %v4593 = vunpack.c.h.b16 %v4540
        %v4594 = vunpack.c.l.b16 %v4541
        %v4595 = vunpack.c.h.b16 %v4541
        %v4596 = vunpack.c.l.b16 %v4542
        %v4597 = vunpack.c.h.b16 %v4542
        %v4598 = vunpack.c.l.b16 %v4543
        %v4599 = vunpack.c.h.b16 %v4543
        %v4600 = vunpack.c.l.b16 %v4544
        %v4601 = vunpack.c.h.b16 %v4544
        %v4602 = vpack.c.b16 %v4572, %v4570
        %v4603 = vpack.c.b16 %v4573, %v4571
        %v4604 = vpack.c.b16 %v4576, %v4574
        %v4605 = vpack.c.b16 %v4577, %v4575
        %v4606 = vpack.c.b16 %v4580, %v4578
        %v4607 = vpack.c.b16 %v4581, %v4579
        %v4608 = vpack.c.b16 %v4584, %v4582
        %v4609 = vpack.c.b16 %v4585, %v4583
        %v4610 = vpack.c.b16 %v4588, %v4586
        %v4611 = vpack.c.b16 %v4589, %v4587
        %v4612 = vpack.c.b16 %v4592, %v4590
        %v4613 = vpack.c.b16 %v4593, %v4591
        %v4614 = vpack.c.b16 %v4596, %v4594
        %v4615 = vpack.c.b16 %v4597, %v4595
        %v4616 = vpack.c.b16 %v4600, %v4598
        %v4617 = vpack.c.b16 %v4601, %v4599
        %4634 = vmatpush.bf16.msra.mxu0 %v4616
        %4635 = vmatpush.bf16.msra.mxu0 %v4614
        %4636 = vmatpush.bf16.msra.mxu0 %v4612
        %4637 = vmatpush.bf16.msra.mxu0 %v4610
        %4638 = vmatpush.bf16.msra.mxu0 %v4608
        %4639 = vmatpush.bf16.msra.mxu0 %v4606
        %4640 = vmatpush.bf16.msra.mxu0 %v4604
        %4641 = vmatpush.bf16.msra.mxu0 %v4602
        %4642 = vmatmul.bf16.gmra.mxu0 %v4545
        %v4643 = vpop.f32.mrf.mxu0
        %v4644 = vadd.f32 %v4550, %v4643
        %v4645 = vpop.f32.mrf.mxu0
        %v4646 = vadd.f32 %v4550, %v4645
        %4647 = vmatmul.bf16.gmra.mxu0 %v4546
        %v4648 = vpop.f32.mrf.mxu0
        %v4649 = vadd.f32 %v4550, %v4648
        %v4650 = vpop.f32.mrf.mxu0
        %4651 = vdwg.mxu0
        %4652 = vmatpush.bf16.msra.mxu0 %v4617
        %4653 = vmatpush.bf16.msra.mxu0 %v4615
        %4654 = vmatpush.bf16.msra.mxu0 %v4613
        %4655 = vmatpush.bf16.msra.mxu0 %v4611
        %4656 = vmatpush.bf16.msra.mxu0 %v4609
        %4657 = vmatpush.bf16.msra.mxu0 %v4607
        %4658 = vmatpush.bf16.msra.mxu0 %v4605
        %4659 = vmatpush.bf16.msra.mxu0 %v4603
        %4660 = vmatmul.bf16.gmra.mxu0 %v4545
        %v4661 = vpop.f32.mrf.mxu0
        %v4662 = vadd.f32 %v4551, %v4661
        %v4663 = vpop.f32.mrf.mxu0
        %v4664 = vadd.f32 %v4551, %v4663
        %4665 = vmatmul.bf16.gmra.mxu0 %v4546
        %v4666 = vpop.f32.mrf.mxu0
        %v4667 = vadd.f32 %v4551, %v4666
        %v4668 = vpop.f32.mrf.mxu0
        %4669 = vdwg.mxu0
        %v4670 = vmul.f32 %v4644, %v4644
        %v4671 = vmul.f32 %v4662, %v4662
        %v4672 = vmul.f32 %v4646, %v4646
        %v4673 = vmul.f32 %v4664, %v4664
        %v4674 = vmul.f32 %v4649, %v4649
        %v4675 = vmul.f32 %v4667, %v4667
        %v4676 = vmul.f32 %v4644, %v4670
        %v4677 = vmul.f32 %v4662, %v4671
        %v4678 = vmul.f32 %v4646, %v4672
        %v4679 = vmul.f32 %v4664, %v4673
        %v4680 = vmul.f32 %v4649, %v4674
        %v4681 = vmul.f32 %v4667, %v4675
        %v4682 = vmul.f32 %v4676, 0.044715
        %v4683 = vmul.f32 %v4677, 0.044715
        %v4684 = vmul.f32 %v4678, 0.044715
        %v4685 = vmul.f32 %v4679, 0.044715
        %v4686 = vmul.f32 %v4680, 0.044715
        %v4687 = vmul.f32 %v4681, 0.044715
        %v4688 = vadd.f32 %v4644, %v4682
        %v4689 = vadd.f32 %v4662, %v4683
        %v4690 = vadd.f32 %v4646, %v4684
        %v4691 = vadd.f32 %v4664, %v4685
        %v4692 = vadd.f32 %v4649, %v4686
        %v4693 = vadd.f32 %v4667, %v4687
        %v4694 = vmul.f32 %v4688, 0.7978846
        %v4695 = vmul.f32 %v4689, 0.7978846
        %v4696 = vmul.f32 %v4690, 0.7978846
        %v4697 = vmul.f32 %v4691, 0.7978846
        %v4698 = vmul.f32 %v4692, 0.7978846
        %v4699 = vmul.f32 %v4693, 0.7978846
        %v4700 = vtanh.pop %v4694
        %v4701 = vtanh.pop %v4695
        %v4702 = vtanh.pop %v4696
        %v4703 = vtanh.pop %v4697
        %v4704 = vtanh.pop %v4698
        %v4705 = vtanh.pop %v4699
        %v4706 = vadd.f32 %v4700, 1.0
        %v4707 = vadd.f32 %v4701, 1.0
        %v4708 = vadd.f32 %v4702, 1.0
        %v4709 = vadd.f32 %v4703, 1.0
        %v4710 = vadd.f32 %v4704, 1.0
        %v4711 = vadd.f32 %v4705, 1.0
        %v4712 = vmul.f32 %v4706, 0.5
        %v4713 = vmul.f32 %v4707, 0.5
        %v4714 = vmul.f32 %v4708, 0.5
        %v4715 = vmul.f32 %v4709, 0.5
        %v4716 = vmul.f32 %v4710, 0.5
        %v4717 = vmul.f32 %v4711, 0.5
        %v4718 = vmul.f32 %v4644, %v4712
        %v4719 = vmul.f32 %v4662, %v4713
        %v4720 = vmul.f32 %v4646, %v4714
        %v4721 = vmul.f32 %v4664, %v4715
        %v4722 = vmul.f32 %v4649, %v4716
        %v4723 = vmul.f32 %v4667, %v4717
        %s4724 = scalar_lea.vmem [#allocation18], 128
        %v4725 = vld [vmem:[%s4724] sm:$0xf]
        %v4726 = vld [vmem:[%s4724 + $0x4] sm:$0xf]
        %v4727 = vld [vmem:[%s4724 + $0x8] sm:$0xf]
        %v4728 = vld [vmem:[%s4724 + $0xc] sm:$0xf]
        %v4729 = vld [vmem:[%s4724 + $0x10] sm:$0xf]
        %v4730 = vld [vmem:[%s4724 + $0x14] sm:$0xf]
        %v4731 = vld [vmem:[%s4724 + $0x18] sm:$0xf]
        %v4732 = vld [vmem:[%s4724 + $0x1c] sm:$0xf]
        %v4733 = vld [vmem:[%s4724 + $0x20] sm:$0xf]
        %v4734 = vld [vmem:[%s4724 + $0x24] sm:$0xf]
        %v4735 = vld [vmem:[%s4724 + $0x28] sm:$0xf]
        %v4736 = vld [vmem:[%s4724 + $0x2c] sm:$0xf]
        %v4737 = vld [vmem:[%s4724 + $0x30] sm:$0xf]
        %v4738 = vld [vmem:[%s4724 + $0x34] sm:$0xf]
        %v4739 = vld [vmem:[%s4724 + $0x38] sm:$0xf]
        %v4740 = vld [vmem:[%s4724 + $0x3c] sm:$0xf]
        %v4741 = vld [vmem:[%s4724 + $0x40] sm:$0xf]
        %v4742 = vld [vmem:[%s4724 + $0x44] sm:$0xf]
        %v4743 = vld [vmem:[%s4724 + $0x48] sm:$0xf]
        %v4744 = vld [vmem:[%s4724 + $0x4c] sm:$0xf]
        %v4745 = vld [vmem:[%s4724 + $0x50] sm:$0xf]
        %v4746 = vld [vmem:[%s4724 + $0x54] sm:$0xf]
        %v4747 = vld [vmem:[%s4724 + $0x58] sm:$0xf]
        %v4748 = vld [vmem:[%s4724 + $0x5c] sm:$0xf]
        %v4749 = vld [vmem:[%s4724 + $0x60] sm:$0xf]
        %v4750 = vld [vmem:[%s4724 + $0x64] sm:$0xf]
        %v4751 = vld [vmem:[%s4724 + $0x68] sm:$0xf]
        %v4752 = vld [vmem:[%s4724 + $0x6c] sm:$0xf]
        %v4753 = vld [vmem:[%s4724 + $0x70] sm:$0xf]
        %v4754 = vld [vmem:[%s4724 + $0x74] sm:$0xf]
        %v4755 = vld [vmem:[%s4724 + $0x78] sm:$0xf]
        %v4756 = vld [vmem:[%s4724 + $0x7c] sm:$0xf]
        %v4757 = vpack.c.bf16 %v4720, %v4718
        %v4758 = vpack.c.bf16 %v4721, %v4719
        %v4759 = vpack.c.bf16 %v4722, %v4722
        %v4760 = vpack.c.bf16 %v4723, %v4723
        %s4761 = scalar_lea.vmem [#allocation19], 1
        %v4762 = vld [vmem:[%s4761] sm:$0x1]
        %v4764 = vperm.slane %v4762, 0
        %v4798 = vunpack.c.l.b16 %v4725
        %v4799 = vunpack.c.l.b16 %v4726
        %v4800 = vunpack.c.l.b16 %v4727
        %v4801 = vunpack.c.l.b16 %v4728
        %v4802 = vunpack.c.l.b16 %v4729
        %v4803 = vunpack.c.l.b16 %v4730
        %v4804 = vunpack.c.l.b16 %v4731
        %v4805 = vunpack.c.l.b16 %v4732
        %v4806 = vunpack.c.l.b16 %v4733
        %v4807 = vunpack.c.l.b16 %v4734
        %v4808 = vunpack.c.l.b16 %v4735
        %v4809 = vunpack.c.l.b16 %v4736
        %v4810 = vunpack.c.l.b16 %v4737
        %v4811 = vunpack.c.l.b16 %v4738
        %v4812 = vunpack.c.l.b16 %v4739
        %v4813 = vunpack.c.l.b16 %v4740
        %v4814 = vunpack.c.l.b16 %v4741
        %v4815 = vunpack.c.l.b16 %v4742
        %v4816 = vunpack.c.l.b16 %v4743
        %v4817 = vunpack.c.l.b16 %v4744
        %v4818 = vunpack.c.l.b16 %v4745
        %v4819 = vunpack.c.l.b16 %v4746
        %v4820 = vunpack.c.l.b16 %v4747
        %v4821 = vunpack.c.l.b16 %v4748
        %v4822 = vunpack.c.l.b16 %v4749
        %v4823 = vunpack.c.l.b16 %v4750
        %v4824 = vunpack.c.l.b16 %v4751
        %v4825 = vunpack.c.l.b16 %v4752
        %v4826 = vunpack.c.l.b16 %v4753
        %v4827 = vunpack.c.l.b16 %v4754
        %v4828 = vunpack.c.l.b16 %v4755
        %v4829 = vunpack.c.l.b16 %v4756
        %v4830 = vpack.c.b16 %v4799, %v4798
        %v4831 = vpack.c.b16 %v4801, %v4800
        %v4832 = vpack.c.b16 %v4803, %v4802
        %v4833 = vpack.c.b16 %v4805, %v4804
        %v4834 = vpack.c.b16 %v4807, %v4806
        %v4835 = vpack.c.b16 %v4809, %v4808
        %v4836 = vpack.c.b16 %v4811, %v4810
        %v4837 = vpack.c.b16 %v4813, %v4812
        %v4838 = vpack.c.b16 %v4815, %v4814
        %v4839 = vpack.c.b16 %v4817, %v4816
        %v4840 = vpack.c.b16 %v4819, %v4818
        %v4841 = vpack.c.b16 %v4821, %v4820
        %v4842 = vpack.c.b16 %v4823, %v4822
        %v4843 = vpack.c.b16 %v4825, %v4824
        %v4844 = vpack.c.b16 %v4827, %v4826
        %v4845 = vpack.c.b16 %v4829, %v4828
        %4862 = vmatpush.bf16.msra.mxu0 %v4837
        %4863 = vmatpush.bf16.msra.mxu0 %v4836
        %4864 = vmatpush.bf16.msra.mxu0 %v4835
        %4865 = vmatpush.bf16.msra.mxu0 %v4834
        %4866 = vmatpush.bf16.msra.mxu0 %v4833
        %4867 = vmatpush.bf16.msra.mxu0 %v4832
        %4868 = vmatpush.bf16.msra.mxu0 %v4831
        %4869 = vmatpush.bf16.msra.mxu0 %v4830
        %4870 = vmatmul.bf16.gmra.mxu0 %v4757
        %v4871 = vpop.f32.mrf.mxu0
        %v4872 = vadd.f32 %v4764, %v4871
        %v4873 = vpop.f32.mrf.mxu0
        %v4874 = vadd.f32 %v4764, %v4873
        %4875 = vmatmul.bf16.gmra.mxu0 %v4759
        %v4876 = vpop.f32.mrf.mxu0
        %v4877 = vadd.f32 %v4764, %v4876
        %v4878 = vpop.f32.mrf.mxu0
        %4879 = vdwg.mxu0
        %4880 = vmatpush.bf16.msra.mxu0 %v4845
        %4881 = vmatpush.bf16.msra.mxu0 %v4844
        %4882 = vmatpush.bf16.msra.mxu0 %v4843
        %4883 = vmatpush.bf16.msra.mxu0 %v4842
        %4884 = vmatpush.bf16.msra.mxu0 %v4841
        %4885 = vmatpush.bf16.msra.mxu0 %v4840
        %4886 = vmatpush.bf16.msra.mxu0 %v4839
        %4887 = vmatpush.bf16.msra.mxu0 %v4838
        %4888 = vmatmul.bf16.gmra.mxu0 %v4758
        %v4889 = vpop.f32.mrf.mxu0
        %v4890 = vadd.f32 %v4872, %v4889
        %v4891 = vpop.f32.mrf.mxu0
        %v4892 = vadd.f32 %v4874, %v4891
        %4893 = vmatmul.bf16.gmra.mxu0 %v4760
        %v4894 = vpop.f32.mrf.mxu0
        %v4895 = vadd.f32 %v4877, %v4894
        %v4896 = vpop.f32.mrf.mxu0
        %4897 = vdwg.mxu0
        %v4898 = vadd.f32 %v4525, %v4890
        %v4899 = vadd.f32 %v4526, %v4892
        %v4900 = vadd.f32 %v4527, %v4895
        %s4901 = scalar_lea.vmem [#allocation21], 1
        %v4902 = vld [vmem:[%s4901] sm:$0x1]
        %s4903 = scalar_lea.vmem [#allocation22], 1
        %v4904 = vld [vmem:[%s4903] sm:$0x1]
        %4905 = vadd.xlane.f32.xlu0 %v4898
        %v4906 = vpop.xlane.xlu0 %4905
        %4907 = vadd.xlane.f32.xlu0 %v4899
        %v4908 = vpop.xlane.xlu0 %4907
        %v4909 = vsel %vm1643, %v4900, 0.0
        %4910 = vadd.xlane.f32.xlu0 %v4909
        %v4911 = vpop.xlane.xlu0 %4910
        %v4912 = vmul.f32 %v4906, %v1653
        %v4913 = vmul.f32 %v4908, %v1653
        %v4914 = vmul.f32 %v4911, %v1653
        %v4915 = vsub.f32 %v4898, %v4912
        %v4916 = vsub.f32 %v4899, %v4913
        %v4917 = vsub.f32 %v4900, %v4914
        %v4918 = vmul.f32 %v4915, %v4915
        %v4919 = vmul.f32 %v4916, %v4916
        %v4920 = vmul.f32 %v4917, %v4917
        %4921 = vadd.xlane.f32.xlu0 %v4918
        %v4922 = vpop.xlane.xlu0 %4921
        %4923 = vadd.xlane.f32.xlu0 %v4919
        %v4924 = vpop.xlane.xlu0 %4923
        %v4925 = vsel %vm1643, %v4920, 0.0
        %4926 = vadd.xlane.f32.xlu0 %v4925
        %v4927 = vpop.xlane.xlu0 %4926
        %v4928 = vmul.f32 %v4922, %v1653
        %v4929 = vmul.f32 %v4924, %v1653
        %v4930 = vmul.f32 %v4927, %v1653
        %v4931 = vadd.f32 %v4928, 1e-05
        %v4932 = vadd.f32 %v4929, 1e-05
        %v4933 = vadd.f32 %v4930, 1e-05
        %v4934 = vrsqrt.pop %v4931
        %v4935 = vmul.f32 %v4934, %v4931
        %v4936 = vmul.f32 %v4935, %v4934
        %v4937 = vmul.f32 0.5, %v4936
        %v4938 = vsub.f32 1.5, %v4937
        %v4939 = vmul.f32 %v4934, %v4938
        %vm4940 = vweird.f32 %v4931
        %vm4941 = vweird.f32 %v4934
        %vm4942 = vmor %vm4940, %vm4941
        %v4943 = vsel %vm4942, %v4934, %v4939
        %v4944 = vrsqrt.pop %v4932
        %v4945 = vmul.f32 %v4944, %v4932
        %v4946 = vmul.f32 %v4945, %v4944
        %v4947 = vmul.f32 0.5, %v4946
        %v4948 = vsub.f32 1.5, %v4947
        %v4949 = vmul.f32 %v4944, %v4948
        %vm4950 = vweird.f32 %v4932
        %vm4951 = vweird.f32 %v4944
        %vm4952 = vmor %vm4950, %vm4951
        %v4953 = vsel %vm4952, %v4944, %v4949
        %v4954 = vrsqrt.pop %v4933
        %v4955 = vmul.f32 %v4954, %v4933
        %v4956 = vmul.f32 %v4955, %v4954
        %v4957 = vmul.f32 0.5, %v4956
        %v4958 = vsub.f32 1.5, %v4957
        %v4959 = vmul.f32 %v4954, %v4958
        %vm4960 = vweird.f32 %v4933
        %vm4961 = vweird.f32 %v4954
        %vm4962 = vmor %vm4960, %vm4961
        %v4963 = vsel %vm4962, %v4954, %v4959
        %v4964 = vmul.f32 %v4915, %v4943
        %v4965 = vmul.f32 %v4916, %v4953
        %v4966 = vmul.f32 %v4917, %v4963
        %v4968 = vperm.slane %v4902, 0
        %v4970 = vmul.f32 %v4964, %v4968
        %v4971 = vmul.f32 %v4965, %v4968
        %v4972 = vmul.f32 %v4966, %v4968
        %v4974 = vperm.slane %v4904, 0
        %v4976 = vadd.f32 %v4970, %v4974
        %v4977 = vadd.f32 %v4971, %v4974
        %v4978 = vadd.f32 %v4972, %v4974
        %4979 = vst [vmem:[%s1327] sm:$0xff] %v4976
        %4980 = vst [vmem:[%s1327 + $0x8] sm:$0xff] %v4977
        %4981 = vst [vmem:[%s1327 + $0x10] sm:$0x3] %v4978
        %v4982 = vld [vmem:[#allocation24] sm:$0xf]
        %v4983 = vld [vmem:[#allocation24 + $0x4] sm:$0xf]
        %v4984 = vld [vmem:[#allocation24 + $0x8] sm:$0xf]
        %v4985 = vld [vmem:[#allocation24 + $0xc] sm:$0xf]
        %v4986 = vld [vmem:[#allocation24 + $0x10] sm:$0xf]
        %v4987 = vld [vmem:[#allocation24 + $0x14] sm:$0xf]
        %v4988 = vld [vmem:[#allocation24 + $0x18] sm:$0xf]
        %v4989 = vld [vmem:[#allocation24 + $0x1c] sm:$0xf]
        %v4990 = vld [vmem:[#allocation24 + $0x20] sm:$0xf]
        %v4991 = vld [vmem:[#allocation24 + $0x24] sm:$0xf]
        %v4992 = vld [vmem:[#allocation24 + $0x28] sm:$0xf]
        %v4993 = vld [vmem:[#allocation24 + $0x2c] sm:$0xf]
        %v4994 = vld [vmem:[#allocation24 + $0x30] sm:$0xf]
        %v4995 = vld [vmem:[#allocation24 + $0x34] sm:$0xf]
        %v4996 = vld [vmem:[#allocation24 + $0x38] sm:$0xf]
        %v4997 = vld [vmem:[#allocation24 + $0x3c] sm:$0xf]
        %v4998 = vpack.c.bf16 %v4977, %v4976
        %v4999 = vpack.c.bf16 %v4978, %v4978
        %v5000 = vld [vmem:[#allocation25] sm:$0x1]
        %v5002 = vperm.slane %v5000, 0
        %v5020 = vunpack.c.l.b16 %v4982
        %v5021 = vunpack.c.l.b16 %v4983
        %v5022 = vunpack.c.l.b16 %v4984
        %v5023 = vunpack.c.l.b16 %v4985
        %v5024 = vunpack.c.l.b16 %v4986
        %v5025 = vunpack.c.l.b16 %v4987
        %v5026 = vunpack.c.l.b16 %v4988
        %v5027 = vunpack.c.l.b16 %v4989
        %v5028 = vunpack.c.l.b16 %v4990
        %v5029 = vunpack.c.l.b16 %v4991
        %v5030 = vunpack.c.l.b16 %v4992
        %v5031 = vunpack.c.l.b16 %v4993
        %v5032 = vunpack.c.l.b16 %v4994
        %v5033 = vunpack.c.l.b16 %v4995
        %v5034 = vunpack.c.l.b16 %v4996
        %v5035 = vunpack.c.l.b16 %v4997
        %v5036 = vpack.c.b16 %v5021, %v5020
        %v5037 = vpack.c.b16 %v5023, %v5022
        %v5038 = vpack.c.b16 %v5025, %v5024
        %v5039 = vpack.c.b16 %v5027, %v5026
        %v5040 = vpack.c.b16 %v5029, %v5028
        %v5041 = vpack.c.b16 %v5031, %v5030
        %v5042 = vpack.c.b16 %v5033, %v5032
        %v5043 = vpack.c.b16 %v5035, %v5034
        %5052 = vmatpush.bf16.msra.mxu0 %v5043
        %5053 = vmatpush.bf16.msra.mxu0 %v5042
        %5054 = vmatpush.bf16.msra.mxu0 %v5041
        %5055 = vmatpush.bf16.msra.mxu0 %v5040
        %5056 = vmatpush.bf16.msra.mxu0 %v5039
        %5057 = vmatpush.bf16.msra.mxu0 %v5038
        %5058 = vmatpush.bf16.msra.mxu0 %v5037
        %5059 = vmatpush.bf16.msra.mxu0 %v5036
        %5060 = vmatmul.bf16.gmra.mxu0 %v4998
        %v5061 = vpop.f32.mrf.mxu0
        %v5062 = vadd.f32 %v5002, %v5061
        %v5063 = vpop.f32.mrf.mxu0
        %v5064 = vadd.f32 %v5002, %v5063
        %5065 = vmatmul.bf16.gmra.mxu0 %v4999
        %v5066 = vpop.f32.mrf.mxu0
        %v5067 = vadd.f32 %v5002, %v5066
        %v5068 = vpop.f32.mrf.mxu0
        %5069 = vdwg.mxu0
        %v5070 = vmax.f32 %v5062, 0.0
        %v5071 = vmax.f32 %v5064, 0.0
        %v5072 = vmax.f32 %v5067, 0.0
        %v5073 = vld [vmem:[#allocation27] sm:$0x1]
        %v5075 = vperm.slane %v5073, 0
        %v5077 = vmul.f32 %v5070, %v5075
        %v5078 = vmul.f32 %v5071, %v5075
        %v5079 = vmul.f32 %v5072, %v5075
        %5080 = vadd.xlane.f32.xlu0 %v5077
        %v5081 = vpop.xlane.xlu0 %5080
        %5082 = vadd.xlane.f32.xlu0 %v5078
        %v5083 = vpop.xlane.xlu0 %5082
        %v5084 = vsel %vm1643, %v5079, 0.0
        %5085 = vadd.xlane.f32.xlu0 %v5084
        %v5086 = vpop.xlane.xlu0 %5085
        %v5087 = vld [vmem:[#allocation3] sm:$0x1]
        %v5089 = vperm.slane %v5087, 0
        %v5091 = vadd.f32 %v5081, %v5089
        %v5092 = vadd.f32 %v5083, %v5089
        %v5093 = vadd.f32 %v5086, %v5089
        %v5094 = vld [vmem:[%s1322] sm:$0xff]
        %v5095 = vld [vmem:[%s1322 + $0x8] sm:$0xff]
        %v5096 = vld [vmem:[%s1322 + $0x10] sm:$0x3]
        %v5097 = vadd.f32 %v5091, %v5094
        %v5098 = vadd.f32 %v5092, %v5095
        %v5099 = vadd.f32 %v5093, %v5096
        %vm5100 = vcmask 7168
        %v5101 = vsel %vm5100, %v5097, -inf
        %v5102 = vsel %vm5100, %v5098, -inf
        %vm5103 = vcmask 1024
        %v5104 = vsel %vm5103, %v5099, -inf
        %v5105 = vmax.f32 %v5101, %v5102
        %v5106 = vmax.f32 %v5105, %v5104
        %v5107 = vrot.slane %v5106, 4
        %v5108 = vmax.f32 %v5106, %v5107
        %v5109 = vrot.slane %v5108, 2
        %v5110 = vmax.f32 %v5108, %v5109
        %v5111 = vrot.slane %v5110, 1
        %v5112 = vmax.f32 %v5110, %v5111
        %v5113 = vsub.f32 %v5097, %v5112
        %v5114 = vsub.f32 %v5098, %v5112
        %v5115 = vsub.f32 %v5099, %v5112
        %v5116 = vmul.f32 %v5113, 1.442695
        %v5117 = vpow.pop %v5116
        %v5118 = vmul.f32 %v5114, 1.442695
        %v5119 = vpow.pop %v5118
        %v5120 = vmul.f32 %v5115, 1.442695
        %v5121 = vpow.pop %v5120
        %v5122 = vsel %vm5100, %v5117, 0.0
        %v5123 = vsel %vm5100, %v5119, 0.0
        %v5124 = vadd.f32 %v5122, %v5123
        %v5125 = vsel %vm5103, %v5121, 0.0
        %v5126 = vadd.f32 %v5124, %v5125
        %v5127 = vrot.slane %v5126, 4
        %v5128 = vadd.f32 %v5126, %v5127
        %v5129 = vrot.slane %v5128, 2
        %v5130 = vadd.f32 %v5128, %v5129
        %v5131 = vrot.slane %v5130, 1
        %v5132 = vadd.f32 %v5130, %v5131
        %v5133 = vrcp.pop %v5132
        %v5134 = vmul.f32 %v5117, %v5133
        %v5135 = vmul.f32 %v5119, %v5133
        %v5136 = vmul.f32 %v5121, %v5133
        %5138 = vset.pattern.permute.xlu0 0
        %5139 = vperm.xlu0 %5138, %v5134
        %v5140 = vpop.permute.xlu0 %5139
        %5143 = vset.pattern.permute.xlu0 0
        %5144 = vperm.xlu0 %5143, %v5135
        %v5145 = vpop.permute.xlu0 %5144
        %5148 = vset.pattern.permute.xlu0 0
        %5149 = vperm.xlu0 %5148, %v5136
        %v5150 = vpop.permute.xlu0 %5149
        %v5152 = vmul.f32 %v5140, %v4976
        %v5153 = vmul.f32 %v5145, %v4977
        %v5154 = vmul.f32 %v5150, %v4978
        %v5155 = vadd.f32 %v5152, %v5153
        %v5156 = vsel %vm1643, %v5154, 0.0
        %v5157 = vadd.f32 %v5155, %v5156
        %v5158 = vrot.slane %v5157, 4
        %v5159 = vadd.f32 %v5157, %v5158
        %v5160 = vrot.slane %v5159, 2
        %v5161 = vadd.f32 %v5159, %v5160
        %v5162 = vrot.slane %v5161, 1
        %v5163 = vadd.f32 %v5161, %v5162
        %v5164 = vld [vmem:[#allocation28] sm:$0xf]
        %v5165 = vld [vmem:[#allocation28 + $0x4] sm:$0xf]
        %v5166 = vld [vmem:[#allocation28 + $0x8] sm:$0xf]
        %v5167 = vld [vmem:[#allocation28 + $0xc] sm:$0xf]
        %v5168 = vld [vmem:[#allocation28 + $0x10] sm:$0xf]
        %v5169 = vld [vmem:[#allocation28 + $0x14] sm:$0xf]
        %v5170 = vld [vmem:[#allocation28 + $0x18] sm:$0xf]
        %v5171 = vld [vmem:[#allocation28 + $0x1c] sm:$0xf]
        %v5172 = vld [vmem:[#allocation28 + $0x20] sm:$0xf]
        %v5173 = vld [vmem:[#allocation28 + $0x24] sm:$0xf]
        %v5174 = vld [vmem:[#allocation28 + $0x28] sm:$0xf]
        %v5175 = vld [vmem:[#allocation28 + $0x2c] sm:$0xf]
        %v5176 = vld [vmem:[#allocation28 + $0x30] sm:$0xf]
        %v5177 = vld [vmem:[#allocation28 + $0x34] sm:$0xf]
        %v5178 = vld [vmem:[#allocation28 + $0x38] sm:$0xf]
        %v5179 = vld [vmem:[#allocation28 + $0x3c] sm:$0xf]
        %v5180 = vpack.c.bf16 %v5163, %v5163
        %v5181 = vld [vmem:[#allocation30] sm:$0x1]
        %v5198 = vunpack.c.l.b16 %v5164
        %v5199 = vunpack.c.l.b16 %v5165
        %v5200 = vunpack.c.l.b16 %v5166
        %v5201 = vunpack.c.l.b16 %v5167
        %v5202 = vunpack.c.l.b16 %v5168
        %v5203 = vunpack.c.l.b16 %v5169
        %v5204 = vunpack.c.l.b16 %v5170
        %v5205 = vunpack.c.l.b16 %v5171
        %v5206 = vunpack.c.l.b16 %v5172
        %v5207 = vunpack.c.l.b16 %v5173
        %v5208 = vunpack.c.l.b16 %v5174
        %v5209 = vunpack.c.l.b16 %v5175
        %v5210 = vunpack.c.l.b16 %v5176
        %v5211 = vunpack.c.l.b16 %v5177
        %v5212 = vunpack.c.l.b16 %v5178
        %v5213 = vunpack.c.l.b16 %v5179
        %v5214 = vpack.c.b16 %v5199, %v5198
        %v5215 = vpack.c.b16 %v5201, %v5200
        %v5216 = vpack.c.b16 %v5203, %v5202
        %v5217 = vpack.c.b16 %v5205, %v5204
        %v5218 = vpack.c.b16 %v5207, %v5206
        %v5219 = vpack.c.b16 %v5209, %v5208
        %v5220 = vpack.c.b16 %v5211, %v5210
        %v5221 = vpack.c.b16 %v5213, %v5212
        %5230 = vmatpush.bf16.msra.mxu0 %v5221
        %5231 = vmatpush.bf16.msra.mxu0 %v5220
        %5232 = vmatpush.bf16.msra.mxu0 %v5219
        %5233 = vmatpush.bf16.msra.mxu0 %v5218
        %5234 = vmatpush.bf16.msra.mxu0 %v5217
        %5235 = vmatpush.bf16.msra.mxu0 %v5216
        %5236 = vmatpush.bf16.msra.mxu0 %v5215
        %5237 = vmatpush.bf16.msra.mxu0 %v5214
        %5238 = vmatmul.bf16.gmra.mxu0 %v5180
        %v5239 = vpop.f32.mrf.mxu0
        %v5240 = vadd.f32 %v5181, %v5239
        %v5241 = vpop.f32.mrf.mxu0
        %5242 = vdwg.mxu0
        %5243 = vst [vmem:[%s1304] sm:$0x1] %v5240
        %p5244 = scmp.lt.s32.totalorder %s91, 1
        %s5245 = scalar_select %p5244, %s91, 1
        %s5246 = smul.addr %s5245, 3
        %s5247 = smul.addr %s5246, 8
        %s5248 = scalar_lea.vmem %s63, %s5247
        %s5249 = sand.u32 %s796, 1
        %s5250 = scalar_lea.sflag [#allocation6], %s5249
        %s5251 = sand.u32 %s796, 1
        %s5252 = scalar_lea.vmem [#allocation31], %s5251
        // Predicated region
        $region213: #{wav2vec2_forward.5} parent=143 // pred_check
          %p5253 = pneg %p780
        $region214: #{wav2vec2_forward.5} parent=143 // pred_check_branch
          %5255 = sbr.rel (%p5253) target = $region216
        $region215: #{wav2vec2_forward.5} parent=143 // pred_region
          _
        $region216: #{wav2vec2_forward.5} parent=143 // pred_fallthru
          _
        // Predicated region
        $region217: #{wav2vec2_forward.5} parent=143 // pred_check
          %p5256 = pneg %p806
        $region218: #{wav2vec2_forward.5} parent=143 // pred_check_branch
          %5258 = sbr.rel (%p5256) target = $region220
        $region219: #{wav2vec2_forward.5} parent=143 // pred_region
          %5260 = vsyncadd %s5250, 0
          %s5261 = scalar_lea.hbm %s65, %s91
          %s5263 = sshll.u32 %s5252, 4
          %s5264 = int_to_ptr.vmem [resolvable:$true] %s5263
          %s5265 = sshll.u32 %s5261, 4
          %s5266 = int_to_ptr.hbm [resolvable:$true] %s5265
          %5268 = dma.vmem_to_hbm [thread:$0]  %s5264, 16, %s5266, %s5250
        $region220: #{wav2vec2_forward.5} parent=143 // pred_fallthru
          _
      $region144: #{wav2vec2_forward.5} parent=5 // pred_fallthru
        _
      %p5269 = scmp.le.s32.totalorder 2, %s86
      // Predicated region
      $region221: #{wav2vec2_forward.5} parent=5 // pred_check
        %p5270 = pneg %p5269
      $region222: #{wav2vec2_forward.5} parent=5 // pred_check_branch
        %5272 = sbr.rel (%p5270) target = $region224
      $region223: #{wav2vec2_forward.5} parent=5 // pred_region
        %s5273 = ssub.s32 %s86, 2
        // Predicated region
        $region225: #{wav2vec2_forward.5} parent=223 // pred_check
          %p5274 = pneg %p786
        $region226: #{wav2vec2_forward.5} parent=223 // pred_check_branch
          %5276 = sbr.rel (%p5274) target = $region228
        $region227: #{wav2vec2_forward.5} parent=223 // pred_region
          %p5277 = scmp.lt.s32.totalorder %s92, 1
          %s5278 = scalar_select %p5277, %s92, 1
          %s5279 = smul.addr %s5278, 3
          %s5280 = smul.addr %s5279, 8
          %s5281 = scalar_lea.vmem %s63, %s5280
        $region228: #{wav2vec2_forward.5} parent=223 // pred_fallthru
          _
        // Predicated region
        $region229: #{wav2vec2_forward.5} parent=223 // pred_check
          %p5282 = pneg %p812
        $region230: #{wav2vec2_forward.5} parent=223 // pred_check_branch
          %5284 = sbr.rel (%p5282) target = $region232
        $region231: #{wav2vec2_forward.5} parent=223 // pred_region
          %s5285 = sand.u32 %s797, 1
          %s5286 = scalar_lea.sflag [#allocation6], %s5285
          %s5287 = sand.u32 %s797, 1
          %s5288 = scalar_lea.vmem [#allocation31], %s5287
          %5290 = dma.done %s5286, 16
        $region232: #{wav2vec2_forward.5} parent=223 // pred_fallthru
          _
      $region224: #{wav2vec2_forward.5} parent=5 // pred_fallthru
        _
    $region6: #{wav2vec2_forward.5} parent=1 // loop_footer
      %s90 = sadd.s32 1, %s86
    $region7: #{wav2vec2_forward.5} parent=1 // loop_footer_branch
      %85 = sbr.rel target = $region3
    $region8: #{wav2vec2_forward.5} parent=1 // loop_exit
      _
    %5291 = vsyncpa [#allocation5], 1
    %s5292 = scalar_lea.sflag [#allocation5], 1
    %5293 = vsyncpa %s5292, 1
    %5294 = vsyncpa [#allocation8], 1
    %5295 = vsyncpa [#allocation11], 1
    %5296 = vsyncpa [#allocation14], 1
    %5297 = vsyncpa [#allocation17], 1
    %5298 = vsyncpa [#allocation20], 1
    %5299 = vsyncpa [#allocation23], 1
    %5300 = vsyncpa [#allocation26], 1
    %5301 = vsyncpa [#allocation29], 1
    %5302 = vsyncpa [#allocation6], 1
    %s5303 = scalar_lea.sflag [#allocation6], 1
    %5304 = vsyncpa %s5303, 1

</llo_original>
